<compile_context>
chip_gen: v7x
topology: tpu7x:2x2x1
jax: 0.10.0
libtpu: 0.0.40
codegen_flags: <defaults>
</compile_context>

<pallas_src>
import jax
import jax.numpy as jnp
import numpy as np
from jax import lax
from jax.experimental import pallas as pl
from jax.experimental.pallas import tpu as pltpu

# Matmul operand dtype.  Weights are stored in HBM in this dtype (halves the
# dominant weight DMA); accumulation is always f32.  Set to jnp.float32 to get
# exact f32 matmuls.
MATMUL_DTYPE = jnp.bfloat16


def _dot(a, b):
    """MXU matmul with MATMUL_DTYPE operands and f32 accumulation."""
    return jnp.dot(a.astype(MATMUL_DTYPE), b.astype(MATMUL_DTYPE),
                   preferred_element_type=jnp.float32)


def _sigmoid(v):
    # tanh form: one EUP op, no divide, no exp overflow for very negative v.
    return 0.5 * jnp.tanh(0.5 * v) + 0.5


# ---------------------------------------------------------------------------
# Fused kernel.
# Inputs : x (T*B, Din) [row = t*B + b], wih0 (Din, 8H), whh0 (2H, 4H) [fwd;bwd],
#          b0 (1, 8H), wih1 (2H, 8H) [HBM], whh1 (2H, 4H) [HBM], b1 (1, 8H),
#          attw (1, 2H), selT (B, T*B), w1 (2H, F1), b1f (1, F1),
#          w2 (F1, Cpad), b2f (1, Cpad).
# Output : (B, Cpad).
# Scratch: xg (T*2B, 4H), hseq (T*B, 2H), wih1/whh1 VMEM landing buffers, DMA sems.
# ---------------------------------------------------------------------------
def _fused_bilstm_att_fc_kernel(x_ref, wih0_ref, whh0_ref, b0_ref,
                                wih1_hbm, whh1_hbm, b1_ref,
                                attw_ref, selT_ref, w1_ref, b1f_ref,
                                w2_ref, b2f_ref,
                                out_ref,
                                xg_sc, hseq_sc, wih1_sc, whh1_sc, dma_sem):
    B = selT_ref.shape[0]
    T = selT_ref.shape[1] // B
    Hd = whh0_ref.shape[0] // 2
    G = 4 * Hd

    # Kick off layer-1 LSTM weight DMAs now; they complete under the layer-0
    # projection + serial recurrence.
    cp_wih1 = pltpu.make_async_copy(wih1_hbm, wih1_sc, dma_sem.at[0])
    cp_whh1 = pltpu.make_async_copy(whh1_hbm, whh1_sc, dma_sem.at[1])
    cp_wih1.start()
    cp_whh1.start()

    # Row masks used to build the block-diagonal (2B, 2H) lhs of the stacked
    # fwd/bwd recurrent matmul (built once, reused every unrolled step).
    row = lax.broadcasted_iota(jnp.int32, (2 * B, 1), 0)
    m_top = (row < B).astype(jnp.float32)
    m_bot = 1.0 - m_top

    def rearrange_gates(xg_full):
        # xg_full: (T*B, 8H) = [fwd gates | bwd gates] per (t, b) row (bias folded).
        # Re-store so unrolled step t reads one contiguous (2B, 4H) slab:
        #   rows [2B*t, 2B*t+B)   = fwd gates at time t
        #   rows [2B*t+B, 2B*t+2B)= bwd gates at time T-1-t
        for t in range(T):
            tb = T - 1 - t
            xg_sc[2 * B * t: 2 * B * t + B, :] = xg_full[B * t: B * (t + 1), 0:G]
            xg_sc[2 * B * t + B: 2 * B * (t + 1), :] = \
                xg_full[B * tb: B * (tb + 1), G:2 * G]

    def run_bilstm(whh_m):
        # Stacked fwd/bwd recurrence: state rows [0:B] = fwd, [B:2B] = bwd.
        h = jnp.zeros((2 * B, Hd), jnp.float32)
        c = jnp.zeros((2 * B, Hd), jnp.float32)
        for t in range(T):                       # static, fully unrolled
            tb = T - 1 - t
            lhs = jnp.concatenate([h * m_top, h * m_bot], axis=1)      # (2B, 2H)
            g = xg_sc[2 * B * t: 2 * B * (t + 1), :] + _dot(lhs, whh_m)  # (2B, 4H)
            i = _sigmoid(g[:, 0:Hd])
            f = _sigmoid(g[:, Hd:2 * Hd])
            gc = jnp.tanh(g[:, 2 * Hd:3 * Hd])
            o = _sigmoid(g[:, 3 * Hd:4 * Hd])
            c = f * c + i * gc
            h = o * jnp.tanh(c)
            hseq_sc[B * t: B * (t + 1), 0:Hd] = h[0:B]           # fwd @ time t
            hseq_sc[B * tb: B * (tb + 1), Hd:2 * Hd] = h[B:2 * B]  # bwd @ time tb

    # ---------------- layer 0 ----------------
    rearrange_gates(_dot(x_ref[...], wih0_ref[...]) + b0_ref[...])
    run_bilstm(whh0_ref[...])

    # ---------------- layer 1 ----------------
    cp_wih1.wait()
    cp_whh1.wait()
    rearrange_gates(_dot(hseq_sc[...], wih1_sc[...]) + b1_ref[...])
    run_bilstm(whh1_sc[...])                     # overwrites hseq_sc with layer-1 h

    # ---------- attention pooling + relu + fc1 + fc2 ----------
    Hseq = hseq_sc[...]                                               # (T*B, 2H)
    scores = jnp.sum(Hseq * attw_ref[...], axis=1, keepdims=True)     # VPU mul + lane reduce
    e = jnp.exp(scores - jnp.max(scores, axis=0, keepdims=True))      # global shift is valid
    selT = selT_ref[...]                                              # (B, T*B) one-hot of row%B
    denom = jnp.dot(selT, e, preferred_element_type=jnp.float32)      # (B, 1)  sum_t exp
    num = jnp.dot(selT, Hseq * e, preferred_element_type=jnp.float32)  # (B, 2H) sum_t exp*h
    pooled = num * pl.reciprocal(denom, approx=True)                  # softmax pooling
    a = jnp.maximum(pooled, 0.0)
    z1 = _dot(a, w1_ref[...]) + b1f_ref[...]
    out_ref[...] = _dot(z1, w2_ref[...]) + b2f_ref[...]


def model_forward(x_btd, kp, num_classes):
    B, T, Din = x_btd.shape
    Hd = kp["whh0"].shape[0] // 2
    Cp = kp["w2"].shape[1]

    # Time-major, flattened (row = t*B + b); done in the XLA wrapper.
    x_2d = jnp.transpose(x_btd, (1, 0, 2)).reshape(T * B, Din)

    # Tiny per-batch selection matrix: selT[b, r] = 1 iff r % B == b.
    selT = np.zeros((B, T * B), np.float32)
    r = np.arange(T * B)
    selT[r % B, r] = 1.0
    selT = jnp.asarray(selT)

    vmem = pl.BlockSpec(memory_space=pltpu.MemorySpace.VMEM)
    hbm = pl.BlockSpec(memory_space=pl.ANY)

    out_pad = pl.pallas_call(
        _fused_bilstm_att_fc_kernel,
        out_shape=jax.ShapeDtypeStruct((B, Cp), jnp.float32),
        in_specs=[vmem, vmem, vmem, vmem,      # x, wih0, whh0, b0
                  hbm, hbm, vmem,              # wih1 (manual DMA), whh1 (manual DMA), b1
                  vmem, vmem, vmem, vmem, vmem, vmem],  # attw, selT, w1, b1f, w2, b2f
        out_specs=vmem,
        scratch_shapes=[
            pltpu.VMEM((2 * B * T, 4 * Hd), jnp.float32),     # pre-arranged gate inputs
            pltpu.VMEM((T * B, 2 * Hd), jnp.float32),         # h sequence (reused by both layers)
            pltpu.VMEM(kp["wih1"].shape, kp["wih1"].dtype),   # layer-1 W_ih landing buffer
            pltpu.VMEM(kp["whh1"].shape, kp["whh1"].dtype),   # layer-1 W_hh landing buffer
            pltpu.SemaphoreType.DMA((2,)),
        ],
    )(x_2d, kp["wih0"], kp["whh0"], kp["b0"],
      kp["wih1"], kp["whh1"], kp["b1"],
      kp["attw"], selT, kp["w1"], kp["b1f"], kp["w2"], kp["b2f"])
    return out_pad[:, :num_classes]


# ---------------------------------------------------------------------------
# Pure-JAX reference (same math and same MATMUL_DTYPE operand casts).
# ---------------------------------------------------------------------------
def _ref_lstm_dir(x_tbd, wih, whh, b):
    B = x_tbd.shape[1]
    Hd = whh.shape[0]

    def step(carry, x_t):
        h, c = carry
        g = _dot(x_t, wih) + _dot(h, whh) + b
        i = _sigmoid(g[:, 0:Hd])
        f = _sigmoid(g[:, Hd:2 * Hd])
        gg = jnp.tanh(g[:, 2 * Hd:3 * Hd])
        o = _sigmoid(g[:, 3 * Hd:4 * Hd])
        c = f * c + i * gg
        h = o * jnp.tanh(c)
        return (h, c), h

    init = (jnp.zeros((B, Hd), jnp.float32), jnp.zeros((B, Hd), jnp.float32))
    _, hs = lax.scan(step, init, x_tbd)
    return hs


def _ref_bilstm(x_tbd, wih, whh_stack, b):
    Hd = whh_stack.shape[0] // 2
    G = 4 * Hd
    hf = _ref_lstm_dir(x_tbd, wih[:, :G], whh_stack[:Hd], b[:, :G])
    hb = jnp.flip(_ref_lstm_dir(jnp.flip(x_tbd, 0), wih[:, G:], whh_stack[Hd:], b[:, G:]), 0)
    return jnp.concatenate([hf, hb], axis=-1)


def model_ref(x_btd, kp, num_classes):
    x_tbd = jnp.transpose(x_btd, (1, 0, 2))
    h = _ref_bilstm(x_tbd, kp["wih0"], kp["whh0"], kp["b0"])
    h = _ref_bilstm(h, kp["wih1"], kp["whh1"], kp["b1"])
    Hb = jnp.transpose(h, (1, 0, 2))                                  # (B, T, 2H)
    scores = jnp.einsum("btd,d->bt", Hb, kp["attw"][0])
    alpha = jax.nn.softmax(scores, axis=1)
    pooled = jnp.einsum("btd,bt->bd", Hb, alpha)
    a = jax.nn.relu(pooled)
    z1 = _dot(a, kp["w1"]) + kp["b1f"]
    out = _dot(z1, kp["w2"]) + kp["b2f"]
    return out[:, :num_classes]


# ---------------------------------------------------------------------------
# Deterministic parameter init (shapes mirror the PyTorch module, small sizes).
# ---------------------------------------------------------------------------
def init_params(key, in_dim, hid, fc1, ncls, cpad):
    k0, k1, ka, kf1, kf2 = jax.random.split(key, 5)

    def bilstm_layer(k, d_in):
        bound = hid ** -0.5
        ks = jax.random.split(k, 8)
        u = lambda kk, s: jax.random.uniform(kk, s, jnp.float32, -bound, bound)
        wih = jnp.concatenate([u(ks[0], (d_in, 4 * hid)),
                               u(ks[4], (d_in, 4 * hid))], axis=1)        # (Din, 8H)
        whh = jnp.concatenate([u(ks[1], (hid, 4 * hid)),
                               u(ks[5], (hid, 4 * hid))], axis=0)         # (2H, 4H) [fwd; bwd]
        b = jnp.concatenate([u(ks[2], (1, 4 * hid)) + u(ks[3], (1, 4 * hid)),
                             u(ks[6], (1, 4 * hid)) + u(ks[7], (1, 4 * hid))],
                            axis=1)                                       # (1, 8H), b_ih + b_hh
        return wih.astype(MATMUL_DTYPE), whh.astype(MATMUL_DTYPE), b

    wih0, whh0, b0 = bilstm_layer(k0, in_dim)
    wih1, whh1, b1 = bilstm_layer(k1, 2 * hid)

    f1b = (2 * hid) ** -0.5
    f2b = fc1 ** -0.5
    w1 = jax.random.uniform(jax.random.fold_in(kf1, 0), (2 * hid, fc1),
                            jnp.float32, -f1b, f1b)
    b1f = jax.random.uniform(jax.random.fold_in(kf1, 1), (1, fc1),
                             jnp.float32, -f1b, f1b)
    w2 = jax.random.uniform(jax.random.fold_in(kf2, 0), (fc1, ncls),
                            jnp.float32, -f2b, f2b)
    b2 = jax.random.uniform(jax.random.fold_in(kf2, 1), (1, ncls),
                            jnp.float32, -f2b, f2b)
    w2p = jnp.zeros((fc1, cpad), jnp.float32).at[:, :ncls].set(w2)
    b2p = jnp.zeros((1, cpad), jnp.float32).at[:, :ncls].set(b2)

    # Module inits self.w to zeros; small random values here so the softmax
    # path is actually exercised (forward semantics unchanged).
    attw = 0.1 * jax.random.normal(ka, (1, 2 * hid), jnp.float32)

    return dict(wih0=wih0, whh0=whh0, b0=b0,
                wih1=wih1, whh1=whh1, b1=b1,
                attw=attw,
                w1=w1.astype(MATMUL_DTYPE), b1f=b1f,
                w2=w2p.astype(MATMUL_DTYPE), b2f=b2p)


if __name__ == "__main__":
    B, T, IN = 2, 8, 64        # small stand-in for (1, 10, 1500)
    HID = 128                  # hidden_size (lane-dense; 100 in the reference config)
    F1 = 128                   # fc1 width
    NCLS = 10                  # num_classes
    C_PAD = 128                # fc2 output padded to a full lane group

    key = jax.random.PRNGKey(0)
    kx, kp_key = jax.random.split(key)
    params = init_params(kp_key, IN, HID, F1, NCLS, C_PAD)
    x = jax.random.normal(kx, (B, T, IN), jnp.float32)

    fwd = jax.jit(lambda xx: model_forward(xx, params, NCLS))
    out = jax.block_until_ready(fwd(x))
    ref = jax.block_until_ready(jax.jit(lambda xx: model_ref(xx, params, NCLS))(x))

    assert out.shape == (B, NCLS), out.shape
    np.testing.assert_allclose(np.asarray(out), np.asarray(ref),
                               rtol=2e-2, atol=2e-2)
    print("KERNEL_OK")
</pallas_src>

<mosaic_0001>
module attributes {stable_mosaic.version = 11 : i64} {
  func.func @_fused_bilstm_att_fc_kernel(%arg0: memref<16x64xf32, #tpu.memory_space<vmem>>, %arg1: memref<64x1024xbf16, #tpu.memory_space<vmem>>, %arg2: memref<256x512xbf16, #tpu.memory_space<vmem>>, %arg3: memref<1x1024xf32, #tpu.memory_space<vmem>>, %arg4: memref<256x1024xbf16, #tpu.memory_space<any>>, %arg5: memref<256x512xbf16, #tpu.memory_space<any>>, %arg6: memref<1x1024xf32, #tpu.memory_space<vmem>>, %arg7: memref<1x256xf32, #tpu.memory_space<vmem>>, %arg8: memref<2x16xf32, #tpu.memory_space<vmem>>, %arg9: memref<256x128xbf16, #tpu.memory_space<vmem>>, %arg10: memref<1x128xf32, #tpu.memory_space<vmem>>, %arg11: memref<128x128xbf16, #tpu.memory_space<vmem>>, %arg12: memref<1x128xf32, #tpu.memory_space<vmem>>, %arg13: memref<2x128xf32, #tpu.memory_space<vmem>>, %arg14: memref<32x512xf32, #tpu.memory_space<vmem>>, %arg15: memref<16x256xf32, #tpu.memory_space<vmem>>, %arg16: memref<256x1024xbf16, #tpu.memory_space<vmem>>, %arg17: memref<256x512xbf16, #tpu.memory_space<vmem>>, %arg18: memref<2x!tpu.dma_semaphore, #tpu.memory_space<semaphore_mem>>) attributes {dimension_semantics = [], scalar_prefetch = 0 : i64, scratch_operands = 5 : i64, tpu.core_type = #tpu.core_type<tc>} {
    %c0_i32 = arith.constant 0 : i32
    %0 = tpu.memref_slice %arg18[%c0_i32] : memref<2x!tpu.dma_semaphore, #tpu.memory_space<semaphore_mem>> -> memref<1x!tpu.dma_semaphore, #tpu.memory_space<semaphore_mem>>
    %1 = tpu.memref_squeeze %0 : memref<1x!tpu.dma_semaphore, #tpu.memory_space<semaphore_mem>> -> memref<!tpu.dma_semaphore, #tpu.memory_space<semaphore_mem>>
    tpu.enqueue_dma source(%arg4 : memref<256x1024xbf16, #tpu.memory_space<any>>) target(%arg16 : memref<256x1024xbf16, #tpu.memory_space<vmem>>) target_semaphore(%1 : memref<!tpu.dma_semaphore, #tpu.memory_space<semaphore_mem>>)
    %c1_i32 = arith.constant 1 : i32
    %2 = tpu.memref_slice %arg18[%c1_i32] : memref<2x!tpu.dma_semaphore, #tpu.memory_space<semaphore_mem>> -> memref<1x!tpu.dma_semaphore, #tpu.memory_space<semaphore_mem>>
    %3 = tpu.memref_squeeze %2 : memref<1x!tpu.dma_semaphore, #tpu.memory_space<semaphore_mem>> -> memref<!tpu.dma_semaphore, #tpu.memory_space<semaphore_mem>>
    tpu.enqueue_dma source(%arg5 : memref<256x512xbf16, #tpu.memory_space<any>>) target(%arg17 : memref<256x512xbf16, #tpu.memory_space<vmem>>) target_semaphore(%3 : memref<!tpu.dma_semaphore, #tpu.memory_space<semaphore_mem>>)
    %4 = tpu.iota {dimensions = array<i32: 0>} : vector<4x1xi32>
    %c2_i32 = arith.constant 2 : i32
    %5 = vector.broadcast %c2_i32 : i32 to vector<4x1xi32>
    %6 = arith.cmpi slt, %4, %5 : vector<4x1xi32>
    %7 = arith.extui %6 : vector<4x1xi1> to vector<4x1xi32>
    %8 = arith.sitofp %7 : vector<4x1xi32> to vector<4x1xf32>
    %cst = arith.constant 1.000000e+00 : f32
    %9 = vector.broadcast %cst : f32 to vector<4x1xf32>
    %10 = arith.subf %9, %8 : vector<4x1xf32>
    %c0 = arith.constant 0 : index
    %c0_0 = arith.constant 0 : index
    %11 = vector.load %arg0[%c0, %c0_0] : memref<16x64xf32, #tpu.memory_space<vmem>>, vector<16x64xf32>
    %c0_1 = arith.constant 0 : index
    %c0_2 = arith.constant 0 : index
    %12 = vector.load %arg1[%c0_1, %c0_2] : memref<64x1024xbf16, #tpu.memory_space<vmem>>, vector<64x1024xbf16>
    %13 = arith.truncf %11 : vector<16x64xf32> to vector<16x64xbf16>
    %cst_3 = arith.constant dense<0.000000e+00> : vector<16x1024xf32>
    %14 = tpu.matmul %13, %12, %cst_3 {dimension_numbers = #tpu.dot_dimension_numbers<[1], [0], [0], [1], [0, 0, 1, 1], [], []>} : vector<16x64xbf16>, vector<64x1024xbf16>, vector<16x1024xf32> -> vector<16x1024xf32>
    %c0_4 = arith.constant 0 : index
    %c0_5 = arith.constant 0 : index
    %15 = vector.load %arg3[%c0_4, %c0_5] : memref<1x1024xf32, #tpu.memory_space<vmem>>, vector<1x1024xf32>
    %16 = vector.broadcast %15 : vector<1x1024xf32> to vector<16x1024xf32>
    %17 = arith.addf %14, %16 : vector<16x1024xf32>
    %18 = vector.extract_strided_slice %17 {offsets = [0, 0], sizes = [2, 512], strides = [1, 1]} : vector<16x1024xf32> to vector<2x512xf32>
    %c0_6 = arith.constant 0 : index
    %c0_7 = arith.constant 0 : index
    %19 = vector.load %arg14[%c0_6, %c0_7] : memref<32x512xf32, #tpu.memory_space<vmem>>, vector<2x512xf32>
    tpu.vector_store %arg14[%c0_6, %c0_7], %18 {strides = array<i32>} : memref<32x512xf32, #tpu.memory_space<vmem>>, vector<2x512xf32>,
    %20 = vector.extract_strided_slice %17 {offsets = [14, 512], sizes = [2, 512], strides = [1, 1]} : vector<16x1024xf32> to vector<2x512xf32>
    %c2 = arith.constant 2 : index
    %c0_8 = arith.constant 0 : index
    %21 = vector.load %arg14[%c2, %c0_8] : memref<32x512xf32, #tpu.memory_space<vmem>>, vector<2x512xf32>
    tpu.vector_store %arg14[%c2, %c0_8], %20 {strides = array<i32>} : memref<32x512xf32, #tpu.memory_space<vmem>>, vector<2x512xf32>,
    %22 = vector.extract_strided_slice %17 {offsets = [2, 0], sizes = [2, 512], strides = [1, 1]} : vector<16x1024xf32> to vector<2x512xf32>
    %c4 = arith.constant 4 : index
    %c0_9 = arith.constant 0 : index
    %23 = vector.load %arg14[%c4, %c0_9] : memref<32x512xf32, #tpu.memory_space<vmem>>, vector<2x512xf32>
    tpu.vector_store %arg14[%c4, %c0_9], %22 {strides = array<i32>} : memref<32x512xf32, #tpu.memory_space<vmem>>, vector<2x512xf32>,
    %24 = vector.extract_strided_slice %17 {offsets = [12, 512], sizes = [2, 512], strides = [1, 1]} : vector<16x1024xf32> to vector<2x512xf32>
    %c6 = arith.constant 6 : index
    %c0_10 = arith.constant 0 : index
    %25 = vector.load %arg14[%c6, %c0_10] : memref<32x512xf32, #tpu.memory_space<vmem>>, vector<2x512xf32>
    tpu.vector_store %arg14[%c6, %c0_10], %24 {strides = array<i32>} : memref<32x512xf32, #tpu.memory_space<vmem>>, vector<2x512xf32>,
    %26 = vector.extract_strided_slice %17 {offsets = [4, 0], sizes = [2, 512], strides = [1, 1]} : vector<16x1024xf32> to vector<2x512xf32>
    %c8 = arith.constant 8 : index
    %c0_11 = arith.constant 0 : index
    %27 = vector.load %arg14[%c8, %c0_11] : memref<32x512xf32, #tpu.memory_space<vmem>>, vector<2x512xf32>
    tpu.vector_store %arg14[%c8, %c0_11], %26 {strides = array<i32>} : memref<32x512xf32, #tpu.memory_space<vmem>>, vector<2x512xf32>,
    %28 = vector.extract_strided_slice %17 {offsets = [10, 512], sizes = [2, 512], strides = [1, 1]} : vector<16x1024xf32> to vector<2x512xf32>
    %c10 = arith.constant 10 : index
    %c0_12 = arith.constant 0 : index
    %29 = vector.load %arg14[%c10, %c0_12] : memref<32x512xf32, #tpu.memory_space<vmem>>, vector<2x512xf32>
    tpu.vector_store %arg14[%c10, %c0_12], %28 {strides = array<i32>} : memref<32x512xf32, #tpu.memory_space<vmem>>, vector<2x512xf32>,
    %30 = vector.extract_strided_slice %17 {offsets = [6, 0], sizes = [2, 512], strides = [1, 1]} : vector<16x1024xf32> to vector<2x512xf32>
    %c12 = arith.constant 12 : index
    %c0_13 = arith.constant 0 : index
    %31 = vector.load %arg14[%c12, %c0_13] : memref<32x512xf32, #tpu.memory_space<vmem>>, vector<2x512xf32>
    tpu.vector_store %arg14[%c12, %c0_13], %30 {strides = array<i32>} : memref<32x512xf32, #tpu.memory_space<vmem>>, vector<2x512xf32>,
    %32 = vector.extract_strided_slice %17 {offsets = [8, 512], sizes = [2, 512], strides = [1, 1]} : vector<16x1024xf32> to vector<2x512xf32>
    %c14 = arith.constant 14 : index
    %c0_14 = arith.constant 0 : index
    %33 = vector.load %arg14[%c14, %c0_14] : memref<32x512xf32, #tpu.memory_space<vmem>>, vector<2x512xf32>
    tpu.vector_store %arg14[%c14, %c0_14], %32 {strides = array<i32>} : memref<32x512xf32, #tpu.memory_space<vmem>>, vector<2x512xf32>,
    %34 = vector.extract_strided_slice %17 {offsets = [8, 0], sizes = [2, 512], strides = [1, 1]} : vector<16x1024xf32> to vector<2x512xf32>
    %c16 = arith.constant 16 : index
    %c0_15 = arith.constant 0 : index
    %35 = vector.load %arg14[%c16, %c0_15] : memref<32x512xf32, #tpu.memory_space<vmem>>, vector<2x512xf32>
    tpu.vector_store %arg14[%c16, %c0_15], %34 {strides = array<i32>} : memref<32x512xf32, #tpu.memory_space<vmem>>, vector<2x512xf32>,
    %36 = vector.extract_strided_slice %17 {offsets = [6, 512], sizes = [2, 512], strides = [1, 1]} : vector<16x1024xf32> to vector<2x512xf32>
    %c18 = arith.constant 18 : index
    %c0_16 = arith.constant 0 : index
    %37 = vector.load %arg14[%c18, %c0_16] : memref<32x512xf32, #tpu.memory_space<vmem>>, vector<2x512xf32>
    tpu.vector_store %arg14[%c18, %c0_16], %36 {strides = array<i32>} : memref<32x512xf32, #tpu.memory_space<vmem>>, vector<2x512xf32>,
    %38 = vector.extract_strided_slice %17 {offsets = [10, 0], sizes = [2, 512], strides = [1, 1]} : vector<16x1024xf32> to vector<2x512xf32>
    %c20 = arith.constant 20 : index
    %c0_17 = arith.constant 0 : index
    %39 = vector.load %arg14[%c20, %c0_17] : memref<32x512xf32, #tpu.memory_space<vmem>>, vector<2x512xf32>
    tpu.vector_store %arg14[%c20, %c0_17], %38 {strides = array<i32>} : memref<32x512xf32, #tpu.memory_space<vmem>>, vector<2x512xf32>,
    %40 = vector.extract_strided_slice %17 {offsets = [4, 512], sizes = [2, 512], strides = [1, 1]} : vector<16x1024xf32> to vector<2x512xf32>
    %c22 = arith.constant 22 : index
    %c0_18 = arith.constant 0 : index
    %41 = vector.load %arg14[%c22, %c0_18] : memref<32x512xf32, #tpu.memory_space<vmem>>, vector<2x512xf32>
    tpu.vector_store %arg14[%c22, %c0_18], %40 {strides = array<i32>} : memref<32x512xf32, #tpu.memory_space<vmem>>, vector<2x512xf32>,
    %42 = vector.extract_strided_slice %17 {offsets = [12, 0], sizes = [2, 512], strides = [1, 1]} : vector<16x1024xf32> to vector<2x512xf32>
    %c24 = arith.constant 24 : index
    %c0_19 = arith.constant 0 : index
    %43 = vector.load %arg14[%c24, %c0_19] : memref<32x512xf32, #tpu.memory_space<vmem>>, vector<2x512xf32>
    tpu.vector_store %arg14[%c24, %c0_19], %42 {strides = array<i32>} : memref<32x512xf32, #tpu.memory_space<vmem>>, vector<2x512xf32>,
    %44 = vector.extract_strided_slice %17 {offsets = [2, 512], sizes = [2, 512], strides = [1, 1]} : vector<16x1024xf32> to vector<2x512xf32>
    %c26 = arith.constant 26 : index
    %c0_20 = arith.constant 0 : index
    %45 = vector.load %arg14[%c26, %c0_20] : memref<32x512xf32, #tpu.memory_space<vmem>>, vector<2x512xf32>
    tpu.vector_store %arg14[%c26, %c0_20], %44 {strides = array<i32>} : memref<32x512xf32, #tpu.memory_space<vmem>>, vector<2x512xf32>,
    %46 = vector.extract_strided_slice %17 {offsets = [14, 0], sizes = [2, 512], strides = [1, 1]} : vector<16x1024xf32> to vector<2x512xf32>
    %c28 = arith.constant 28 : index
    %c0_21 = arith.constant 0 : index
    %47 = vector.load %arg14[%c28, %c0_21] : memref<32x512xf32, #tpu.memory_space<vmem>>, vector<2x512xf32>
    tpu.vector_store %arg14[%c28, %c0_21], %46 {strides = array<i32>} : memref<32x512xf32, #tpu.memory_space<vmem>>, vector<2x512xf32>,
    %48 = vector.extract_strided_slice %17 {offsets = [0, 512], sizes = [2, 512], strides = [1, 1]} : vector<16x1024xf32> to vector<2x512xf32>
    %c30 = arith.constant 30 : index
    %c0_22 = arith.constant 0 : index
    %49 = vector.load %arg14[%c30, %c0_22] : memref<32x512xf32, #tpu.memory_space<vmem>>, vector<2x512xf32>
    tpu.vector_store %arg14[%c30, %c0_22], %48 {strides = array<i32>} : memref<32x512xf32, #tpu.memory_space<vmem>>, vector<2x512xf32>,
    %c0_23 = arith.constant 0 : index
    %c0_24 = arith.constant 0 : index
    %50 = vector.load %arg2[%c0_23, %c0_24] : memref<256x512xbf16, #tpu.memory_space<vmem>>, vector<256x512xbf16>
    %cst_25 = arith.constant 0.000000e+00 : f32
    %51 = vector.broadcast %cst_25 : f32 to vector<4x128xf32>
    %cst_26 = arith.constant 0.000000e+00 : f32
    %52 = vector.broadcast %cst_26 : f32 to vector<4x128xf32>
    %53 = vector.broadcast %8 : vector<4x1xf32> to vector<4x128xf32>
    %54 = arith.mulf %51, %53 : vector<4x128xf32>
    %55 = vector.broadcast %10 : vector<4x1xf32> to vector<4x128xf32>
    %56 = arith.mulf %51, %55 : vector<4x128xf32>
    %57 = tpu.concatenate %54, %56 in 1 : vector<4x128xf32>, vector<4x128xf32> -> vector<4x256xf32>
    %c0_27 = arith.constant 0 : index
    %c0_28 = arith.constant 0 : index
    %58 = vector.load %arg14[%c0_27, %c0_28] : memref<32x512xf32, #tpu.memory_space<vmem>>, vector<4x512xf32>
    %59 = arith.truncf %57 : vector<4x256xf32> to vector<4x256xbf16>
    %cst_29 = arith.constant dense<0.000000e+00> : vector<4x512xf32>
    %60 = tpu.matmul %59, %50, %cst_29 {dimension_numbers = #tpu.dot_dimension_numbers<[1], [0], [0], [1], [0, 0, 1, 1], [], []>} : vector<4x256xbf16>, vector<256x512xbf16>, vector<4x512xf32> -> vector<4x512xf32>
    %61 = arith.addf %58, %60 : vector<4x512xf32>
    %62 = vector.extract_strided_slice %61 {offsets = [0, 0], sizes = [4, 128], strides = [1, 1]} : vector<4x512xf32> to vector<4x128xf32>
    %cst_30 = arith.constant 5.000000e-01 : f32
    %63 = vector.broadcast %cst_30 : f32 to vector<4x128xf32>
    %64 = arith.mulf %63, %62 : vector<4x128xf32>
    %65 = math.tanh %64 : vector<4x128xf32>
    %cst_31 = arith.constant 5.000000e-01 : f32
    %66 = vector.broadcast %cst_31 : f32 to vector<4x128xf32>
    %67 = arith.mulf %66, %65 : vector<4x128xf32>
    %cst_32 = arith.constant 5.000000e-01 : f32
    %68 = vector.broadcast %cst_32 : f32 to vector<4x128xf32>
    %69 = arith.addf %67, %68 : vector<4x128xf32>
    %70 = vector.extract_strided_slice %61 {offsets = [0, 128], sizes = [4, 128], strides = [1, 1]} : vector<4x512xf32> to vector<4x128xf32>
    %cst_33 = arith.constant 5.000000e-01 : f32
    %71 = vector.broadcast %cst_33 : f32 to vector<4x128xf32>
    %72 = arith.mulf %71, %70 : vector<4x128xf32>
    %73 = math.tanh %72 : vector<4x128xf32>
    %cst_34 = arith.constant 5.000000e-01 : f32
    %74 = vector.broadcast %cst_34 : f32 to vector<4x128xf32>
    %75 = arith.mulf %74, %73 : vector<4x128xf32>
    %cst_35 = arith.constant 5.000000e-01 : f32
    %76 = vector.broadcast %cst_35 : f32 to vector<4x128xf32>
    %77 = arith.addf %75, %76 : vector<4x128xf32>
    %78 = vector.extract_strided_slice %61 {offsets = [0, 256], sizes = [4, 128], strides = [1, 1]} : vector<4x512xf32> to vector<4x128xf32>
    %79 = math.tanh %78 : vector<4x128xf32>
    %80 = vector.extract_strided_slice %61 {offsets = [0, 384], sizes = [4, 128], strides = [1, 1]} : vector<4x512xf32> to vector<4x128xf32>
    %cst_36 = arith.constant 5.000000e-01 : f32
    %81 = vector.broadcast %cst_36 : f32 to vector<4x128xf32>
    %82 = arith.mulf %81, %80 : vector<4x128xf32>
    %83 = math.tanh %82 : vector<4x128xf32>
    %cst_37 = arith.constant 5.000000e-01 : f32
    %84 = vector.broadcast %cst_37 : f32 to vector<4x128xf32>
    %85 = arith.mulf %84, %83 : vector<4x128xf32>
    %cst_38 = arith.constant 5.000000e-01 : f32
    %86 = vector.broadcast %cst_38 : f32 to vector<4x128xf32>
    %87 = arith.addf %85, %86 : vector<4x128xf32>
    %88 = arith.mulf %77, %52 : vector<4x128xf32>
    %89 = arith.mulf %69, %79 : vector<4x128xf32>
    %90 = arith.addf %88, %89 : vector<4x128xf32>
    %91 = math.tanh %90 : vector<4x128xf32>
    %92 = arith.mulf %87, %91 : vector<4x128xf32>
    %93 = vector.extract_strided_slice %92 {offsets = [0, 0], sizes = [2, 128], strides = [1, 1]} : vector<4x128xf32> to vector<2x128xf32>
    %c0_39 = arith.constant 0 : index
    %c0_40 = arith.constant 0 : index
    %94 = vector.load %arg15[%c0_39, %c0_40] : memref<16x256xf32, #tpu.memory_space<vmem>>, vector<2x128xf32>
    tpu.vector_store %arg15[%c0_39, %c0_40], %93 {strides = array<i32>} : memref<16x256xf32, #tpu.memory_space<vmem>>, vector<2x128xf32>,
    %95 = vector.extract_strided_slice %92 {offsets = [2, 0], sizes = [2, 128], strides = [1, 1]} : vector<4x128xf32> to vector<2x128xf32>
    %c14_41 = arith.constant 14 : index
    %c128 = arith.constant 128 : index
    %96 = vector.load %arg15[%c14_41, %c128] : memref<16x256xf32, #tpu.memory_space<vmem>>, vector<2x128xf32>
    tpu.vector_store %arg15[%c14_41, %c128], %95 {strides = array<i32>} : memref<16x256xf32, #tpu.memory_space<vmem>>, vector<2x128xf32>,
    %97 = vector.broadcast %8 : vector<4x1xf32> to vector<4x128xf32>
    %98 = arith.mulf %92, %97 : vector<4x128xf32>
    %99 = vector.broadcast %10 : vector<4x1xf32> to vector<4x128xf32>
    %100 = arith.mulf %92, %99 : vector<4x128xf32>
    %101 = tpu.concatenate %98, %100 in 1 : vector<4x128xf32>, vector<4x128xf32> -> vector<4x256xf32>
    %c4_42 = arith.constant 4 : index
    %c0_43 = arith.constant 0 : index
    %102 = vector.load %arg14[%c4_42, %c0_43] : memref<32x512xf32, #tpu.memory_space<vmem>>, vector<4x512xf32>
    %103 = arith.truncf %101 : vector<4x256xf32> to vector<4x256xbf16>
    %cst_44 = arith.constant dense<0.000000e+00> : vector<4x512xf32>
    %104 = tpu.matmul %103, %50, %cst_44 {dimension_numbers = #tpu.dot_dimension_numbers<[1], [0], [0], [1], [0, 0, 1, 1], [], []>} : vector<4x256xbf16>, vector<256x512xbf16>, vector<4x512xf32> -> vector<4x512xf32>
    %105 = arith.addf %102, %104 : vector<4x512xf32>
    %106 = vector.extract_strided_slice %105 {offsets = [0, 0], sizes = [4, 128], strides = [1, 1]} : vector<4x512xf32> to vector<4x128xf32>
    %cst_45 = arith.constant 5.000000e-01 : f32
    %107 = vector.broadcast %cst_45 : f32 to vector<4x128xf32>
    %108 = arith.mulf %107, %106 : vector<4x128xf32>
    %109 = math.tanh %108 : vector<4x128xf32>
    %cst_46 = arith.constant 5.000000e-01 : f32
    %110 = vector.broadcast %cst_46 : f32 to vector<4x128xf32>
    %111 = arith.mulf %110, %109 : vector<4x128xf32>
    %cst_47 = arith.constant 5.000000e-01 : f32
    %112 = vector.broadcast %cst_47 : f32 to vector<4x128xf32>
    %113 = arith.addf %111, %112 : vector<4x128xf32>
    %114 = vector.extract_strided_slice %105 {offsets = [0, 128], sizes = [4, 128], strides = [1, 1]} : vector<4x512xf32> to vector<4x128xf32>
    %cst_48 = arith.constant 5.000000e-01 : f32
    %115 = vector.broadcast %cst_48 : f32 to vector<4x128xf32>
    %116 = arith.mulf %115, %114 : vector<4x128xf32>
    %117 = math.tanh %116 : vector<4x128xf32>
    %cst_49 = arith.constant 5.000000e-01 : f32
    %118 = vector.broadcast %cst_49 : f32 to vector<4x128xf32>
    %119 = arith.mulf %118, %117 : vector<4x128xf32>
    %cst_50 = arith.constant 5.000000e-01 : f32
    %120 = vector.broadcast %cst_50 : f32 to vector<4x128xf32>
    %121 = arith.addf %119, %120 : vector<4x128xf32>
    %122 = vector.extract_strided_slice %105 {offsets = [0, 256], sizes = [4, 128], strides = [1, 1]} : vector<4x512xf32> to vector<4x128xf32>
    %123 = math.tanh %122 : vector<4x128xf32>
    %124 = vector.extract_strided_slice %105 {offsets = [0, 384], sizes = [4, 128], strides = [1, 1]} : vector<4x512xf32> to vector<4x128xf32>
    %cst_51 = arith.constant 5.000000e-01 : f32
    %125 = vector.broadcast %cst_51 : f32 to vector<4x128xf32>
    %126 = arith.mulf %125, %124 : vector<4x128xf32>
    %127 = math.tanh %126 : vector<4x128xf32>
    %cst_52 = arith.constant 5.000000e-01 : f32
    %128 = vector.broadcast %cst_52 : f32 to vector<4x128xf32>
    %129 = arith.mulf %128, %127 : vector<4x128xf32>
    %cst_53 = arith.constant 5.000000e-01 : f32
    %130 = vector.broadcast %cst_53 : f32 to vector<4x128xf32>
    %131 = arith.addf %129, %130 : vector<4x128xf32>
    %132 = arith.mulf %121, %90 : vector<4x128xf32>
    %133 = arith.mulf %113, %123 : vector<4x128xf32>
    %134 = arith.addf %132, %133 : vector<4x128xf32>
    %135 = math.tanh %134 : vector<4x128xf32>
    %136 = arith.mulf %131, %135 : vector<4x128xf32>
    %137 = vector.extract_strided_slice %136 {offsets = [0, 0], sizes = [2, 128], strides = [1, 1]} : vector<4x128xf32> to vector<2x128xf32>
    %c2_54 = arith.constant 2 : index
    %c0_55 = arith.constant 0 : index
    %138 = vector.load %arg15[%c2_54, %c0_55] : memref<16x256xf32, #tpu.memory_space<vmem>>, vector<2x128xf32>
    tpu.vector_store %arg15[%c2_54, %c0_55], %137 {strides = array<i32>} : memref<16x256xf32, #tpu.memory_space<vmem>>, vector<2x128xf32>,
    %139 = vector.extract_strided_slice %136 {offsets = [2, 0], sizes = [2, 128], strides = [1, 1]} : vector<4x128xf32> to vector<2x128xf32>
    %c12_56 = arith.constant 12 : index
    %c128_57 = arith.constant 128 : index
    %140 = vector.load %arg15[%c12_56, %c128_57] : memref<16x256xf32, #tpu.memory_space<vmem>>, vector<2x128xf32>
    tpu.vector_store %arg15[%c12_56, %c128_57], %139 {strides = array<i32>} : memref<16x256xf32, #tpu.memory_space<vmem>>, vector<2x128xf32>,
    %141 = vector.broadcast %8 : vector<4x1xf32> to vector<4x128xf32>
    %142 = arith.mulf %136, %141 : vector<4x128xf32>
    %143 = vector.broadcast %10 : vector<4x1xf32> to vector<4x128xf32>
    %144 = arith.mulf %136, %143 : vector<4x128xf32>
    %145 = tpu.concatenate %142, %144 in 1 : vector<4x128xf32>, vector<4x128xf32> -> vector<4x256xf32>
    %c8_58 = arith.constant 8 : index
    %c0_59 = arith.constant 0 : index
    %146 = vector.load %arg14[%c8_58, %c0_59] : memref<32x512xf32, #tpu.memory_space<vmem>>, vector<4x512xf32>
    %147 = arith.truncf %145 : vector<4x256xf32> to vector<4x256xbf16>
    %cst_60 = arith.constant dense<0.000000e+00> : vector<4x512xf32>
    %148 = tpu.matmul %147, %50, %cst_60 {dimension_numbers = #tpu.dot_dimension_numbers<[1], [0], [0], [1], [0, 0, 1, 1], [], []>} : vector<4x256xbf16>, vector<256x512xbf16>, vector<4x512xf32> -> vector<4x512xf32>
    %149 = arith.addf %146, %148 : vector<4x512xf32>
    %150 = vector.extract_strided_slice %149 {offsets = [0, 0], sizes = [4, 128], strides = [1, 1]} : vector<4x512xf32> to vector<4x128xf32>
    %cst_61 = arith.constant 5.000000e-01 : f32
    %151 = vector.broadcast %cst_61 : f32 to vector<4x128xf32>
    %152 = arith.mulf %151, %150 : vector<4x128xf32>
    %153 = math.tanh %152 : vector<4x128xf32>
    %cst_62 = arith.constant 5.000000e-01 : f32
    %154 = vector.broadcast %cst_62 : f32 to vector<4x128xf32>
    %155 = arith.mulf %154, %153 : vector<4x128xf32>
    %cst_63 = arith.constant 5.000000e-01 : f32
    %156 = vector.broadcast %cst_63 : f32 to vector<4x128xf32>
    %157 = arith.addf %155, %156 : vector<4x128xf32>
    %158 = vector.extract_strided_slice %149 {offsets = [0, 128], sizes = [4, 128], strides = [1, 1]} : vector<4x512xf32> to vector<4x128xf32>
    %cst_64 = arith.constant 5.000000e-01 : f32
    %159 = vector.broadcast %cst_64 : f32 to vector<4x128xf32>
    %160 = arith.mulf %159, %158 : vector<4x128xf32>
    %161 = math.tanh %160 : vector<4x128xf32>
    %cst_65 = arith.constant 5.000000e-01 : f32
    %162 = vector.broadcast %cst_65 : f32 to vector<4x128xf32>
    %163 = arith.mulf %162, %161 : vector<4x128xf32>
    %cst_66 = arith.constant 5.000000e-01 : f32
    %164 = vector.broadcast %cst_66 : f32 to vector<4x128xf32>
    %165 = arith.addf %163, %164 : vector<4x128xf32>
    %166 = vector.extract_strided_slice %149 {offsets = [0, 256], sizes = [4, 128], strides = [1, 1]} : vector<4x512xf32> to vector<4x128xf32>
    %167 = math.tanh %166 : vector<4x128xf32>
    %168 = vector.extract_strided_slice %149 {offsets = [0, 384], sizes = [4, 128], strides = [1, 1]} : vector<4x512xf32> to vector<4x128xf32>
    %cst_67 = arith.constant 5.000000e-01 : f32
    %169 = vector.broadcast %cst_67 : f32 to vector<4x128xf32>
    %170 = arith.mulf %169, %168 : vector<4x128xf32>
    %171 = math.tanh %170 : vector<4x128xf32>
    %cst_68 = arith.constant 5.000000e-01 : f32
    %172 = vector.broadcast %cst_68 : f32 to vector<4x128xf32>
    %173 = arith.mulf %172, %171 : vector<4x128xf32>
    %cst_69 = arith.constant 5.000000e-01 : f32
    %174 = vector.broadcast %cst_69 : f32 to vector<4x128xf32>
    %175 = arith.addf %173, %174 : vector<4x128xf32>
    %176 = arith.mulf %165, %134 : vector<4x128xf32>
    %177 = arith.mulf %157, %167 : vector<4x128xf32>
    %178 = arith.addf %176, %177 : vector<4x128xf32>
    %179 = math.tanh %178 : vector<4x128xf32>
    %180 = arith.mulf %175, %179 : vector<4x128xf32>
    %181 = vector.extract_strided_slice %180 {offsets = [0, 0], sizes = [2, 128], strides = [1, 1]} : vector<4x128xf32> to vector<2x128xf32>
    %c4_70 = arith.constant 4 : index
    %c0_71 = arith.constant 0 : index
    %182 = vector.load %arg15[%c4_70, %c0_71] : memref<16x256xf32, #tpu.memory_space<vmem>>, vector<2x128xf32>
    tpu.vector_store %arg15[%c4_70, %c0_71], %181 {strides = array<i32>} : memref<16x256xf32, #tpu.memory_space<vmem>>, vector<2x128xf32>,
    %183 = vector.extract_strided_slice %180 {offsets = [2, 0], sizes = [2, 128], strides = [1, 1]} : vector<4x128xf32> to vector<2x128xf32>
    %c10_72 = arith.constant 10 : index
    %c128_73 = arith.constant 128 : index
    %184 = vector.load %arg15[%c10_72, %c128_73] : memref<16x256xf32, #tpu.memory_space<vmem>>, vector<2x128xf32>
    tpu.vector_store %arg15[%c10_72, %c128_73], %183 {strides = array<i32>} : memref<16x256xf32, #tpu.memory_space<vmem>>, vector<2x128xf32>,
    %185 = vector.broadcast %8 : vector<4x1xf32> to vector<4x128xf32>
    %186 = arith.mulf %180, %185 : vector<4x128xf32>
    %187 = vector.broadcast %10 : vector<4x1xf32> to vector<4x128xf32>
    %188 = arith.mulf %180, %187 : vector<4x128xf32>
    %189 = tpu.concatenate %186, %188 in 1 : vector<4x128xf32>, vector<4x128xf32> -> vector<4x256xf32>
    %c12_74 = arith.constant 12 : index
    %c0_75 = arith.constant 0 : index
    %190 = vector.load %arg14[%c12_74, %c0_75] : memref<32x512xf32, #tpu.memory_space<vmem>>, vector<4x512xf32>
    %191 = arith.truncf %189 : vector<4x256xf32> to vector<4x256xbf16>
    %cst_76 = arith.constant dense<0.000000e+00> : vector<4x512xf32>
    %192 = tpu.matmul %191, %50, %cst_76 {dimension_numbers = #tpu.dot_dimension_numbers<[1], [0], [0], [1], [0, 0, 1, 1], [], []>} : vector<4x256xbf16>, vector<256x512xbf16>, vector<4x512xf32> -> vector<4x512xf32>
    %193 = arith.addf %190, %192 : vector<4x512xf32>
    %194 = vector.extract_strided_slice %193 {offsets = [0, 0], sizes = [4, 128], strides = [1, 1]} : vector<4x512xf32> to vector<4x128xf32>
    %cst_77 = arith.constant 5.000000e-01 : f32
    %195 = vector.broadcast %cst_77 : f32 to vector<4x128xf32>
    %196 = arith.mulf %195, %194 : vector<4x128xf32>
    %197 = math.tanh %196 : vector<4x128xf32>
    %cst_78 = arith.constant 5.000000e-01 : f32
    %198 = vector.broadcast %cst_78 : f32 to vector<4x128xf32>
    %199 = arith.mulf %198, %197 : vector<4x128xf32>
    %cst_79 = arith.constant 5.000000e-01 : f32
    %200 = vector.broadcast %cst_79 : f32 to vector<4x128xf32>
    %201 = arith.addf %199, %200 : vector<4x128xf32>
    %202 = vector.extract_strided_slice %193 {offsets = [0, 128], sizes = [4, 128], strides = [1, 1]} : vector<4x512xf32> to vector<4x128xf32>
    %cst_80 = arith.constant 5.000000e-01 : f32
    %203 = vector.broadcast %cst_80 : f32 to vector<4x128xf32>
    %204 = arith.mulf %203, %202 : vector<4x128xf32>
    %205 = math.tanh %204 : vector<4x128xf32>
    %cst_81 = arith.constant 5.000000e-01 : f32
    %206 = vector.broadcast %cst_81 : f32 to vector<4x128xf32>
    %207 = arith.mulf %206, %205 : vector<4x128xf32>
    %cst_82 = arith.constant 5.000000e-01 : f32
    %208 = vector.broadcast %cst_82 : f32 to vector<4x128xf32>
    %209 = arith.addf %207, %208 : vector<4x128xf32>
    %210 = vector.extract_strided_slice %193 {offsets = [0, 256], sizes = [4, 128], strides = [1, 1]} : vector<4x512xf32> to vector<4x128xf32>
    %211 = math.tanh %210 : vector<4x128xf32>
    %212 = vector.extract_strided_slice %193 {offsets = [0, 384], sizes = [4, 128], strides = [1, 1]} : vector<4x512xf32> to vector<4x128xf32>
    %cst_83 = arith.constant 5.000000e-01 : f32
    %213 = vector.broadcast %cst_83 : f32 to vector<4x128xf32>
    %214 = arith.mulf %213, %212 : vector<4x128xf32>
    %215 = math.tanh %214 : vector<4x128xf32>
    %cst_84 = arith.constant 5.000000e-01 : f32
    %216 = vector.broadcast %cst_84 : f32 to vector<4x128xf32>
    %217 = arith.mulf %216, %215 : vector<4x128xf32>
    %cst_85 = arith.constant 5.000000e-01 : f32
    %218 = vector.broadcast %cst_85 : f32 to vector<4x128xf32>
    %219 = arith.addf %217, %218 : vector<4x128xf32>
    %220 = arith.mulf %209, %178 : vector<4x128xf32>
    %221 = arith.mulf %201, %211 : vector<4x128xf32>
    %222 = arith.addf %220, %221 : vector<4x128xf32>
    %223 = math.tanh %222 : vector<4x128xf32>
    %224 = arith.mulf %219, %223 : vector<4x128xf32>
    %225 = vector.extract_strided_slice %224 {offsets = [0, 0], sizes = [2, 128], strides = [1, 1]} : vector<4x128xf32> to vector<2x128xf32>
    %c6_86 = arith.constant 6 : index
    %c0_87 = arith.constant 0 : index
    %226 = vector.load %arg15[%c6_86, %c0_87] : memref<16x256xf32, #tpu.memory_space<vmem>>, vector<2x128xf32>
    tpu.vector_store %arg15[%c6_86, %c0_87], %225 {strides = array<i32>} : memref<16x256xf32, #tpu.memory_space<vmem>>, vector<2x128xf32>,
    %227 = vector.extract_strided_slice %224 {offsets = [2, 0], sizes = [2, 128], strides = [1, 1]} : vector<4x128xf32> to vector<2x128xf32>
    %c8_88 = arith.constant 8 : index
    %c128_89 = arith.constant 128 : index
    %228 = vector.load %arg15[%c8_88, %c128_89] : memref<16x256xf32, #tpu.memory_space<vmem>>, vector<2x128xf32>
    tpu.vector_store %arg15[%c8_88, %c128_89], %227 {strides = array<i32>} : memref<16x256xf32, #tpu.memory_space<vmem>>, vector<2x128xf32>,
    %229 = vector.broadcast %8 : vector<4x1xf32> to vector<4x128xf32>
    %230 = arith.mulf %224, %229 : vector<4x128xf32>
    %231 = vector.broadcast %10 : vector<4x1xf32> to vector<4x128xf32>
    %232 = arith.mulf %224, %231 : vector<4x128xf32>
    %233 = tpu.concatenate %230, %232 in 1 : vector<4x128xf32>, vector<4x128xf32> -> vector<4x256xf32>
    %c16_90 = arith.constant 16 : index
    %c0_91 = arith.constant 0 : index
    %234 = vector.load %arg14[%c16_90, %c0_91] : memref<32x512xf32, #tpu.memory_space<vmem>>, vector<4x512xf32>
    %235 = arith.truncf %233 : vector<4x256xf32> to vector<4x256xbf16>
    %cst_92 = arith.constant dense<0.000000e+00> : vector<4x512xf32>
    %236 = tpu.matmul %235, %50, %cst_92 {dimension_numbers = #tpu.dot_dimension_numbers<[1], [0], [0], [1], [0, 0, 1, 1], [], []>} : vector<4x256xbf16>, vector<256x512xbf16>, vector<4x512xf32> -> vector<4x512xf32>
    %237 = arith.addf %234, %236 : vector<4x512xf32>
    %238 = vector.extract_strided_slice %237 {offsets = [0, 0], sizes = [4, 128], strides = [1, 1]} : vector<4x512xf32> to vector<4x128xf32>
    %cst_93 = arith.constant 5.000000e-01 : f32
    %239 = vector.broadcast %cst_93 : f32 to vector<4x128xf32>
    %240 = arith.mulf %239, %238 : vector<4x128xf32>
    %241 = math.tanh %240 : vector<4x128xf32>
    %cst_94 = arith.constant 5.000000e-01 : f32
    %242 = vector.broadcast %cst_94 : f32 to vector<4x128xf32>
    %243 = arith.mulf %242, %241 : vector<4x128xf32>
    %cst_95 = arith.constant 5.000000e-01 : f32
    %244 = vector.broadcast %cst_95 : f32 to vector<4x128xf32>
    %245 = arith.addf %243, %244 : vector<4x128xf32>
    %246 = vector.extract_strided_slice %237 {offsets = [0, 128], sizes = [4, 128], strides = [1, 1]} : vector<4x512xf32> to vector<4x128xf32>
    %cst_96 = arith.constant 5.000000e-01 : f32
    %247 = vector.broadcast %cst_96 : f32 to vector<4x128xf32>
    %248 = arith.mulf %247, %246 : vector<4x128xf32>
    %249 = math.tanh %248 : vector<4x128xf32>
    %cst_97 = arith.constant 5.000000e-01 : f32
    %250 = vector.broadcast %cst_97 : f32 to vector<4x128xf32>
    %251 = arith.mulf %250, %249 : vector<4x128xf32>
    %cst_98 = arith.constant 5.000000e-01 : f32
    %252 = vector.broadcast %cst_98 : f32 to vector<4x128xf32>
    %253 = arith.addf %251, %252 : vector<4x128xf32>
    %254 = vector.extract_strided_slice %237 {offsets = [0, 256], sizes = [4, 128], strides = [1, 1]} : vector<4x512xf32> to vector<4x128xf32>
    %255 = math.tanh %254 : vector<4x128xf32>
    %256 = vector.extract_strided_slice %237 {offsets = [0, 384], sizes = [4, 128], strides = [1, 1]} : vector<4x512xf32> to vector<4x128xf32>
    %cst_99 = arith.constant 5.000000e-01 : f32
    %257 = vector.broadcast %cst_99 : f32 to vector<4x128xf32>
    %258 = arith.mulf %257, %256 : vector<4x128xf32>
    %259 = math.tanh %258 : vector<4x128xf32>
    %cst_100 = arith.constant 5.000000e-01 : f32
    %260 = vector.broadcast %cst_100 : f32 to vector<4x128xf32>
    %261 = arith.mulf %260, %259 : vector<4x128xf32>
    %cst_101 = arith.constant 5.000000e-01 : f32
    %262 = vector.broadcast %cst_101 : f32 to vector<4x128xf32>
    %263 = arith.addf %261, %262 : vector<4x128xf32>
    %264 = arith.mulf %253, %222 : vector<4x128xf32>
    %265 = arith.mulf %245, %255 : vector<4x128xf32>
    %266 = arith.addf %264, %265 : vector<4x128xf32>
    %267 = math.tanh %266 : vector<4x128xf32>
    %268 = arith.mulf %263, %267 : vector<4x128xf32>
    %269 = vector.extract_strided_slice %268 {offsets = [0, 0], sizes = [2, 128], strides = [1, 1]} : vector<4x128xf32> to vector<2x128xf32>
    %c8_102 = arith.constant 8 : index
    %c0_103 = arith.constant 0 : index
    %270 = vector.load %arg15[%c8_102, %c0_103] : memref<16x256xf32, #tpu.memory_space<vmem>>, vector<2x128xf32>
    tpu.vector_store %arg15[%c8_102, %c0_103], %269 {strides = array<i32>} : memref<16x256xf32, #tpu.memory_space<vmem>>, vector<2x128xf32>,
    %271 = vector.extract_strided_slice %268 {offsets = [2, 0], sizes = [2, 128], strides = [1, 1]} : vector<4x128xf32> to vector<2x128xf32>
    %c6_104 = arith.constant 6 : index
    %c128_105 = arith.constant 128 : index
    %272 = vector.load %arg15[%c6_104, %c128_105] : memref<16x256xf32, #tpu.memory_space<vmem>>, vector<2x128xf32>
    tpu.vector_store %arg15[%c6_104, %c128_105], %271 {strides = array<i32>} : memref<16x256xf32, #tpu.memory_space<vmem>>, vector<2x128xf32>,
    %273 = vector.broadcast %8 : vector<4x1xf32> to vector<4x128xf32>
    %274 = arith.mulf %268, %273 : vector<4x128xf32>
    %275 = vector.broadcast %10 : vector<4x1xf32> to vector<4x128xf32>
    %276 = arith.mulf %268, %275 : vector<4x128xf32>
    %277 = tpu.concatenate %274, %276 in 1 : vector<4x128xf32>, vector<4x128xf32> -> vector<4x256xf32>
    %c20_106 = arith.constant 20 : index
    %c0_107 = arith.constant 0 : index
    %278 = vector.load %arg14[%c20_106, %c0_107] : memref<32x512xf32, #tpu.memory_space<vmem>>, vector<4x512xf32>
    %279 = arith.truncf %277 : vector<4x256xf32> to vector<4x256xbf16>
    %cst_108 = arith.constant dense<0.000000e+00> : vector<4x512xf32>
    %280 = tpu.matmul %279, %50, %cst_108 {dimension_numbers = #tpu.dot_dimension_numbers<[1], [0], [0], [1], [0, 0, 1, 1], [], []>} : vector<4x256xbf16>, vector<256x512xbf16>, vector<4x512xf32> -> vector<4x512xf32>
    %281 = arith.addf %278, %280 : vector<4x512xf32>
    %282 = vector.extract_strided_slice %281 {offsets = [0, 0], sizes = [4, 128], strides = [1, 1]} : vector<4x512xf32> to vector<4x128xf32>
    %cst_109 = arith.constant 5.000000e-01 : f32
    %283 = vector.broadcast %cst_109 : f32 to vector<4x128xf32>
    %284 = arith.mulf %283, %282 : vector<4x128xf32>
    %285 = math.tanh %284 : vector<4x128xf32>
    %cst_110 = arith.constant 5.000000e-01 : f32
    %286 = vector.broadcast %cst_110 : f32 to vector<4x128xf32>
    %287 = arith.mulf %286, %285 : vector<4x128xf32>
    %cst_111 = arith.constant 5.000000e-01 : f32
    %288 = vector.broadcast %cst_111 : f32 to vector<4x128xf32>
    %289 = arith.addf %287, %288 : vector<4x128xf32>
    %290 = vector.extract_strided_slice %281 {offsets = [0, 128], sizes = [4, 128], strides = [1, 1]} : vector<4x512xf32> to vector<4x128xf32>
    %cst_112 = arith.constant 5.000000e-01 : f32
    %291 = vector.broadcast %cst_112 : f32 to vector<4x128xf32>
    %292 = arith.mulf %291, %290 : vector<4x128xf32>
    %293 = math.tanh %292 : vector<4x128xf32>
    %cst_113 = arith.constant 5.000000e-01 : f32
    %294 = vector.broadcast %cst_113 : f32 to vector<4x128xf32>
    %295 = arith.mulf %294, %293 : vector<4x128xf32>
    %cst_114 = arith.constant 5.000000e-01 : f32
    %296 = vector.broadcast %cst_114 : f32 to vector<4x128xf32>
    %297 = arith.addf %295, %296 : vector<4x128xf32>
    %298 = vector.extract_strided_slice %281 {offsets = [0, 256], sizes = [4, 128], strides = [1, 1]} : vector<4x512xf32> to vector<4x128xf32>
    %299 = math.tanh %298 : vector<4x128xf32>
    %300 = vector.extract_strided_slice %281 {offsets = [0, 384], sizes = [4, 128], strides = [1, 1]} : vector<4x512xf32> to vector<4x128xf32>
    %cst_115 = arith.constant 5.000000e-01 : f32
    %301 = vector.broadcast %cst_115 : f32 to vector<4x128xf32>
    %302 = arith.mulf %301, %300 : vector<4x128xf32>
    %303 = math.tanh %302 : vector<4x128xf32>
    %cst_116 = arith.constant 5.000000e-01 : f32
    %304 = vector.broadcast %cst_116 : f32 to vector<4x128xf32>
    %305 = arith.mulf %304, %303 : vector<4x128xf32>
    %cst_117 = arith.constant 5.000000e-01 : f32
    %306 = vector.broadcast %cst_117 : f32 to vector<4x128xf32>
    %307 = arith.addf %305, %306 : vector<4x128xf32>
    %308 = arith.mulf %297, %266 : vector<4x128xf32>
    %309 = arith.mulf %289, %299 : vector<4x128xf32>
    %310 = arith.addf %308, %309 : vector<4x128xf32>
    %311 = math.tanh %310 : vector<4x128xf32>
    %312 = arith.mulf %307, %311 : vector<4x128xf32>
    %313 = vector.extract_strided_slice %312 {offsets = [0, 0], sizes = [2, 128], strides = [1, 1]} : vector<4x128xf32> to vector<2x128xf32>
    %c10_118 = arith.constant 10 : index
    %c0_119 = arith.constant 0 : index
    %314 = vector.load %arg15[%c10_118, %c0_119] : memref<16x256xf32, #tpu.memory_space<vmem>>, vector<2x128xf32>
    tpu.vector_store %arg15[%c10_118, %c0_119], %313 {strides = array<i32>} : memref<16x256xf32, #tpu.memory_space<vmem>>, vector<2x128xf32>,
    %315 = vector.extract_strided_slice %312 {offsets = [2, 0], sizes = [2, 128], strides = [1, 1]} : vector<4x128xf32> to vector<2x128xf32>
    %c4_120 = arith.constant 4 : index
    %c128_121 = arith.constant 128 : index
    %316 = vector.load %arg15[%c4_120, %c128_121] : memref<16x256xf32, #tpu.memory_space<vmem>>, vector<2x128xf32>
    tpu.vector_store %arg15[%c4_120, %c128_121], %315 {strides = array<i32>} : memref<16x256xf32, #tpu.memory_space<vmem>>, vector<2x128xf32>,
    %317 = vector.broadcast %8 : vector<4x1xf32> to vector<4x128xf32>
    %318 = arith.mulf %312, %317 : vector<4x128xf32>
    %319 = vector.broadcast %10 : vector<4x1xf32> to vector<4x128xf32>
    %320 = arith.mulf %312, %319 : vector<4x128xf32>
    %321 = tpu.concatenate %318, %320 in 1 : vector<4x128xf32>, vector<4x128xf32> -> vector<4x256xf32>
    %c24_122 = arith.constant 24 : index
    %c0_123 = arith.constant 0 : index
    %322 = vector.load %arg14[%c24_122, %c0_123] : memref<32x512xf32, #tpu.memory_space<vmem>>, vector<4x512xf32>
    %323 = arith.truncf %321 : vector<4x256xf32> to vector<4x256xbf16>
    %cst_124 = arith.constant dense<0.000000e+00> : vector<4x512xf32>
    %324 = tpu.matmul %323, %50, %cst_124 {dimension_numbers = #tpu.dot_dimension_numbers<[1], [0], [0], [1], [0, 0, 1, 1], [], []>} : vector<4x256xbf16>, vector<256x512xbf16>, vector<4x512xf32> -> vector<4x512xf32>
    %325 = arith.addf %322, %324 : vector<4x512xf32>
    %326 = vector.extract_strided_slice %325 {offsets = [0, 0], sizes = [4, 128], strides = [1, 1]} : vector<4x512xf32> to vector<4x128xf32>
    %cst_125 = arith.constant 5.000000e-01 : f32
    %327 = vector.broadcast %cst_125 : f32 to vector<4x128xf32>
    %328 = arith.mulf %327, %326 : vector<4x128xf32>
    %329 = math.tanh %328 : vector<4x128xf32>
    %cst_126 = arith.constant 5.000000e-01 : f32
    %330 = vector.broadcast %cst_126 : f32 to vector<4x128xf32>
    %331 = arith.mulf %330, %329 : vector<4x128xf32>
    %cst_127 = arith.constant 5.000000e-01 : f32
    %332 = vector.broadcast %cst_127 : f32 to vector<4x128xf32>
    %333 = arith.addf %331, %332 : vector<4x128xf32>
    %334 = vector.extract_strided_slice %325 {offsets = [0, 128], sizes = [4, 128], strides = [1, 1]} : vector<4x512xf32> to vector<4x128xf32>
    %cst_128 = arith.constant 5.000000e-01 : f32
    %335 = vector.broadcast %cst_128 : f32 to vector<4x128xf32>
    %336 = arith.mulf %335, %334 : vector<4x128xf32>
    %337 = math.tanh %336 : vector<4x128xf32>
    %cst_129 = arith.constant 5.000000e-01 : f32
    %338 = vector.broadcast %cst_129 : f32 to vector<4x128xf32>
    %339 = arith.mulf %338, %337 : vector<4x128xf32>
    %cst_130 = arith.constant 5.000000e-01 : f32
    %340 = vector.broadcast %cst_130 : f32 to vector<4x128xf32>
    %341 = arith.addf %339, %340 : vector<4x128xf32>
    %342 = vector.extract_strided_slice %325 {offsets = [0, 256], sizes = [4, 128], strides = [1, 1]} : vector<4x512xf32> to vector<4x128xf32>
    %343 = math.tanh %342 : vector<4x128xf32>
    %344 = vector.extract_strided_slice %325 {offsets = [0, 384], sizes = [4, 128], strides = [1, 1]} : vector<4x512xf32> to vector<4x128xf32>
    %cst_131 = arith.constant 5.000000e-01 : f32
    %345 = vector.broadcast %cst_131 : f32 to vector<4x128xf32>
    %346 = arith.mulf %345, %344 : vector<4x128xf32>
    %347 = math.tanh %346 : vector<4x128xf32>
    %cst_132 = arith.constant 5.000000e-01 : f32
    %348 = vector.broadcast %cst_132 : f32 to vector<4x128xf32>
    %349 = arith.mulf %348, %347 : vector<4x128xf32>
    %cst_133 = arith.constant 5.000000e-01 : f32
    %350 = vector.broadcast %cst_133 : f32 to vector<4x128xf32>
    %351 = arith.addf %349, %350 : vector<4x128xf32>
    %352 = arith.mulf %341, %310 : vector<4x128xf32>
    %353 = arith.mulf %333, %343 : vector<4x128xf32>
    %354 = arith.addf %352, %353 : vector<4x128xf32>
    %355 = math.tanh %354 : vector<4x128xf32>
    %356 = arith.mulf %351, %355 : vector<4x128xf32>
    %357 = vector.extract_strided_slice %356 {offsets = [0, 0], sizes = [2, 128], strides = [1, 1]} : vector<4x128xf32> to vector<2x128xf32>
    %c12_134 = arith.constant 12 : index
    %c0_135 = arith.constant 0 : index
    %358 = vector.load %arg15[%c12_134, %c0_135] : memref<16x256xf32, #tpu.memory_space<vmem>>, vector<2x128xf32>
    tpu.vector_store %arg15[%c12_134, %c0_135], %357 {strides = array<i32>} : memref<16x256xf32, #tpu.memory_space<vmem>>, vector<2x128xf32>,
    %359 = vector.extract_strided_slice %356 {offsets = [2, 0], sizes = [2, 128], strides = [1, 1]} : vector<4x128xf32> to vector<2x128xf32>
    %c2_136 = arith.constant 2 : index
    %c128_137 = arith.constant 128 : index
    %360 = vector.load %arg15[%c2_136, %c128_137] : memref<16x256xf32, #tpu.memory_space<vmem>>, vector<2x128xf32>
    tpu.vector_store %arg15[%c2_136, %c128_137], %359 {strides = array<i32>} : memref<16x256xf32, #tpu.memory_space<vmem>>, vector<2x128xf32>,
    %361 = vector.broadcast %8 : vector<4x1xf32> to vector<4x128xf32>
    %362 = arith.mulf %356, %361 : vector<4x128xf32>
    %363 = vector.broadcast %10 : vector<4x1xf32> to vector<4x128xf32>
    %364 = arith.mulf %356, %363 : vector<4x128xf32>
    %365 = tpu.concatenate %362, %364 in 1 : vector<4x128xf32>, vector<4x128xf32> -> vector<4x256xf32>
    %c28_138 = arith.constant 28 : index
    %c0_139 = arith.constant 0 : index
    %366 = vector.load %arg14[%c28_138, %c0_139] : memref<32x512xf32, #tpu.memory_space<vmem>>, vector<4x512xf32>
    %367 = arith.truncf %365 : vector<4x256xf32> to vector<4x256xbf16>
    %cst_140 = arith.constant dense<0.000000e+00> : vector<4x512xf32>
    %368 = tpu.matmul %367, %50, %cst_140 {dimension_numbers = #tpu.dot_dimension_numbers<[1], [0], [0], [1], [0, 0, 1, 1], [], []>} : vector<4x256xbf16>, vector<256x512xbf16>, vector<4x512xf32> -> vector<4x512xf32>
    %369 = arith.addf %366, %368 : vector<4x512xf32>
    %370 = vector.extract_strided_slice %369 {offsets = [0, 0], sizes = [4, 128], strides = [1, 1]} : vector<4x512xf32> to vector<4x128xf32>
    %cst_141 = arith.constant 5.000000e-01 : f32
    %371 = vector.broadcast %cst_141 : f32 to vector<4x128xf32>
    %372 = arith.mulf %371, %370 : vector<4x128xf32>
    %373 = math.tanh %372 : vector<4x128xf32>
    %cst_142 = arith.constant 5.000000e-01 : f32
    %374 = vector.broadcast %cst_142 : f32 to vector<4x128xf32>
    %375 = arith.mulf %374, %373 : vector<4x128xf32>
    %cst_143 = arith.constant 5.000000e-01 : f32
    %376 = vector.broadcast %cst_143 : f32 to vector<4x128xf32>
    %377 = arith.addf %375, %376 : vector<4x128xf32>
    %378 = vector.extract_strided_slice %369 {offsets = [0, 128], sizes = [4, 128], strides = [1, 1]} : vector<4x512xf32> to vector<4x128xf32>
    %cst_144 = arith.constant 5.000000e-01 : f32
    %379 = vector.broadcast %cst_144 : f32 to vector<4x128xf32>
    %380 = arith.mulf %379, %378 : vector<4x128xf32>
    %381 = math.tanh %380 : vector<4x128xf32>
    %cst_145 = arith.constant 5.000000e-01 : f32
    %382 = vector.broadcast %cst_145 : f32 to vector<4x128xf32>
    %383 = arith.mulf %382, %381 : vector<4x128xf32>
    %cst_146 = arith.constant 5.000000e-01 : f32
    %384 = vector.broadcast %cst_146 : f32 to vector<4x128xf32>
    %385 = arith.addf %383, %384 : vector<4x128xf32>
    %386 = vector.extract_strided_slice %369 {offsets = [0, 256], sizes = [4, 128], strides = [1, 1]} : vector<4x512xf32> to vector<4x128xf32>
    %387 = math.tanh %386 : vector<4x128xf32>
    %388 = vector.extract_strided_slice %369 {offsets = [0, 384], sizes = [4, 128], strides = [1, 1]} : vector<4x512xf32> to vector<4x128xf32>
    %cst_147 = arith.constant 5.000000e-01 : f32
    %389 = vector.broadcast %cst_147 : f32 to vector<4x128xf32>
    %390 = arith.mulf %389, %388 : vector<4x128xf32>
    %391 = math.tanh %390 : vector<4x128xf32>
    %cst_148 = arith.constant 5.000000e-01 : f32
    %392 = vector.broadcast %cst_148 : f32 to vector<4x128xf32>
    %393 = arith.mulf %392, %391 : vector<4x128xf32>
    %cst_149 = arith.constant 5.000000e-01 : f32
    %394 = vector.broadcast %cst_149 : f32 to vector<4x128xf32>
    %395 = arith.addf %393, %394 : vector<4x128xf32>
    %396 = arith.mulf %385, %354 : vector<4x128xf32>
    %397 = arith.mulf %377, %387 : vector<4x128xf32>
    %398 = arith.addf %396, %397 : vector<4x128xf32>
    %399 = math.tanh %398 : vector<4x128xf32>
    %400 = arith.mulf %395, %399 : vector<4x128xf32>
    %401 = vector.extract_strided_slice %400 {offsets = [0, 0], sizes = [2, 128], strides = [1, 1]} : vector<4x128xf32> to vector<2x128xf32>
    %c14_150 = arith.constant 14 : index
    %c0_151 = arith.constant 0 : index
    %402 = vector.load %arg15[%c14_150, %c0_151] : memref<16x256xf32, #tpu.memory_space<vmem>>, vector<2x128xf32>
    tpu.vector_store %arg15[%c14_150, %c0_151], %401 {strides = array<i32>} : memref<16x256xf32, #tpu.memory_space<vmem>>, vector<2x128xf32>,
    %403 = vector.extract_strided_slice %400 {offsets = [2, 0], sizes = [2, 128], strides = [1, 1]} : vector<4x128xf32> to vector<2x128xf32>
    %c0_152 = arith.constant 0 : index
    %c128_153 = arith.constant 128 : index
    %404 = vector.load %arg15[%c0_152, %c128_153] : memref<16x256xf32, #tpu.memory_space<vmem>>, vector<2x128xf32>
    tpu.vector_store %arg15[%c0_152, %c128_153], %403 {strides = array<i32>} : memref<16x256xf32, #tpu.memory_space<vmem>>, vector<2x128xf32>,
    %c0_i32_154 = arith.constant 0 : i32
    %405 = tpu.memref_slice %arg18[%c0_i32_154] : memref<2x!tpu.dma_semaphore, #tpu.memory_space<semaphore_mem>> -> memref<1x!tpu.dma_semaphore, #tpu.memory_space<semaphore_mem>>
    %406 = tpu.memref_squeeze %405 : memref<1x!tpu.dma_semaphore, #tpu.memory_space<semaphore_mem>> -> memref<!tpu.dma_semaphore, #tpu.memory_space<semaphore_mem>>
    tpu.wait_dma2 semaphore(%406 : memref<!tpu.dma_semaphore, #tpu.memory_space<semaphore_mem>>) src(%arg4 : memref<256x1024xbf16, #tpu.memory_space<any>>) dst(%arg16 : memref<256x1024xbf16, #tpu.memory_space<vmem>>)
    %c1_i32_155 = arith.constant 1 : i32
    %407 = tpu.memref_slice %arg18[%c1_i32_155] : memref<2x!tpu.dma_semaphore, #tpu.memory_space<semaphore_mem>> -> memref<1x!tpu.dma_semaphore, #tpu.memory_space<semaphore_mem>>
    %408 = tpu.memref_squeeze %407 : memref<1x!tpu.dma_semaphore, #tpu.memory_space<semaphore_mem>> -> memref<!tpu.dma_semaphore, #tpu.memory_space<semaphore_mem>>
    tpu.wait_dma2 semaphore(%408 : memref<!tpu.dma_semaphore, #tpu.memory_space<semaphore_mem>>) src(%arg5 : memref<256x512xbf16, #tpu.memory_space<any>>) dst(%arg17 : memref<256x512xbf16, #tpu.memory_space<vmem>>)
    %c0_156 = arith.constant 0 : index
    %c0_157 = arith.constant 0 : index
    %409 = vector.load %arg15[%c0_156, %c0_157] : memref<16x256xf32, #tpu.memory_space<vmem>>, vector<16x256xf32>
    %c0_158 = arith.constant 0 : index
    %c0_159 = arith.constant 0 : index
    %410 = vector.load %arg16[%c0_158, %c0_159] : memref<256x1024xbf16, #tpu.memory_space<vmem>>, vector<256x1024xbf16>
    %411 = arith.truncf %409 : vector<16x256xf32> to vector<16x256xbf16>
    %cst_160 = arith.constant dense<0.000000e+00> : vector<16x1024xf32>
    %412 = tpu.matmul %411, %410, %cst_160 {dimension_numbers = #tpu.dot_dimension_numbers<[1], [0], [0], [1], [0, 0, 1, 1], [], []>} : vector<16x256xbf16>, vector<256x1024xbf16>, vector<16x1024xf32> -> vector<16x1024xf32>
    %c0_161 = arith.constant 0 : index
    %c0_162 = arith.constant 0 : index
    %413 = vector.load %arg6[%c0_161, %c0_162] : memref<1x1024xf32, #tpu.memory_space<vmem>>, vector<1x1024xf32>
    %414 = vector.broadcast %413 : vector<1x1024xf32> to vector<16x1024xf32>
    %415 = arith.addf %412, %414 : vector<16x1024xf32>
    %416 = vector.extract_strided_slice %415 {offsets = [0, 0], sizes = [2, 512], strides = [1, 1]} : vector<16x1024xf32> to vector<2x512xf32>
    %c0_163 = arith.constant 0 : index
    %c0_164 = arith.constant 0 : index
    %417 = vector.load %arg14[%c0_163, %c0_164] : memref<32x512xf32, #tpu.memory_space<vmem>>, vector<2x512xf32>
    tpu.vector_store %arg14[%c0_163, %c0_164], %416 {strides = array<i32>} : memref<32x512xf32, #tpu.memory_space<vmem>>, vector<2x512xf32>,
    %418 = vector.extract_strided_slice %415 {offsets = [14, 512], sizes = [2, 512], strides = [1, 1]} : vector<16x1024xf32> to vector<2x512xf32>
    %c2_165 = arith.constant 2 : index
    %c0_166 = arith.constant 0 : index
    %419 = vector.load %arg14[%c2_165, %c0_166] : memref<32x512xf32, #tpu.memory_space<vmem>>, vector<2x512xf32>
    tpu.vector_store %arg14[%c2_165, %c0_166], %418 {strides = array<i32>} : memref<32x512xf32, #tpu.memory_space<vmem>>, vector<2x512xf32>,
    %420 = vector.extract_strided_slice %415 {offsets = [2, 0], sizes = [2, 512], strides = [1, 1]} : vector<16x1024xf32> to vector<2x512xf32>
    %c4_167 = arith.constant 4 : index
    %c0_168 = arith.constant 0 : index
    %421 = vector.load %arg14[%c4_167, %c0_168] : memref<32x512xf32, #tpu.memory_space<vmem>>, vector<2x512xf32>
    tpu.vector_store %arg14[%c4_167, %c0_168], %420 {strides = array<i32>} : memref<32x512xf32, #tpu.memory_space<vmem>>, vector<2x512xf32>,
    %422 = vector.extract_strided_slice %415 {offsets = [12, 512], sizes = [2, 512], strides = [1, 1]} : vector<16x1024xf32> to vector<2x512xf32>
    %c6_169 = arith.constant 6 : index
    %c0_170 = arith.constant 0 : index
    %423 = vector.load %arg14[%c6_169, %c0_170] : memref<32x512xf32, #tpu.memory_space<vmem>>, vector<2x512xf32>
    tpu.vector_store %arg14[%c6_169, %c0_170], %422 {strides = array<i32>} : memref<32x512xf32, #tpu.memory_space<vmem>>, vector<2x512xf32>,
    %424 = vector.extract_strided_slice %415 {offsets = [4, 0], sizes = [2, 512], strides = [1, 1]} : vector<16x1024xf32> to vector<2x512xf32>
    %c8_171 = arith.constant 8 : index
    %c0_172 = arith.constant 0 : index
    %425 = vector.load %arg14[%c8_171, %c0_172] : memref<32x512xf32, #tpu.memory_space<vmem>>, vector<2x512xf32>
    tpu.vector_store %arg14[%c8_171, %c0_172], %424 {strides = array<i32>} : memref<32x512xf32, #tpu.memory_space<vmem>>, vector<2x512xf32>,
    %426 = vector.extract_strided_slice %415 {offsets = [10, 512], sizes = [2, 512], strides = [1, 1]} : vector<16x1024xf32> to vector<2x512xf32>
    %c10_173 = arith.constant 10 : index
    %c0_174 = arith.constant 0 : index
    %427 = vector.load %arg14[%c10_173, %c0_174] : memref<32x512xf32, #tpu.memory_space<vmem>>, vector<2x512xf32>
    tpu.vector_store %arg14[%c10_173, %c0_174], %426 {strides = array<i32>} : memref<32x512xf32, #tpu.memory_space<vmem>>, vector<2x512xf32>,
    %428 = vector.extract_strided_slice %415 {offsets = [6, 0], sizes = [2, 512], strides = [1, 1]} : vector<16x1024xf32> to vector<2x512xf32>
    %c12_175 = arith.constant 12 : index
    %c0_176 = arith.constant 0 : index
    %429 = vector.load %arg14[%c12_175, %c0_176] : memref<32x512xf32, #tpu.memory_space<vmem>>, vector<2x512xf32>
    tpu.vector_store %arg14[%c12_175, %c0_176], %428 {strides = array<i32>} : memref<32x512xf32, #tpu.memory_space<vmem>>, vector<2x512xf32>,
    %430 = vector.extract_strided_slice %415 {offsets = [8, 512], sizes = [2, 512], strides = [1, 1]} : vector<16x1024xf32> to vector<2x512xf32>
    %c14_177 = arith.constant 14 : index
    %c0_178 = arith.constant 0 : index
    %431 = vector.load %arg14[%c14_177, %c0_178] : memref<32x512xf32, #tpu.memory_space<vmem>>, vector<2x512xf32>
    tpu.vector_store %arg14[%c14_177, %c0_178], %430 {strides = array<i32>} : memref<32x512xf32, #tpu.memory_space<vmem>>, vector<2x512xf32>,
    %432 = vector.extract_strided_slice %415 {offsets = [8, 0], sizes = [2, 512], strides = [1, 1]} : vector<16x1024xf32> to vector<2x512xf32>
    %c16_179 = arith.constant 16 : index
    %c0_180 = arith.constant 0 : index
    %433 = vector.load %arg14[%c16_179, %c0_180] : memref<32x512xf32, #tpu.memory_space<vmem>>, vector<2x512xf32>
    tpu.vector_store %arg14[%c16_179, %c0_180], %432 {strides = array<i32>} : memref<32x512xf32, #tpu.memory_space<vmem>>, vector<2x512xf32>,
    %434 = vector.extract_strided_slice %415 {offsets = [6, 512], sizes = [2, 512], strides = [1, 1]} : vector<16x1024xf32> to vector<2x512xf32>
    %c18_181 = arith.constant 18 : index
    %c0_182 = arith.constant 0 : index
    %435 = vector.load %arg14[%c18_181, %c0_182] : memref<32x512xf32, #tpu.memory_space<vmem>>, vector<2x512xf32>
    tpu.vector_store %arg14[%c18_181, %c0_182], %434 {strides = array<i32>} : memref<32x512xf32, #tpu.memory_space<vmem>>, vector<2x512xf32>,
    %436 = vector.extract_strided_slice %415 {offsets = [10, 0], sizes = [2, 512], strides = [1, 1]} : vector<16x1024xf32> to vector<2x512xf32>
    %c20_183 = arith.constant 20 : index
    %c0_184 = arith.constant 0 : index
    %437 = vector.load %arg14[%c20_183, %c0_184] : memref<32x512xf32, #tpu.memory_space<vmem>>, vector<2x512xf32>
    tpu.vector_store %arg14[%c20_183, %c0_184], %436 {strides = array<i32>} : memref<32x512xf32, #tpu.memory_space<vmem>>, vector<2x512xf32>,
    %438 = vector.extract_strided_slice %415 {offsets = [4, 512], sizes = [2, 512], strides = [1, 1]} : vector<16x1024xf32> to vector<2x512xf32>
    %c22_185 = arith.constant 22 : index
    %c0_186 = arith.constant 0 : index
    %439 = vector.load %arg14[%c22_185, %c0_186] : memref<32x512xf32, #tpu.memory_space<vmem>>, vector<2x512xf32>
    tpu.vector_store %arg14[%c22_185, %c0_186], %438 {strides = array<i32>} : memref<32x512xf32, #tpu.memory_space<vmem>>, vector<2x512xf32>,
    %440 = vector.extract_strided_slice %415 {offsets = [12, 0], sizes = [2, 512], strides = [1, 1]} : vector<16x1024xf32> to vector<2x512xf32>
    %c24_187 = arith.constant 24 : index
    %c0_188 = arith.constant 0 : index
    %441 = vector.load %arg14[%c24_187, %c0_188] : memref<32x512xf32, #tpu.memory_space<vmem>>, vector<2x512xf32>
    tpu.vector_store %arg14[%c24_187, %c0_188], %440 {strides = array<i32>} : memref<32x512xf32, #tpu.memory_space<vmem>>, vector<2x512xf32>,
    %442 = vector.extract_strided_slice %415 {offsets = [2, 512], sizes = [2, 512], strides = [1, 1]} : vector<16x1024xf32> to vector<2x512xf32>
    %c26_189 = arith.constant 26 : index
    %c0_190 = arith.constant 0 : index
    %443 = vector.load %arg14[%c26_189, %c0_190] : memref<32x512xf32, #tpu.memory_space<vmem>>, vector<2x512xf32>
    tpu.vector_store %arg14[%c26_189, %c0_190], %442 {strides = array<i32>} : memref<32x512xf32, #tpu.memory_space<vmem>>, vector<2x512xf32>,
    %444 = vector.extract_strided_slice %415 {offsets = [14, 0], sizes = [2, 512], strides = [1, 1]} : vector<16x1024xf32> to vector<2x512xf32>
    %c28_191 = arith.constant 28 : index
    %c0_192 = arith.constant 0 : index
    %445 = vector.load %arg14[%c28_191, %c0_192] : memref<32x512xf32, #tpu.memory_space<vmem>>, vector<2x512xf32>
    tpu.vector_store %arg14[%c28_191, %c0_192], %444 {strides = array<i32>} : memref<32x512xf32, #tpu.memory_space<vmem>>, vector<2x512xf32>,
    %446 = vector.extract_strided_slice %415 {offsets = [0, 512], sizes = [2, 512], strides = [1, 1]} : vector<16x1024xf32> to vector<2x512xf32>
    %c30_193 = arith.constant 30 : index
    %c0_194 = arith.constant 0 : index
    %447 = vector.load %arg14[%c30_193, %c0_194] : memref<32x512xf32, #tpu.memory_space<vmem>>, vector<2x512xf32>
    tpu.vector_store %arg14[%c30_193, %c0_194], %446 {strides = array<i32>} : memref<32x512xf32, #tpu.memory_space<vmem>>, vector<2x512xf32>,
    %c0_195 = arith.constant 0 : index
    %c0_196 = arith.constant 0 : index
    %448 = vector.load %arg17[%c0_195, %c0_196] : memref<256x512xbf16, #tpu.memory_space<vmem>>, vector<256x512xbf16>
    %cst_197 = arith.constant 0.000000e+00 : f32
    %449 = vector.broadcast %cst_197 : f32 to vector<4x128xf32>
    %cst_198 = arith.constant 0.000000e+00 : f32
    %450 = vector.broadcast %cst_198 : f32 to vector<4x128xf32>
    %451 = vector.broadcast %8 : vector<4x1xf32> to vector<4x128xf32>
    %452 = arith.mulf %449, %451 : vector<4x128xf32>
    %453 = vector.broadcast %10 : vector<4x1xf32> to vector<4x128xf32>
    %454 = arith.mulf %449, %453 : vector<4x128xf32>
    %455 = tpu.concatenate %452, %454 in 1 : vector<4x128xf32>, vector<4x128xf32> -> vector<4x256xf32>
    %c0_199 = arith.constant 0 : index
    %c0_200 = arith.constant 0 : index
    %456 = vector.load %arg14[%c0_199, %c0_200] : memref<32x512xf32, #tpu.memory_space<vmem>>, vector<4x512xf32>
    %457 = arith.truncf %455 : vector<4x256xf32> to vector<4x256xbf16>
    %cst_201 = arith.constant dense<0.000000e+00> : vector<4x512xf32>
    %458 = tpu.matmul %457, %448, %cst_201 {dimension_numbers = #tpu.dot_dimension_numbers<[1], [0], [0], [1], [0, 0, 1, 1], [], []>} : vector<4x256xbf16>, vector<256x512xbf16>, vector<4x512xf32> -> vector<4x512xf32>
    %459 = arith.addf %456, %458 : vector<4x512xf32>
    %460 = vector.extract_strided_slice %459 {offsets = [0, 0], sizes = [4, 128], strides = [1, 1]} : vector<4x512xf32> to vector<4x128xf32>
    %cst_202 = arith.constant 5.000000e-01 : f32
    %461 = vector.broadcast %cst_202 : f32 to vector<4x128xf32>
    %462 = arith.mulf %461, %460 : vector<4x128xf32>
    %463 = math.tanh %462 : vector<4x128xf32>
    %cst_203 = arith.constant 5.000000e-01 : f32
    %464 = vector.broadcast %cst_203 : f32 to vector<4x128xf32>
    %465 = arith.mulf %464, %463 : vector<4x128xf32>
    %cst_204 = arith.constant 5.000000e-01 : f32
    %466 = vector.broadcast %cst_204 : f32 to vector<4x128xf32>
    %467 = arith.addf %465, %466 : vector<4x128xf32>
    %468 = vector.extract_strided_slice %459 {offsets = [0, 128], sizes = [4, 128], strides = [1, 1]} : vector<4x512xf32> to vector<4x128xf32>
    %cst_205 = arith.constant 5.000000e-01 : f32
    %469 = vector.broadcast %cst_205 : f32 to vector<4x128xf32>
    %470 = arith.mulf %469, %468 : vector<4x128xf32>
    %471 = math.tanh %470 : vector<4x128xf32>
    %cst_206 = arith.constant 5.000000e-01 : f32
    %472 = vector.broadcast %cst_206 : f32 to vector<4x128xf32>
    %473 = arith.mulf %472, %471 : vector<4x128xf32>
    %cst_207 = arith.constant 5.000000e-01 : f32
    %474 = vector.broadcast %cst_207 : f32 to vector<4x128xf32>
    %475 = arith.addf %473, %474 : vector<4x128xf32>
    %476 = vector.extract_strided_slice %459 {offsets = [0, 256], sizes = [4, 128], strides = [1, 1]} : vector<4x512xf32> to vector<4x128xf32>
    %477 = math.tanh %476 : vector<4x128xf32>
    %478 = vector.extract_strided_slice %459 {offsets = [0, 384], sizes = [4, 128], strides = [1, 1]} : vector<4x512xf32> to vector<4x128xf32>
    %cst_208 = arith.constant 5.000000e-01 : f32
    %479 = vector.broadcast %cst_208 : f32 to vector<4x128xf32>
    %480 = arith.mulf %479, %478 : vector<4x128xf32>
    %481 = math.tanh %480 : vector<4x128xf32>
    %cst_209 = arith.constant 5.000000e-01 : f32
    %482 = vector.broadcast %cst_209 : f32 to vector<4x128xf32>
    %483 = arith.mulf %482, %481 : vector<4x128xf32>
    %cst_210 = arith.constant 5.000000e-01 : f32
    %484 = vector.broadcast %cst_210 : f32 to vector<4x128xf32>
    %485 = arith.addf %483, %484 : vector<4x128xf32>
    %486 = arith.mulf %475, %450 : vector<4x128xf32>
    %487 = arith.mulf %467, %477 : vector<4x128xf32>
    %488 = arith.addf %486, %487 : vector<4x128xf32>
    %489 = math.tanh %488 : vector<4x128xf32>
    %490 = arith.mulf %485, %489 : vector<4x128xf32>
    %491 = vector.extract_strided_slice %490 {offsets = [0, 0], sizes = [2, 128], strides = [1, 1]} : vector<4x128xf32> to vector<2x128xf32>
    %c0_211 = arith.constant 0 : index
    %c0_212 = arith.constant 0 : index
    %492 = vector.load %arg15[%c0_211, %c0_212] : memref<16x256xf32, #tpu.memory_space<vmem>>, vector<2x128xf32>
    tpu.vector_store %arg15[%c0_211, %c0_212], %491 {strides = array<i32>} : memref<16x256xf32, #tpu.memory_space<vmem>>, vector<2x128xf32>,
    %493 = vector.extract_strided_slice %490 {offsets = [2, 0], sizes = [2, 128], strides = [1, 1]} : vector<4x128xf32> to vector<2x128xf32>
    %c14_213 = arith.constant 14 : index
    %c128_214 = arith.constant 128 : index
    %494 = vector.load %arg15[%c14_213, %c128_214] : memref<16x256xf32, #tpu.memory_space<vmem>>, vector<2x128xf32>
    tpu.vector_store %arg15[%c14_213, %c128_214], %493 {strides = array<i32>} : memref<16x256xf32, #tpu.memory_space<vmem>>, vector<2x128xf32>,
    %495 = vector.broadcast %8 : vector<4x1xf32> to vector<4x128xf32>
    %496 = arith.mulf %490, %495 : vector<4x128xf32>
    %497 = vector.broadcast %10 : vector<4x1xf32> to vector<4x128xf32>
    %498 = arith.mulf %490, %497 : vector<4x128xf32>
    %499 = tpu.concatenate %496, %498 in 1 : vector<4x128xf32>, vector<4x128xf32> -> vector<4x256xf32>
    %c4_215 = arith.constant 4 : index
    %c0_216 = arith.constant 0 : index
    %500 = vector.load %arg14[%c4_215, %c0_216] : memref<32x512xf32, #tpu.memory_space<vmem>>, vector<4x512xf32>
    %501 = arith.truncf %499 : vector<4x256xf32> to vector<4x256xbf16>
    %cst_217 = arith.constant dense<0.000000e+00> : vector<4x512xf32>
    %502 = tpu.matmul %501, %448, %cst_217 {dimension_numbers = #tpu.dot_dimension_numbers<[1], [0], [0], [1], [0, 0, 1, 1], [], []>} : vector<4x256xbf16>, vector<256x512xbf16>, vector<4x512xf32> -> vector<4x512xf32>
    %503 = arith.addf %500, %502 : vector<4x512xf32>
    %504 = vector.extract_strided_slice %503 {offsets = [0, 0], sizes = [4, 128], strides = [1, 1]} : vector<4x512xf32> to vector<4x128xf32>
    %cst_218 = arith.constant 5.000000e-01 : f32
    %505 = vector.broadcast %cst_218 : f32 to vector<4x128xf32>
    %506 = arith.mulf %505, %504 : vector<4x128xf32>
    %507 = math.tanh %506 : vector<4x128xf32>
    %cst_219 = arith.constant 5.000000e-01 : f32
    %508 = vector.broadcast %cst_219 : f32 to vector<4x128xf32>
    %509 = arith.mulf %508, %507 : vector<4x128xf32>
    %cst_220 = arith.constant 5.000000e-01 : f32
    %510 = vector.broadcast %cst_220 : f32 to vector<4x128xf32>
    %511 = arith.addf %509, %510 : vector<4x128xf32>
    %512 = vector.extract_strided_slice %503 {offsets = [0, 128], sizes = [4, 128], strides = [1, 1]} : vector<4x512xf32> to vector<4x128xf32>
    %cst_221 = arith.constant 5.000000e-01 : f32
    %513 = vector.broadcast %cst_221 : f32 to vector<4x128xf32>
    %514 = arith.mulf %513, %512 : vector<4x128xf32>
    %515 = math.tanh %514 : vector<4x128xf32>
    %cst_222 = arith.constant 5.000000e-01 : f32
    %516 = vector.broadcast %cst_222 : f32 to vector<4x128xf32>
    %517 = arith.mulf %516, %515 : vector<4x128xf32>
    %cst_223 = arith.constant 5.000000e-01 : f32
    %518 = vector.broadcast %cst_223 : f32 to vector<4x128xf32>
    %519 = arith.addf %517, %518 : vector<4x128xf32>
    %520 = vector.extract_strided_slice %503 {offsets = [0, 256], sizes = [4, 128], strides = [1, 1]} : vector<4x512xf32> to vector<4x128xf32>
    %521 = math.tanh %520 : vector<4x128xf32>
    %522 = vector.extract_strided_slice %503 {offsets = [0, 384], sizes = [4, 128], strides = [1, 1]} : vector<4x512xf32> to vector<4x128xf32>
    %cst_224 = arith.constant 5.000000e-01 : f32
    %523 = vector.broadcast %cst_224 : f32 to vector<4x128xf32>
    %524 = arith.mulf %523, %522 : vector<4x128xf32>
    %525 = math.tanh %524 : vector<4x128xf32>
    %cst_225 = arith.constant 5.000000e-01 : f32
    %526 = vector.broadcast %cst_225 : f32 to vector<4x128xf32>
    %527 = arith.mulf %526, %525 : vector<4x128xf32>
    %cst_226 = arith.constant 5.000000e-01 : f32
    %528 = vector.broadcast %cst_226 : f32 to vector<4x128xf32>
    %529 = arith.addf %527, %528 : vector<4x128xf32>
    %530 = arith.mulf %519, %488 : vector<4x128xf32>
    %531 = arith.mulf %511, %521 : vector<4x128xf32>
    %532 = arith.addf %530, %531 : vector<4x128xf32>
    %533 = math.tanh %532 : vector<4x128xf32>
    %534 = arith.mulf %529, %533 : vector<4x128xf32>
    %535 = vector.extract_strided_slice %534 {offsets = [0, 0], sizes = [2, 128], strides = [1, 1]} : vector<4x128xf32> to vector<2x128xf32>
    %c2_227 = arith.constant 2 : index
    %c0_228 = arith.constant 0 : index
    %536 = vector.load %arg15[%c2_227, %c0_228] : memref<16x256xf32, #tpu.memory_space<vmem>>, vector<2x128xf32>
    tpu.vector_store %arg15[%c2_227, %c0_228], %535 {strides = array<i32>} : memref<16x256xf32, #tpu.memory_space<vmem>>, vector<2x128xf32>,
    %537 = vector.extract_strided_slice %534 {offsets = [2, 0], sizes = [2, 128], strides = [1, 1]} : vector<4x128xf32> to vector<2x128xf32>
    %c12_229 = arith.constant 12 : index
    %c128_230 = arith.constant 128 : index
    %538 = vector.load %arg15[%c12_229, %c128_230] : memref<16x256xf32, #tpu.memory_space<vmem>>, vector<2x128xf32>
    tpu.vector_store %arg15[%c12_229, %c128_230], %537 {strides = array<i32>} : memref<16x256xf32, #tpu.memory_space<vmem>>, vector<2x128xf32>,
    %539 = vector.broadcast %8 : vector<4x1xf32> to vector<4x128xf32>
    %540 = arith.mulf %534, %539 : vector<4x128xf32>
    %541 = vector.broadcast %10 : vector<4x1xf32> to vector<4x128xf32>
    %542 = arith.mulf %534, %541 : vector<4x128xf32>
    %543 = tpu.concatenate %540, %542 in 1 : vector<4x128xf32>, vector<4x128xf32> -> vector<4x256xf32>
    %c8_231 = arith.constant 8 : index
    %c0_232 = arith.constant 0 : index
    %544 = vector.load %arg14[%c8_231, %c0_232] : memref<32x512xf32, #tpu.memory_space<vmem>>, vector<4x512xf32>
    %545 = arith.truncf %543 : vector<4x256xf32> to vector<4x256xbf16>
    %cst_233 = arith.constant dense<0.000000e+00> : vector<4x512xf32>
    %546 = tpu.matmul %545, %448, %cst_233 {dimension_numbers = #tpu.dot_dimension_numbers<[1], [0], [0], [1], [0, 0, 1, 1], [], []>} : vector<4x256xbf16>, vector<256x512xbf16>, vector<4x512xf32> -> vector<4x512xf32>
    %547 = arith.addf %544, %546 : vector<4x512xf32>
    %548 = vector.extract_strided_slice %547 {offsets = [0, 0], sizes = [4, 128], strides = [1, 1]} : vector<4x512xf32> to vector<4x128xf32>
    %cst_234 = arith.constant 5.000000e-01 : f32
    %549 = vector.broadcast %cst_234 : f32 to vector<4x128xf32>
    %550 = arith.mulf %549, %548 : vector<4x128xf32>
    %551 = math.tanh %550 : vector<4x128xf32>
    %cst_235 = arith.constant 5.000000e-01 : f32
    %552 = vector.broadcast %cst_235 : f32 to vector<4x128xf32>
    %553 = arith.mulf %552, %551 : vector<4x128xf32>
    %cst_236 = arith.constant 5.000000e-01 : f32
    %554 = vector.broadcast %cst_236 : f32 to vector<4x128xf32>
    %555 = arith.addf %553, %554 : vector<4x128xf32>
    %556 = vector.extract_strided_slice %547 {offsets = [0, 128], sizes = [4, 128], strides = [1, 1]} : vector<4x512xf32> to vector<4x128xf32>
    %cst_237 = arith.constant 5.000000e-01 : f32
    %557 = vector.broadcast %cst_237 : f32 to vector<4x128xf32>
    %558 = arith.mulf %557, %556 : vector<4x128xf32>
    %559 = math.tanh %558 : vector<4x128xf32>
    %cst_238 = arith.constant 5.000000e-01 : f32
    %560 = vector.broadcast %cst_238 : f32 to vector<4x128xf32>
    %561 = arith.mulf %560, %559 : vector<4x128xf32>
    %cst_239 = arith.constant 5.000000e-01 : f32
    %562 = vector.broadcast %cst_239 : f32 to vector<4x128xf32>
    %563 = arith.addf %561, %562 : vector<4x128xf32>
    %564 = vector.extract_strided_slice %547 {offsets = [0, 256], sizes = [4, 128], strides = [1, 1]} : vector<4x512xf32> to vector<4x128xf32>
    %565 = math.tanh %564 : vector<4x128xf32>
    %566 = vector.extract_strided_slice %547 {offsets = [0, 384], sizes = [4, 128], strides = [1, 1]} : vector<4x512xf32> to vector<4x128xf32>
    %cst_240 = arith.constant 5.000000e-01 : f32
    %567 = vector.broadcast %cst_240 : f32 to vector<4x128xf32>
    %568 = arith.mulf %567, %566 : vector<4x128xf32>
    %569 = math.tanh %568 : vector<4x128xf32>
    %cst_241 = arith.constant 5.000000e-01 : f32
    %570 = vector.broadcast %cst_241 : f32 to vector<4x128xf32>
    %571 = arith.mulf %570, %569 : vector<4x128xf32>
    %cst_242 = arith.constant 5.000000e-01 : f32
    %572 = vector.broadcast %cst_242 : f32 to vector<4x128xf32>
    %573 = arith.addf %571, %572 : vector<4x128xf32>
    %574 = arith.mulf %563, %532 : vector<4x128xf32>
    %575 = arith.mulf %555, %565 : vector<4x128xf32>
    %576 = arith.addf %574, %575 : vector<4x128xf32>
    %577 = math.tanh %576 : vector<4x128xf32>
    %578 = arith.mulf %573, %577 : vector<4x128xf32>
    %579 = vector.extract_strided_slice %578 {offsets = [0, 0], sizes = [2, 128], strides = [1, 1]} : vector<4x128xf32> to vector<2x128xf32>
    %c4_243 = arith.constant 4 : index
    %c0_244 = arith.constant 0 : index
    %580 = vector.load %arg15[%c4_243, %c0_244] : memref<16x256xf32, #tpu.memory_space<vmem>>, vector<2x128xf32>
    tpu.vector_store %arg15[%c4_243, %c0_244], %579 {strides = array<i32>} : memref<16x256xf32, #tpu.memory_space<vmem>>, vector<2x128xf32>,
    %581 = vector.extract_strided_slice %578 {offsets = [2, 0], sizes = [2, 128], strides = [1, 1]} : vector<4x128xf32> to vector<2x128xf32>
    %c10_245 = arith.constant 10 : index
    %c128_246 = arith.constant 128 : index
    %582 = vector.load %arg15[%c10_245, %c128_246] : memref<16x256xf32, #tpu.memory_space<vmem>>, vector<2x128xf32>
    tpu.vector_store %arg15[%c10_245, %c128_246], %581 {strides = array<i32>} : memref<16x256xf32, #tpu.memory_space<vmem>>, vector<2x128xf32>,
    %583 = vector.broadcast %8 : vector<4x1xf32> to vector<4x128xf32>
    %584 = arith.mulf %578, %583 : vector<4x128xf32>
    %585 = vector.broadcast %10 : vector<4x1xf32> to vector<4x128xf32>
    %586 = arith.mulf %578, %585 : vector<4x128xf32>
    %587 = tpu.concatenate %584, %586 in 1 : vector<4x128xf32>, vector<4x128xf32> -> vector<4x256xf32>
    %c12_247 = arith.constant 12 : index
    %c0_248 = arith.constant 0 : index
    %588 = vector.load %arg14[%c12_247, %c0_248] : memref<32x512xf32, #tpu.memory_space<vmem>>, vector<4x512xf32>
    %589 = arith.truncf %587 : vector<4x256xf32> to vector<4x256xbf16>
    %cst_249 = arith.constant dense<0.000000e+00> : vector<4x512xf32>
    %590 = tpu.matmul %589, %448, %cst_249 {dimension_numbers = #tpu.dot_dimension_numbers<[1], [0], [0], [1], [0, 0, 1, 1], [], []>} : vector<4x256xbf16>, vector<256x512xbf16>, vector<4x512xf32> -> vector<4x512xf32>
    %591 = arith.addf %588, %590 : vector<4x512xf32>
    %592 = vector.extract_strided_slice %591 {offsets = [0, 0], sizes = [4, 128], strides = [1, 1]} : vector<4x512xf32> to vector<4x128xf32>
    %cst_250 = arith.constant 5.000000e-01 : f32
    %593 = vector.broadcast %cst_250 : f32 to vector<4x128xf32>
    %594 = arith.mulf %593, %592 : vector<4x128xf32>
    %595 = math.tanh %594 : vector<4x128xf32>
    %cst_251 = arith.constant 5.000000e-01 : f32
    %596 = vector.broadcast %cst_251 : f32 to vector<4x128xf32>
    %597 = arith.mulf %596, %595 : vector<4x128xf32>
    %cst_252 = arith.constant 5.000000e-01 : f32
    %598 = vector.broadcast %cst_252 : f32 to vector<4x128xf32>
    %599 = arith.addf %597, %598 : vector<4x128xf32>
    %600 = vector.extract_strided_slice %591 {offsets = [0, 128], sizes = [4, 128], strides = [1, 1]} : vector<4x512xf32> to vector<4x128xf32>
    %cst_253 = arith.constant 5.000000e-01 : f32
    %601 = vector.broadcast %cst_253 : f32 to vector<4x128xf32>
    %602 = arith.mulf %601, %600 : vector<4x128xf32>
    %603 = math.tanh %602 : vector<4x128xf32>
    %cst_254 = arith.constant 5.000000e-01 : f32
    %604 = vector.broadcast %cst_254 : f32 to vector<4x128xf32>
    %605 = arith.mulf %604, %603 : vector<4x128xf32>
    %cst_255 = arith.constant 5.000000e-01 : f32
    %606 = vector.broadcast %cst_255 : f32 to vector<4x128xf32>
    %607 = arith.addf %605, %606 : vector<4x128xf32>
    %608 = vector.extract_strided_slice %591 {offsets = [0, 256], sizes = [4, 128], strides = [1, 1]} : vector<4x512xf32> to vector<4x128xf32>
    %609 = math.tanh %608 : vector<4x128xf32>
    %610 = vector.extract_strided_slice %591 {offsets = [0, 384], sizes = [4, 128], strides = [1, 1]} : vector<4x512xf32> to vector<4x128xf32>
    %cst_256 = arith.constant 5.000000e-01 : f32
    %611 = vector.broadcast %cst_256 : f32 to vector<4x128xf32>
    %612 = arith.mulf %611, %610 : vector<4x128xf32>
    %613 = math.tanh %612 : vector<4x128xf32>
    %cst_257 = arith.constant 5.000000e-01 : f32
    %614 = vector.broadcast %cst_257 : f32 to vector<4x128xf32>
    %615 = arith.mulf %614, %613 : vector<4x128xf32>
    %cst_258 = arith.constant 5.000000e-01 : f32
    %616 = vector.broadcast %cst_258 : f32 to vector<4x128xf32>
    %617 = arith.addf %615, %616 : vector<4x128xf32>
    %618 = arith.mulf %607, %576 : vector<4x128xf32>
    %619 = arith.mulf %599, %609 : vector<4x128xf32>
    %620 = arith.addf %618, %619 : vector<4x128xf32>
    %621 = math.tanh %620 : vector<4x128xf32>
    %622 = arith.mulf %617, %621 : vector<4x128xf32>
    %623 = vector.extract_strided_slice %622 {offsets = [0, 0], sizes = [2, 128], strides = [1, 1]} : vector<4x128xf32> to vector<2x128xf32>
    %c6_259 = arith.constant 6 : index
    %c0_260 = arith.constant 0 : index
    %624 = vector.load %arg15[%c6_259, %c0_260] : memref<16x256xf32, #tpu.memory_space<vmem>>, vector<2x128xf32>
    tpu.vector_store %arg15[%c6_259, %c0_260], %623 {strides = array<i32>} : memref<16x256xf32, #tpu.memory_space<vmem>>, vector<2x128xf32>,
    %625 = vector.extract_strided_slice %622 {offsets = [2, 0], sizes = [2, 128], strides = [1, 1]} : vector<4x128xf32> to vector<2x128xf32>
    %c8_261 = arith.constant 8 : index
    %c128_262 = arith.constant 128 : index
    %626 = vector.load %arg15[%c8_261, %c128_262] : memref<16x256xf32, #tpu.memory_space<vmem>>, vector<2x128xf32>
    tpu.vector_store %arg15[%c8_261, %c128_262], %625 {strides = array<i32>} : memref<16x256xf32, #tpu.memory_space<vmem>>, vector<2x128xf32>,
    %627 = vector.broadcast %8 : vector<4x1xf32> to vector<4x128xf32>
    %628 = arith.mulf %622, %627 : vector<4x128xf32>
    %629 = vector.broadcast %10 : vector<4x1xf32> to vector<4x128xf32>
    %630 = arith.mulf %622, %629 : vector<4x128xf32>
    %631 = tpu.concatenate %628, %630 in 1 : vector<4x128xf32>, vector<4x128xf32> -> vector<4x256xf32>
    %c16_263 = arith.constant 16 : index
    %c0_264 = arith.constant 0 : index
    %632 = vector.load %arg14[%c16_263, %c0_264] : memref<32x512xf32, #tpu.memory_space<vmem>>, vector<4x512xf32>
    %633 = arith.truncf %631 : vector<4x256xf32> to vector<4x256xbf16>
    %cst_265 = arith.constant dense<0.000000e+00> : vector<4x512xf32>
    %634 = tpu.matmul %633, %448, %cst_265 {dimension_numbers = #tpu.dot_dimension_numbers<[1], [0], [0], [1], [0, 0, 1, 1], [], []>} : vector<4x256xbf16>, vector<256x512xbf16>, vector<4x512xf32> -> vector<4x512xf32>
    %635 = arith.addf %632, %634 : vector<4x512xf32>
    %636 = vector.extract_strided_slice %635 {offsets = [0, 0], sizes = [4, 128], strides = [1, 1]} : vector<4x512xf32> to vector<4x128xf32>
    %cst_266 = arith.constant 5.000000e-01 : f32
    %637 = vector.broadcast %cst_266 : f32 to vector<4x128xf32>
    %638 = arith.mulf %637, %636 : vector<4x128xf32>
    %639 = math.tanh %638 : vector<4x128xf32>
    %cst_267 = arith.constant 5.000000e-01 : f32
    %640 = vector.broadcast %cst_267 : f32 to vector<4x128xf32>
    %641 = arith.mulf %640, %639 : vector<4x128xf32>
    %cst_268 = arith.constant 5.000000e-01 : f32
    %642 = vector.broadcast %cst_268 : f32 to vector<4x128xf32>
    %643 = arith.addf %641, %642 : vector<4x128xf32>
    %644 = vector.extract_strided_slice %635 {offsets = [0, 128], sizes = [4, 128], strides = [1, 1]} : vector<4x512xf32> to vector<4x128xf32>
    %cst_269 = arith.constant 5.000000e-01 : f32
    %645 = vector.broadcast %cst_269 : f32 to vector<4x128xf32>
    %646 = arith.mulf %645, %644 : vector<4x128xf32>
    %647 = math.tanh %646 : vector<4x128xf32>
    %cst_270 = arith.constant 5.000000e-01 : f32
    %648 = vector.broadcast %cst_270 : f32 to vector<4x128xf32>
    %649 = arith.mulf %648, %647 : vector<4x128xf32>
    %cst_271 = arith.constant 5.000000e-01 : f32
    %650 = vector.broadcast %cst_271 : f32 to vector<4x128xf32>
    %651 = arith.addf %649, %650 : vector<4x128xf32>
    %652 = vector.extract_strided_slice %635 {offsets = [0, 256], sizes = [4, 128], strides = [1, 1]} : vector<4x512xf32> to vector<4x128xf32>
    %653 = math.tanh %652 : vector<4x128xf32>
    %654 = vector.extract_strided_slice %635 {offsets = [0, 384], sizes = [4, 128], strides = [1, 1]} : vector<4x512xf32> to vector<4x128xf32>
    %cst_272 = arith.constant 5.000000e-01 : f32
    %655 = vector.broadcast %cst_272 : f32 to vector<4x128xf32>
    %656 = arith.mulf %655, %654 : vector<4x128xf32>
    %657 = math.tanh %656 : vector<4x128xf32>
    %cst_273 = arith.constant 5.000000e-01 : f32
    %658 = vector.broadcast %cst_273 : f32 to vector<4x128xf32>
    %659 = arith.mulf %658, %657 : vector<4x128xf32>
    %cst_274 = arith.constant 5.000000e-01 : f32
    %660 = vector.broadcast %cst_274 : f32 to vector<4x128xf32>
    %661 = arith.addf %659, %660 : vector<4x128xf32>
    %662 = arith.mulf %651, %620 : vector<4x128xf32>
    %663 = arith.mulf %643, %653 : vector<4x128xf32>
    %664 = arith.addf %662, %663 : vector<4x128xf32>
    %665 = math.tanh %664 : vector<4x128xf32>
    %666 = arith.mulf %661, %665 : vector<4x128xf32>
    %667 = vector.extract_strided_slice %666 {offsets = [0, 0], sizes = [2, 128], strides = [1, 1]} : vector<4x128xf32> to vector<2x128xf32>
    %c8_275 = arith.constant 8 : index
    %c0_276 = arith.constant 0 : index
    %668 = vector.load %arg15[%c8_275, %c0_276] : memref<16x256xf32, #tpu.memory_space<vmem>>, vector<2x128xf32>
    tpu.vector_store %arg15[%c8_275, %c0_276], %667 {strides = array<i32>} : memref<16x256xf32, #tpu.memory_space<vmem>>, vector<2x128xf32>,
    %669 = vector.extract_strided_slice %666 {offsets = [2, 0], sizes = [2, 128], strides = [1, 1]} : vector<4x128xf32> to vector<2x128xf32>
    %c6_277 = arith.constant 6 : index
    %c128_278 = arith.constant 128 : index
    %670 = vector.load %arg15[%c6_277, %c128_278] : memref<16x256xf32, #tpu.memory_space<vmem>>, vector<2x128xf32>
    tpu.vector_store %arg15[%c6_277, %c128_278], %669 {strides = array<i32>} : memref<16x256xf32, #tpu.memory_space<vmem>>, vector<2x128xf32>,
    %671 = vector.broadcast %8 : vector<4x1xf32> to vector<4x128xf32>
    %672 = arith.mulf %666, %671 : vector<4x128xf32>
    %673 = vector.broadcast %10 : vector<4x1xf32> to vector<4x128xf32>
    %674 = arith.mulf %666, %673 : vector<4x128xf32>
    %675 = tpu.concatenate %672, %674 in 1 : vector<4x128xf32>, vector<4x128xf32> -> vector<4x256xf32>
    %c20_279 = arith.constant 20 : index
    %c0_280 = arith.constant 0 : index
    %676 = vector.load %arg14[%c20_279, %c0_280] : memref<32x512xf32, #tpu.memory_space<vmem>>, vector<4x512xf32>
    %677 = arith.truncf %675 : vector<4x256xf32> to vector<4x256xbf16>
    %cst_281 = arith.constant dense<0.000000e+00> : vector<4x512xf32>
    %678 = tpu.matmul %677, %448, %cst_281 {dimension_numbers = #tpu.dot_dimension_numbers<[1], [0], [0], [1], [0, 0, 1, 1], [], []>} : vector<4x256xbf16>, vector<256x512xbf16>, vector<4x512xf32> -> vector<4x512xf32>
    %679 = arith.addf %676, %678 : vector<4x512xf32>
    %680 = vector.extract_strided_slice %679 {offsets = [0, 0], sizes = [4, 128], strides = [1, 1]} : vector<4x512xf32> to vector<4x128xf32>
    %cst_282 = arith.constant 5.000000e-01 : f32
    %681 = vector.broadcast %cst_282 : f32 to vector<4x128xf32>
    %682 = arith.mulf %681, %680 : vector<4x128xf32>
    %683 = math.tanh %682 : vector<4x128xf32>
    %cst_283 = arith.constant 5.000000e-01 : f32
    %684 = vector.broadcast %cst_283 : f32 to vector<4x128xf32>
    %685 = arith.mulf %684, %683 : vector<4x128xf32>
    %cst_284 = arith.constant 5.000000e-01 : f32
    %686 = vector.broadcast %cst_284 : f32 to vector<4x128xf32>
    %687 = arith.addf %685, %686 : vector<4x128xf32>
    %688 = vector.extract_strided_slice %679 {offsets = [0, 128], sizes = [4, 128], strides = [1, 1]} : vector<4x512xf32> to vector<4x128xf32>
    %cst_285 = arith.constant 5.000000e-01 : f32
    %689 = vector.broadcast %cst_285 : f32 to vector<4x128xf32>
    %690 = arith.mulf %689, %688 : vector<4x128xf32>
    %691 = math.tanh %690 : vector<4x128xf32>
    %cst_286 = arith.constant 5.000000e-01 : f32
    %692 = vector.broadcast %cst_286 : f32 to vector<4x128xf32>
    %693 = arith.mulf %692, %691 : vector<4x128xf32>
    %cst_287 = arith.constant 5.000000e-01 : f32
    %694 = vector.broadcast %cst_287 : f32 to vector<4x128xf32>
    %695 = arith.addf %693, %694 : vector<4x128xf32>
    %696 = vector.extract_strided_slice %679 {offsets = [0, 256], sizes = [4, 128], strides = [1, 1]} : vector<4x512xf32> to vector<4x128xf32>
    %697 = math.tanh %696 : vector<4x128xf32>
    %698 = vector.extract_strided_slice %679 {offsets = [0, 384], sizes = [4, 128], strides = [1, 1]} : vector<4x512xf32> to vector<4x128xf32>
    %cst_288 = arith.constant 5.000000e-01 : f32
    %699 = vector.broadcast %cst_288 : f32 to vector<4x128xf32>
    %700 = arith.mulf %699, %698 : vector<4x128xf32>
    %701 = math.tanh %700 : vector<4x128xf32>
    %cst_289 = arith.constant 5.000000e-01 : f32
    %702 = vector.broadcast %cst_289 : f32 to vector<4x128xf32>
    %703 = arith.mulf %702, %701 : vector<4x128xf32>
    %cst_290 = arith.constant 5.000000e-01 : f32
    %704 = vector.broadcast %cst_290 : f32 to vector<4x128xf32>
    %705 = arith.addf %703, %704 : vector<4x128xf32>
    %706 = arith.mulf %695, %664 : vector<4x128xf32>
    %707 = arith.mulf %687, %697 : vector<4x128xf32>
    %708 = arith.addf %706, %707 : vector<4x128xf32>
    %709 = math.tanh %708 : vector<4x128xf32>
    %710 = arith.mulf %705, %709 : vector<4x128xf32>
    %711 = vector.extract_strided_slice %710 {offsets = [0, 0], sizes = [2, 128], strides = [1, 1]} : vector<4x128xf32> to vector<2x128xf32>
    %c10_291 = arith.constant 10 : index
    %c0_292 = arith.constant 0 : index
    %712 = vector.load %arg15[%c10_291, %c0_292] : memref<16x256xf32, #tpu.memory_space<vmem>>, vector<2x128xf32>
    tpu.vector_store %arg15[%c10_291, %c0_292], %711 {strides = array<i32>} : memref<16x256xf32, #tpu.memory_space<vmem>>, vector<2x128xf32>,
    %713 = vector.extract_strided_slice %710 {offsets = [2, 0], sizes = [2, 128], strides = [1, 1]} : vector<4x128xf32> to vector<2x128xf32>
    %c4_293 = arith.constant 4 : index
    %c128_294 = arith.constant 128 : index
    %714 = vector.load %arg15[%c4_293, %c128_294] : memref<16x256xf32, #tpu.memory_space<vmem>>, vector<2x128xf32>
    tpu.vector_store %arg15[%c4_293, %c128_294], %713 {strides = array<i32>} : memref<16x256xf32, #tpu.memory_space<vmem>>, vector<2x128xf32>,
    %715 = vector.broadcast %8 : vector<4x1xf32> to vector<4x128xf32>
    %716 = arith.mulf %710, %715 : vector<4x128xf32>
    %717 = vector.broadcast %10 : vector<4x1xf32> to vector<4x128xf32>
    %718 = arith.mulf %710, %717 : vector<4x128xf32>
    %719 = tpu.concatenate %716, %718 in 1 : vector<4x128xf32>, vector<4x128xf32> -> vector<4x256xf32>
    %c24_295 = arith.constant 24 : index
    %c0_296 = arith.constant 0 : index
    %720 = vector.load %arg14[%c24_295, %c0_296] : memref<32x512xf32, #tpu.memory_space<vmem>>, vector<4x512xf32>
    %721 = arith.truncf %719 : vector<4x256xf32> to vector<4x256xbf16>
    %cst_297 = arith.constant dense<0.000000e+00> : vector<4x512xf32>
    %722 = tpu.matmul %721, %448, %cst_297 {dimension_numbers = #tpu.dot_dimension_numbers<[1], [0], [0], [1], [0, 0, 1, 1], [], []>} : vector<4x256xbf16>, vector<256x512xbf16>, vector<4x512xf32> -> vector<4x512xf32>
    %723 = arith.addf %720, %722 : vector<4x512xf32>
    %724 = vector.extract_strided_slice %723 {offsets = [0, 0], sizes = [4, 128], strides = [1, 1]} : vector<4x512xf32> to vector<4x128xf32>
    %cst_298 = arith.constant 5.000000e-01 : f32
    %725 = vector.broadcast %cst_298 : f32 to vector<4x128xf32>
    %726 = arith.mulf %725, %724 : vector<4x128xf32>
    %727 = math.tanh %726 : vector<4x128xf32>
    %cst_299 = arith.constant 5.000000e-01 : f32
    %728 = vector.broadcast %cst_299 : f32 to vector<4x128xf32>
    %729 = arith.mulf %728, %727 : vector<4x128xf32>
    %cst_300 = arith.constant 5.000000e-01 : f32
    %730 = vector.broadcast %cst_300 : f32 to vector<4x128xf32>
    %731 = arith.addf %729, %730 : vector<4x128xf32>
    %732 = vector.extract_strided_slice %723 {offsets = [0, 128], sizes = [4, 128], strides = [1, 1]} : vector<4x512xf32> to vector<4x128xf32>
    %cst_301 = arith.constant 5.000000e-01 : f32
    %733 = vector.broadcast %cst_301 : f32 to vector<4x128xf32>
    %734 = arith.mulf %733, %732 : vector<4x128xf32>
    %735 = math.tanh %734 : vector<4x128xf32>
    %cst_302 = arith.constant 5.000000e-01 : f32
    %736 = vector.broadcast %cst_302 : f32 to vector<4x128xf32>
    %737 = arith.mulf %736, %735 : vector<4x128xf32>
    %cst_303 = arith.constant 5.000000e-01 : f32
    %738 = vector.broadcast %cst_303 : f32 to vector<4x128xf32>
    %739 = arith.addf %737, %738 : vector<4x128xf32>
    %740 = vector.extract_strided_slice %723 {offsets = [0, 256], sizes = [4, 128], strides = [1, 1]} : vector<4x512xf32> to vector<4x128xf32>
    %741 = math.tanh %740 : vector<4x128xf32>
    %742 = vector.extract_strided_slice %723 {offsets = [0, 384], sizes = [4, 128], strides = [1, 1]} : vector<4x512xf32> to vector<4x128xf32>
    %cst_304 = arith.constant 5.000000e-01 : f32
    %743 = vector.broadcast %cst_304 : f32 to vector<4x128xf32>
    %744 = arith.mulf %743, %742 : vector<4x128xf32>
    %745 = math.tanh %744 : vector<4x128xf32>
    %cst_305 = arith.constant 5.000000e-01 : f32
    %746 = vector.broadcast %cst_305 : f32 to vector<4x128xf32>
    %747 = arith.mulf %746, %745 : vector<4x128xf32>
    %cst_306 = arith.constant 5.000000e-01 : f32
    %748 = vector.broadcast %cst_306 : f32 to vector<4x128xf32>
    %749 = arith.addf %747, %748 : vector<4x128xf32>
    %750 = arith.mulf %739, %708 : vector<4x128xf32>
    %751 = arith.mulf %731, %741 : vector<4x128xf32>
    %752 = arith.addf %750, %751 : vector<4x128xf32>
    %753 = math.tanh %752 : vector<4x128xf32>
    %754 = arith.mulf %749, %753 : vector<4x128xf32>
    %755 = vector.extract_strided_slice %754 {offsets = [0, 0], sizes = [2, 128], strides = [1, 1]} : vector<4x128xf32> to vector<2x128xf32>
    %c12_307 = arith.constant 12 : index
    %c0_308 = arith.constant 0 : index
    %756 = vector.load %arg15[%c12_307, %c0_308] : memref<16x256xf32, #tpu.memory_space<vmem>>, vector<2x128xf32>
    tpu.vector_store %arg15[%c12_307, %c0_308], %755 {strides = array<i32>} : memref<16x256xf32, #tpu.memory_space<vmem>>, vector<2x128xf32>,
    %757 = vector.extract_strided_slice %754 {offsets = [2, 0], sizes = [2, 128], strides = [1, 1]} : vector<4x128xf32> to vector<2x128xf32>
    %c2_309 = arith.constant 2 : index
    %c128_310 = arith.constant 128 : index
    %758 = vector.load %arg15[%c2_309, %c128_310] : memref<16x256xf32, #tpu.memory_space<vmem>>, vector<2x128xf32>
    tpu.vector_store %arg15[%c2_309, %c128_310], %757 {strides = array<i32>} : memref<16x256xf32, #tpu.memory_space<vmem>>, vector<2x128xf32>,
    %759 = vector.broadcast %8 : vector<4x1xf32> to vector<4x128xf32>
    %760 = arith.mulf %754, %759 : vector<4x128xf32>
    %761 = vector.broadcast %10 : vector<4x1xf32> to vector<4x128xf32>
    %762 = arith.mulf %754, %761 : vector<4x128xf32>
    %763 = tpu.concatenate %760, %762 in 1 : vector<4x128xf32>, vector<4x128xf32> -> vector<4x256xf32>
    %c28_311 = arith.constant 28 : index
    %c0_312 = arith.constant 0 : index
    %764 = vector.load %arg14[%c28_311, %c0_312] : memref<32x512xf32, #tpu.memory_space<vmem>>, vector<4x512xf32>
    %765 = arith.truncf %763 : vector<4x256xf32> to vector<4x256xbf16>
    %cst_313 = arith.constant dense<0.000000e+00> : vector<4x512xf32>
    %766 = tpu.matmul %765, %448, %cst_313 {dimension_numbers = #tpu.dot_dimension_numbers<[1], [0], [0], [1], [0, 0, 1, 1], [], []>} : vector<4x256xbf16>, vector<256x512xbf16>, vector<4x512xf32> -> vector<4x512xf32>
    %767 = arith.addf %764, %766 : vector<4x512xf32>
    %768 = vector.extract_strided_slice %767 {offsets = [0, 0], sizes = [4, 128], strides = [1, 1]} : vector<4x512xf32> to vector<4x128xf32>
    %cst_314 = arith.constant 5.000000e-01 : f32
    %769 = vector.broadcast %cst_314 : f32 to vector<4x128xf32>
    %770 = arith.mulf %769, %768 : vector<4x128xf32>
    %771 = math.tanh %770 : vector<4x128xf32>
    %cst_315 = arith.constant 5.000000e-01 : f32
    %772 = vector.broadcast %cst_315 : f32 to vector<4x128xf32>
    %773 = arith.mulf %772, %771 : vector<4x128xf32>
    %cst_316 = arith.constant 5.000000e-01 : f32
    %774 = vector.broadcast %cst_316 : f32 to vector<4x128xf32>
    %775 = arith.addf %773, %774 : vector<4x128xf32>
    %776 = vector.extract_strided_slice %767 {offsets = [0, 128], sizes = [4, 128], strides = [1, 1]} : vector<4x512xf32> to vector<4x128xf32>
    %cst_317 = arith.constant 5.000000e-01 : f32
    %777 = vector.broadcast %cst_317 : f32 to vector<4x128xf32>
    %778 = arith.mulf %777, %776 : vector<4x128xf32>
    %779 = math.tanh %778 : vector<4x128xf32>
    %cst_318 = arith.constant 5.000000e-01 : f32
    %780 = vector.broadcast %cst_318 : f32 to vector<4x128xf32>
    %781 = arith.mulf %780, %779 : vector<4x128xf32>
    %cst_319 = arith.constant 5.000000e-01 : f32
    %782 = vector.broadcast %cst_319 : f32 to vector<4x128xf32>
    %783 = arith.addf %781, %782 : vector<4x128xf32>
    %784 = vector.extract_strided_slice %767 {offsets = [0, 256], sizes = [4, 128], strides = [1, 1]} : vector<4x512xf32> to vector<4x128xf32>
    %785 = math.tanh %784 : vector<4x128xf32>
    %786 = vector.extract_strided_slice %767 {offsets = [0, 384], sizes = [4, 128], strides = [1, 1]} : vector<4x512xf32> to vector<4x128xf32>
    %cst_320 = arith.constant 5.000000e-01 : f32
    %787 = vector.broadcast %cst_320 : f32 to vector<4x128xf32>
    %788 = arith.mulf %787, %786 : vector<4x128xf32>
    %789 = math.tanh %788 : vector<4x128xf32>
    %cst_321 = arith.constant 5.000000e-01 : f32
    %790 = vector.broadcast %cst_321 : f32 to vector<4x128xf32>
    %791 = arith.mulf %790, %789 : vector<4x128xf32>
    %cst_322 = arith.constant 5.000000e-01 : f32
    %792 = vector.broadcast %cst_322 : f32 to vector<4x128xf32>
    %793 = arith.addf %791, %792 : vector<4x128xf32>
    %794 = arith.mulf %783, %752 : vector<4x128xf32>
    %795 = arith.mulf %775, %785 : vector<4x128xf32>
    %796 = arith.addf %794, %795 : vector<4x128xf32>
    %797 = math.tanh %796 : vector<4x128xf32>
    %798 = arith.mulf %793, %797 : vector<4x128xf32>
    %799 = vector.extract_strided_slice %798 {offsets = [0, 0], sizes = [2, 128], strides = [1, 1]} : vector<4x128xf32> to vector<2x128xf32>
    %c14_323 = arith.constant 14 : index
    %c0_324 = arith.constant 0 : index
    %800 = vector.load %arg15[%c14_323, %c0_324] : memref<16x256xf32, #tpu.memory_space<vmem>>, vector<2x128xf32>
    tpu.vector_store %arg15[%c14_323, %c0_324], %799 {strides = array<i32>} : memref<16x256xf32, #tpu.memory_space<vmem>>, vector<2x128xf32>,
    %801 = vector.extract_strided_slice %798 {offsets = [2, 0], sizes = [2, 128], strides = [1, 1]} : vector<4x128xf32> to vector<2x128xf32>
    %c0_325 = arith.constant 0 : index
    %c128_326 = arith.constant 128 : index
    %802 = vector.load %arg15[%c0_325, %c128_326] : memref<16x256xf32, #tpu.memory_space<vmem>>, vector<2x128xf32>
    tpu.vector_store %arg15[%c0_325, %c128_326], %801 {strides = array<i32>} : memref<16x256xf32, #tpu.memory_space<vmem>>, vector<2x128xf32>,
    %c0_327 = arith.constant 0 : index
    %c0_328 = arith.constant 0 : index
    %803 = vector.load %arg15[%c0_327, %c0_328] : memref<16x256xf32, #tpu.memory_space<vmem>>, vector<16x256xf32>
    %c0_329 = arith.constant 0 : index
    %c0_330 = arith.constant 0 : index
    %804 = vector.load %arg7[%c0_329, %c0_330] : memref<1x256xf32, #tpu.memory_space<vmem>>, vector<1x256xf32>
    %805 = vector.broadcast %804 : vector<1x256xf32> to vector<16x256xf32>
    %806 = arith.mulf %803, %805 : vector<16x256xf32>
    %cst_331 = arith.constant dense<0.000000e+00> : vector<16xf32>
    %807 = vector.multi_reduction <add>, %806, %cst_331 [1] : vector<16x256xf32> to vector<16xf32>
    %808 = vector.shape_cast %807 : vector<16xf32> to vector<16x1xf32>
    %cst_332 = arith.constant dense<0xFF800000> : vector<1xf32>
    %809 = vector.multi_reduction <maximumf>, %808, %cst_332 [0] : vector<16x1xf32> to vector<1xf32>
    %810 = vector.shape_cast %809 : vector<1xf32> to vector<1x1xf32>
    %811 = vector.broadcast %810 : vector<1x1xf32> to vector<16x1xf32>
    %812 = arith.subf %808, %811 : vector<16x1xf32>
    %813 = math.exp %812 : vector<16x1xf32>
    %c0_333 = arith.constant 0 : index
    %c0_334 = arith.constant 0 : index
    %814 = vector.load %arg8[%c0_333, %c0_334] : memref<2x16xf32, #tpu.memory_space<vmem>>, vector<2x16xf32>
    %cst_335 = arith.constant dense<0.000000e+00> : vector<2x1xf32>
    %815 = tpu.matmul %814, %813, %cst_335 {dimension_numbers = #tpu.dot_dimension_numbers<[1], [0], [0], [1], [0, 0, 1, 1], [], []>} : vector<2x16xf32>, vector<16x1xf32>, vector<2x1xf32> -> vector<2x1xf32>
    %816 = vector.broadcast %813 : vector<16x1xf32> to vector<16x256xf32>
    %817 = arith.mulf %803, %816 : vector<16x256xf32>
    %cst_336 = arith.constant dense<0.000000e+00> : vector<2x256xf32>
    %818 = tpu.matmul %814, %817, %cst_336 {dimension_numbers = #tpu.dot_dimension_numbers<[1], [0], [0], [1], [0, 0, 1, 1], [], []>} : vector<2x16xf32>, vector<16x256xf32>, vector<2x256xf32> -> vector<2x256xf32>
    %819 = tpu.reciprocal %815 {approx = true} : vector<2x1xf32> -> vector<2x1xf32>
    %820 = vector.broadcast %819 : vector<2x1xf32> to vector<2x256xf32>
    %821 = arith.mulf %818, %820 : vector<2x256xf32>
    %cst_337 = arith.constant 0.000000e+00 : f32
    %822 = vector.broadcast %cst_337 : f32 to vector<2x256xf32>
    %823 = arith.maximumf %821, %822 : vector<2x256xf32>
    %c0_338 = arith.constant 0 : index
    %c0_339 = arith.constant 0 : index
    %824 = vector.load %arg9[%c0_338, %c0_339] : memref<256x128xbf16, #tpu.memory_space<vmem>>, vector<256x128xbf16>
    %825 = arith.truncf %823 : vector<2x256xf32> to vector<2x256xbf16>
    %cst_340 = arith.constant dense<0.000000e+00> : vector<2x128xf32>
    %826 = tpu.matmul %825, %824, %cst_340 {dimension_numbers = #tpu.dot_dimension_numbers<[1], [0], [0], [1], [0, 0, 1, 1], [], []>} : vector<2x256xbf16>, vector<256x128xbf16>, vector<2x128xf32> -> vector<2x128xf32>
    %c0_341 = arith.constant 0 : index
    %c0_342 = arith.constant 0 : index
    %827 = vector.load %arg10[%c0_341, %c0_342] : memref<1x128xf32, #tpu.memory_space<vmem>>, vector<1x128xf32>
    %828 = vector.broadcast %827 : vector<1x128xf32> to vector<2x128xf32>
    %829 = arith.addf %826, %828 : vector<2x128xf32>
    %c0_343 = arith.constant 0 : index
    %c0_344 = arith.constant 0 : index
    %830 = vector.load %arg11[%c0_343, %c0_344] : memref<128x128xbf16, #tpu.memory_space<vmem>>, vector<128x128xbf16>
    %831 = arith.truncf %829 : vector<2x128xf32> to vector<2x128xbf16>
    %cst_345 = arith.constant dense<0.000000e+00> : vector<2x128xf32>
    %832 = tpu.matmul %831, %830, %cst_345 {dimension_numbers = #tpu.dot_dimension_numbers<[1], [0], [0], [1], [0, 0, 1, 1], [], []>} : vector<2x128xbf16>, vector<128x128xbf16>, vector<2x128xf32> -> vector<2x128xf32>
    %c0_346 = arith.constant 0 : index
    %c0_347 = arith.constant 0 : index
    %833 = vector.load %arg12[%c0_346, %c0_347] : memref<1x128xf32, #tpu.memory_space<vmem>>, vector<1x128xf32>
    %834 = vector.broadcast %833 : vector<1x128xf32> to vector<2x128xf32>
    %835 = arith.addf %832, %834 : vector<2x128xf32>
    %c0_348 = arith.constant 0 : index
    %c0_349 = arith.constant 0 : index
    %836 = vector.load %arg13[%c0_348, %c0_349] : memref<2x128xf32, #tpu.memory_space<vmem>>, vector<2x128xf32>
    tpu.vector_store %arg13[%c0_348, %c0_349], %835 {strides = array<i32>} : memref<2x128xf32, #tpu.memory_space<vmem>>, vector<2x128xf32>,
    return
  }
}

</mosaic_0001>

<llo_original>
// kernel: _lambda_.1
$region0: #{_lambda_.1}
  #allocation0 [shape = 'u32[]', space=smem, size = 0x4, offset = 0x4, fixed_abs, tag = 'smem constant byte address 0x4 - core index']
  #allocation1 [shape = 'u32[144,128]{1,0:T(1,128)}', space=vmem, size = 0x12000, scoped, tag = 'internal scratch']
  #allocation2 [shape = 'f32[32,512]{1,0:T(8,128)}', space=vmem, size = 0x10000, scoped, tag = 'scratch operand']
  #allocation3 [shape = 'f32[16,256]{1,0:T(8,128)}', space=vmem, size = 0x4000, scoped, tag = 'scratch operand']
  #allocation4 [shape = 'bf16[256,1024]{1,0:T(16,128)(2,1)}', space=vmem, size = 0x80000, scoped, tag = 'scratch operand']
  #allocation5 [shape = 'bf16[256,512]{1,0:T(16,128)(2,1)}', space=vmem, size = 0x40000, scoped, tag = 'scratch operand']
  #allocation6 [shape = 's32[2]{0}', space=sflag, size = 0x8, scoped, tag = 'scratch operand']
  #allocation9 [shape = 's32[]', space=sflag, size = 0x4, offset = 0, fixed_abs, tag = 'sflag constant byte address 0x0 - dummy sync flag']
  #allocation10 [shape = 's32[]', space=sflag, size = 0x4, offset = 0, fixed_abs, tag = 'sflag constant byte address 0x0 - dummy sync flag']
  %s0 = inlined_call_operand.vmem [shape: f32[16,64], index: 0, kind: input, shape index: {}]
  %s1 = inlined_call_operand.vmem [shape: bf16[64,1024], index: 1, kind: input, shape index: {}]
  %s2 = inlined_call_operand.vmem [shape: bf16[256,512], index: 2, kind: input, shape index: {}]
  %s3 = inlined_call_operand.vmem [shape: f32[1,1024], index: 3, kind: input, shape index: {}]
  %s4 = inlined_call_operand.vmem [shape: bf16[256,1024], index: 4, kind: input, shape index: {}]
  %s5 = inlined_call_operand.vmem [shape: bf16[256,512], index: 5, kind: input, shape index: {}]
  %s6 = inlined_call_operand.vmem [shape: f32[1,1024], index: 6, kind: input, shape index: {}]
  %s7 = inlined_call_operand.vmem [shape: f32[1,256], index: 7, kind: input, shape index: {}]
  %s8 = inlined_call_operand.vmem [shape: f32[2,16], index: 8, kind: input, shape index: {}]
  %s9 = inlined_call_operand.vmem [shape: bf16[256,128], index: 9, kind: input, shape index: {}]
  %s10 = inlined_call_operand.vmem [shape: f32[1,128], index: 10, kind: input, shape index: {}]
  %s11 = inlined_call_operand.vmem [shape: bf16[128,128], index: 11, kind: input, shape index: {}]
  %s12 = inlined_call_operand.vmem [shape: f32[1,128], index: 12, kind: input, shape index: {}]
  %s13 = inlined_call_operand.hbm [shape: f32[2,128], index: 13, kind: output, shape index: {}]
  %s14 = sld [smem:[#allocation0]]
  $region128: #{_lambda_.1} parent=0
    _
  %s16 = ssub.s32 1, %s14
  %s17 = scalar_select 0, %s16, %s14
  $region1: #{_lambda_.1} parent=0
    #allocation7 [shape = 'u8[1024]{0}', space=vmem, size = 0x400, scoped, tag = 'output window, operand 0, single buffered']
    #allocation8 [shape = 's32[1]{0}', space=sflag, size = 0x4, scoped, tag = 'scoped memory for _lambda_.1']
    %18 = vsyncpa [#allocation8], 0
    // Predicated region
    $region2: #{_lambda_.1} parent=1 // pred_check
      _
    $region3: #{_lambda_.1} parent=1 // pred_check_branch
      %20 = sbr.rel (0) target = $region5
    $region4: #{_lambda_.1} parent=1 // pred_region
      _
    $region5: #{_lambda_.1} parent=1 // pred_fallthru
      _
    // Predicated region
    $region6: #{_lambda_.1} parent=1 // pred_check
      _
    $region7: #{_lambda_.1} parent=1 // pred_check_branch
      %22 = sbr.rel (0) target = $region9
    $region8: #{_lambda_.1} parent=1 // pred_region
      _
    $region9: #{_lambda_.1} parent=1 // pred_fallthru
      _
    // Predicated region
    $region10: #{_lambda_.1} parent=1 // pred_check
      _
    $region11: #{_lambda_.1} parent=1 // pred_check_branch
      %24 = sbr.rel (0) target = $region13
    $region12: #{_lambda_.1} parent=1 // pred_region
      _
    $region13: #{_lambda_.1} parent=1 // pred_fallthru
      _
    // Predicated region
    $region14: #{_lambda_.1} parent=1 // pred_check
      _
    $region15: #{_lambda_.1} parent=1 // pred_check_branch
      %26 = sbr.rel (0) target = $region17
    $region16: #{_lambda_.1} parent=1 // pred_region
      _
    $region17: #{_lambda_.1} parent=1 // pred_fallthru
      _
    // Predicated region
    $region18: #{_lambda_.1} parent=1 // pred_check
      _
    $region19: #{_lambda_.1} parent=1 // pred_check_branch
      %28 = sbr.rel (0) target = $region21
    $region20: #{_lambda_.1} parent=1 // pred_region
      _
    $region21: #{_lambda_.1} parent=1 // pred_fallthru
      _
    // Predicated region
    $region22: #{_lambda_.1} parent=1 // pred_check
      _
    $region23: #{_lambda_.1} parent=1 // pred_check_branch
      %30 = sbr.rel (0) target = $region25
    $region24: #{_lambda_.1} parent=1 // pred_region
      _
    $region25: #{_lambda_.1} parent=1 // pred_fallthru
      _
    // Predicated region
    $region26: #{_lambda_.1} parent=1 // pred_check
      _
    $region27: #{_lambda_.1} parent=1 // pred_check_branch
      %32 = sbr.rel (0) target = $region29
    $region28: #{_lambda_.1} parent=1 // pred_region
      _
    $region29: #{_lambda_.1} parent=1 // pred_fallthru
      _
    // Predicated region
    $region30: #{_lambda_.1} parent=1 // pred_check
      _
    $region31: #{_lambda_.1} parent=1 // pred_check_branch
      %34 = sbr.rel (0) target = $region33
    $region32: #{_lambda_.1} parent=1 // pred_region
      _
    $region33: #{_lambda_.1} parent=1 // pred_fallthru
      _
    // Predicated region
    $region34: #{_lambda_.1} parent=1 // pred_check
      _
    $region35: #{_lambda_.1} parent=1 // pred_check_branch
      %36 = sbr.rel (0) target = $region37
    $region36: #{_lambda_.1} parent=1 // pred_region
      _
    $region37: #{_lambda_.1} parent=1 // pred_fallthru
      _
    // Predicated region
    $region38: #{_lambda_.1} parent=1 // pred_check
      _
    $region39: #{_lambda_.1} parent=1 // pred_check_branch
      %38 = sbr.rel (0) target = $region41
    $region40: #{_lambda_.1} parent=1 // pred_region
      _
    $region41: #{_lambda_.1} parent=1 // pred_fallthru
      _
    // Predicated region
    $region42: #{_lambda_.1} parent=1 // pred_check
      _
    $region43: #{_lambda_.1} parent=1 // pred_check_branch
      %40 = sbr.rel (0) target = $region45
    $region44: #{_lambda_.1} parent=1 // pred_region
      _
    $region45: #{_lambda_.1} parent=1 // pred_fallthru
      _
    %p43 = scmp.lt.u32.totalorder 4, 8
    %p44 = pneg %p43
    // Predicated region
    $region46: #{_lambda_.1} parent=1 // pred_check
      _
    $region47: #{_lambda_.1} parent=1 // pred_check_branch
      %46 = sbr.rel (%p43) target = $region49
    $region48: #{_lambda_.1} parent=1 // pred_region
      %s571 = sand.u32 4, 7
      %p572 = scmp.eq.s32.totalorder %s571, 0
      %p573 = pneg %p572
      // Predicated region
      $region61: #{_lambda_.1} parent=48 // pred_check
        _
      $region62: #{_lambda_.1} parent=48 // pred_check_branch
        %575 = sbr.rel (%p572) target = $region64
      $region63: #{_lambda_.1} parent=48 // pred_region
        %s576 = sand.u32 4, 7
        %s577 = ssub.s32 4, %s576
        %s578 = scalar_lea.vmem %s4, %s577
        %s579 = ssub.s32 4, %s576
        %s580 = scalar_lea.vmem [#allocation4], %s579
        loop: start=0, step=1, limit=1
        $region65: #{_lambda_.1} parent=63 // loop_pre_header
          _
        $region66: #{_lambda_.1} parent=63 // loop_header
          %s582 = sphi 0, %s586
          %p583 = scmp.ge.s32.totalorder %s582, 1
          %s587 = sphi %s4, %s4
          %s588 = sphi [#allocation4], [#allocation4]
        $region67: #{_lambda_.1} parent=63 // loop_header_branch
          %585 = sbr.rel (%p583) target = $region71
        $region68: #{_lambda_.1} parent=63 // loop_body
          _
        $region69: #{_lambda_.1} parent=63 // loop_footer
          %s586 = sadd.s32 1, %s582
        $region70: #{_lambda_.1} parent=63 // loop_footer_branch
          %581 = sbr.rel target = $region66
        $region71: #{_lambda_.1} parent=63 // loop_exit
          _
        %s589 = sshllo.u32 0, %s576
        loop: start=0, step=1, limit=1
        $region72: #{_lambda_.1} parent=63 // loop_pre_header
          _
        $region73: #{_lambda_.1} parent=63 // loop_header
          %s591 = sphi 0, %s595
          %p592 = scmp.ge.s32.totalorder %s591, 1
          %s596 = sphi %s578, %s578
          %s597 = sphi %s580, %s580
        $region74: #{_lambda_.1} parent=63 // loop_header_branch
          %594 = sbr.rel (%p592) target = $region78
        $region75: #{_lambda_.1} parent=63 // loop_body
          %v598 = vld [vmem:[%s596] sm:%s589]
          %599 = vst [vmem:[%s597] sm:%s589] %v598
          %v600 = vld [vmem:[%s596 + $0x20] sm:%s589]
          %601 = vst [vmem:[%s597 + $0x4] sm:%s589] %v600
          %v602 = vld [vmem:[%s596 + $0x4] sm:%s589]
          %603 = vst [vmem:[%s597 + $0x8] sm:%s589] %v602
          %v604 = vld [vmem:[%s596 + $0x24] sm:%s589]
          %605 = vst [vmem:[%s597 + $0xc] sm:%s589] %v604
          %v606 = vld [vmem:[%s596 + $0x8] sm:%s589]
          %607 = vst [vmem:[%s597 + $0x10] sm:%s589] %v606
          %v608 = vld [vmem:[%s596 + $0x28] sm:%s589]
          %609 = vst [vmem:[%s597 + $0x14] sm:%s589] %v608
          %v610 = vld [vmem:[%s596 + $0xc] sm:%s589]
          %611 = vst [vmem:[%s597 + $0x18] sm:%s589] %v610
          %v612 = vld [vmem:[%s596 + $0x2c] sm:%s589]
          %613 = vst [vmem:[%s597 + $0x1c] sm:%s589] %v612
          %v614 = vld [vmem:[%s596 + $0x10] sm:%s589]
          %615 = vst [vmem:[%s597 + $0x20] sm:%s589] %v614
          %v616 = vld [vmem:[%s596 + $0x30] sm:%s589]
          %617 = vst [vmem:[%s597 + $0x24] sm:%s589] %v616
          %v618 = vld [vmem:[%s596 + $0x14] sm:%s589]
          %619 = vst [vmem:[%s597 + $0x28] sm:%s589] %v618
          %v620 = vld [vmem:[%s596 + $0x34] sm:%s589]
          %621 = vst [vmem:[%s597 + $0x2c] sm:%s589] %v620
          %v622 = vld [vmem:[%s596 + $0x18] sm:%s589]
          %623 = vst [vmem:[%s597 + $0x30] sm:%s589] %v622
          %v624 = vld [vmem:[%s596 + $0x38] sm:%s589]
          %625 = vst [vmem:[%s597 + $0x34] sm:%s589] %v624
          %v626 = vld [vmem:[%s596 + $0x1c] sm:%s589]
          %627 = vst [vmem:[%s597 + $0x38] sm:%s589] %v626
          %v628 = vld [vmem:[%s596 + $0x3c] sm:%s589]
          %629 = vst [vmem:[%s597 + $0x3c] sm:%s589] %v628
          %v630 = vld [vmem:[%s596 + $0x40] sm:%s589]
          %631 = vst [vmem:[%s597 + $0x40] sm:%s589] %v630
          %v632 = vld [vmem:[%s596 + $0x60] sm:%s589]
          %633 = vst [vmem:[%s597 + $0x44] sm:%s589] %v632
          %v634 = vld [vmem:[%s596 + $0x44] sm:%s589]
          %635 = vst [vmem:[%s597 + $0x48] sm:%s589] %v634
          %v636 = vld [vmem:[%s596 + $0x64] sm:%s589]
          %637 = vst [vmem:[%s597 + $0x4c] sm:%s589] %v636
          %v638 = vld [vmem:[%s596 + $0x48] sm:%s589]
          %639 = vst [vmem:[%s597 + $0x50] sm:%s589] %v638
          %v640 = vld [vmem:[%s596 + $0x68] sm:%s589]
          %641 = vst [vmem:[%s597 + $0x54] sm:%s589] %v640
          %v642 = vld [vmem:[%s596 + $0x4c] sm:%s589]
          %643 = vst [vmem:[%s597 + $0x58] sm:%s589] %v642
          %v644 = vld [vmem:[%s596 + $0x6c] sm:%s589]
          %645 = vst [vmem:[%s597 + $0x5c] sm:%s589] %v644
          %v646 = vld [vmem:[%s596 + $0x50] sm:%s589]
          %647 = vst [vmem:[%s597 + $0x60] sm:%s589] %v646
          %v648 = vld [vmem:[%s596 + $0x70] sm:%s589]
          %649 = vst [vmem:[%s597 + $0x64] sm:%s589] %v648
          %v650 = vld [vmem:[%s596 + $0x54] sm:%s589]
          %651 = vst [vmem:[%s597 + $0x68] sm:%s589] %v650
          %v652 = vld [vmem:[%s596 + $0x74] sm:%s589]
          %653 = vst [vmem:[%s597 + $0x6c] sm:%s589] %v652
          %v654 = vld [vmem:[%s596 + $0x58] sm:%s589]
          %655 = vst [vmem:[%s597 + $0x70] sm:%s589] %v654
          %v656 = vld [vmem:[%s596 + $0x78] sm:%s589]
          %657 = vst [vmem:[%s597 + $0x74] sm:%s589] %v656
          %v658 = vld [vmem:[%s596 + $0x5c] sm:%s589]
          %659 = vst [vmem:[%s597 + $0x78] sm:%s589] %v658
          %v660 = vld [vmem:[%s596 + $0x7c] sm:%s589]
          %661 = vst [vmem:[%s597 + $0x7c] sm:%s589] %v660
          %v662 = vld [vmem:[%s596 + $0x80] sm:%s589]
          %663 = vst [vmem:[%s597 + $0x80] sm:%s589] %v662
          %v664 = vld [vmem:[%s596 + $0xa0] sm:%s589]
          %665 = vst [vmem:[%s597 + $0x84] sm:%s589] %v664
          %v666 = vld [vmem:[%s596 + $0x84] sm:%s589]
          %667 = vst [vmem:[%s597 + $0x88] sm:%s589] %v666
          %v668 = vld [vmem:[%s596 + $0xa4] sm:%s589]
          %669 = vst [vmem:[%s597 + $0x8c] sm:%s589] %v668
          %v670 = vld [vmem:[%s596 + $0x88] sm:%s589]
          %671 = vst [vmem:[%s597 + $0x90] sm:%s589] %v670
          %v672 = vld [vmem:[%s596 + $0xa8] sm:%s589]
          %673 = vst [vmem:[%s597 + $0x94] sm:%s589] %v672
          %v674 = vld [vmem:[%s596 + $0x8c] sm:%s589]
          %675 = vst [vmem:[%s597 + $0x98] sm:%s589] %v674
          %v676 = vld [vmem:[%s596 + $0xac] sm:%s589]
          %677 = vst [vmem:[%s597 + $0x9c] sm:%s589] %v676
          %v678 = vld [vmem:[%s596 + $0x90] sm:%s589]
          %679 = vst [vmem:[%s597 + $0xa0] sm:%s589] %v678
          %v680 = vld [vmem:[%s596 + $0xb0] sm:%s589]
          %681 = vst [vmem:[%s597 + $0xa4] sm:%s589] %v680
          %v682 = vld [vmem:[%s596 + $0x94] sm:%s589]
          %683 = vst [vmem:[%s597 + $0xa8] sm:%s589] %v682
          %v684 = vld [vmem:[%s596 + $0xb4] sm:%s589]
          %685 = vst [vmem:[%s597 + $0xac] sm:%s589] %v684
          %v686 = vld [vmem:[%s596 + $0x98] sm:%s589]
          %687 = vst [vmem:[%s597 + $0xb0] sm:%s589] %v686
          %v688 = vld [vmem:[%s596 + $0xb8] sm:%s589]
          %689 = vst [vmem:[%s597 + $0xb4] sm:%s589] %v688
          %v690 = vld [vmem:[%s596 + $0x9c] sm:%s589]
          %691 = vst [vmem:[%s597 + $0xb8] sm:%s589] %v690
          %v692 = vld [vmem:[%s596 + $0xbc] sm:%s589]
          %693 = vst [vmem:[%s597 + $0xbc] sm:%s589] %v692
          %v694 = vld [vmem:[%s596 + $0xc0] sm:%s589]
          %695 = vst [vmem:[%s597 + $0xc0] sm:%s589] %v694
          %v696 = vld [vmem:[%s596 + $0xe0] sm:%s589]
          %697 = vst [vmem:[%s597 + $0xc4] sm:%s589] %v696
          %v698 = vld [vmem:[%s596 + $0xc4] sm:%s589]
          %699 = vst [vmem:[%s597 + $0xc8] sm:%s589] %v698
          %v700 = vld [vmem:[%s596 + $0xe4] sm:%s589]
          %701 = vst [vmem:[%s597 + $0xcc] sm:%s589] %v700
          %v702 = vld [vmem:[%s596 + $0xc8] sm:%s589]
          %703 = vst [vmem:[%s597 + $0xd0] sm:%s589] %v702
          %v704 = vld [vmem:[%s596 + $0xe8] sm:%s589]
          %705 = vst [vmem:[%s597 + $0xd4] sm:%s589] %v704
          %v706 = vld [vmem:[%s596 + $0xcc] sm:%s589]
          %707 = vst [vmem:[%s597 + $0xd8] sm:%s589] %v706
          %v708 = vld [vmem:[%s596 + $0xec] sm:%s589]
          %709 = vst [vmem:[%s597 + $0xdc] sm:%s589] %v708
          %v710 = vld [vmem:[%s596 + $0xd0] sm:%s589]
          %711 = vst [vmem:[%s597 + $0xe0] sm:%s589] %v710
          %v712 = vld [vmem:[%s596 + $0xf0] sm:%s589]
          %713 = vst [vmem:[%s597 + $0xe4] sm:%s589] %v712
          %v714 = vld [vmem:[%s596 + $0xd4] sm:%s589]
          %715 = vst [vmem:[%s597 + $0xe8] sm:%s589] %v714
          %v716 = vld [vmem:[%s596 + $0xf4] sm:%s589]
          %717 = vst [vmem:[%s597 + $0xec] sm:%s589] %v716
          %v718 = vld [vmem:[%s596 + $0xd8] sm:%s589]
          %719 = vst [vmem:[%s597 + $0xf0] sm:%s589] %v718
          %v720 = vld [vmem:[%s596 + $0xf8] sm:%s589]
          %721 = vst [vmem:[%s597 + $0xf4] sm:%s589] %v720
          %v722 = vld [vmem:[%s596 + $0xdc] sm:%s589]
          %723 = vst [vmem:[%s597 + $0xf8] sm:%s589] %v722
          %v724 = vld [vmem:[%s596 + $0xfc] sm:%s589]
          %725 = vst [vmem:[%s597 + $0xfc] sm:%s589] %v724
          %v726 = vld [vmem:[%s596 + $0x100] sm:%s589]
          %727 = vst [vmem:[%s597 + $0x100] sm:%s589] %v726
          %v728 = vld [vmem:[%s596 + $0x120] sm:%s589]
          %729 = vst [vmem:[%s597 + $0x104] sm:%s589] %v728
          %v730 = vld [vmem:[%s596 + $0x104] sm:%s589]
          %731 = vst [vmem:[%s597 + $0x108] sm:%s589] %v730
          %v732 = vld [vmem:[%s596 + $0x124] sm:%s589]
          %733 = vst [vmem:[%s597 + $0x10c] sm:%s589] %v732
          %v734 = vld [vmem:[%s596 + $0x108] sm:%s589]
          %735 = vst [vmem:[%s597 + $0x110] sm:%s589] %v734
          %v736 = vld [vmem:[%s596 + $0x128] sm:%s589]
          %737 = vst [vmem:[%s597 + $0x114] sm:%s589] %v736
          %v738 = vld [vmem:[%s596 + $0x10c] sm:%s589]
          %739 = vst [vmem:[%s597 + $0x118] sm:%s589] %v738
          %v740 = vld [vmem:[%s596 + $0x12c] sm:%s589]
          %741 = vst [vmem:[%s597 + $0x11c] sm:%s589] %v740
          %v742 = vld [vmem:[%s596 + $0x110] sm:%s589]
          %743 = vst [vmem:[%s597 + $0x120] sm:%s589] %v742
          %v744 = vld [vmem:[%s596 + $0x130] sm:%s589]
          %745 = vst [vmem:[%s597 + $0x124] sm:%s589] %v744
          %v746 = vld [vmem:[%s596 + $0x114] sm:%s589]
          %747 = vst [vmem:[%s597 + $0x128] sm:%s589] %v746
          %v748 = vld [vmem:[%s596 + $0x134] sm:%s589]
          %749 = vst [vmem:[%s597 + $0x12c] sm:%s589] %v748
          %v750 = vld [vmem:[%s596 + $0x118] sm:%s589]
          %751 = vst [vmem:[%s597 + $0x130] sm:%s589] %v750
          %v752 = vld [vmem:[%s596 + $0x138] sm:%s589]
          %753 = vst [vmem:[%s597 + $0x134] sm:%s589] %v752
          %v754 = vld [vmem:[%s596 + $0x11c] sm:%s589]
          %755 = vst [vmem:[%s597 + $0x138] sm:%s589] %v754
          %v756 = vld [vmem:[%s596 + $0x13c] sm:%s589]
          %757 = vst [vmem:[%s597 + $0x13c] sm:%s589] %v756
          %v758 = vld [vmem:[%s596 + $0x140] sm:%s589]
          %759 = vst [vmem:[%s597 + $0x140] sm:%s589] %v758
          %v760 = vld [vmem:[%s596 + $0x160] sm:%s589]
          %761 = vst [vmem:[%s597 + $0x144] sm:%s589] %v760
          %v762 = vld [vmem:[%s596 + $0x144] sm:%s589]
          %763 = vst [vmem:[%s597 + $0x148] sm:%s589] %v762
          %v764 = vld [vmem:[%s596 + $0x164] sm:%s589]
          %765 = vst [vmem:[%s597 + $0x14c] sm:%s589] %v764
          %v766 = vld [vmem:[%s596 + $0x148] sm:%s589]
          %767 = vst [vmem:[%s597 + $0x150] sm:%s589] %v766
          %v768 = vld [vmem:[%s596 + $0x168] sm:%s589]
          %769 = vst [vmem:[%s597 + $0x154] sm:%s589] %v768
          %v770 = vld [vmem:[%s596 + $0x14c] sm:%s589]
          %771 = vst [vmem:[%s597 + $0x158] sm:%s589] %v770
          %v772 = vld [vmem:[%s596 + $0x16c] sm:%s589]
          %773 = vst [vmem:[%s597 + $0x15c] sm:%s589] %v772
          %v774 = vld [vmem:[%s596 + $0x150] sm:%s589]
          %775 = vst [vmem:[%s597 + $0x160] sm:%s589] %v774
          %v776 = vld [vmem:[%s596 + $0x170] sm:%s589]
          %777 = vst [vmem:[%s597 + $0x164] sm:%s589] %v776
          %v778 = vld [vmem:[%s596 + $0x154] sm:%s589]
          %779 = vst [vmem:[%s597 + $0x168] sm:%s589] %v778
          %v780 = vld [vmem:[%s596 + $0x174] sm:%s589]
          %781 = vst [vmem:[%s597 + $0x16c] sm:%s589] %v780
          %v782 = vld [vmem:[%s596 + $0x158] sm:%s589]
          %783 = vst [vmem:[%s597 + $0x170] sm:%s589] %v782
          %v784 = vld [vmem:[%s596 + $0x178] sm:%s589]
          %785 = vst [vmem:[%s597 + $0x174] sm:%s589] %v784
          %v786 = vld [vmem:[%s596 + $0x15c] sm:%s589]
          %787 = vst [vmem:[%s597 + $0x178] sm:%s589] %v786
          %v788 = vld [vmem:[%s596 + $0x17c] sm:%s589]
          %789 = vst [vmem:[%s597 + $0x17c] sm:%s589] %v788
          %v790 = vld [vmem:[%s596 + $0x180] sm:%s589]
          %791 = vst [vmem:[%s597 + $0x180] sm:%s589] %v790
          %v792 = vld [vmem:[%s596 + $0x1a0] sm:%s589]
          %793 = vst [vmem:[%s597 + $0x184] sm:%s589] %v792
          %v794 = vld [vmem:[%s596 + $0x184] sm:%s589]
          %795 = vst [vmem:[%s597 + $0x188] sm:%s589] %v794
          %v796 = vld [vmem:[%s596 + $0x1a4] sm:%s589]
          %797 = vst [vmem:[%s597 + $0x18c] sm:%s589] %v796
          %v798 = vld [vmem:[%s596 + $0x188] sm:%s589]
          %799 = vst [vmem:[%s597 + $0x190] sm:%s589] %v798
          %v800 = vld [vmem:[%s596 + $0x1a8] sm:%s589]
          %801 = vst [vmem:[%s597 + $0x194] sm:%s589] %v800
          %v802 = vld [vmem:[%s596 + $0x18c] sm:%s589]
          %803 = vst [vmem:[%s597 + $0x198] sm:%s589] %v802
          %v804 = vld [vmem:[%s596 + $0x1ac] sm:%s589]
          %805 = vst [vmem:[%s597 + $0x19c] sm:%s589] %v804
          %v806 = vld [vmem:[%s596 + $0x190] sm:%s589]
          %807 = vst [vmem:[%s597 + $0x1a0] sm:%s589] %v806
          %v808 = vld [vmem:[%s596 + $0x1b0] sm:%s589]
          %809 = vst [vmem:[%s597 + $0x1a4] sm:%s589] %v808
          %v810 = vld [vmem:[%s596 + $0x194] sm:%s589]
          %811 = vst [vmem:[%s597 + $0x1a8] sm:%s589] %v810
          %v812 = vld [vmem:[%s596 + $0x1b4] sm:%s589]
          %813 = vst [vmem:[%s597 + $0x1ac] sm:%s589] %v812
          %v814 = vld [vmem:[%s596 + $0x198] sm:%s589]
          %815 = vst [vmem:[%s597 + $0x1b0] sm:%s589] %v814
          %v816 = vld [vmem:[%s596 + $0x1b8] sm:%s589]
          %817 = vst [vmem:[%s597 + $0x1b4] sm:%s589] %v816
          %v818 = vld [vmem:[%s596 + $0x19c] sm:%s589]
          %819 = vst [vmem:[%s597 + $0x1b8] sm:%s589] %v818
          %v820 = vld [vmem:[%s596 + $0x1bc] sm:%s589]
          %821 = vst [vmem:[%s597 + $0x1bc] sm:%s589] %v820
          %v822 = vld [vmem:[%s596 + $0x1c0] sm:%s589]
          %823 = vst [vmem:[%s597 + $0x1c0] sm:%s589] %v822
          %v824 = vld [vmem:[%s596 + $0x1e0] sm:%s589]
          %825 = vst [vmem:[%s597 + $0x1c4] sm:%s589] %v824
          %v826 = vld [vmem:[%s596 + $0x1c4] sm:%s589]
          %827 = vst [vmem:[%s597 + $0x1c8] sm:%s589] %v826
          %v828 = vld [vmem:[%s596 + $0x1e4] sm:%s589]
          %829 = vst [vmem:[%s597 + $0x1cc] sm:%s589] %v828
          %v830 = vld [vmem:[%s596 + $0x1c8] sm:%s589]
          %831 = vst [vmem:[%s597 + $0x1d0] sm:%s589] %v830
          %v832 = vld [vmem:[%s596 + $0x1e8] sm:%s589]
          %833 = vst [vmem:[%s597 + $0x1d4] sm:%s589] %v832
          %v834 = vld [vmem:[%s596 + $0x1cc] sm:%s589]
          %835 = vst [vmem:[%s597 + $0x1d8] sm:%s589] %v834
          %v836 = vld [vmem:[%s596 + $0x1ec] sm:%s589]
          %837 = vst [vmem:[%s597 + $0x1dc] sm:%s589] %v836
          %v838 = vld [vmem:[%s596 + $0x1d0] sm:%s589]
          %839 = vst [vmem:[%s597 + $0x1e0] sm:%s589] %v838
          %v840 = vld [vmem:[%s596 + $0x1f0] sm:%s589]
          %841 = vst [vmem:[%s597 + $0x1e4] sm:%s589] %v840
          %v842 = vld [vmem:[%s596 + $0x1d4] sm:%s589]
          %843 = vst [vmem:[%s597 + $0x1e8] sm:%s589] %v842
          %v844 = vld [vmem:[%s596 + $0x1f4] sm:%s589]
          %845 = vst [vmem:[%s597 + $0x1ec] sm:%s589] %v844
          %v846 = vld [vmem:[%s596 + $0x1d8] sm:%s589]
          %847 = vst [vmem:[%s597 + $0x1f0] sm:%s589] %v846
          %v848 = vld [vmem:[%s596 + $0x1f8] sm:%s589]
          %849 = vst [vmem:[%s597 + $0x1f4] sm:%s589] %v848
          %v850 = vld [vmem:[%s596 + $0x1dc] sm:%s589]
          %851 = vst [vmem:[%s597 + $0x1f8] sm:%s589] %v850
          %v852 = vld [vmem:[%s596 + $0x1fc] sm:%s589]
          %853 = vst [vmem:[%s597 + $0x1fc] sm:%s589] %v852
          %v854 = vld [vmem:[%s596 + $0x200] sm:%s589]
          %855 = vst [vmem:[%s597 + $0x200] sm:%s589] %v854
          %v856 = vld [vmem:[%s596 + $0x220] sm:%s589]
          %857 = vst [vmem:[%s597 + $0x204] sm:%s589] %v856
          %v858 = vld [vmem:[%s596 + $0x204] sm:%s589]
          %859 = vst [vmem:[%s597 + $0x208] sm:%s589] %v858
          %v860 = vld [vmem:[%s596 + $0x224] sm:%s589]
          %861 = vst [vmem:[%s597 + $0x20c] sm:%s589] %v860
          %v862 = vld [vmem:[%s596 + $0x208] sm:%s589]
          %863 = vst [vmem:[%s597 + $0x210] sm:%s589] %v862
          %v864 = vld [vmem:[%s596 + $0x228] sm:%s589]
          %865 = vst [vmem:[%s597 + $0x214] sm:%s589] %v864
          %v866 = vld [vmem:[%s596 + $0x20c] sm:%s589]
          %867 = vst [vmem:[%s597 + $0x218] sm:%s589] %v866
          %v868 = vld [vmem:[%s596 + $0x22c] sm:%s589]
          %869 = vst [vmem:[%s597 + $0x21c] sm:%s589] %v868
          %v870 = vld [vmem:[%s596 + $0x210] sm:%s589]
          %871 = vst [vmem:[%s597 + $0x220] sm:%s589] %v870
          %v872 = vld [vmem:[%s596 + $0x230] sm:%s589]
          %873 = vst [vmem:[%s597 + $0x224] sm:%s589] %v872
          %v874 = vld [vmem:[%s596 + $0x214] sm:%s589]
          %875 = vst [vmem:[%s597 + $0x228] sm:%s589] %v874
          %v876 = vld [vmem:[%s596 + $0x234] sm:%s589]
          %877 = vst [vmem:[%s597 + $0x22c] sm:%s589] %v876
          %v878 = vld [vmem:[%s596 + $0x218] sm:%s589]
          %879 = vst [vmem:[%s597 + $0x230] sm:%s589] %v878
          %v880 = vld [vmem:[%s596 + $0x238] sm:%s589]
          %881 = vst [vmem:[%s597 + $0x234] sm:%s589] %v880
          %v882 = vld [vmem:[%s596 + $0x21c] sm:%s589]
          %883 = vst [vmem:[%s597 + $0x238] sm:%s589] %v882
          %v884 = vld [vmem:[%s596 + $0x23c] sm:%s589]
          %885 = vst [vmem:[%s597 + $0x23c] sm:%s589] %v884
          %v886 = vld [vmem:[%s596 + $0x240] sm:%s589]
          %887 = vst [vmem:[%s597 + $0x240] sm:%s589] %v886
          %v888 = vld [vmem:[%s596 + $0x260] sm:%s589]
          %889 = vst [vmem:[%s597 + $0x244] sm:%s589] %v888
          %v890 = vld [vmem:[%s596 + $0x244] sm:%s589]
          %891 = vst [vmem:[%s597 + $0x248] sm:%s589] %v890
          %v892 = vld [vmem:[%s596 + $0x264] sm:%s589]
          %893 = vst [vmem:[%s597 + $0x24c] sm:%s589] %v892
          %v894 = vld [vmem:[%s596 + $0x248] sm:%s589]
          %895 = vst [vmem:[%s597 + $0x250] sm:%s589] %v894
          %v896 = vld [vmem:[%s596 + $0x268] sm:%s589]
          %897 = vst [vmem:[%s597 + $0x254] sm:%s589] %v896
          %v898 = vld [vmem:[%s596 + $0x24c] sm:%s589]
          %899 = vst [vmem:[%s597 + $0x258] sm:%s589] %v898
          %v900 = vld [vmem:[%s596 + $0x26c] sm:%s589]
          %901 = vst [vmem:[%s597 + $0x25c] sm:%s589] %v900
          %v902 = vld [vmem:[%s596 + $0x250] sm:%s589]
          %903 = vst [vmem:[%s597 + $0x260] sm:%s589] %v902
          %v904 = vld [vmem:[%s596 + $0x270] sm:%s589]
          %905 = vst [vmem:[%s597 + $0x264] sm:%s589] %v904
          %v906 = vld [vmem:[%s596 + $0x254] sm:%s589]
          %907 = vst [vmem:[%s597 + $0x268] sm:%s589] %v906
          %v908 = vld [vmem:[%s596 + $0x274] sm:%s589]
          %909 = vst [vmem:[%s597 + $0x26c] sm:%s589] %v908
          %v910 = vld [vmem:[%s596 + $0x258] sm:%s589]
          %911 = vst [vmem:[%s597 + $0x270] sm:%s589] %v910
          %v912 = vld [vmem:[%s596 + $0x278] sm:%s589]
          %913 = vst [vmem:[%s597 + $0x274] sm:%s589] %v912
          %v914 = vld [vmem:[%s596 + $0x25c] sm:%s589]
          %915 = vst [vmem:[%s597 + $0x278] sm:%s589] %v914
          %v916 = vld [vmem:[%s596 + $0x27c] sm:%s589]
          %917 = vst [vmem:[%s597 + $0x27c] sm:%s589] %v916
          %v918 = vld [vmem:[%s596 + $0x280] sm:%s589]
          %919 = vst [vmem:[%s597 + $0x280] sm:%s589] %v918
          %v920 = vld [vmem:[%s596 + $0x2a0] sm:%s589]
          %921 = vst [vmem:[%s597 + $0x284] sm:%s589] %v920
          %v922 = vld [vmem:[%s596 + $0x284] sm:%s589]
          %923 = vst [vmem:[%s597 + $0x288] sm:%s589] %v922
          %v924 = vld [vmem:[%s596 + $0x2a4] sm:%s589]
          %925 = vst [vmem:[%s597 + $0x28c] sm:%s589] %v924
          %v926 = vld [vmem:[%s596 + $0x288] sm:%s589]
          %927 = vst [vmem:[%s597 + $0x290] sm:%s589] %v926
          %v928 = vld [vmem:[%s596 + $0x2a8] sm:%s589]
          %929 = vst [vmem:[%s597 + $0x294] sm:%s589] %v928
          %v930 = vld [vmem:[%s596 + $0x28c] sm:%s589]
          %931 = vst [vmem:[%s597 + $0x298] sm:%s589] %v930
          %v932 = vld [vmem:[%s596 + $0x2ac] sm:%s589]
          %933 = vst [vmem:[%s597 + $0x29c] sm:%s589] %v932
          %v934 = vld [vmem:[%s596 + $0x290] sm:%s589]
          %935 = vst [vmem:[%s597 + $0x2a0] sm:%s589] %v934
          %v936 = vld [vmem:[%s596 + $0x2b0] sm:%s589]
          %937 = vst [vmem:[%s597 + $0x2a4] sm:%s589] %v936
          %v938 = vld [vmem:[%s596 + $0x294] sm:%s589]
          %939 = vst [vmem:[%s597 + $0x2a8] sm:%s589] %v938
          %v940 = vld [vmem:[%s596 + $0x2b4] sm:%s589]
          %941 = vst [vmem:[%s597 + $0x2ac] sm:%s589] %v940
          %v942 = vld [vmem:[%s596 + $0x298] sm:%s589]
          %943 = vst [vmem:[%s597 + $0x2b0] sm:%s589] %v942
          %v944 = vld [vmem:[%s596 + $0x2b8] sm:%s589]
          %945 = vst [vmem:[%s597 + $0x2b4] sm:%s589] %v944
          %v946 = vld [vmem:[%s596 + $0x29c] sm:%s589]
          %947 = vst [vmem:[%s597 + $0x2b8] sm:%s589] %v946
          %v948 = vld [vmem:[%s596 + $0x2bc] sm:%s589]
          %949 = vst [vmem:[%s597 + $0x2bc] sm:%s589] %v948
          %v950 = vld [vmem:[%s596 + $0x2c0] sm:%s589]
          %951 = vst [vmem:[%s597 + $0x2c0] sm:%s589] %v950
          %v952 = vld [vmem:[%s596 + $0x2e0] sm:%s589]
          %953 = vst [vmem:[%s597 + $0x2c4] sm:%s589] %v952
          %v954 = vld [vmem:[%s596 + $0x2c4] sm:%s589]
          %955 = vst [vmem:[%s597 + $0x2c8] sm:%s589] %v954
          %v956 = vld [vmem:[%s596 + $0x2e4] sm:%s589]
          %957 = vst [vmem:[%s597 + $0x2cc] sm:%s589] %v956
          %v958 = vld [vmem:[%s596 + $0x2c8] sm:%s589]
          %959 = vst [vmem:[%s597 + $0x2d0] sm:%s589] %v958
          %v960 = vld [vmem:[%s596 + $0x2e8] sm:%s589]
          %961 = vst [vmem:[%s597 + $0x2d4] sm:%s589] %v960
          %v962 = vld [vmem:[%s596 + $0x2cc] sm:%s589]
          %963 = vst [vmem:[%s597 + $0x2d8] sm:%s589] %v962
          %v964 = vld [vmem:[%s596 + $0x2ec] sm:%s589]
          %965 = vst [vmem:[%s597 + $0x2dc] sm:%s589] %v964
          %v966 = vld [vmem:[%s596 + $0x2d0] sm:%s589]
          %967 = vst [vmem:[%s597 + $0x2e0] sm:%s589] %v966
          %v968 = vld [vmem:[%s596 + $0x2f0] sm:%s589]
          %969 = vst [vmem:[%s597 + $0x2e4] sm:%s589] %v968
          %v970 = vld [vmem:[%s596 + $0x2d4] sm:%s589]
          %971 = vst [vmem:[%s597 + $0x2e8] sm:%s589] %v970
          %v972 = vld [vmem:[%s596 + $0x2f4] sm:%s589]
          %973 = vst [vmem:[%s597 + $0x2ec] sm:%s589] %v972
          %v974 = vld [vmem:[%s596 + $0x2d8] sm:%s589]
          %975 = vst [vmem:[%s597 + $0x2f0] sm:%s589] %v974
          %v976 = vld [vmem:[%s596 + $0x2f8] sm:%s589]
          %977 = vst [vmem:[%s597 + $0x2f4] sm:%s589] %v976
          %v978 = vld [vmem:[%s596 + $0x2dc] sm:%s589]
          %979 = vst [vmem:[%s597 + $0x2f8] sm:%s589] %v978
          %v980 = vld [vmem:[%s596 + $0x2fc] sm:%s589]
          %981 = vst [vmem:[%s597 + $0x2fc] sm:%s589] %v980
          %v982 = vld [vmem:[%s596 + $0x300] sm:%s589]
          %983 = vst [vmem:[%s597 + $0x300] sm:%s589] %v982
          %v984 = vld [vmem:[%s596 + $0x320] sm:%s589]
          %985 = vst [vmem:[%s597 + $0x304] sm:%s589] %v984
          %v986 = vld [vmem:[%s596 + $0x304] sm:%s589]
          %987 = vst [vmem:[%s597 + $0x308] sm:%s589] %v986
          %v988 = vld [vmem:[%s596 + $0x324] sm:%s589]
          %989 = vst [vmem:[%s597 + $0x30c] sm:%s589] %v988
          %v990 = vld [vmem:[%s596 + $0x308] sm:%s589]
          %991 = vst [vmem:[%s597 + $0x310] sm:%s589] %v990
          %v992 = vld [vmem:[%s596 + $0x328] sm:%s589]
          %993 = vst [vmem:[%s597 + $0x314] sm:%s589] %v992
          %v994 = vld [vmem:[%s596 + $0x30c] sm:%s589]
          %995 = vst [vmem:[%s597 + $0x318] sm:%s589] %v994
          %v996 = vld [vmem:[%s596 + $0x32c] sm:%s589]
          %997 = vst [vmem:[%s597 + $0x31c] sm:%s589] %v996
          %v998 = vld [vmem:[%s596 + $0x310] sm:%s589]
          %999 = vst [vmem:[%s597 + $0x320] sm:%s589] %v998
          %v1000 = vld [vmem:[%s596 + $0x330] sm:%s589]
          %1001 = vst [vmem:[%s597 + $0x324] sm:%s589] %v1000
          %v1002 = vld [vmem:[%s596 + $0x314] sm:%s589]
          %1003 = vst [vmem:[%s597 + $0x328] sm:%s589] %v1002
          %v1004 = vld [vmem:[%s596 + $0x334] sm:%s589]
          %1005 = vst [vmem:[%s597 + $0x32c] sm:%s589] %v1004
          %v1006 = vld [vmem:[%s596 + $0x318] sm:%s589]
          %1007 = vst [vmem:[%s597 + $0x330] sm:%s589] %v1006
          %v1008 = vld [vmem:[%s596 + $0x338] sm:%s589]
          %1009 = vst [vmem:[%s597 + $0x334] sm:%s589] %v1008
          %v1010 = vld [vmem:[%s596 + $0x31c] sm:%s589]
          %1011 = vst [vmem:[%s597 + $0x338] sm:%s589] %v1010
          %v1012 = vld [vmem:[%s596 + $0x33c] sm:%s589]
          %1013 = vst [vmem:[%s597 + $0x33c] sm:%s589] %v1012
          %v1014 = vld [vmem:[%s596 + $0x340] sm:%s589]
          %1015 = vst [vmem:[%s597 + $0x340] sm:%s589] %v1014
          %v1016 = vld [vmem:[%s596 + $0x360] sm:%s589]
          %1017 = vst [vmem:[%s597 + $0x344] sm:%s589] %v1016
          %v1018 = vld [vmem:[%s596 + $0x344] sm:%s589]
          %1019 = vst [vmem:[%s597 + $0x348] sm:%s589] %v1018
          %v1020 = vld [vmem:[%s596 + $0x364] sm:%s589]
          %1021 = vst [vmem:[%s597 + $0x34c] sm:%s589] %v1020
          %v1022 = vld [vmem:[%s596 + $0x348] sm:%s589]
          %1023 = vst [vmem:[%s597 + $0x350] sm:%s589] %v1022
          %v1024 = vld [vmem:[%s596 + $0x368] sm:%s589]
          %1025 = vst [vmem:[%s597 + $0x354] sm:%s589] %v1024
          %v1026 = vld [vmem:[%s596 + $0x34c] sm:%s589]
          %1027 = vst [vmem:[%s597 + $0x358] sm:%s589] %v1026
          %v1028 = vld [vmem:[%s596 + $0x36c] sm:%s589]
          %1029 = vst [vmem:[%s597 + $0x35c] sm:%s589] %v1028
          %v1030 = vld [vmem:[%s596 + $0x350] sm:%s589]
          %1031 = vst [vmem:[%s597 + $0x360] sm:%s589] %v1030
          %v1032 = vld [vmem:[%s596 + $0x370] sm:%s589]
          %1033 = vst [vmem:[%s597 + $0x364] sm:%s589] %v1032
          %v1034 = vld [vmem:[%s596 + $0x354] sm:%s589]
          %1035 = vst [vmem:[%s597 + $0x368] sm:%s589] %v1034
          %v1036 = vld [vmem:[%s596 + $0x374] sm:%s589]
          %1037 = vst [vmem:[%s597 + $0x36c] sm:%s589] %v1036
          %v1038 = vld [vmem:[%s596 + $0x358] sm:%s589]
          %1039 = vst [vmem:[%s597 + $0x370] sm:%s589] %v1038
          %v1040 = vld [vmem:[%s596 + $0x378] sm:%s589]
          %1041 = vst [vmem:[%s597 + $0x374] sm:%s589] %v1040
          %v1042 = vld [vmem:[%s596 + $0x35c] sm:%s589]
          %1043 = vst [vmem:[%s597 + $0x378] sm:%s589] %v1042
          %v1044 = vld [vmem:[%s596 + $0x37c] sm:%s589]
          %1045 = vst [vmem:[%s597 + $0x37c] sm:%s589] %v1044
          %v1046 = vld [vmem:[%s596 + $0x380] sm:%s589]
          %1047 = vst [vmem:[%s597 + $0x380] sm:%s589] %v1046
          %v1048 = vld [vmem:[%s596 + $0x3a0] sm:%s589]
          %1049 = vst [vmem:[%s597 + $0x384] sm:%s589] %v1048
          %v1050 = vld [vmem:[%s596 + $0x384] sm:%s589]
          %1051 = vst [vmem:[%s597 + $0x388] sm:%s589] %v1050
          %v1052 = vld [vmem:[%s596 + $0x3a4] sm:%s589]
          %1053 = vst [vmem:[%s597 + $0x38c] sm:%s589] %v1052
          %v1054 = vld [vmem:[%s596 + $0x388] sm:%s589]
          %1055 = vst [vmem:[%s597 + $0x390] sm:%s589] %v1054
          %v1056 = vld [vmem:[%s596 + $0x3a8] sm:%s589]
          %1057 = vst [vmem:[%s597 + $0x394] sm:%s589] %v1056
          %v1058 = vld [vmem:[%s596 + $0x38c] sm:%s589]
          %1059 = vst [vmem:[%s597 + $0x398] sm:%s589] %v1058
          %v1060 = vld [vmem:[%s596 + $0x3ac] sm:%s589]
          %1061 = vst [vmem:[%s597 + $0x39c] sm:%s589] %v1060
          %v1062 = vld [vmem:[%s596 + $0x390] sm:%s589]
          %1063 = vst [vmem:[%s597 + $0x3a0] sm:%s589] %v1062
          %v1064 = vld [vmem:[%s596 + $0x3b0] sm:%s589]
          %1065 = vst [vmem:[%s597 + $0x3a4] sm:%s589] %v1064
          %v1066 = vld [vmem:[%s596 + $0x394] sm:%s589]
          %1067 = vst [vmem:[%s597 + $0x3a8] sm:%s589] %v1066
          %v1068 = vld [vmem:[%s596 + $0x3b4] sm:%s589]
          %1069 = vst [vmem:[%s597 + $0x3ac] sm:%s589] %v1068
          %v1070 = vld [vmem:[%s596 + $0x398] sm:%s589]
          %1071 = vst [vmem:[%s597 + $0x3b0] sm:%s589] %v1070
          %v1072 = vld [vmem:[%s596 + $0x3b8] sm:%s589]
          %1073 = vst [vmem:[%s597 + $0x3b4] sm:%s589] %v1072
          %v1074 = vld [vmem:[%s596 + $0x39c] sm:%s589]
          %1075 = vst [vmem:[%s597 + $0x3b8] sm:%s589] %v1074
          %v1076 = vld [vmem:[%s596 + $0x3bc] sm:%s589]
          %1077 = vst [vmem:[%s597 + $0x3bc] sm:%s589] %v1076
          %v1078 = vld [vmem:[%s596 + $0x3c0] sm:%s589]
          %1079 = vst [vmem:[%s597 + $0x3c0] sm:%s589] %v1078
          %v1080 = vld [vmem:[%s596 + $0x3e0] sm:%s589]
          %1081 = vst [vmem:[%s597 + $0x3c4] sm:%s589] %v1080
          %v1082 = vld [vmem:[%s596 + $0x3c4] sm:%s589]
          %1083 = vst [vmem:[%s597 + $0x3c8] sm:%s589] %v1082
          %v1084 = vld [vmem:[%s596 + $0x3e4] sm:%s589]
          %1085 = vst [vmem:[%s597 + $0x3cc] sm:%s589] %v1084
          %v1086 = vld [vmem:[%s596 + $0x3c8] sm:%s589]
          %1087 = vst [vmem:[%s597 + $0x3d0] sm:%s589] %v1086
          %v1088 = vld [vmem:[%s596 + $0x3e8] sm:%s589]
          %1089 = vst [vmem:[%s597 + $0x3d4] sm:%s589] %v1088
          %v1090 = vld [vmem:[%s596 + $0x3cc] sm:%s589]
          %1091 = vst [vmem:[%s597 + $0x3d8] sm:%s589] %v1090
          %v1092 = vld [vmem:[%s596 + $0x3ec] sm:%s589]
          %1093 = vst [vmem:[%s597 + $0x3dc] sm:%s589] %v1092
          %v1094 = vld [vmem:[%s596 + $0x3d0] sm:%s589]
          %1095 = vst [vmem:[%s597 + $0x3e0] sm:%s589] %v1094
          %v1096 = vld [vmem:[%s596 + $0x3f0] sm:%s589]
          %1097 = vst [vmem:[%s597 + $0x3e4] sm:%s589] %v1096
          %v1098 = vld [vmem:[%s596 + $0x3d4] sm:%s589]
          %1099 = vst [vmem:[%s597 + $0x3e8] sm:%s589] %v1098
          %v1100 = vld [vmem:[%s596 + $0x3f4] sm:%s589]
          %1101 = vst [vmem:[%s597 + $0x3ec] sm:%s589] %v1100
          %v1102 = vld [vmem:[%s596 + $0x3d8] sm:%s589]
          %1103 = vst [vmem:[%s597 + $0x3f0] sm:%s589] %v1102
          %v1104 = vld [vmem:[%s596 + $0x3f8] sm:%s589]
          %1105 = vst [vmem:[%s597 + $0x3f4] sm:%s589] %v1104
          %v1106 = vld [vmem:[%s596 + $0x3dc] sm:%s589]
          %1107 = vst [vmem:[%s597 + $0x3f8] sm:%s589] %v1106
          %v1108 = vld [vmem:[%s596 + $0x3fc] sm:%s589]
          %1109 = vst [vmem:[%s597 + $0x3fc] sm:%s589] %v1108
        $region76: #{_lambda_.1} parent=63 // loop_footer
          %s595 = sadd.s32 1, %s591
        $region77: #{_lambda_.1} parent=63 // loop_footer_branch
          %590 = sbr.rel target = $region73
        $region78: #{_lambda_.1} parent=63 // loop_exit
          _
      $region64: #{_lambda_.1} parent=48 // pred_fallthru
        _
    $region49: #{_lambda_.1} parent=1 // pred_fallthru
      _
    // Predicated region
    $region50: #{_lambda_.1} parent=1 // pred_check
      %p47 = pneg %p43
    $region51: #{_lambda_.1} parent=1 // pred_check_branch
      %49 = sbr.rel (%p47) target = $region53
    $region52: #{_lambda_.1} parent=1 // pred_region
      %s50 = sshllo.u32 0, 4
      loop: start=0, step=1, limit=1
      $region54: #{_lambda_.1} parent=52 // loop_pre_header
        _
      $region55: #{_lambda_.1} parent=52 // loop_header
        %s52 = sphi 0, %s56
        %p53 = scmp.ge.s32.totalorder %s52, 1
        %s57 = sphi %s4, %s4
        %s58 = sphi [#allocation4], [#allocation4]
      $region56: #{_lambda_.1} parent=52 // loop_header_branch
        %55 = sbr.rel (%p53) target = $region60
      $region57: #{_lambda_.1} parent=52 // loop_body
        %v59 = vld [vmem:[%s57] sm:%s50]
        %60 = vst [vmem:[%s58] sm:%s50] %v59
        %v61 = vld [vmem:[%s57 + $0x20] sm:%s50]
        %62 = vst [vmem:[%s58 + $0x4] sm:%s50] %v61
        %v63 = vld [vmem:[%s57 + $0x4] sm:%s50]
        %64 = vst [vmem:[%s58 + $0x8] sm:%s50] %v63
        %v65 = vld [vmem:[%s57 + $0x24] sm:%s50]
        %66 = vst [vmem:[%s58 + $0xc] sm:%s50] %v65
        %v67 = vld [vmem:[%s57 + $0x8] sm:%s50]
        %68 = vst [vmem:[%s58 + $0x10] sm:%s50] %v67
        %v69 = vld [vmem:[%s57 + $0x28] sm:%s50]
        %70 = vst [vmem:[%s58 + $0x14] sm:%s50] %v69
        %v71 = vld [vmem:[%s57 + $0xc] sm:%s50]
        %72 = vst [vmem:[%s58 + $0x18] sm:%s50] %v71
        %v73 = vld [vmem:[%s57 + $0x2c] sm:%s50]
        %74 = vst [vmem:[%s58 + $0x1c] sm:%s50] %v73
        %v75 = vld [vmem:[%s57 + $0x10] sm:%s50]
        %76 = vst [vmem:[%s58 + $0x20] sm:%s50] %v75
        %v77 = vld [vmem:[%s57 + $0x30] sm:%s50]
        %78 = vst [vmem:[%s58 + $0x24] sm:%s50] %v77
        %v79 = vld [vmem:[%s57 + $0x14] sm:%s50]
        %80 = vst [vmem:[%s58 + $0x28] sm:%s50] %v79
        %v81 = vld [vmem:[%s57 + $0x34] sm:%s50]
        %82 = vst [vmem:[%s58 + $0x2c] sm:%s50] %v81
        %v83 = vld [vmem:[%s57 + $0x18] sm:%s50]
        %84 = vst [vmem:[%s58 + $0x30] sm:%s50] %v83
        %v85 = vld [vmem:[%s57 + $0x38] sm:%s50]
        %86 = vst [vmem:[%s58 + $0x34] sm:%s50] %v85
        %v87 = vld [vmem:[%s57 + $0x1c] sm:%s50]
        %88 = vst [vmem:[%s58 + $0x38] sm:%s50] %v87
        %v89 = vld [vmem:[%s57 + $0x3c] sm:%s50]
        %90 = vst [vmem:[%s58 + $0x3c] sm:%s50] %v89
        %v91 = vld [vmem:[%s57 + $0x40] sm:%s50]
        %92 = vst [vmem:[%s58 + $0x40] sm:%s50] %v91
        %v93 = vld [vmem:[%s57 + $0x60] sm:%s50]
        %94 = vst [vmem:[%s58 + $0x44] sm:%s50] %v93
        %v95 = vld [vmem:[%s57 + $0x44] sm:%s50]
        %96 = vst [vmem:[%s58 + $0x48] sm:%s50] %v95
        %v97 = vld [vmem:[%s57 + $0x64] sm:%s50]
        %98 = vst [vmem:[%s58 + $0x4c] sm:%s50] %v97
        %v99 = vld [vmem:[%s57 + $0x48] sm:%s50]
        %100 = vst [vmem:[%s58 + $0x50] sm:%s50] %v99
        %v101 = vld [vmem:[%s57 + $0x68] sm:%s50]
        %102 = vst [vmem:[%s58 + $0x54] sm:%s50] %v101
        %v103 = vld [vmem:[%s57 + $0x4c] sm:%s50]
        %104 = vst [vmem:[%s58 + $0x58] sm:%s50] %v103
        %v105 = vld [vmem:[%s57 + $0x6c] sm:%s50]
        %106 = vst [vmem:[%s58 + $0x5c] sm:%s50] %v105
        %v107 = vld [vmem:[%s57 + $0x50] sm:%s50]
        %108 = vst [vmem:[%s58 + $0x60] sm:%s50] %v107
        %v109 = vld [vmem:[%s57 + $0x70] sm:%s50]
        %110 = vst [vmem:[%s58 + $0x64] sm:%s50] %v109
        %v111 = vld [vmem:[%s57 + $0x54] sm:%s50]
        %112 = vst [vmem:[%s58 + $0x68] sm:%s50] %v111
        %v113 = vld [vmem:[%s57 + $0x74] sm:%s50]
        %114 = vst [vmem:[%s58 + $0x6c] sm:%s50] %v113
        %v115 = vld [vmem:[%s57 + $0x58] sm:%s50]
        %116 = vst [vmem:[%s58 + $0x70] sm:%s50] %v115
        %v117 = vld [vmem:[%s57 + $0x78] sm:%s50]
        %118 = vst [vmem:[%s58 + $0x74] sm:%s50] %v117
        %v119 = vld [vmem:[%s57 + $0x5c] sm:%s50]
        %120 = vst [vmem:[%s58 + $0x78] sm:%s50] %v119
        %v121 = vld [vmem:[%s57 + $0x7c] sm:%s50]
        %122 = vst [vmem:[%s58 + $0x7c] sm:%s50] %v121
        %v123 = vld [vmem:[%s57 + $0x80] sm:%s50]
        %124 = vst [vmem:[%s58 + $0x80] sm:%s50] %v123
        %v125 = vld [vmem:[%s57 + $0xa0] sm:%s50]
        %126 = vst [vmem:[%s58 + $0x84] sm:%s50] %v125
        %v127 = vld [vmem:[%s57 + $0x84] sm:%s50]
        %128 = vst [vmem:[%s58 + $0x88] sm:%s50] %v127
        %v129 = vld [vmem:[%s57 + $0xa4] sm:%s50]
        %130 = vst [vmem:[%s58 + $0x8c] sm:%s50] %v129
        %v131 = vld [vmem:[%s57 + $0x88] sm:%s50]
        %132 = vst [vmem:[%s58 + $0x90] sm:%s50] %v131
        %v133 = vld [vmem:[%s57 + $0xa8] sm:%s50]
        %134 = vst [vmem:[%s58 + $0x94] sm:%s50] %v133
        %v135 = vld [vmem:[%s57 + $0x8c] sm:%s50]
        %136 = vst [vmem:[%s58 + $0x98] sm:%s50] %v135
        %v137 = vld [vmem:[%s57 + $0xac] sm:%s50]
        %138 = vst [vmem:[%s58 + $0x9c] sm:%s50] %v137
        %v139 = vld [vmem:[%s57 + $0x90] sm:%s50]
        %140 = vst [vmem:[%s58 + $0xa0] sm:%s50] %v139
        %v141 = vld [vmem:[%s57 + $0xb0] sm:%s50]
        %142 = vst [vmem:[%s58 + $0xa4] sm:%s50] %v141
        %v143 = vld [vmem:[%s57 + $0x94] sm:%s50]
        %144 = vst [vmem:[%s58 + $0xa8] sm:%s50] %v143
        %v145 = vld [vmem:[%s57 + $0xb4] sm:%s50]
        %146 = vst [vmem:[%s58 + $0xac] sm:%s50] %v145
        %v147 = vld [vmem:[%s57 + $0x98] sm:%s50]
        %148 = vst [vmem:[%s58 + $0xb0] sm:%s50] %v147
        %v149 = vld [vmem:[%s57 + $0xb8] sm:%s50]
        %150 = vst [vmem:[%s58 + $0xb4] sm:%s50] %v149
        %v151 = vld [vmem:[%s57 + $0x9c] sm:%s50]
        %152 = vst [vmem:[%s58 + $0xb8] sm:%s50] %v151
        %v153 = vld [vmem:[%s57 + $0xbc] sm:%s50]
        %154 = vst [vmem:[%s58 + $0xbc] sm:%s50] %v153
        %v155 = vld [vmem:[%s57 + $0xc0] sm:%s50]
        %156 = vst [vmem:[%s58 + $0xc0] sm:%s50] %v155
        %v157 = vld [vmem:[%s57 + $0xe0] sm:%s50]
        %158 = vst [vmem:[%s58 + $0xc4] sm:%s50] %v157
        %v159 = vld [vmem:[%s57 + $0xc4] sm:%s50]
        %160 = vst [vmem:[%s58 + $0xc8] sm:%s50] %v159
        %v161 = vld [vmem:[%s57 + $0xe4] sm:%s50]
        %162 = vst [vmem:[%s58 + $0xcc] sm:%s50] %v161
        %v163 = vld [vmem:[%s57 + $0xc8] sm:%s50]
        %164 = vst [vmem:[%s58 + $0xd0] sm:%s50] %v163
        %v165 = vld [vmem:[%s57 + $0xe8] sm:%s50]
        %166 = vst [vmem:[%s58 + $0xd4] sm:%s50] %v165
        %v167 = vld [vmem:[%s57 + $0xcc] sm:%s50]
        %168 = vst [vmem:[%s58 + $0xd8] sm:%s50] %v167
        %v169 = vld [vmem:[%s57 + $0xec] sm:%s50]
        %170 = vst [vmem:[%s58 + $0xdc] sm:%s50] %v169
        %v171 = vld [vmem:[%s57 + $0xd0] sm:%s50]
        %172 = vst [vmem:[%s58 + $0xe0] sm:%s50] %v171
        %v173 = vld [vmem:[%s57 + $0xf0] sm:%s50]
        %174 = vst [vmem:[%s58 + $0xe4] sm:%s50] %v173
        %v175 = vld [vmem:[%s57 + $0xd4] sm:%s50]
        %176 = vst [vmem:[%s58 + $0xe8] sm:%s50] %v175
        %v177 = vld [vmem:[%s57 + $0xf4] sm:%s50]
        %178 = vst [vmem:[%s58 + $0xec] sm:%s50] %v177
        %v179 = vld [vmem:[%s57 + $0xd8] sm:%s50]
        %180 = vst [vmem:[%s58 + $0xf0] sm:%s50] %v179
        %v181 = vld [vmem:[%s57 + $0xf8] sm:%s50]
        %182 = vst [vmem:[%s58 + $0xf4] sm:%s50] %v181
        %v183 = vld [vmem:[%s57 + $0xdc] sm:%s50]
        %184 = vst [vmem:[%s58 + $0xf8] sm:%s50] %v183
        %v185 = vld [vmem:[%s57 + $0xfc] sm:%s50]
        %186 = vst [vmem:[%s58 + $0xfc] sm:%s50] %v185
        %v187 = vld [vmem:[%s57 + $0x100] sm:%s50]
        %188 = vst [vmem:[%s58 + $0x100] sm:%s50] %v187
        %v189 = vld [vmem:[%s57 + $0x120] sm:%s50]
        %190 = vst [vmem:[%s58 + $0x104] sm:%s50] %v189
        %v191 = vld [vmem:[%s57 + $0x104] sm:%s50]
        %192 = vst [vmem:[%s58 + $0x108] sm:%s50] %v191
        %v193 = vld [vmem:[%s57 + $0x124] sm:%s50]
        %194 = vst [vmem:[%s58 + $0x10c] sm:%s50] %v193
        %v195 = vld [vmem:[%s57 + $0x108] sm:%s50]
        %196 = vst [vmem:[%s58 + $0x110] sm:%s50] %v195
        %v197 = vld [vmem:[%s57 + $0x128] sm:%s50]
        %198 = vst [vmem:[%s58 + $0x114] sm:%s50] %v197
        %v199 = vld [vmem:[%s57 + $0x10c] sm:%s50]
        %200 = vst [vmem:[%s58 + $0x118] sm:%s50] %v199
        %v201 = vld [vmem:[%s57 + $0x12c] sm:%s50]
        %202 = vst [vmem:[%s58 + $0x11c] sm:%s50] %v201
        %v203 = vld [vmem:[%s57 + $0x110] sm:%s50]
        %204 = vst [vmem:[%s58 + $0x120] sm:%s50] %v203
        %v205 = vld [vmem:[%s57 + $0x130] sm:%s50]
        %206 = vst [vmem:[%s58 + $0x124] sm:%s50] %v205
        %v207 = vld [vmem:[%s57 + $0x114] sm:%s50]
        %208 = vst [vmem:[%s58 + $0x128] sm:%s50] %v207
        %v209 = vld [vmem:[%s57 + $0x134] sm:%s50]
        %210 = vst [vmem:[%s58 + $0x12c] sm:%s50] %v209
        %v211 = vld [vmem:[%s57 + $0x118] sm:%s50]
        %212 = vst [vmem:[%s58 + $0x130] sm:%s50] %v211
        %v213 = vld [vmem:[%s57 + $0x138] sm:%s50]
        %214 = vst [vmem:[%s58 + $0x134] sm:%s50] %v213
        %v215 = vld [vmem:[%s57 + $0x11c] sm:%s50]
        %216 = vst [vmem:[%s58 + $0x138] sm:%s50] %v215
        %v217 = vld [vmem:[%s57 + $0x13c] sm:%s50]
        %218 = vst [vmem:[%s58 + $0x13c] sm:%s50] %v217
        %v219 = vld [vmem:[%s57 + $0x140] sm:%s50]
        %220 = vst [vmem:[%s58 + $0x140] sm:%s50] %v219
        %v221 = vld [vmem:[%s57 + $0x160] sm:%s50]
        %222 = vst [vmem:[%s58 + $0x144] sm:%s50] %v221
        %v223 = vld [vmem:[%s57 + $0x144] sm:%s50]
        %224 = vst [vmem:[%s58 + $0x148] sm:%s50] %v223
        %v225 = vld [vmem:[%s57 + $0x164] sm:%s50]
        %226 = vst [vmem:[%s58 + $0x14c] sm:%s50] %v225
        %v227 = vld [vmem:[%s57 + $0x148] sm:%s50]
        %228 = vst [vmem:[%s58 + $0x150] sm:%s50] %v227
        %v229 = vld [vmem:[%s57 + $0x168] sm:%s50]
        %230 = vst [vmem:[%s58 + $0x154] sm:%s50] %v229
        %v231 = vld [vmem:[%s57 + $0x14c] sm:%s50]
        %232 = vst [vmem:[%s58 + $0x158] sm:%s50] %v231
        %v233 = vld [vmem:[%s57 + $0x16c] sm:%s50]
        %234 = vst [vmem:[%s58 + $0x15c] sm:%s50] %v233
        %v235 = vld [vmem:[%s57 + $0x150] sm:%s50]
        %236 = vst [vmem:[%s58 + $0x160] sm:%s50] %v235
        %v237 = vld [vmem:[%s57 + $0x170] sm:%s50]
        %238 = vst [vmem:[%s58 + $0x164] sm:%s50] %v237
        %v239 = vld [vmem:[%s57 + $0x154] sm:%s50]
        %240 = vst [vmem:[%s58 + $0x168] sm:%s50] %v239
        %v241 = vld [vmem:[%s57 + $0x174] sm:%s50]
        %242 = vst [vmem:[%s58 + $0x16c] sm:%s50] %v241
        %v243 = vld [vmem:[%s57 + $0x158] sm:%s50]
        %244 = vst [vmem:[%s58 + $0x170] sm:%s50] %v243
        %v245 = vld [vmem:[%s57 + $0x178] sm:%s50]
        %246 = vst [vmem:[%s58 + $0x174] sm:%s50] %v245
        %v247 = vld [vmem:[%s57 + $0x15c] sm:%s50]
        %248 = vst [vmem:[%s58 + $0x178] sm:%s50] %v247
        %v249 = vld [vmem:[%s57 + $0x17c] sm:%s50]
        %250 = vst [vmem:[%s58 + $0x17c] sm:%s50] %v249
        %v251 = vld [vmem:[%s57 + $0x180] sm:%s50]
        %252 = vst [vmem:[%s58 + $0x180] sm:%s50] %v251
        %v253 = vld [vmem:[%s57 + $0x1a0] sm:%s50]
        %254 = vst [vmem:[%s58 + $0x184] sm:%s50] %v253
        %v255 = vld [vmem:[%s57 + $0x184] sm:%s50]
        %256 = vst [vmem:[%s58 + $0x188] sm:%s50] %v255
        %v257 = vld [vmem:[%s57 + $0x1a4] sm:%s50]
        %258 = vst [vmem:[%s58 + $0x18c] sm:%s50] %v257
        %v259 = vld [vmem:[%s57 + $0x188] sm:%s50]
        %260 = vst [vmem:[%s58 + $0x190] sm:%s50] %v259
        %v261 = vld [vmem:[%s57 + $0x1a8] sm:%s50]
        %262 = vst [vmem:[%s58 + $0x194] sm:%s50] %v261
        %v263 = vld [vmem:[%s57 + $0x18c] sm:%s50]
        %264 = vst [vmem:[%s58 + $0x198] sm:%s50] %v263
        %v265 = vld [vmem:[%s57 + $0x1ac] sm:%s50]
        %266 = vst [vmem:[%s58 + $0x19c] sm:%s50] %v265
        %v267 = vld [vmem:[%s57 + $0x190] sm:%s50]
        %268 = vst [vmem:[%s58 + $0x1a0] sm:%s50] %v267
        %v269 = vld [vmem:[%s57 + $0x1b0] sm:%s50]
        %270 = vst [vmem:[%s58 + $0x1a4] sm:%s50] %v269
        %v271 = vld [vmem:[%s57 + $0x194] sm:%s50]
        %272 = vst [vmem:[%s58 + $0x1a8] sm:%s50] %v271
        %v273 = vld [vmem:[%s57 + $0x1b4] sm:%s50]
        %274 = vst [vmem:[%s58 + $0x1ac] sm:%s50] %v273
        %v275 = vld [vmem:[%s57 + $0x198] sm:%s50]
        %276 = vst [vmem:[%s58 + $0x1b0] sm:%s50] %v275
        %v277 = vld [vmem:[%s57 + $0x1b8] sm:%s50]
        %278 = vst [vmem:[%s58 + $0x1b4] sm:%s50] %v277
        %v279 = vld [vmem:[%s57 + $0x19c] sm:%s50]
        %280 = vst [vmem:[%s58 + $0x1b8] sm:%s50] %v279
        %v281 = vld [vmem:[%s57 + $0x1bc] sm:%s50]
        %282 = vst [vmem:[%s58 + $0x1bc] sm:%s50] %v281
        %v283 = vld [vmem:[%s57 + $0x1c0] sm:%s50]
        %284 = vst [vmem:[%s58 + $0x1c0] sm:%s50] %v283
        %v285 = vld [vmem:[%s57 + $0x1e0] sm:%s50]
        %286 = vst [vmem:[%s58 + $0x1c4] sm:%s50] %v285
        %v287 = vld [vmem:[%s57 + $0x1c4] sm:%s50]
        %288 = vst [vmem:[%s58 + $0x1c8] sm:%s50] %v287
        %v289 = vld [vmem:[%s57 + $0x1e4] sm:%s50]
        %290 = vst [vmem:[%s58 + $0x1cc] sm:%s50] %v289
        %v291 = vld [vmem:[%s57 + $0x1c8] sm:%s50]
        %292 = vst [vmem:[%s58 + $0x1d0] sm:%s50] %v291
        %v293 = vld [vmem:[%s57 + $0x1e8] sm:%s50]
        %294 = vst [vmem:[%s58 + $0x1d4] sm:%s50] %v293
        %v295 = vld [vmem:[%s57 + $0x1cc] sm:%s50]
        %296 = vst [vmem:[%s58 + $0x1d8] sm:%s50] %v295
        %v297 = vld [vmem:[%s57 + $0x1ec] sm:%s50]
        %298 = vst [vmem:[%s58 + $0x1dc] sm:%s50] %v297
        %v299 = vld [vmem:[%s57 + $0x1d0] sm:%s50]
        %300 = vst [vmem:[%s58 + $0x1e0] sm:%s50] %v299
        %v301 = vld [vmem:[%s57 + $0x1f0] sm:%s50]
        %302 = vst [vmem:[%s58 + $0x1e4] sm:%s50] %v301
        %v303 = vld [vmem:[%s57 + $0x1d4] sm:%s50]
        %304 = vst [vmem:[%s58 + $0x1e8] sm:%s50] %v303
        %v305 = vld [vmem:[%s57 + $0x1f4] sm:%s50]
        %306 = vst [vmem:[%s58 + $0x1ec] sm:%s50] %v305
        %v307 = vld [vmem:[%s57 + $0x1d8] sm:%s50]
        %308 = vst [vmem:[%s58 + $0x1f0] sm:%s50] %v307
        %v309 = vld [vmem:[%s57 + $0x1f8] sm:%s50]
        %310 = vst [vmem:[%s58 + $0x1f4] sm:%s50] %v309
        %v311 = vld [vmem:[%s57 + $0x1dc] sm:%s50]
        %312 = vst [vmem:[%s58 + $0x1f8] sm:%s50] %v311
        %v313 = vld [vmem:[%s57 + $0x1fc] sm:%s50]
        %314 = vst [vmem:[%s58 + $0x1fc] sm:%s50] %v313
        %v315 = vld [vmem:[%s57 + $0x200] sm:%s50]
        %316 = vst [vmem:[%s58 + $0x200] sm:%s50] %v315
        %v317 = vld [vmem:[%s57 + $0x220] sm:%s50]
        %318 = vst [vmem:[%s58 + $0x204] sm:%s50] %v317
        %v319 = vld [vmem:[%s57 + $0x204] sm:%s50]
        %320 = vst [vmem:[%s58 + $0x208] sm:%s50] %v319
        %v321 = vld [vmem:[%s57 + $0x224] sm:%s50]
        %322 = vst [vmem:[%s58 + $0x20c] sm:%s50] %v321
        %v323 = vld [vmem:[%s57 + $0x208] sm:%s50]
        %324 = vst [vmem:[%s58 + $0x210] sm:%s50] %v323
        %v325 = vld [vmem:[%s57 + $0x228] sm:%s50]
        %326 = vst [vmem:[%s58 + $0x214] sm:%s50] %v325
        %v327 = vld [vmem:[%s57 + $0x20c] sm:%s50]
        %328 = vst [vmem:[%s58 + $0x218] sm:%s50] %v327
        %v329 = vld [vmem:[%s57 + $0x22c] sm:%s50]
        %330 = vst [vmem:[%s58 + $0x21c] sm:%s50] %v329
        %v331 = vld [vmem:[%s57 + $0x210] sm:%s50]
        %332 = vst [vmem:[%s58 + $0x220] sm:%s50] %v331
        %v333 = vld [vmem:[%s57 + $0x230] sm:%s50]
        %334 = vst [vmem:[%s58 + $0x224] sm:%s50] %v333
        %v335 = vld [vmem:[%s57 + $0x214] sm:%s50]
        %336 = vst [vmem:[%s58 + $0x228] sm:%s50] %v335
        %v337 = vld [vmem:[%s57 + $0x234] sm:%s50]
        %338 = vst [vmem:[%s58 + $0x22c] sm:%s50] %v337
        %v339 = vld [vmem:[%s57 + $0x218] sm:%s50]
        %340 = vst [vmem:[%s58 + $0x230] sm:%s50] %v339
        %v341 = vld [vmem:[%s57 + $0x238] sm:%s50]
        %342 = vst [vmem:[%s58 + $0x234] sm:%s50] %v341
        %v343 = vld [vmem:[%s57 + $0x21c] sm:%s50]
        %344 = vst [vmem:[%s58 + $0x238] sm:%s50] %v343
        %v345 = vld [vmem:[%s57 + $0x23c] sm:%s50]
        %346 = vst [vmem:[%s58 + $0x23c] sm:%s50] %v345
        %v347 = vld [vmem:[%s57 + $0x240] sm:%s50]
        %348 = vst [vmem:[%s58 + $0x240] sm:%s50] %v347
        %v349 = vld [vmem:[%s57 + $0x260] sm:%s50]
        %350 = vst [vmem:[%s58 + $0x244] sm:%s50] %v349
        %v351 = vld [vmem:[%s57 + $0x244] sm:%s50]
        %352 = vst [vmem:[%s58 + $0x248] sm:%s50] %v351
        %v353 = vld [vmem:[%s57 + $0x264] sm:%s50]
        %354 = vst [vmem:[%s58 + $0x24c] sm:%s50] %v353
        %v355 = vld [vmem:[%s57 + $0x248] sm:%s50]
        %356 = vst [vmem:[%s58 + $0x250] sm:%s50] %v355
        %v357 = vld [vmem:[%s57 + $0x268] sm:%s50]
        %358 = vst [vmem:[%s58 + $0x254] sm:%s50] %v357
        %v359 = vld [vmem:[%s57 + $0x24c] sm:%s50]
        %360 = vst [vmem:[%s58 + $0x258] sm:%s50] %v359
        %v361 = vld [vmem:[%s57 + $0x26c] sm:%s50]
        %362 = vst [vmem:[%s58 + $0x25c] sm:%s50] %v361
        %v363 = vld [vmem:[%s57 + $0x250] sm:%s50]
        %364 = vst [vmem:[%s58 + $0x260] sm:%s50] %v363
        %v365 = vld [vmem:[%s57 + $0x270] sm:%s50]
        %366 = vst [vmem:[%s58 + $0x264] sm:%s50] %v365
        %v367 = vld [vmem:[%s57 + $0x254] sm:%s50]
        %368 = vst [vmem:[%s58 + $0x268] sm:%s50] %v367
        %v369 = vld [vmem:[%s57 + $0x274] sm:%s50]
        %370 = vst [vmem:[%s58 + $0x26c] sm:%s50] %v369
        %v371 = vld [vmem:[%s57 + $0x258] sm:%s50]
        %372 = vst [vmem:[%s58 + $0x270] sm:%s50] %v371
        %v373 = vld [vmem:[%s57 + $0x278] sm:%s50]
        %374 = vst [vmem:[%s58 + $0x274] sm:%s50] %v373
        %v375 = vld [vmem:[%s57 + $0x25c] sm:%s50]
        %376 = vst [vmem:[%s58 + $0x278] sm:%s50] %v375
        %v377 = vld [vmem:[%s57 + $0x27c] sm:%s50]
        %378 = vst [vmem:[%s58 + $0x27c] sm:%s50] %v377
        %v379 = vld [vmem:[%s57 + $0x280] sm:%s50]
        %380 = vst [vmem:[%s58 + $0x280] sm:%s50] %v379
        %v381 = vld [vmem:[%s57 + $0x2a0] sm:%s50]
        %382 = vst [vmem:[%s58 + $0x284] sm:%s50] %v381
        %v383 = vld [vmem:[%s57 + $0x284] sm:%s50]
        %384 = vst [vmem:[%s58 + $0x288] sm:%s50] %v383
        %v385 = vld [vmem:[%s57 + $0x2a4] sm:%s50]
        %386 = vst [vmem:[%s58 + $0x28c] sm:%s50] %v385
        %v387 = vld [vmem:[%s57 + $0x288] sm:%s50]
        %388 = vst [vmem:[%s58 + $0x290] sm:%s50] %v387
        %v389 = vld [vmem:[%s57 + $0x2a8] sm:%s50]
        %390 = vst [vmem:[%s58 + $0x294] sm:%s50] %v389
        %v391 = vld [vmem:[%s57 + $0x28c] sm:%s50]
        %392 = vst [vmem:[%s58 + $0x298] sm:%s50] %v391
        %v393 = vld [vmem:[%s57 + $0x2ac] sm:%s50]
        %394 = vst [vmem:[%s58 + $0x29c] sm:%s50] %v393
        %v395 = vld [vmem:[%s57 + $0x290] sm:%s50]
        %396 = vst [vmem:[%s58 + $0x2a0] sm:%s50] %v395
        %v397 = vld [vmem:[%s57 + $0x2b0] sm:%s50]
        %398 = vst [vmem:[%s58 + $0x2a4] sm:%s50] %v397
        %v399 = vld [vmem:[%s57 + $0x294] sm:%s50]
        %400 = vst [vmem:[%s58 + $0x2a8] sm:%s50] %v399
        %v401 = vld [vmem:[%s57 + $0x2b4] sm:%s50]
        %402 = vst [vmem:[%s58 + $0x2ac] sm:%s50] %v401
        %v403 = vld [vmem:[%s57 + $0x298] sm:%s50]
        %404 = vst [vmem:[%s58 + $0x2b0] sm:%s50] %v403
        %v405 = vld [vmem:[%s57 + $0x2b8] sm:%s50]
        %406 = vst [vmem:[%s58 + $0x2b4] sm:%s50] %v405
        %v407 = vld [vmem:[%s57 + $0x29c] sm:%s50]
        %408 = vst [vmem:[%s58 + $0x2b8] sm:%s50] %v407
        %v409 = vld [vmem:[%s57 + $0x2bc] sm:%s50]
        %410 = vst [vmem:[%s58 + $0x2bc] sm:%s50] %v409
        %v411 = vld [vmem:[%s57 + $0x2c0] sm:%s50]
        %412 = vst [vmem:[%s58 + $0x2c0] sm:%s50] %v411
        %v413 = vld [vmem:[%s57 + $0x2e0] sm:%s50]
        %414 = vst [vmem:[%s58 + $0x2c4] sm:%s50] %v413
        %v415 = vld [vmem:[%s57 + $0x2c4] sm:%s50]
        %416 = vst [vmem:[%s58 + $0x2c8] sm:%s50] %v415
        %v417 = vld [vmem:[%s57 + $0x2e4] sm:%s50]
        %418 = vst [vmem:[%s58 + $0x2cc] sm:%s50] %v417
        %v419 = vld [vmem:[%s57 + $0x2c8] sm:%s50]
        %420 = vst [vmem:[%s58 + $0x2d0] sm:%s50] %v419
        %v421 = vld [vmem:[%s57 + $0x2e8] sm:%s50]
        %422 = vst [vmem:[%s58 + $0x2d4] sm:%s50] %v421
        %v423 = vld [vmem:[%s57 + $0x2cc] sm:%s50]
        %424 = vst [vmem:[%s58 + $0x2d8] sm:%s50] %v423
        %v425 = vld [vmem:[%s57 + $0x2ec] sm:%s50]
        %426 = vst [vmem:[%s58 + $0x2dc] sm:%s50] %v425
        %v427 = vld [vmem:[%s57 + $0x2d0] sm:%s50]
        %428 = vst [vmem:[%s58 + $0x2e0] sm:%s50] %v427
        %v429 = vld [vmem:[%s57 + $0x2f0] sm:%s50]
        %430 = vst [vmem:[%s58 + $0x2e4] sm:%s50] %v429
        %v431 = vld [vmem:[%s57 + $0x2d4] sm:%s50]
        %432 = vst [vmem:[%s58 + $0x2e8] sm:%s50] %v431
        %v433 = vld [vmem:[%s57 + $0x2f4] sm:%s50]
        %434 = vst [vmem:[%s58 + $0x2ec] sm:%s50] %v433
        %v435 = vld [vmem:[%s57 + $0x2d8] sm:%s50]
        %436 = vst [vmem:[%s58 + $0x2f0] sm:%s50] %v435
        %v437 = vld [vmem:[%s57 + $0x2f8] sm:%s50]
        %438 = vst [vmem:[%s58 + $0x2f4] sm:%s50] %v437
        %v439 = vld [vmem:[%s57 + $0x2dc] sm:%s50]
        %440 = vst [vmem:[%s58 + $0x2f8] sm:%s50] %v439
        %v441 = vld [vmem:[%s57 + $0x2fc] sm:%s50]
        %442 = vst [vmem:[%s58 + $0x2fc] sm:%s50] %v441
        %v443 = vld [vmem:[%s57 + $0x300] sm:%s50]
        %444 = vst [vmem:[%s58 + $0x300] sm:%s50] %v443
        %v445 = vld [vmem:[%s57 + $0x320] sm:%s50]
        %446 = vst [vmem:[%s58 + $0x304] sm:%s50] %v445
        %v447 = vld [vmem:[%s57 + $0x304] sm:%s50]
        %448 = vst [vmem:[%s58 + $0x308] sm:%s50] %v447
        %v449 = vld [vmem:[%s57 + $0x324] sm:%s50]
        %450 = vst [vmem:[%s58 + $0x30c] sm:%s50] %v449
        %v451 = vld [vmem:[%s57 + $0x308] sm:%s50]
        %452 = vst [vmem:[%s58 + $0x310] sm:%s50] %v451
        %v453 = vld [vmem:[%s57 + $0x328] sm:%s50]
        %454 = vst [vmem:[%s58 + $0x314] sm:%s50] %v453
        %v455 = vld [vmem:[%s57 + $0x30c] sm:%s50]
        %456 = vst [vmem:[%s58 + $0x318] sm:%s50] %v455
        %v457 = vld [vmem:[%s57 + $0x32c] sm:%s50]
        %458 = vst [vmem:[%s58 + $0x31c] sm:%s50] %v457
        %v459 = vld [vmem:[%s57 + $0x310] sm:%s50]
        %460 = vst [vmem:[%s58 + $0x320] sm:%s50] %v459
        %v461 = vld [vmem:[%s57 + $0x330] sm:%s50]
        %462 = vst [vmem:[%s58 + $0x324] sm:%s50] %v461
        %v463 = vld [vmem:[%s57 + $0x314] sm:%s50]
        %464 = vst [vmem:[%s58 + $0x328] sm:%s50] %v463
        %v465 = vld [vmem:[%s57 + $0x334] sm:%s50]
        %466 = vst [vmem:[%s58 + $0x32c] sm:%s50] %v465
        %v467 = vld [vmem:[%s57 + $0x318] sm:%s50]
        %468 = vst [vmem:[%s58 + $0x330] sm:%s50] %v467
        %v469 = vld [vmem:[%s57 + $0x338] sm:%s50]
        %470 = vst [vmem:[%s58 + $0x334] sm:%s50] %v469
        %v471 = vld [vmem:[%s57 + $0x31c] sm:%s50]
        %472 = vst [vmem:[%s58 + $0x338] sm:%s50] %v471
        %v473 = vld [vmem:[%s57 + $0x33c] sm:%s50]
        %474 = vst [vmem:[%s58 + $0x33c] sm:%s50] %v473
        %v475 = vld [vmem:[%s57 + $0x340] sm:%s50]
        %476 = vst [vmem:[%s58 + $0x340] sm:%s50] %v475
        %v477 = vld [vmem:[%s57 + $0x360] sm:%s50]
        %478 = vst [vmem:[%s58 + $0x344] sm:%s50] %v477
        %v479 = vld [vmem:[%s57 + $0x344] sm:%s50]
        %480 = vst [vmem:[%s58 + $0x348] sm:%s50] %v479
        %v481 = vld [vmem:[%s57 + $0x364] sm:%s50]
        %482 = vst [vmem:[%s58 + $0x34c] sm:%s50] %v481
        %v483 = vld [vmem:[%s57 + $0x348] sm:%s50]
        %484 = vst [vmem:[%s58 + $0x350] sm:%s50] %v483
        %v485 = vld [vmem:[%s57 + $0x368] sm:%s50]
        %486 = vst [vmem:[%s58 + $0x354] sm:%s50] %v485
        %v487 = vld [vmem:[%s57 + $0x34c] sm:%s50]
        %488 = vst [vmem:[%s58 + $0x358] sm:%s50] %v487
        %v489 = vld [vmem:[%s57 + $0x36c] sm:%s50]
        %490 = vst [vmem:[%s58 + $0x35c] sm:%s50] %v489
        %v491 = vld [vmem:[%s57 + $0x350] sm:%s50]
        %492 = vst [vmem:[%s58 + $0x360] sm:%s50] %v491
        %v493 = vld [vmem:[%s57 + $0x370] sm:%s50]
        %494 = vst [vmem:[%s58 + $0x364] sm:%s50] %v493
        %v495 = vld [vmem:[%s57 + $0x354] sm:%s50]
        %496 = vst [vmem:[%s58 + $0x368] sm:%s50] %v495
        %v497 = vld [vmem:[%s57 + $0x374] sm:%s50]
        %498 = vst [vmem:[%s58 + $0x36c] sm:%s50] %v497
        %v499 = vld [vmem:[%s57 + $0x358] sm:%s50]
        %500 = vst [vmem:[%s58 + $0x370] sm:%s50] %v499
        %v501 = vld [vmem:[%s57 + $0x378] sm:%s50]
        %502 = vst [vmem:[%s58 + $0x374] sm:%s50] %v501
        %v503 = vld [vmem:[%s57 + $0x35c] sm:%s50]
        %504 = vst [vmem:[%s58 + $0x378] sm:%s50] %v503
        %v505 = vld [vmem:[%s57 + $0x37c] sm:%s50]
        %506 = vst [vmem:[%s58 + $0x37c] sm:%s50] %v505
        %v507 = vld [vmem:[%s57 + $0x380] sm:%s50]
        %508 = vst [vmem:[%s58 + $0x380] sm:%s50] %v507
        %v509 = vld [vmem:[%s57 + $0x3a0] sm:%s50]
        %510 = vst [vmem:[%s58 + $0x384] sm:%s50] %v509
        %v511 = vld [vmem:[%s57 + $0x384] sm:%s50]
        %512 = vst [vmem:[%s58 + $0x388] sm:%s50] %v511
        %v513 = vld [vmem:[%s57 + $0x3a4] sm:%s50]
        %514 = vst [vmem:[%s58 + $0x38c] sm:%s50] %v513
        %v515 = vld [vmem:[%s57 + $0x388] sm:%s50]
        %516 = vst [vmem:[%s58 + $0x390] sm:%s50] %v515
        %v517 = vld [vmem:[%s57 + $0x3a8] sm:%s50]
        %518 = vst [vmem:[%s58 + $0x394] sm:%s50] %v517
        %v519 = vld [vmem:[%s57 + $0x38c] sm:%s50]
        %520 = vst [vmem:[%s58 + $0x398] sm:%s50] %v519
        %v521 = vld [vmem:[%s57 + $0x3ac] sm:%s50]
        %522 = vst [vmem:[%s58 + $0x39c] sm:%s50] %v521
        %v523 = vld [vmem:[%s57 + $0x390] sm:%s50]
        %524 = vst [vmem:[%s58 + $0x3a0] sm:%s50] %v523
        %v525 = vld [vmem:[%s57 + $0x3b0] sm:%s50]
        %526 = vst [vmem:[%s58 + $0x3a4] sm:%s50] %v525
        %v527 = vld [vmem:[%s57 + $0x394] sm:%s50]
        %528 = vst [vmem:[%s58 + $0x3a8] sm:%s50] %v527
        %v529 = vld [vmem:[%s57 + $0x3b4] sm:%s50]
        %530 = vst [vmem:[%s58 + $0x3ac] sm:%s50] %v529
        %v531 = vld [vmem:[%s57 + $0x398] sm:%s50]
        %532 = vst [vmem:[%s58 + $0x3b0] sm:%s50] %v531
        %v533 = vld [vmem:[%s57 + $0x3b8] sm:%s50]
        %534 = vst [vmem:[%s58 + $0x3b4] sm:%s50] %v533
        %v535 = vld [vmem:[%s57 + $0x39c] sm:%s50]
        %536 = vst [vmem:[%s58 + $0x3b8] sm:%s50] %v535
        %v537 = vld [vmem:[%s57 + $0x3bc] sm:%s50]
        %538 = vst [vmem:[%s58 + $0x3bc] sm:%s50] %v537
        %v539 = vld [vmem:[%s57 + $0x3c0] sm:%s50]
        %540 = vst [vmem:[%s58 + $0x3c0] sm:%s50] %v539
        %v541 = vld [vmem:[%s57 + $0x3e0] sm:%s50]
        %542 = vst [vmem:[%s58 + $0x3c4] sm:%s50] %v541
        %v543 = vld [vmem:[%s57 + $0x3c4] sm:%s50]
        %544 = vst [vmem:[%s58 + $0x3c8] sm:%s50] %v543
        %v545 = vld [vmem:[%s57 + $0x3e4] sm:%s50]
        %546 = vst [vmem:[%s58 + $0x3cc] sm:%s50] %v545
        %v547 = vld [vmem:[%s57 + $0x3c8] sm:%s50]
        %548 = vst [vmem:[%s58 + $0x3d0] sm:%s50] %v547
        %v549 = vld [vmem:[%s57 + $0x3e8] sm:%s50]
        %550 = vst [vmem:[%s58 + $0x3d4] sm:%s50] %v549
        %v551 = vld [vmem:[%s57 + $0x3cc] sm:%s50]
        %552 = vst [vmem:[%s58 + $0x3d8] sm:%s50] %v551
        %v553 = vld [vmem:[%s57 + $0x3ec] sm:%s50]
        %554 = vst [vmem:[%s58 + $0x3dc] sm:%s50] %v553
        %v555 = vld [vmem:[%s57 + $0x3d0] sm:%s50]
        %556 = vst [vmem:[%s58 + $0x3e0] sm:%s50] %v555
        %v557 = vld [vmem:[%s57 + $0x3f0] sm:%s50]
        %558 = vst [vmem:[%s58 + $0x3e4] sm:%s50] %v557
        %v559 = vld [vmem:[%s57 + $0x3d4] sm:%s50]
        %560 = vst [vmem:[%s58 + $0x3e8] sm:%s50] %v559
        %v561 = vld [vmem:[%s57 + $0x3f4] sm:%s50]
        %562 = vst [vmem:[%s58 + $0x3ec] sm:%s50] %v561
        %v563 = vld [vmem:[%s57 + $0x3d8] sm:%s50]
        %564 = vst [vmem:[%s58 + $0x3f0] sm:%s50] %v563
        %v565 = vld [vmem:[%s57 + $0x3f8] sm:%s50]
        %566 = vst [vmem:[%s58 + $0x3f4] sm:%s50] %v565
        %v567 = vld [vmem:[%s57 + $0x3dc] sm:%s50]
        %568 = vst [vmem:[%s58 + $0x3f8] sm:%s50] %v567
        %v569 = vld [vmem:[%s57 + $0x3fc] sm:%s50]
        %570 = vst [vmem:[%s58 + $0x3fc] sm:%s50] %v569
      $region58: #{_lambda_.1} parent=52 // loop_footer
        %s56 = sadd.s32 1, %s52
      $region59: #{_lambda_.1} parent=52 // loop_footer_branch
        %51 = sbr.rel target = $region55
      $region60: #{_lambda_.1} parent=52 // loop_exit
        _
    $region53: #{_lambda_.1} parent=1 // pred_fallthru
      _
    // Predicated region
    $region79: #{_lambda_.1} parent=1 // pred_check
      _
    $region80: #{_lambda_.1} parent=1 // pred_check_branch
      %1112 = sbr.rel (0) target = $region82
    $region81: #{_lambda_.1} parent=1 // pred_region
      %1113 = vsyncadd [#allocation6], 16384
    $region82: #{_lambda_.1} parent=1 // pred_fallthru
      _
    %s1114 = scalar_lea.sflag [#allocation6], 1
    %p1116 = scmp.lt.u32.totalorder 4, 8
    %p1117 = pneg %p1116
    // Predicated region
    $region83: #{_lambda_.1} parent=1 // pred_check
      _
    $region84: #{_lambda_.1} parent=1 // pred_check_branch
      %1119 = sbr.rel (%p1116) target = $region86
    $region85: #{_lambda_.1} parent=1 // pred_region
      %s1388 = sand.u32 4, 7
      %p1389 = scmp.eq.s32.totalorder %s1388, 0
      %p1390 = pneg %p1389
      // Predicated region
      $region98: #{_lambda_.1} parent=85 // pred_check
        _
      $region99: #{_lambda_.1} parent=85 // pred_check_branch
        %1392 = sbr.rel (%p1389) target = $region101
      $region100: #{_lambda_.1} parent=85 // pred_region
        %s1393 = sand.u32 4, 7
        %s1394 = ssub.s32 4, %s1393
        %s1395 = scalar_lea.vmem %s5, %s1394
        %s1396 = ssub.s32 4, %s1393
        %s1397 = scalar_lea.vmem [#allocation5], %s1396
        loop: start=0, step=1, limit=1
        $region102: #{_lambda_.1} parent=100 // loop_pre_header
          _
        $region103: #{_lambda_.1} parent=100 // loop_header
          %s1399 = sphi 0, %s1403
          %p1400 = scmp.ge.s32.totalorder %s1399, 1
          %s1404 = sphi %s5, %s5
          %s1405 = sphi [#allocation5], [#allocation5]
        $region104: #{_lambda_.1} parent=100 // loop_header_branch
          %1402 = sbr.rel (%p1400) target = $region108
        $region105: #{_lambda_.1} parent=100 // loop_body
          _
        $region106: #{_lambda_.1} parent=100 // loop_footer
          %s1403 = sadd.s32 1, %s1399
        $region107: #{_lambda_.1} parent=100 // loop_footer_branch
          %1398 = sbr.rel target = $region103
        $region108: #{_lambda_.1} parent=100 // loop_exit
          _
        %s1406 = sshllo.u32 0, %s1393
        loop: start=0, step=1, limit=1
        $region109: #{_lambda_.1} parent=100 // loop_pre_header
          _
        $region110: #{_lambda_.1} parent=100 // loop_header
          %s1408 = sphi 0, %s1412
          %p1409 = scmp.ge.s32.totalorder %s1408, 1
          %s1413 = sphi %s1395, %s1395
          %s1414 = sphi %s1397, %s1397
        $region111: #{_lambda_.1} parent=100 // loop_header_branch
          %1411 = sbr.rel (%p1409) target = $region115
        $region112: #{_lambda_.1} parent=100 // loop_body
          %v1415 = vld [vmem:[%s1413] sm:%s1406]
          %1416 = vst [vmem:[%s1414] sm:%s1406] %v1415
          %v1417 = vld [vmem:[%s1413 + $0x10] sm:%s1406]
          %1418 = vst [vmem:[%s1414 + $0x4] sm:%s1406] %v1417
          %v1419 = vld [vmem:[%s1413 + $0x4] sm:%s1406]
          %1420 = vst [vmem:[%s1414 + $0x8] sm:%s1406] %v1419
          %v1421 = vld [vmem:[%s1413 + $0x14] sm:%s1406]
          %1422 = vst [vmem:[%s1414 + $0xc] sm:%s1406] %v1421
          %v1423 = vld [vmem:[%s1413 + $0x8] sm:%s1406]
          %1424 = vst [vmem:[%s1414 + $0x10] sm:%s1406] %v1423
          %v1425 = vld [vmem:[%s1413 + $0x18] sm:%s1406]
          %1426 = vst [vmem:[%s1414 + $0x14] sm:%s1406] %v1425
          %v1427 = vld [vmem:[%s1413 + $0xc] sm:%s1406]
          %1428 = vst [vmem:[%s1414 + $0x18] sm:%s1406] %v1427
          %v1429 = vld [vmem:[%s1413 + $0x1c] sm:%s1406]
          %1430 = vst [vmem:[%s1414 + $0x1c] sm:%s1406] %v1429
          %v1431 = vld [vmem:[%s1413 + $0x20] sm:%s1406]
          %1432 = vst [vmem:[%s1414 + $0x20] sm:%s1406] %v1431
          %v1433 = vld [vmem:[%s1413 + $0x30] sm:%s1406]
          %1434 = vst [vmem:[%s1414 + $0x24] sm:%s1406] %v1433
          %v1435 = vld [vmem:[%s1413 + $0x24] sm:%s1406]
          %1436 = vst [vmem:[%s1414 + $0x28] sm:%s1406] %v1435
          %v1437 = vld [vmem:[%s1413 + $0x34] sm:%s1406]
          %1438 = vst [vmem:[%s1414 + $0x2c] sm:%s1406] %v1437
          %v1439 = vld [vmem:[%s1413 + $0x28] sm:%s1406]
          %1440 = vst [vmem:[%s1414 + $0x30] sm:%s1406] %v1439
          %v1441 = vld [vmem:[%s1413 + $0x38] sm:%s1406]
          %1442 = vst [vmem:[%s1414 + $0x34] sm:%s1406] %v1441
          %v1443 = vld [vmem:[%s1413 + $0x2c] sm:%s1406]
          %1444 = vst [vmem:[%s1414 + $0x38] sm:%s1406] %v1443
          %v1445 = vld [vmem:[%s1413 + $0x3c] sm:%s1406]
          %1446 = vst [vmem:[%s1414 + $0x3c] sm:%s1406] %v1445
          %v1447 = vld [vmem:[%s1413 + $0x40] sm:%s1406]
          %1448 = vst [vmem:[%s1414 + $0x40] sm:%s1406] %v1447
          %v1449 = vld [vmem:[%s1413 + $0x50] sm:%s1406]
          %1450 = vst [vmem:[%s1414 + $0x44] sm:%s1406] %v1449
          %v1451 = vld [vmem:[%s1413 + $0x44] sm:%s1406]
          %1452 = vst [vmem:[%s1414 + $0x48] sm:%s1406] %v1451
          %v1453 = vld [vmem:[%s1413 + $0x54] sm:%s1406]
          %1454 = vst [vmem:[%s1414 + $0x4c] sm:%s1406] %v1453
          %v1455 = vld [vmem:[%s1413 + $0x48] sm:%s1406]
          %1456 = vst [vmem:[%s1414 + $0x50] sm:%s1406] %v1455
          %v1457 = vld [vmem:[%s1413 + $0x58] sm:%s1406]
          %1458 = vst [vmem:[%s1414 + $0x54] sm:%s1406] %v1457
          %v1459 = vld [vmem:[%s1413 + $0x4c] sm:%s1406]
          %1460 = vst [vmem:[%s1414 + $0x58] sm:%s1406] %v1459
          %v1461 = vld [vmem:[%s1413 + $0x5c] sm:%s1406]
          %1462 = vst [vmem:[%s1414 + $0x5c] sm:%s1406] %v1461
          %v1463 = vld [vmem:[%s1413 + $0x60] sm:%s1406]
          %1464 = vst [vmem:[%s1414 + $0x60] sm:%s1406] %v1463
          %v1465 = vld [vmem:[%s1413 + $0x70] sm:%s1406]
          %1466 = vst [vmem:[%s1414 + $0x64] sm:%s1406] %v1465
          %v1467 = vld [vmem:[%s1413 + $0x64] sm:%s1406]
          %1468 = vst [vmem:[%s1414 + $0x68] sm:%s1406] %v1467
          %v1469 = vld [vmem:[%s1413 + $0x74] sm:%s1406]
          %1470 = vst [vmem:[%s1414 + $0x6c] sm:%s1406] %v1469
          %v1471 = vld [vmem:[%s1413 + $0x68] sm:%s1406]
          %1472 = vst [vmem:[%s1414 + $0x70] sm:%s1406] %v1471
          %v1473 = vld [vmem:[%s1413 + $0x78] sm:%s1406]
          %1474 = vst [vmem:[%s1414 + $0x74] sm:%s1406] %v1473
          %v1475 = vld [vmem:[%s1413 + $0x6c] sm:%s1406]
          %1476 = vst [vmem:[%s1414 + $0x78] sm:%s1406] %v1475
          %v1477 = vld [vmem:[%s1413 + $0x7c] sm:%s1406]
          %1478 = vst [vmem:[%s1414 + $0x7c] sm:%s1406] %v1477
          %v1479 = vld [vmem:[%s1413 + $0x80] sm:%s1406]
          %1480 = vst [vmem:[%s1414 + $0x80] sm:%s1406] %v1479
          %v1481 = vld [vmem:[%s1413 + $0x90] sm:%s1406]
          %1482 = vst [vmem:[%s1414 + $0x84] sm:%s1406] %v1481
          %v1483 = vld [vmem:[%s1413 + $0x84] sm:%s1406]
          %1484 = vst [vmem:[%s1414 + $0x88] sm:%s1406] %v1483
          %v1485 = vld [vmem:[%s1413 + $0x94] sm:%s1406]
          %1486 = vst [vmem:[%s1414 + $0x8c] sm:%s1406] %v1485
          %v1487 = vld [vmem:[%s1413 + $0x88] sm:%s1406]
          %1488 = vst [vmem:[%s1414 + $0x90] sm:%s1406] %v1487
          %v1489 = vld [vmem:[%s1413 + $0x98] sm:%s1406]
          %1490 = vst [vmem:[%s1414 + $0x94] sm:%s1406] %v1489
          %v1491 = vld [vmem:[%s1413 + $0x8c] sm:%s1406]
          %1492 = vst [vmem:[%s1414 + $0x98] sm:%s1406] %v1491
          %v1493 = vld [vmem:[%s1413 + $0x9c] sm:%s1406]
          %1494 = vst [vmem:[%s1414 + $0x9c] sm:%s1406] %v1493
          %v1495 = vld [vmem:[%s1413 + $0xa0] sm:%s1406]
          %1496 = vst [vmem:[%s1414 + $0xa0] sm:%s1406] %v1495
          %v1497 = vld [vmem:[%s1413 + $0xb0] sm:%s1406]
          %1498 = vst [vmem:[%s1414 + $0xa4] sm:%s1406] %v1497
          %v1499 = vld [vmem:[%s1413 + $0xa4] sm:%s1406]
          %1500 = vst [vmem:[%s1414 + $0xa8] sm:%s1406] %v1499
          %v1501 = vld [vmem:[%s1413 + $0xb4] sm:%s1406]
          %1502 = vst [vmem:[%s1414 + $0xac] sm:%s1406] %v1501
          %v1503 = vld [vmem:[%s1413 + $0xa8] sm:%s1406]
          %1504 = vst [vmem:[%s1414 + $0xb0] sm:%s1406] %v1503
          %v1505 = vld [vmem:[%s1413 + $0xb8] sm:%s1406]
          %1506 = vst [vmem:[%s1414 + $0xb4] sm:%s1406] %v1505
          %v1507 = vld [vmem:[%s1413 + $0xac] sm:%s1406]
          %1508 = vst [vmem:[%s1414 + $0xb8] sm:%s1406] %v1507
          %v1509 = vld [vmem:[%s1413 + $0xbc] sm:%s1406]
          %1510 = vst [vmem:[%s1414 + $0xbc] sm:%s1406] %v1509
          %v1511 = vld [vmem:[%s1413 + $0xc0] sm:%s1406]
          %1512 = vst [vmem:[%s1414 + $0xc0] sm:%s1406] %v1511
          %v1513 = vld [vmem:[%s1413 + $0xd0] sm:%s1406]
          %1514 = vst [vmem:[%s1414 + $0xc4] sm:%s1406] %v1513
          %v1515 = vld [vmem:[%s1413 + $0xc4] sm:%s1406]
          %1516 = vst [vmem:[%s1414 + $0xc8] sm:%s1406] %v1515
          %v1517 = vld [vmem:[%s1413 + $0xd4] sm:%s1406]
          %1518 = vst [vmem:[%s1414 + $0xcc] sm:%s1406] %v1517
          %v1519 = vld [vmem:[%s1413 + $0xc8] sm:%s1406]
          %1520 = vst [vmem:[%s1414 + $0xd0] sm:%s1406] %v1519
          %v1521 = vld [vmem:[%s1413 + $0xd8] sm:%s1406]
          %1522 = vst [vmem:[%s1414 + $0xd4] sm:%s1406] %v1521
          %v1523 = vld [vmem:[%s1413 + $0xcc] sm:%s1406]
          %1524 = vst [vmem:[%s1414 + $0xd8] sm:%s1406] %v1523
          %v1525 = vld [vmem:[%s1413 + $0xdc] sm:%s1406]
          %1526 = vst [vmem:[%s1414 + $0xdc] sm:%s1406] %v1525
          %v1527 = vld [vmem:[%s1413 + $0xe0] sm:%s1406]
          %1528 = vst [vmem:[%s1414 + $0xe0] sm:%s1406] %v1527
          %v1529 = vld [vmem:[%s1413 + $0xf0] sm:%s1406]
          %1530 = vst [vmem:[%s1414 + $0xe4] sm:%s1406] %v1529
          %v1531 = vld [vmem:[%s1413 + $0xe4] sm:%s1406]
          %1532 = vst [vmem:[%s1414 + $0xe8] sm:%s1406] %v1531
          %v1533 = vld [vmem:[%s1413 + $0xf4] sm:%s1406]
          %1534 = vst [vmem:[%s1414 + $0xec] sm:%s1406] %v1533
          %v1535 = vld [vmem:[%s1413 + $0xe8] sm:%s1406]
          %1536 = vst [vmem:[%s1414 + $0xf0] sm:%s1406] %v1535
          %v1537 = vld [vmem:[%s1413 + $0xf8] sm:%s1406]
          %1538 = vst [vmem:[%s1414 + $0xf4] sm:%s1406] %v1537
          %v1539 = vld [vmem:[%s1413 + $0xec] sm:%s1406]
          %1540 = vst [vmem:[%s1414 + $0xf8] sm:%s1406] %v1539
          %v1541 = vld [vmem:[%s1413 + $0xfc] sm:%s1406]
          %1542 = vst [vmem:[%s1414 + $0xfc] sm:%s1406] %v1541
          %v1543 = vld [vmem:[%s1413 + $0x100] sm:%s1406]
          %1544 = vst [vmem:[%s1414 + $0x100] sm:%s1406] %v1543
          %v1545 = vld [vmem:[%s1413 + $0x110] sm:%s1406]
          %1546 = vst [vmem:[%s1414 + $0x104] sm:%s1406] %v1545
          %v1547 = vld [vmem:[%s1413 + $0x104] sm:%s1406]
          %1548 = vst [vmem:[%s1414 + $0x108] sm:%s1406] %v1547
          %v1549 = vld [vmem:[%s1413 + $0x114] sm:%s1406]
          %1550 = vst [vmem:[%s1414 + $0x10c] sm:%s1406] %v1549
          %v1551 = vld [vmem:[%s1413 + $0x108] sm:%s1406]
          %1552 = vst [vmem:[%s1414 + $0x110] sm:%s1406] %v1551
          %v1553 = vld [vmem:[%s1413 + $0x118] sm:%s1406]
          %1554 = vst [vmem:[%s1414 + $0x114] sm:%s1406] %v1553
          %v1555 = vld [vmem:[%s1413 + $0x10c] sm:%s1406]
          %1556 = vst [vmem:[%s1414 + $0x118] sm:%s1406] %v1555
          %v1557 = vld [vmem:[%s1413 + $0x11c] sm:%s1406]
          %1558 = vst [vmem:[%s1414 + $0x11c] sm:%s1406] %v1557
          %v1559 = vld [vmem:[%s1413 + $0x120] sm:%s1406]
          %1560 = vst [vmem:[%s1414 + $0x120] sm:%s1406] %v1559
          %v1561 = vld [vmem:[%s1413 + $0x130] sm:%s1406]
          %1562 = vst [vmem:[%s1414 + $0x124] sm:%s1406] %v1561
          %v1563 = vld [vmem:[%s1413 + $0x124] sm:%s1406]
          %1564 = vst [vmem:[%s1414 + $0x128] sm:%s1406] %v1563
          %v1565 = vld [vmem:[%s1413 + $0x134] sm:%s1406]
          %1566 = vst [vmem:[%s1414 + $0x12c] sm:%s1406] %v1565
          %v1567 = vld [vmem:[%s1413 + $0x128] sm:%s1406]
          %1568 = vst [vmem:[%s1414 + $0x130] sm:%s1406] %v1567
          %v1569 = vld [vmem:[%s1413 + $0x138] sm:%s1406]
          %1570 = vst [vmem:[%s1414 + $0x134] sm:%s1406] %v1569
          %v1571 = vld [vmem:[%s1413 + $0x12c] sm:%s1406]
          %1572 = vst [vmem:[%s1414 + $0x138] sm:%s1406] %v1571
          %v1573 = vld [vmem:[%s1413 + $0x13c] sm:%s1406]
          %1574 = vst [vmem:[%s1414 + $0x13c] sm:%s1406] %v1573
          %v1575 = vld [vmem:[%s1413 + $0x140] sm:%s1406]
          %1576 = vst [vmem:[%s1414 + $0x140] sm:%s1406] %v1575
          %v1577 = vld [vmem:[%s1413 + $0x150] sm:%s1406]
          %1578 = vst [vmem:[%s1414 + $0x144] sm:%s1406] %v1577
          %v1579 = vld [vmem:[%s1413 + $0x144] sm:%s1406]
          %1580 = vst [vmem:[%s1414 + $0x148] sm:%s1406] %v1579
          %v1581 = vld [vmem:[%s1413 + $0x154] sm:%s1406]
          %1582 = vst [vmem:[%s1414 + $0x14c] sm:%s1406] %v1581
          %v1583 = vld [vmem:[%s1413 + $0x148] sm:%s1406]
          %1584 = vst [vmem:[%s1414 + $0x150] sm:%s1406] %v1583
          %v1585 = vld [vmem:[%s1413 + $0x158] sm:%s1406]
          %1586 = vst [vmem:[%s1414 + $0x154] sm:%s1406] %v1585
          %v1587 = vld [vmem:[%s1413 + $0x14c] sm:%s1406]
          %1588 = vst [vmem:[%s1414 + $0x158] sm:%s1406] %v1587
          %v1589 = vld [vmem:[%s1413 + $0x15c] sm:%s1406]
          %1590 = vst [vmem:[%s1414 + $0x15c] sm:%s1406] %v1589
          %v1591 = vld [vmem:[%s1413 + $0x160] sm:%s1406]
          %1592 = vst [vmem:[%s1414 + $0x160] sm:%s1406] %v1591
          %v1593 = vld [vmem:[%s1413 + $0x170] sm:%s1406]
          %1594 = vst [vmem:[%s1414 + $0x164] sm:%s1406] %v1593
          %v1595 = vld [vmem:[%s1413 + $0x164] sm:%s1406]
          %1596 = vst [vmem:[%s1414 + $0x168] sm:%s1406] %v1595
          %v1597 = vld [vmem:[%s1413 + $0x174] sm:%s1406]
          %1598 = vst [vmem:[%s1414 + $0x16c] sm:%s1406] %v1597
          %v1599 = vld [vmem:[%s1413 + $0x168] sm:%s1406]
          %1600 = vst [vmem:[%s1414 + $0x170] sm:%s1406] %v1599
          %v1601 = vld [vmem:[%s1413 + $0x178] sm:%s1406]
          %1602 = vst [vmem:[%s1414 + $0x174] sm:%s1406] %v1601
          %v1603 = vld [vmem:[%s1413 + $0x16c] sm:%s1406]
          %1604 = vst [vmem:[%s1414 + $0x178] sm:%s1406] %v1603
          %v1605 = vld [vmem:[%s1413 + $0x17c] sm:%s1406]
          %1606 = vst [vmem:[%s1414 + $0x17c] sm:%s1406] %v1605
          %v1607 = vld [vmem:[%s1413 + $0x180] sm:%s1406]
          %1608 = vst [vmem:[%s1414 + $0x180] sm:%s1406] %v1607
          %v1609 = vld [vmem:[%s1413 + $0x190] sm:%s1406]
          %1610 = vst [vmem:[%s1414 + $0x184] sm:%s1406] %v1609
          %v1611 = vld [vmem:[%s1413 + $0x184] sm:%s1406]
          %1612 = vst [vmem:[%s1414 + $0x188] sm:%s1406] %v1611
          %v1613 = vld [vmem:[%s1413 + $0x194] sm:%s1406]
          %1614 = vst [vmem:[%s1414 + $0x18c] sm:%s1406] %v1613
          %v1615 = vld [vmem:[%s1413 + $0x188] sm:%s1406]
          %1616 = vst [vmem:[%s1414 + $0x190] sm:%s1406] %v1615
          %v1617 = vld [vmem:[%s1413 + $0x198] sm:%s1406]
          %1618 = vst [vmem:[%s1414 + $0x194] sm:%s1406] %v1617
          %v1619 = vld [vmem:[%s1413 + $0x18c] sm:%s1406]
          %1620 = vst [vmem:[%s1414 + $0x198] sm:%s1406] %v1619
          %v1621 = vld [vmem:[%s1413 + $0x19c] sm:%s1406]
          %1622 = vst [vmem:[%s1414 + $0x19c] sm:%s1406] %v1621
          %v1623 = vld [vmem:[%s1413 + $0x1a0] sm:%s1406]
          %1624 = vst [vmem:[%s1414 + $0x1a0] sm:%s1406] %v1623
          %v1625 = vld [vmem:[%s1413 + $0x1b0] sm:%s1406]
          %1626 = vst [vmem:[%s1414 + $0x1a4] sm:%s1406] %v1625
          %v1627 = vld [vmem:[%s1413 + $0x1a4] sm:%s1406]
          %1628 = vst [vmem:[%s1414 + $0x1a8] sm:%s1406] %v1627
          %v1629 = vld [vmem:[%s1413 + $0x1b4] sm:%s1406]
          %1630 = vst [vmem:[%s1414 + $0x1ac] sm:%s1406] %v1629
          %v1631 = vld [vmem:[%s1413 + $0x1a8] sm:%s1406]
          %1632 = vst [vmem:[%s1414 + $0x1b0] sm:%s1406] %v1631
          %v1633 = vld [vmem:[%s1413 + $0x1b8] sm:%s1406]
          %1634 = vst [vmem:[%s1414 + $0x1b4] sm:%s1406] %v1633
          %v1635 = vld [vmem:[%s1413 + $0x1ac] sm:%s1406]
          %1636 = vst [vmem:[%s1414 + $0x1b8] sm:%s1406] %v1635
          %v1637 = vld [vmem:[%s1413 + $0x1bc] sm:%s1406]
          %1638 = vst [vmem:[%s1414 + $0x1bc] sm:%s1406] %v1637
          %v1639 = vld [vmem:[%s1413 + $0x1c0] sm:%s1406]
          %1640 = vst [vmem:[%s1414 + $0x1c0] sm:%s1406] %v1639
          %v1641 = vld [vmem:[%s1413 + $0x1d0] sm:%s1406]
          %1642 = vst [vmem:[%s1414 + $0x1c4] sm:%s1406] %v1641
          %v1643 = vld [vmem:[%s1413 + $0x1c4] sm:%s1406]
          %1644 = vst [vmem:[%s1414 + $0x1c8] sm:%s1406] %v1643
          %v1645 = vld [vmem:[%s1413 + $0x1d4] sm:%s1406]
          %1646 = vst [vmem:[%s1414 + $0x1cc] sm:%s1406] %v1645
          %v1647 = vld [vmem:[%s1413 + $0x1c8] sm:%s1406]
          %1648 = vst [vmem:[%s1414 + $0x1d0] sm:%s1406] %v1647
          %v1649 = vld [vmem:[%s1413 + $0x1d8] sm:%s1406]
          %1650 = vst [vmem:[%s1414 + $0x1d4] sm:%s1406] %v1649
          %v1651 = vld [vmem:[%s1413 + $0x1cc] sm:%s1406]
          %1652 = vst [vmem:[%s1414 + $0x1d8] sm:%s1406] %v1651
          %v1653 = vld [vmem:[%s1413 + $0x1dc] sm:%s1406]
          %1654 = vst [vmem:[%s1414 + $0x1dc] sm:%s1406] %v1653
          %v1655 = vld [vmem:[%s1413 + $0x1e0] sm:%s1406]
          %1656 = vst [vmem:[%s1414 + $0x1e0] sm:%s1406] %v1655
          %v1657 = vld [vmem:[%s1413 + $0x1f0] sm:%s1406]
          %1658 = vst [vmem:[%s1414 + $0x1e4] sm:%s1406] %v1657
          %v1659 = vld [vmem:[%s1413 + $0x1e4] sm:%s1406]
          %1660 = vst [vmem:[%s1414 + $0x1e8] sm:%s1406] %v1659
          %v1661 = vld [vmem:[%s1413 + $0x1f4] sm:%s1406]
          %1662 = vst [vmem:[%s1414 + $0x1ec] sm:%s1406] %v1661
          %v1663 = vld [vmem:[%s1413 + $0x1e8] sm:%s1406]
          %1664 = vst [vmem:[%s1414 + $0x1f0] sm:%s1406] %v1663
          %v1665 = vld [vmem:[%s1413 + $0x1f8] sm:%s1406]
          %1666 = vst [vmem:[%s1414 + $0x1f4] sm:%s1406] %v1665
          %v1667 = vld [vmem:[%s1413 + $0x1ec] sm:%s1406]
          %1668 = vst [vmem:[%s1414 + $0x1f8] sm:%s1406] %v1667
          %v1669 = vld [vmem:[%s1413 + $0x1fc] sm:%s1406]
          %1670 = vst [vmem:[%s1414 + $0x1fc] sm:%s1406] %v1669
        $region113: #{_lambda_.1} parent=100 // loop_footer
          %s1412 = sadd.s32 1, %s1408
        $region114: #{_lambda_.1} parent=100 // loop_footer_branch
          %1407 = sbr.rel target = $region110
        $region115: #{_lambda_.1} parent=100 // loop_exit
          _
      $region101: #{_lambda_.1} parent=85 // pred_fallthru
        _
    $region86: #{_lambda_.1} parent=1 // pred_fallthru
      _
    // Predicated region
    $region87: #{_lambda_.1} parent=1 // pred_check
      %p1120 = pneg %p1116
    $region88: #{_lambda_.1} parent=1 // pred_check_branch
      %1122 = sbr.rel (%p1120) target = $region90
    $region89: #{_lambda_.1} parent=1 // pred_region
      %s1123 = sshllo.u32 0, 4
      loop: start=0, step=1, limit=1
      $region91: #{_lambda_.1} parent=89 // loop_pre_header
        _
      $region92: #{_lambda_.1} parent=89 // loop_header
        %s1125 = sphi 0, %s1129
        %p1126 = scmp.ge.s32.totalorder %s1125, 1
        %s1130 = sphi %s5, %s5
        %s1131 = sphi [#allocation5], [#allocation5]
      $region93: #{_lambda_.1} parent=89 // loop_header_branch
        %1128 = sbr.rel (%p1126) target = $region97
      $region94: #{_lambda_.1} parent=89 // loop_body
        %v1132 = vld [vmem:[%s1130] sm:%s1123]
        %1133 = vst [vmem:[%s1131] sm:%s1123] %v1132
        %v1134 = vld [vmem:[%s1130 + $0x10] sm:%s1123]
        %1135 = vst [vmem:[%s1131 + $0x4] sm:%s1123] %v1134
        %v1136 = vld [vmem:[%s1130 + $0x4] sm:%s1123]
        %1137 = vst [vmem:[%s1131 + $0x8] sm:%s1123] %v1136
        %v1138 = vld [vmem:[%s1130 + $0x14] sm:%s1123]
        %1139 = vst [vmem:[%s1131 + $0xc] sm:%s1123] %v1138
        %v1140 = vld [vmem:[%s1130 + $0x8] sm:%s1123]
        %1141 = vst [vmem:[%s1131 + $0x10] sm:%s1123] %v1140
        %v1142 = vld [vmem:[%s1130 + $0x18] sm:%s1123]
        %1143 = vst [vmem:[%s1131 + $0x14] sm:%s1123] %v1142
        %v1144 = vld [vmem:[%s1130 + $0xc] sm:%s1123]
        %1145 = vst [vmem:[%s1131 + $0x18] sm:%s1123] %v1144
        %v1146 = vld [vmem:[%s1130 + $0x1c] sm:%s1123]
        %1147 = vst [vmem:[%s1131 + $0x1c] sm:%s1123] %v1146
        %v1148 = vld [vmem:[%s1130 + $0x20] sm:%s1123]
        %1149 = vst [vmem:[%s1131 + $0x20] sm:%s1123] %v1148
        %v1150 = vld [vmem:[%s1130 + $0x30] sm:%s1123]
        %1151 = vst [vmem:[%s1131 + $0x24] sm:%s1123] %v1150
        %v1152 = vld [vmem:[%s1130 + $0x24] sm:%s1123]
        %1153 = vst [vmem:[%s1131 + $0x28] sm:%s1123] %v1152
        %v1154 = vld [vmem:[%s1130 + $0x34] sm:%s1123]
        %1155 = vst [vmem:[%s1131 + $0x2c] sm:%s1123] %v1154
        %v1156 = vld [vmem:[%s1130 + $0x28] sm:%s1123]
        %1157 = vst [vmem:[%s1131 + $0x30] sm:%s1123] %v1156
        %v1158 = vld [vmem:[%s1130 + $0x38] sm:%s1123]
        %1159 = vst [vmem:[%s1131 + $0x34] sm:%s1123] %v1158
        %v1160 = vld [vmem:[%s1130 + $0x2c] sm:%s1123]
        %1161 = vst [vmem:[%s1131 + $0x38] sm:%s1123] %v1160
        %v1162 = vld [vmem:[%s1130 + $0x3c] sm:%s1123]
        %1163 = vst [vmem:[%s1131 + $0x3c] sm:%s1123] %v1162
        %v1164 = vld [vmem:[%s1130 + $0x40] sm:%s1123]
        %1165 = vst [vmem:[%s1131 + $0x40] sm:%s1123] %v1164
        %v1166 = vld [vmem:[%s1130 + $0x50] sm:%s1123]
        %1167 = vst [vmem:[%s1131 + $0x44] sm:%s1123] %v1166
        %v1168 = vld [vmem:[%s1130 + $0x44] sm:%s1123]
        %1169 = vst [vmem:[%s1131 + $0x48] sm:%s1123] %v1168
        %v1170 = vld [vmem:[%s1130 + $0x54] sm:%s1123]
        %1171 = vst [vmem:[%s1131 + $0x4c] sm:%s1123] %v1170
        %v1172 = vld [vmem:[%s1130 + $0x48] sm:%s1123]
        %1173 = vst [vmem:[%s1131 + $0x50] sm:%s1123] %v1172
        %v1174 = vld [vmem:[%s1130 + $0x58] sm:%s1123]
        %1175 = vst [vmem:[%s1131 + $0x54] sm:%s1123] %v1174
        %v1176 = vld [vmem:[%s1130 + $0x4c] sm:%s1123]
        %1177 = vst [vmem:[%s1131 + $0x58] sm:%s1123] %v1176
        %v1178 = vld [vmem:[%s1130 + $0x5c] sm:%s1123]
        %1179 = vst [vmem:[%s1131 + $0x5c] sm:%s1123] %v1178
        %v1180 = vld [vmem:[%s1130 + $0x60] sm:%s1123]
        %1181 = vst [vmem:[%s1131 + $0x60] sm:%s1123] %v1180
        %v1182 = vld [vmem:[%s1130 + $0x70] sm:%s1123]
        %1183 = vst [vmem:[%s1131 + $0x64] sm:%s1123] %v1182
        %v1184 = vld [vmem:[%s1130 + $0x64] sm:%s1123]
        %1185 = vst [vmem:[%s1131 + $0x68] sm:%s1123] %v1184
        %v1186 = vld [vmem:[%s1130 + $0x74] sm:%s1123]
        %1187 = vst [vmem:[%s1131 + $0x6c] sm:%s1123] %v1186
        %v1188 = vld [vmem:[%s1130 + $0x68] sm:%s1123]
        %1189 = vst [vmem:[%s1131 + $0x70] sm:%s1123] %v1188
        %v1190 = vld [vmem:[%s1130 + $0x78] sm:%s1123]
        %1191 = vst [vmem:[%s1131 + $0x74] sm:%s1123] %v1190
        %v1192 = vld [vmem:[%s1130 + $0x6c] sm:%s1123]
        %1193 = vst [vmem:[%s1131 + $0x78] sm:%s1123] %v1192
        %v1194 = vld [vmem:[%s1130 + $0x7c] sm:%s1123]
        %1195 = vst [vmem:[%s1131 + $0x7c] sm:%s1123] %v1194
        %v1196 = vld [vmem:[%s1130 + $0x80] sm:%s1123]
        %1197 = vst [vmem:[%s1131 + $0x80] sm:%s1123] %v1196
        %v1198 = vld [vmem:[%s1130 + $0x90] sm:%s1123]
        %1199 = vst [vmem:[%s1131 + $0x84] sm:%s1123] %v1198
        %v1200 = vld [vmem:[%s1130 + $0x84] sm:%s1123]
        %1201 = vst [vmem:[%s1131 + $0x88] sm:%s1123] %v1200
        %v1202 = vld [vmem:[%s1130 + $0x94] sm:%s1123]
        %1203 = vst [vmem:[%s1131 + $0x8c] sm:%s1123] %v1202
        %v1204 = vld [vmem:[%s1130 + $0x88] sm:%s1123]
        %1205 = vst [vmem:[%s1131 + $0x90] sm:%s1123] %v1204
        %v1206 = vld [vmem:[%s1130 + $0x98] sm:%s1123]
        %1207 = vst [vmem:[%s1131 + $0x94] sm:%s1123] %v1206
        %v1208 = vld [vmem:[%s1130 + $0x8c] sm:%s1123]
        %1209 = vst [vmem:[%s1131 + $0x98] sm:%s1123] %v1208
        %v1210 = vld [vmem:[%s1130 + $0x9c] sm:%s1123]
        %1211 = vst [vmem:[%s1131 + $0x9c] sm:%s1123] %v1210
        %v1212 = vld [vmem:[%s1130 + $0xa0] sm:%s1123]
        %1213 = vst [vmem:[%s1131 + $0xa0] sm:%s1123] %v1212
        %v1214 = vld [vmem:[%s1130 + $0xb0] sm:%s1123]
        %1215 = vst [vmem:[%s1131 + $0xa4] sm:%s1123] %v1214
        %v1216 = vld [vmem:[%s1130 + $0xa4] sm:%s1123]
        %1217 = vst [vmem:[%s1131 + $0xa8] sm:%s1123] %v1216
        %v1218 = vld [vmem:[%s1130 + $0xb4] sm:%s1123]
        %1219 = vst [vmem:[%s1131 + $0xac] sm:%s1123] %v1218
        %v1220 = vld [vmem:[%s1130 + $0xa8] sm:%s1123]
        %1221 = vst [vmem:[%s1131 + $0xb0] sm:%s1123] %v1220
        %v1222 = vld [vmem:[%s1130 + $0xb8] sm:%s1123]
        %1223 = vst [vmem:[%s1131 + $0xb4] sm:%s1123] %v1222
        %v1224 = vld [vmem:[%s1130 + $0xac] sm:%s1123]
        %1225 = vst [vmem:[%s1131 + $0xb8] sm:%s1123] %v1224
        %v1226 = vld [vmem:[%s1130 + $0xbc] sm:%s1123]
        %1227 = vst [vmem:[%s1131 + $0xbc] sm:%s1123] %v1226
        %v1228 = vld [vmem:[%s1130 + $0xc0] sm:%s1123]
        %1229 = vst [vmem:[%s1131 + $0xc0] sm:%s1123] %v1228
        %v1230 = vld [vmem:[%s1130 + $0xd0] sm:%s1123]
        %1231 = vst [vmem:[%s1131 + $0xc4] sm:%s1123] %v1230
        %v1232 = vld [vmem:[%s1130 + $0xc4] sm:%s1123]
        %1233 = vst [vmem:[%s1131 + $0xc8] sm:%s1123] %v1232
        %v1234 = vld [vmem:[%s1130 + $0xd4] sm:%s1123]
        %1235 = vst [vmem:[%s1131 + $0xcc] sm:%s1123] %v1234
        %v1236 = vld [vmem:[%s1130 + $0xc8] sm:%s1123]
        %1237 = vst [vmem:[%s1131 + $0xd0] sm:%s1123] %v1236
        %v1238 = vld [vmem:[%s1130 + $0xd8] sm:%s1123]
        %1239 = vst [vmem:[%s1131 + $0xd4] sm:%s1123] %v1238
        %v1240 = vld [vmem:[%s1130 + $0xcc] sm:%s1123]
        %1241 = vst [vmem:[%s1131 + $0xd8] sm:%s1123] %v1240
        %v1242 = vld [vmem:[%s1130 + $0xdc] sm:%s1123]
        %1243 = vst [vmem:[%s1131 + $0xdc] sm:%s1123] %v1242
        %v1244 = vld [vmem:[%s1130 + $0xe0] sm:%s1123]
        %1245 = vst [vmem:[%s1131 + $0xe0] sm:%s1123] %v1244
        %v1246 = vld [vmem:[%s1130 + $0xf0] sm:%s1123]
        %1247 = vst [vmem:[%s1131 + $0xe4] sm:%s1123] %v1246
        %v1248 = vld [vmem:[%s1130 + $0xe4] sm:%s1123]
        %1249 = vst [vmem:[%s1131 + $0xe8] sm:%s1123] %v1248
        %v1250 = vld [vmem:[%s1130 + $0xf4] sm:%s1123]
        %1251 = vst [vmem:[%s1131 + $0xec] sm:%s1123] %v1250
        %v1252 = vld [vmem:[%s1130 + $0xe8] sm:%s1123]
        %1253 = vst [vmem:[%s1131 + $0xf0] sm:%s1123] %v1252
        %v1254 = vld [vmem:[%s1130 + $0xf8] sm:%s1123]
        %1255 = vst [vmem:[%s1131 + $0xf4] sm:%s1123] %v1254
        %v1256 = vld [vmem:[%s1130 + $0xec] sm:%s1123]
        %1257 = vst [vmem:[%s1131 + $0xf8] sm:%s1123] %v1256
        %v1258 = vld [vmem:[%s1130 + $0xfc] sm:%s1123]
        %1259 = vst [vmem:[%s1131 + $0xfc] sm:%s1123] %v1258
        %v1260 = vld [vmem:[%s1130 + $0x100] sm:%s1123]
        %1261 = vst [vmem:[%s1131 + $0x100] sm:%s1123] %v1260
        %v1262 = vld [vmem:[%s1130 + $0x110] sm:%s1123]
        %1263 = vst [vmem:[%s1131 + $0x104] sm:%s1123] %v1262
        %v1264 = vld [vmem:[%s1130 + $0x104] sm:%s1123]
        %1265 = vst [vmem:[%s1131 + $0x108] sm:%s1123] %v1264
        %v1266 = vld [vmem:[%s1130 + $0x114] sm:%s1123]
        %1267 = vst [vmem:[%s1131 + $0x10c] sm:%s1123] %v1266
        %v1268 = vld [vmem:[%s1130 + $0x108] sm:%s1123]
        %1269 = vst [vmem:[%s1131 + $0x110] sm:%s1123] %v1268
        %v1270 = vld [vmem:[%s1130 + $0x118] sm:%s1123]
        %1271 = vst [vmem:[%s1131 + $0x114] sm:%s1123] %v1270
        %v1272 = vld [vmem:[%s1130 + $0x10c] sm:%s1123]
        %1273 = vst [vmem:[%s1131 + $0x118] sm:%s1123] %v1272
        %v1274 = vld [vmem:[%s1130 + $0x11c] sm:%s1123]
        %1275 = vst [vmem:[%s1131 + $0x11c] sm:%s1123] %v1274
        %v1276 = vld [vmem:[%s1130 + $0x120] sm:%s1123]
        %1277 = vst [vmem:[%s1131 + $0x120] sm:%s1123] %v1276
        %v1278 = vld [vmem:[%s1130 + $0x130] sm:%s1123]
        %1279 = vst [vmem:[%s1131 + $0x124] sm:%s1123] %v1278
        %v1280 = vld [vmem:[%s1130 + $0x124] sm:%s1123]
        %1281 = vst [vmem:[%s1131 + $0x128] sm:%s1123] %v1280
        %v1282 = vld [vmem:[%s1130 + $0x134] sm:%s1123]
        %1283 = vst [vmem:[%s1131 + $0x12c] sm:%s1123] %v1282
        %v1284 = vld [vmem:[%s1130 + $0x128] sm:%s1123]
        %1285 = vst [vmem:[%s1131 + $0x130] sm:%s1123] %v1284
        %v1286 = vld [vmem:[%s1130 + $0x138] sm:%s1123]
        %1287 = vst [vmem:[%s1131 + $0x134] sm:%s1123] %v1286
        %v1288 = vld [vmem:[%s1130 + $0x12c] sm:%s1123]
        %1289 = vst [vmem:[%s1131 + $0x138] sm:%s1123] %v1288
        %v1290 = vld [vmem:[%s1130 + $0x13c] sm:%s1123]
        %1291 = vst [vmem:[%s1131 + $0x13c] sm:%s1123] %v1290
        %v1292 = vld [vmem:[%s1130 + $0x140] sm:%s1123]
        %1293 = vst [vmem:[%s1131 + $0x140] sm:%s1123] %v1292
        %v1294 = vld [vmem:[%s1130 + $0x150] sm:%s1123]
        %1295 = vst [vmem:[%s1131 + $0x144] sm:%s1123] %v1294
        %v1296 = vld [vmem:[%s1130 + $0x144] sm:%s1123]
        %1297 = vst [vmem:[%s1131 + $0x148] sm:%s1123] %v1296
        %v1298 = vld [vmem:[%s1130 + $0x154] sm:%s1123]
        %1299 = vst [vmem:[%s1131 + $0x14c] sm:%s1123] %v1298
        %v1300 = vld [vmem:[%s1130 + $0x148] sm:%s1123]
        %1301 = vst [vmem:[%s1131 + $0x150] sm:%s1123] %v1300
        %v1302 = vld [vmem:[%s1130 + $0x158] sm:%s1123]
        %1303 = vst [vmem:[%s1131 + $0x154] sm:%s1123] %v1302
        %v1304 = vld [vmem:[%s1130 + $0x14c] sm:%s1123]
        %1305 = vst [vmem:[%s1131 + $0x158] sm:%s1123] %v1304
        %v1306 = vld [vmem:[%s1130 + $0x15c] sm:%s1123]
        %1307 = vst [vmem:[%s1131 + $0x15c] sm:%s1123] %v1306
        %v1308 = vld [vmem:[%s1130 + $0x160] sm:%s1123]
        %1309 = vst [vmem:[%s1131 + $0x160] sm:%s1123] %v1308
        %v1310 = vld [vmem:[%s1130 + $0x170] sm:%s1123]
        %1311 = vst [vmem:[%s1131 + $0x164] sm:%s1123] %v1310
        %v1312 = vld [vmem:[%s1130 + $0x164] sm:%s1123]
        %1313 = vst [vmem:[%s1131 + $0x168] sm:%s1123] %v1312
        %v1314 = vld [vmem:[%s1130 + $0x174] sm:%s1123]
        %1315 = vst [vmem:[%s1131 + $0x16c] sm:%s1123] %v1314
        %v1316 = vld [vmem:[%s1130 + $0x168] sm:%s1123]
        %1317 = vst [vmem:[%s1131 + $0x170] sm:%s1123] %v1316
        %v1318 = vld [vmem:[%s1130 + $0x178] sm:%s1123]
        %1319 = vst [vmem:[%s1131 + $0x174] sm:%s1123] %v1318
        %v1320 = vld [vmem:[%s1130 + $0x16c] sm:%s1123]
        %1321 = vst [vmem:[%s1131 + $0x178] sm:%s1123] %v1320
        %v1322 = vld [vmem:[%s1130 + $0x17c] sm:%s1123]
        %1323 = vst [vmem:[%s1131 + $0x17c] sm:%s1123] %v1322
        %v1324 = vld [vmem:[%s1130 + $0x180] sm:%s1123]
        %1325 = vst [vmem:[%s1131 + $0x180] sm:%s1123] %v1324
        %v1326 = vld [vmem:[%s1130 + $0x190] sm:%s1123]
        %1327 = vst [vmem:[%s1131 + $0x184] sm:%s1123] %v1326
        %v1328 = vld [vmem:[%s1130 + $0x184] sm:%s1123]
        %1329 = vst [vmem:[%s1131 + $0x188] sm:%s1123] %v1328
        %v1330 = vld [vmem:[%s1130 + $0x194] sm:%s1123]
        %1331 = vst [vmem:[%s1131 + $0x18c] sm:%s1123] %v1330
        %v1332 = vld [vmem:[%s1130 + $0x188] sm:%s1123]
        %1333 = vst [vmem:[%s1131 + $0x190] sm:%s1123] %v1332
        %v1334 = vld [vmem:[%s1130 + $0x198] sm:%s1123]
        %1335 = vst [vmem:[%s1131 + $0x194] sm:%s1123] %v1334
        %v1336 = vld [vmem:[%s1130 + $0x18c] sm:%s1123]
        %1337 = vst [vmem:[%s1131 + $0x198] sm:%s1123] %v1336
        %v1338 = vld [vmem:[%s1130 + $0x19c] sm:%s1123]
        %1339 = vst [vmem:[%s1131 + $0x19c] sm:%s1123] %v1338
        %v1340 = vld [vmem:[%s1130 + $0x1a0] sm:%s1123]
        %1341 = vst [vmem:[%s1131 + $0x1a0] sm:%s1123] %v1340
        %v1342 = vld [vmem:[%s1130 + $0x1b0] sm:%s1123]
        %1343 = vst [vmem:[%s1131 + $0x1a4] sm:%s1123] %v1342
        %v1344 = vld [vmem:[%s1130 + $0x1a4] sm:%s1123]
        %1345 = vst [vmem:[%s1131 + $0x1a8] sm:%s1123] %v1344
        %v1346 = vld [vmem:[%s1130 + $0x1b4] sm:%s1123]
        %1347 = vst [vmem:[%s1131 + $0x1ac] sm:%s1123] %v1346
        %v1348 = vld [vmem:[%s1130 + $0x1a8] sm:%s1123]
        %1349 = vst [vmem:[%s1131 + $0x1b0] sm:%s1123] %v1348
        %v1350 = vld [vmem:[%s1130 + $0x1b8] sm:%s1123]
        %1351 = vst [vmem:[%s1131 + $0x1b4] sm:%s1123] %v1350
        %v1352 = vld [vmem:[%s1130 + $0x1ac] sm:%s1123]
        %1353 = vst [vmem:[%s1131 + $0x1b8] sm:%s1123] %v1352
        %v1354 = vld [vmem:[%s1130 + $0x1bc] sm:%s1123]
        %1355 = vst [vmem:[%s1131 + $0x1bc] sm:%s1123] %v1354
        %v1356 = vld [vmem:[%s1130 + $0x1c0] sm:%s1123]
        %1357 = vst [vmem:[%s1131 + $0x1c0] sm:%s1123] %v1356
        %v1358 = vld [vmem:[%s1130 + $0x1d0] sm:%s1123]
        %1359 = vst [vmem:[%s1131 + $0x1c4] sm:%s1123] %v1358
        %v1360 = vld [vmem:[%s1130 + $0x1c4] sm:%s1123]
        %1361 = vst [vmem:[%s1131 + $0x1c8] sm:%s1123] %v1360
        %v1362 = vld [vmem:[%s1130 + $0x1d4] sm:%s1123]
        %1363 = vst [vmem:[%s1131 + $0x1cc] sm:%s1123] %v1362
        %v1364 = vld [vmem:[%s1130 + $0x1c8] sm:%s1123]
        %1365 = vst [vmem:[%s1131 + $0x1d0] sm:%s1123] %v1364
        %v1366 = vld [vmem:[%s1130 + $0x1d8] sm:%s1123]
        %1367 = vst [vmem:[%s1131 + $0x1d4] sm:%s1123] %v1366
        %v1368 = vld [vmem:[%s1130 + $0x1cc] sm:%s1123]
        %1369 = vst [vmem:[%s1131 + $0x1d8] sm:%s1123] %v1368
        %v1370 = vld [vmem:[%s1130 + $0x1dc] sm:%s1123]
        %1371 = vst [vmem:[%s1131 + $0x1dc] sm:%s1123] %v1370
        %v1372 = vld [vmem:[%s1130 + $0x1e0] sm:%s1123]
        %1373 = vst [vmem:[%s1131 + $0x1e0] sm:%s1123] %v1372
        %v1374 = vld [vmem:[%s1130 + $0x1f0] sm:%s1123]
        %1375 = vst [vmem:[%s1131 + $0x1e4] sm:%s1123] %v1374
        %v1376 = vld [vmem:[%s1130 + $0x1e4] sm:%s1123]
        %1377 = vst [vmem:[%s1131 + $0x1e8] sm:%s1123] %v1376
        %v1378 = vld [vmem:[%s1130 + $0x1f4] sm:%s1123]
        %1379 = vst [vmem:[%s1131 + $0x1ec] sm:%s1123] %v1378
        %v1380 = vld [vmem:[%s1130 + $0x1e8] sm:%s1123]
        %1381 = vst [vmem:[%s1131 + $0x1f0] sm:%s1123] %v1380
        %v1382 = vld [vmem:[%s1130 + $0x1f8] sm:%s1123]
        %1383 = vst [vmem:[%s1131 + $0x1f4] sm:%s1123] %v1382
        %v1384 = vld [vmem:[%s1130 + $0x1ec] sm:%s1123]
        %1385 = vst [vmem:[%s1131 + $0x1f8] sm:%s1123] %v1384
        %v1386 = vld [vmem:[%s1130 + $0x1fc] sm:%s1123]
        %1387 = vst [vmem:[%s1131 + $0x1fc] sm:%s1123] %v1386
      $region95: #{_lambda_.1} parent=89 // loop_footer
        %s1129 = sadd.s32 1, %s1125
      $region96: #{_lambda_.1} parent=89 // loop_footer_branch
        %1124 = sbr.rel target = $region92
      $region97: #{_lambda_.1} parent=89 // loop_exit
        _
    $region90: #{_lambda_.1} parent=1 // pred_fallthru
      _
    // Predicated region
    $region116: #{_lambda_.1} parent=1 // pred_check
      _
    $region117: #{_lambda_.1} parent=1 // pred_check_branch
      %1673 = sbr.rel (0) target = $region119
    $region118: #{_lambda_.1} parent=1 // pred_region
      %1674 = vsyncadd %s1114, 8192
    $region119: #{_lambda_.1} parent=1 // pred_fallthru
      _
    %v1675 = vlaneseq
    %v1676 = vshrl.u32 %v1675, 7
    %vm1677 = vcmp.lt.s32.totalorder %v1676, 2
    %v1678 = vsel %vm1677, 1, 0
    %v1679 = vcvt.s32.f32 %v1678
    %v1680 = vsub.f32 1.0, %v1679
    %v1681 = vld [vmem:[%s0] sm:$0xff]
    %v1682 = vld [vmem:[%s0 + $0x8] sm:$0xff]
    %v1683 = vld [vmem:[%s1] sm:$0xff]
    %v1684 = vld [vmem:[%s1 + $0x8] sm:$0xff]
    %v1685 = vld [vmem:[%s1 + $0x10] sm:$0xff]
    %v1686 = vld [vmem:[%s1 + $0x18] sm:$0xff]
    %v1687 = vld [vmem:[%s1 + $0x20] sm:$0xff]
    %v1688 = vld [vmem:[%s1 + $0x28] sm:$0xff]
    %v1689 = vld [vmem:[%s1 + $0x30] sm:$0xff]
    %v1690 = vld [vmem:[%s1 + $0x38] sm:$0xff]
    %v1691 = vld [vmem:[%s1 + $0x40] sm:$0xff]
    %v1692 = vld [vmem:[%s1 + $0x48] sm:$0xff]
    %v1693 = vld [vmem:[%s1 + $0x50] sm:$0xff]
    %v1694 = vld [vmem:[%s1 + $0x58] sm:$0xff]
    %v1695 = vld [vmem:[%s1 + $0x60] sm:$0xff]
    %v1696 = vld [vmem:[%s1 + $0x68] sm:$0xff]
    %v1697 = vld [vmem:[%s1 + $0x70] sm:$0xff]
    %v1698 = vld [vmem:[%s1 + $0x78] sm:$0xff]
    %v1699 = vld [vmem:[%s1 + $0x80] sm:$0xff]
    %v1700 = vld [vmem:[%s1 + $0x88] sm:$0xff]
    %v1701 = vld [vmem:[%s1 + $0x90] sm:$0xff]
    %v1702 = vld [vmem:[%s1 + $0x98] sm:$0xff]
    %v1703 = vld [vmem:[%s1 + $0xa0] sm:$0xff]
    %v1704 = vld [vmem:[%s1 + $0xa8] sm:$0xff]
    %v1705 = vld [vmem:[%s1 + $0xb0] sm:$0xff]
    %v1706 = vld [vmem:[%s1 + $0xb8] sm:$0xff]
    %v1707 = vld [vmem:[%s1 + $0xc0] sm:$0xff]
    %v1708 = vld [vmem:[%s1 + $0xc8] sm:$0xff]
    %v1709 = vld [vmem:[%s1 + $0xd0] sm:$0xff]
    %v1710 = vld [vmem:[%s1 + $0xd8] sm:$0xff]
    %v1711 = vld [vmem:[%s1 + $0xe0] sm:$0xff]
    %v1712 = vld [vmem:[%s1 + $0xe8] sm:$0xff]
    %v1713 = vld [vmem:[%s1 + $0xf0] sm:$0xff]
    %v1714 = vld [vmem:[%s1 + $0xf8] sm:$0xff]
    %v1715 = vpack.c.bf16 %v1682, %v1681
    %v1716 = vld [vmem:[%s3] sm:$0xff]
    %v1718 = vlaneseq
    %v1719 = vshrl.u32 %v1718, 7
    %v1720 = vsub.s32 0, %v1719
    %v1721 = vrot.slane %v1716, %v1720
    %v1722 = vlaneseq
    %v1723 = vshrl.u32 %v1722, 7
    %v1724 = vsub.s32 1, %v1723
    %v1725 = vrot.slane %v1716, %v1724
    %v1726 = vlaneseq
    %v1727 = vshrl.u32 %v1726, 7
    %v1728 = vsub.s32 2, %v1727
    %v1729 = vrot.slane %v1716, %v1728
    %v1730 = vlaneseq
    %v1731 = vshrl.u32 %v1730, 7
    %v1732 = vsub.s32 3, %v1731
    %v1733 = vrot.slane %v1716, %v1732
    %v1734 = vlaneseq
    %v1735 = vshrl.u32 %v1734, 7
    %v1736 = vsub.s32 4, %v1735
    %v1737 = vrot.slane %v1716, %v1736
    %v1738 = vlaneseq
    %v1739 = vshrl.u32 %v1738, 7
    %v1740 = vsub.s32 5, %v1739
    %v1741 = vrot.slane %v1716, %v1740
    %v1742 = vlaneseq
    %v1743 = vshrl.u32 %v1742, 7
    %v1744 = vsub.s32 6, %v1743
    %v1745 = vrot.slane %v1716, %v1744
    %v1746 = vlaneseq
    %v1747 = vshrl.u32 %v1746, 7
    %v1748 = vsub.s32 7, %v1747
    %v1749 = vrot.slane %v1716, %v1748
    %v1790 = vunpack.c.l.b16 %v1683
    %v1791 = vunpack.c.h.b16 %v1683
    %v1792 = vunpack.c.l.b16 %v1684
    %v1793 = vunpack.c.h.b16 %v1684
    %v1794 = vunpack.c.l.b16 %v1685
    %v1795 = vunpack.c.h.b16 %v1685
    %v1796 = vunpack.c.l.b16 %v1686
    %v1797 = vunpack.c.h.b16 %v1686
    %v1798 = vunpack.c.l.b16 %v1687
    %v1799 = vunpack.c.h.b16 %v1687
    %v1800 = vunpack.c.l.b16 %v1688
    %v1801 = vunpack.c.h.b16 %v1688
    %v1802 = vunpack.c.l.b16 %v1689
    %v1803 = vunpack.c.h.b16 %v1689
    %v1804 = vunpack.c.l.b16 %v1690
    %v1805 = vunpack.c.h.b16 %v1690
    %v1806 = vunpack.c.l.b16 %v1691
    %v1807 = vunpack.c.h.b16 %v1691
    %v1808 = vunpack.c.l.b16 %v1692
    %v1809 = vunpack.c.h.b16 %v1692
    %v1810 = vunpack.c.l.b16 %v1693
    %v1811 = vunpack.c.h.b16 %v1693
    %v1812 = vunpack.c.l.b16 %v1694
    %v1813 = vunpack.c.h.b16 %v1694
    %v1814 = vunpack.c.l.b16 %v1695
    %v1815 = vunpack.c.h.b16 %v1695
    %v1816 = vunpack.c.l.b16 %v1696
    %v1817 = vunpack.c.h.b16 %v1696
    %v1818 = vunpack.c.l.b16 %v1697
    %v1819 = vunpack.c.h.b16 %v1697
    %v1820 = vunpack.c.l.b16 %v1698
    %v1821 = vunpack.c.h.b16 %v1698
    %v1822 = vunpack.c.l.b16 %v1699
    %v1823 = vunpack.c.h.b16 %v1699
    %v1824 = vunpack.c.l.b16 %v1700
    %v1825 = vunpack.c.h.b16 %v1700
    %v1826 = vunpack.c.l.b16 %v1701
    %v1827 = vunpack.c.h.b16 %v1701
    %v1828 = vunpack.c.l.b16 %v1702
    %v1829 = vunpack.c.h.b16 %v1702
    %v1830 = vunpack.c.l.b16 %v1703
    %v1831 = vunpack.c.h.b16 %v1703
    %v1832 = vunpack.c.l.b16 %v1704
    %v1833 = vunpack.c.h.b16 %v1704
    %v1834 = vunpack.c.l.b16 %v1705
    %v1835 = vunpack.c.h.b16 %v1705
    %v1836 = vunpack.c.l.b16 %v1706
    %v1837 = vunpack.c.h.b16 %v1706
    %v1838 = vunpack.c.l.b16 %v1707
    %v1839 = vunpack.c.h.b16 %v1707
    %v1840 = vunpack.c.l.b16 %v1708
    %v1841 = vunpack.c.h.b16 %v1708
    %v1842 = vunpack.c.l.b16 %v1709
    %v1843 = vunpack.c.h.b16 %v1709
    %v1844 = vunpack.c.l.b16 %v1710
    %v1845 = vunpack.c.h.b16 %v1710
    %v1846 = vunpack.c.l.b16 %v1711
    %v1847 = vunpack.c.h.b16 %v1711
    %v1848 = vunpack.c.l.b16 %v1712
    %v1849 = vunpack.c.h.b16 %v1712
    %v1850 = vunpack.c.l.b16 %v1713
    %v1851 = vunpack.c.h.b16 %v1713
    %v1852 = vunpack.c.l.b16 %v1714
    %v1853 = vunpack.c.h.b16 %v1714
    %v1854 = vpack.c.b16 %v1798, %v1790
    %v1855 = vpack.c.b16 %v1799, %v1791
    %v1856 = vpack.c.b16 %v1800, %v1792
    %v1857 = vpack.c.b16 %v1801, %v1793
    %v1858 = vpack.c.b16 %v1802, %v1794
    %v1859 = vpack.c.b16 %v1803, %v1795
    %v1860 = vpack.c.b16 %v1804, %v1796
    %v1861 = vpack.c.b16 %v1805, %v1797
    %v1862 = vpack.c.b16 %v1814, %v1806
    %v1863 = vpack.c.b16 %v1815, %v1807
    %v1864 = vpack.c.b16 %v1816, %v1808
    %v1865 = vpack.c.b16 %v1817, %v1809
    %v1866 = vpack.c.b16 %v1818, %v1810
    %v1867 = vpack.c.b16 %v1819, %v1811
    %v1868 = vpack.c.b16 %v1820, %v1812
    %v1869 = vpack.c.b16 %v1821, %v1813
    %v1870 = vpack.c.b16 %v1830, %v1822
    %v1871 = vpack.c.b16 %v1831, %v1823
    %v1872 = vpack.c.b16 %v1832, %v1824
    %v1873 = vpack.c.b16 %v1833, %v1825
    %v1874 = vpack.c.b16 %v1834, %v1826
    %v1875 = vpack.c.b16 %v1835, %v1827
    %v1876 = vpack.c.b16 %v1836, %v1828
    %v1877 = vpack.c.b16 %v1837, %v1829
    %v1878 = vpack.c.b16 %v1846, %v1838
    %v1879 = vpack.c.b16 %v1847, %v1839
    %v1880 = vpack.c.b16 %v1848, %v1840
    %v1881 = vpack.c.b16 %v1849, %v1841
    %v1882 = vpack.c.b16 %v1850, %v1842
    %v1883 = vpack.c.b16 %v1851, %v1843
    %v1884 = vpack.c.b16 %v1852, %v1844
    %v1885 = vpack.c.b16 %v1853, %v1845
    %vm1918 = vcmask 523264
    %v1920 = vsel %vm1918, %v1715, 0
    %1922 = vmatprep.subr.bf16.mxu0 %v1855
    %1923 = vmatpush1.bf16.msra.mxu0 %v1854
    %1924 = vmatprep.subr.bf16.mxu0 %v1863
    %1925 = vmatpush1.bf16.msra.mxu0 %v1862
    %1926 = vmatprep.subr.bf16.mxu0 %v1871
    %1927 = vmatpush1.bf16.msra.mxu0 %v1870
    %1928 = vmatprep.subr.bf16.mxu0 %v1879
    %1929 = vmatpush1.bf16.msra.mxu0 %v1878
    %1930 = vmatprep.subr.bf16.mxu0 0
    %1931 = vmatpush1.bf16.msra.mxu0 0
    %1932 = vmatprep.subr.bf16.mxu0 0
    %1933 = vmatpush1.bf16.msra.mxu0 0
    %1934 = vmatprep.subr.bf16.mxu0 0
    %1935 = vmatpush1.bf16.msra.mxu0 0
    %1936 = vmatprep.subr.bf16.mxu0 0
    %1937 = vmatpush1.bf16.msra.mxu0 0
    %1938 = vmatprep.subr.bf16.mxu0 0
    %1939 = vmatpush1.bf16.msra.mxu0 0
    %1940 = vmatprep.subr.bf16.mxu0 0
    %1941 = vmatpush1.bf16.msra.mxu0 0
    %1942 = vmatprep.subr.bf16.mxu0 0
    %1943 = vmatpush1.bf16.msra.mxu0 0
    %1944 = vmatprep.subr.bf16.mxu0 0
    %1945 = vmatpush1.bf16.msra.mxu0 0
    %1946 = vmatprep.subr.bf16.mxu0 0
    %1947 = vmatpush1.bf16.msra.mxu0 0
    %1948 = vmatprep.subr.bf16.mxu0 0
    %1949 = vmatpush1.bf16.msra.mxu0 0
    %1950 = vmatprep.subr.bf16.mxu0 0
    %1951 = vmatpush1.bf16.msra.mxu0 0
    %1952 = vmatprep.subr.bf16.mxu0 0
    %1953 = vmatpush1.bf16.msra.mxu0 0
    %1954 = vmatprep.mubr.bf16.mxu0 0
    %1955 = vmatmul.mubr.bf16.gmra.mrb[0].mxu0 %v1920
    %v1956 = vpop.f32.mrb[0].mxu0
    %v1957 = vadd.f32 %v1721, %v1956
    %v1958 = vpop.f32.mrb[0].mxu0
    %v1959 = vadd.f32 %v1725, %v1958
    %v1960 = vpop.f32.mrb[0].mxu0
    %v1961 = vadd.f32 %v1721, %v1960
    %v1962 = vpop.f32.mrb[0].mxu0
    %v1963 = vadd.f32 %v1725, %v1962
    %1964 = vdwg.mxu0
    %1965 = vmatprep.subr.bf16.mxu0 %v1857
    %1966 = vmatpush1.bf16.msra.mxu0 %v1856
    %1967 = vmatprep.subr.bf16.mxu0 %v1865
    %1968 = vmatpush1.bf16.msra.mxu0 %v1864
    %1969 = vmatprep.subr.bf16.mxu0 %v1873
    %1970 = vmatpush1.bf16.msra.mxu0 %v1872
    %1971 = vmatprep.subr.bf16.mxu0 %v1881
    %1972 = vmatpush1.bf16.msra.mxu0 %v1880
    %1973 = vmatprep.subr.bf16.mxu0 0
    %1974 = vmatpush1.bf16.msra.mxu0 0
    %1975 = vmatprep.subr.bf16.mxu0 0
    %1976 = vmatpush1.bf16.msra.mxu0 0
    %1977 = vmatprep.subr.bf16.mxu0 0
    %1978 = vmatpush1.bf16.msra.mxu0 0
    %1979 = vmatprep.subr.bf16.mxu0 0
    %1980 = vmatpush1.bf16.msra.mxu0 0
    %1981 = vmatprep.subr.bf16.mxu0 0
    %1982 = vmatpush1.bf16.msra.mxu0 0
    %1983 = vmatprep.subr.bf16.mxu0 0
    %1984 = vmatpush1.bf16.msra.mxu0 0
    %1985 = vmatprep.subr.bf16.mxu0 0
    %1986 = vmatpush1.bf16.msra.mxu0 0
    %1987 = vmatprep.subr.bf16.mxu0 0
    %1988 = vmatpush1.bf16.msra.mxu0 0
    %1989 = vmatprep.subr.bf16.mxu0 0
    %1990 = vmatpush1.bf16.msra.mxu0 0
    %1991 = vmatprep.subr.bf16.mxu0 0
    %1992 = vmatpush1.bf16.msra.mxu0 0
    %1993 = vmatprep.subr.bf16.mxu0 0
    %1994 = vmatpush1.bf16.msra.mxu0 0
    %1995 = vmatprep.subr.bf16.mxu0 0
    %1996 = vmatpush1.bf16.msra.mxu0 0
    %1997 = vmatprep.mubr.bf16.mxu0 0
    %1998 = vmatmul.mubr.bf16.gmra.mrb[0].mxu0 %v1920
    %v1999 = vpop.f32.mrb[0].mxu0
    %v2000 = vadd.f32 %v1729, %v1999
    %v2001 = vpop.f32.mrb[0].mxu0
    %v2002 = vadd.f32 %v1733, %v2001
    %v2003 = vpop.f32.mrb[0].mxu0
    %v2004 = vadd.f32 %v1729, %v2003
    %v2005 = vpop.f32.mrb[0].mxu0
    %v2006 = vadd.f32 %v1733, %v2005
    %2007 = vdwg.mxu0
    %2008 = vmatprep.subr.bf16.mxu0 %v1859
    %2009 = vmatpush1.bf16.msra.mxu0 %v1858
    %2010 = vmatprep.subr.bf16.mxu0 %v1867
    %2011 = vmatpush1.bf16.msra.mxu0 %v1866
    %2012 = vmatprep.subr.bf16.mxu0 %v1875
    %2013 = vmatpush1.bf16.msra.mxu0 %v1874
    %2014 = vmatprep.subr.bf16.mxu0 %v1883
    %2015 = vmatpush1.bf16.msra.mxu0 %v1882
    %2016 = vmatprep.subr.bf16.mxu0 0
    %2017 = vmatpush1.bf16.msra.mxu0 0
    %2018 = vmatprep.subr.bf16.mxu0 0
    %2019 = vmatpush1.bf16.msra.mxu0 0
    %2020 = vmatprep.subr.bf16.mxu0 0
    %2021 = vmatpush1.bf16.msra.mxu0 0
    %2022 = vmatprep.subr.bf16.mxu0 0
    %2023 = vmatpush1.bf16.msra.mxu0 0
    %2024 = vmatprep.subr.bf16.mxu0 0
    %2025 = vmatpush1.bf16.msra.mxu0 0
    %2026 = vmatprep.subr.bf16.mxu0 0
    %2027 = vmatpush1.bf16.msra.mxu0 0
    %2028 = vmatprep.subr.bf16.mxu0 0
    %2029 = vmatpush1.bf16.msra.mxu0 0
    %2030 = vmatprep.subr.bf16.mxu0 0
    %2031 = vmatpush1.bf16.msra.mxu0 0
    %2032 = vmatprep.subr.bf16.mxu0 0
    %2033 = vmatpush1.bf16.msra.mxu0 0
    %2034 = vmatprep.subr.bf16.mxu0 0
    %2035 = vmatpush1.bf16.msra.mxu0 0
    %2036 = vmatprep.subr.bf16.mxu0 0
    %2037 = vmatpush1.bf16.msra.mxu0 0
    %2038 = vmatprep.subr.bf16.mxu0 0
    %2039 = vmatpush1.bf16.msra.mxu0 0
    %2040 = vmatprep.mubr.bf16.mxu0 0
    %2041 = vmatmul.mubr.bf16.gmra.mrb[0].mxu0 %v1920
    %v2042 = vpop.f32.mrb[0].mxu0
    %v2043 = vadd.f32 %v1737, %v2042
    %v2044 = vpop.f32.mrb[0].mxu0
    %v2045 = vadd.f32 %v1741, %v2044
    %v2046 = vpop.f32.mrb[0].mxu0
    %v2047 = vadd.f32 %v1737, %v2046
    %v2048 = vpop.f32.mrb[0].mxu0
    %v2049 = vadd.f32 %v1741, %v2048
    %2050 = vdwg.mxu0
    %2051 = vmatprep.subr.bf16.mxu0 %v1861
    %2052 = vmatpush1.bf16.msra.mxu0 %v1860
    %2053 = vmatprep.subr.bf16.mxu0 %v1869
    %2054 = vmatpush1.bf16.msra.mxu0 %v1868
    %2055 = vmatprep.subr.bf16.mxu0 %v1877
    %2056 = vmatpush1.bf16.msra.mxu0 %v1876
    %2057 = vmatprep.subr.bf16.mxu0 %v1885
    %2058 = vmatpush1.bf16.msra.mxu0 %v1884
    %2059 = vmatprep.subr.bf16.mxu0 0
    %2060 = vmatpush1.bf16.msra.mxu0 0
    %2061 = vmatprep.subr.bf16.mxu0 0
    %2062 = vmatpush1.bf16.msra.mxu0 0
    %2063 = vmatprep.subr.bf16.mxu0 0
    %2064 = vmatpush1.bf16.msra.mxu0 0
    %2065 = vmatprep.subr.bf16.mxu0 0
    %2066 = vmatpush1.bf16.msra.mxu0 0
    %2067 = vmatprep.subr.bf16.mxu0 0
    %2068 = vmatpush1.bf16.msra.mxu0 0
    %2069 = vmatprep.subr.bf16.mxu0 0
    %2070 = vmatpush1.bf16.msra.mxu0 0
    %2071 = vmatprep.subr.bf16.mxu0 0
    %2072 = vmatpush1.bf16.msra.mxu0 0
    %2073 = vmatprep.subr.bf16.mxu0 0
    %2074 = vmatpush1.bf16.msra.mxu0 0
    %2075 = vmatprep.subr.bf16.mxu0 0
    %2076 = vmatpush1.bf16.msra.mxu0 0
    %2077 = vmatprep.subr.bf16.mxu0 0
    %2078 = vmatpush1.bf16.msra.mxu0 0
    %2079 = vmatprep.subr.bf16.mxu0 0
    %2080 = vmatpush1.bf16.msra.mxu0 0
    %2081 = vmatprep.subr.bf16.mxu0 0
    %2082 = vmatpush1.bf16.msra.mxu0 0
    %2083 = vmatprep.mubr.bf16.mxu0 0
    %2084 = vmatmul.mubr.bf16.gmra.mrb[0].mxu0 %v1920
    %v2085 = vpop.f32.mrb[0].mxu0
    %v2086 = vadd.f32 %v1745, %v2085
    %v2087 = vpop.f32.mrb[0].mxu0
    %v2088 = vadd.f32 %v1749, %v2087
    %v2089 = vpop.f32.mrb[0].mxu0
    %v2090 = vadd.f32 %v1745, %v2089
    %v2091 = vpop.f32.mrb[0].mxu0
    %v2092 = vadd.f32 %v1749, %v2091
    %2093 = vdwg.mxu0
    %2094 = vst [vmem:[#allocation2] sm:$0x3] %v1957
    %2095 = vst [vmem:[#allocation2 + $0x8] sm:$0x3] %v1959
    %2096 = vst [vmem:[#allocation2 + $0x10] sm:$0x3] %v2000
    %2097 = vst [vmem:[#allocation2 + $0x18] sm:$0x3] %v2002
    %v2102 = vrot.slane %v2047, 4
    %v2103 = vrot.slane %v2049, 4
    %v2104 = vrot.slane %v2090, 4
    %v2105 = vrot.slane %v2092, 4
    %2110 = vst [vmem:[#allocation2] sm:$0xc] %v2102
    %2111 = vst [vmem:[#allocation2 + $0x8] sm:$0xc] %v2103
    %2112 = vst [vmem:[#allocation2 + $0x10] sm:$0xc] %v2104
    %2113 = vst [vmem:[#allocation2 + $0x18] sm:$0xc] %v2105
    %v2118 = vrot.slane %v1957, 6
    %v2119 = vrot.slane %v1959, 6
    %v2120 = vrot.slane %v2000, 6
    %v2121 = vrot.slane %v2002, 6
    %2126 = vst [vmem:[#allocation2] sm:$0x30] %v2118
    %2127 = vst [vmem:[#allocation2 + $0x8] sm:$0x30] %v2119
    %2128 = vst [vmem:[#allocation2 + $0x10] sm:$0x30] %v2120
    %2129 = vst [vmem:[#allocation2 + $0x18] sm:$0x30] %v2121
    %v2130 = vrot.slane %v2047, 6
    %v2131 = vrot.slane %v2049, 6
    %v2132 = vrot.slane %v2090, 6
    %v2133 = vrot.slane %v2092, 6
    %2138 = vst [vmem:[#allocation2] sm:$0xc0] %v2130
    %2139 = vst [vmem:[#allocation2 + $0x8] sm:$0xc0] %v2131
    %2140 = vst [vmem:[#allocation2 + $0x10] sm:$0xc0] %v2132
    %2141 = vst [vmem:[#allocation2 + $0x18] sm:$0xc0] %v2133
    %v2142 = vrot.slane %v1957, 4
    %v2143 = vrot.slane %v1959, 4
    %v2144 = vrot.slane %v2000, 4
    %v2145 = vrot.slane %v2002, 4
    %2150 = vst [vmem:[#allocation2 + $0x20] sm:$0x3] %v2142
    %2151 = vst [vmem:[#allocation2 + $0x28] sm:$0x3] %v2143
    %2152 = vst [vmem:[#allocation2 + $0x30] sm:$0x3] %v2144
    %2153 = vst [vmem:[#allocation2 + $0x38] sm:$0x3] %v2145
    %2154 = vst [vmem:[#allocation2 + $0x20] sm:$0xc] %v2047
    %2155 = vst [vmem:[#allocation2 + $0x28] sm:$0xc] %v2049
    %2156 = vst [vmem:[#allocation2 + $0x30] sm:$0xc] %v2090
    %2157 = vst [vmem:[#allocation2 + $0x38] sm:$0xc] %v2092
    %v2158 = vrot.slane %v1957, 2
    %v2159 = vrot.slane %v1959, 2
    %v2160 = vrot.slane %v2000, 2
    %v2161 = vrot.slane %v2002, 2
    %2166 = vst [vmem:[#allocation2 + $0x20] sm:$0x30] %v2158
    %2167 = vst [vmem:[#allocation2 + $0x28] sm:$0x30] %v2159
    %2168 = vst [vmem:[#allocation2 + $0x30] sm:$0x30] %v2160
    %2169 = vst [vmem:[#allocation2 + $0x38] sm:$0x30] %v2161
    %v2170 = vrot.slane %v2047, 2
    %v2171 = vrot.slane %v2049, 2
    %v2172 = vrot.slane %v2090, 2
    %v2173 = vrot.slane %v2092, 2
    %2178 = vst [vmem:[#allocation2 + $0x20] sm:$0xc0] %v2170
    %2179 = vst [vmem:[#allocation2 + $0x28] sm:$0xc0] %v2171
    %2180 = vst [vmem:[#allocation2 + $0x30] sm:$0xc0] %v2172
    %2181 = vst [vmem:[#allocation2 + $0x38] sm:$0xc0] %v2173
    %2182 = vst [vmem:[#allocation2 + $0x40] sm:$0x3] %v1961
    %2183 = vst [vmem:[#allocation2 + $0x48] sm:$0x3] %v1963
    %2184 = vst [vmem:[#allocation2 + $0x50] sm:$0x3] %v2004
    %2185 = vst [vmem:[#allocation2 + $0x58] sm:$0x3] %v2006
    %v2190 = vrot.slane %v2043, 4
    %v2191 = vrot.slane %v2045, 4
    %v2192 = vrot.slane %v2086, 4
    %v2193 = vrot.slane %v2088, 4
    %2198 = vst [vmem:[#allocation2 + $0x40] sm:$0xc] %v2190
    %2199 = vst [vmem:[#allocation2 + $0x48] sm:$0xc] %v2191
    %2200 = vst [vmem:[#allocation2 + $0x50] sm:$0xc] %v2192
    %2201 = vst [vmem:[#allocation2 + $0x58] sm:$0xc] %v2193
    %v2206 = vrot.slane %v1961, 6
    %v2207 = vrot.slane %v1963, 6
    %v2208 = vrot.slane %v2004, 6
    %v2209 = vrot.slane %v2006, 6
    %2214 = vst [vmem:[#allocation2 + $0x40] sm:$0x30] %v2206
    %2215 = vst [vmem:[#allocation2 + $0x48] sm:$0x30] %v2207
    %2216 = vst [vmem:[#allocation2 + $0x50] sm:$0x30] %v2208
    %2217 = vst [vmem:[#allocation2 + $0x58] sm:$0x30] %v2209
    %v2218 = vrot.slane %v2043, 6
    %v2219 = vrot.slane %v2045, 6
    %v2220 = vrot.slane %v2086, 6
    %v2221 = vrot.slane %v2088, 6
    %2226 = vst [vmem:[#allocation2 + $0x40] sm:$0xc0] %v2218
    %2227 = vst [vmem:[#allocation2 + $0x48] sm:$0xc0] %v2219
    %2228 = vst [vmem:[#allocation2 + $0x50] sm:$0xc0] %v2220
    %2229 = vst [vmem:[#allocation2 + $0x58] sm:$0xc0] %v2221
    %v2230 = vrot.slane %v1961, 4
    %v2231 = vrot.slane %v1963, 4
    %v2232 = vrot.slane %v2004, 4
    %v2233 = vrot.slane %v2006, 4
    %2238 = vst [vmem:[#allocation2 + $0x60] sm:$0x3] %v2230
    %2239 = vst [vmem:[#allocation2 + $0x68] sm:$0x3] %v2231
    %2240 = vst [vmem:[#allocation2 + $0x70] sm:$0x3] %v2232
    %2241 = vst [vmem:[#allocation2 + $0x78] sm:$0x3] %v2233
    %2242 = vst [vmem:[#allocation2 + $0x60] sm:$0xc] %v2043
    %2243 = vst [vmem:[#allocation2 + $0x68] sm:$0xc] %v2045
    %2244 = vst [vmem:[#allocation2 + $0x70] sm:$0xc] %v2086
    %2245 = vst [vmem:[#allocation2 + $0x78] sm:$0xc] %v2088
    %v2246 = vrot.slane %v1961, 2
    %v2247 = vrot.slane %v1963, 2
    %v2248 = vrot.slane %v2004, 2
    %v2249 = vrot.slane %v2006, 2
    %2254 = vst [vmem:[#allocation2 + $0x60] sm:$0x30] %v2246
    %2255 = vst [vmem:[#allocation2 + $0x68] sm:$0x30] %v2247
    %2256 = vst [vmem:[#allocation2 + $0x70] sm:$0x30] %v2248
    %2257 = vst [vmem:[#allocation2 + $0x78] sm:$0x30] %v2249
    %v2258 = vrot.slane %v2043, 2
    %v2259 = vrot.slane %v2045, 2
    %v2260 = vrot.slane %v2086, 2
    %v2261 = vrot.slane %v2088, 2
    %2266 = vst [vmem:[#allocation2 + $0x60] sm:$0xc0] %v2258
    %2267 = vst [vmem:[#allocation2 + $0x68] sm:$0xc0] %v2259
    %2268 = vst [vmem:[#allocation2 + $0x70] sm:$0xc0] %v2260
    %2269 = vst [vmem:[#allocation2 + $0x78] sm:$0xc0] %v2261
    %v2270 = vld [vmem:[%s2] sm:$0xff]
    %v2271 = vld [vmem:[%s2 + $0x8] sm:$0xff]
    %v2272 = vld [vmem:[%s2 + $0x10] sm:$0xff]
    %v2273 = vld [vmem:[%s2 + $0x18] sm:$0xff]
    %v2274 = vld [vmem:[%s2 + $0x20] sm:$0xff]
    %v2275 = vld [vmem:[%s2 + $0x28] sm:$0xff]
    %v2276 = vld [vmem:[%s2 + $0x30] sm:$0xff]
    %v2277 = vld [vmem:[%s2 + $0x38] sm:$0xff]
    %v2278 = vld [vmem:[%s2 + $0x40] sm:$0xff]
    %v2279 = vld [vmem:[%s2 + $0x48] sm:$0xff]
    %v2280 = vld [vmem:[%s2 + $0x50] sm:$0xff]
    %v2281 = vld [vmem:[%s2 + $0x58] sm:$0xff]
    %v2282 = vld [vmem:[%s2 + $0x60] sm:$0xff]
    %v2283 = vld [vmem:[%s2 + $0x68] sm:$0xff]
    %v2284 = vld [vmem:[%s2 + $0x70] sm:$0xff]
    %v2285 = vld [vmem:[%s2 + $0x78] sm:$0xff]
    %v2286 = vld [vmem:[%s2 + $0x80] sm:$0xff]
    %v2287 = vld [vmem:[%s2 + $0x88] sm:$0xff]
    %v2288 = vld [vmem:[%s2 + $0x90] sm:$0xff]
    %v2289 = vld [vmem:[%s2 + $0x98] sm:$0xff]
    %v2290 = vld [vmem:[%s2 + $0xa0] sm:$0xff]
    %v2291 = vld [vmem:[%s2 + $0xa8] sm:$0xff]
    %v2292 = vld [vmem:[%s2 + $0xb0] sm:$0xff]
    %v2293 = vld [vmem:[%s2 + $0xb8] sm:$0xff]
    %v2294 = vld [vmem:[%s2 + $0xc0] sm:$0xff]
    %v2295 = vld [vmem:[%s2 + $0xc8] sm:$0xff]
    %v2296 = vld [vmem:[%s2 + $0xd0] sm:$0xff]
    %v2297 = vld [vmem:[%s2 + $0xd8] sm:$0xff]
    %v2298 = vld [vmem:[%s2 + $0xe0] sm:$0xff]
    %v2299 = vld [vmem:[%s2 + $0xe8] sm:$0xff]
    %v2300 = vld [vmem:[%s2 + $0xf0] sm:$0xff]
    %v2301 = vld [vmem:[%s2 + $0xf8] sm:$0xff]
    %v2302 = vld [vmem:[%s2 + $0x100] sm:$0xff]
    %v2303 = vld [vmem:[%s2 + $0x108] sm:$0xff]
    %v2304 = vld [vmem:[%s2 + $0x110] sm:$0xff]
    %v2305 = vld [vmem:[%s2 + $0x118] sm:$0xff]
    %v2306 = vld [vmem:[%s2 + $0x120] sm:$0xff]
    %v2307 = vld [vmem:[%s2 + $0x128] sm:$0xff]
    %v2308 = vld [vmem:[%s2 + $0x130] sm:$0xff]
    %v2309 = vld [vmem:[%s2 + $0x138] sm:$0xff]
    %v2310 = vld [vmem:[%s2 + $0x140] sm:$0xff]
    %v2311 = vld [vmem:[%s2 + $0x148] sm:$0xff]
    %v2312 = vld [vmem:[%s2 + $0x150] sm:$0xff]
    %v2313 = vld [vmem:[%s2 + $0x158] sm:$0xff]
    %v2314 = vld [vmem:[%s2 + $0x160] sm:$0xff]
    %v2315 = vld [vmem:[%s2 + $0x168] sm:$0xff]
    %v2316 = vld [vmem:[%s2 + $0x170] sm:$0xff]
    %v2317 = vld [vmem:[%s2 + $0x178] sm:$0xff]
    %v2318 = vld [vmem:[%s2 + $0x180] sm:$0xff]
    %v2319 = vld [vmem:[%s2 + $0x188] sm:$0xff]
    %v2320 = vld [vmem:[%s2 + $0x190] sm:$0xff]
    %v2321 = vld [vmem:[%s2 + $0x198] sm:$0xff]
    %v2322 = vld [vmem:[%s2 + $0x1a0] sm:$0xff]
    %v2323 = vld [vmem:[%s2 + $0x1a8] sm:$0xff]
    %v2324 = vld [vmem:[%s2 + $0x1b0] sm:$0xff]
    %v2325 = vld [vmem:[%s2 + $0x1b8] sm:$0xff]
    %v2326 = vld [vmem:[%s2 + $0x1c0] sm:$0xff]
    %v2327 = vld [vmem:[%s2 + $0x1c8] sm:$0xff]
    %v2328 = vld [vmem:[%s2 + $0x1d0] sm:$0xff]
    %v2329 = vld [vmem:[%s2 + $0x1d8] sm:$0xff]
    %v2330 = vld [vmem:[%s2 + $0x1e0] sm:$0xff]
    %v2331 = vld [vmem:[%s2 + $0x1e8] sm:$0xff]
    %v2332 = vld [vmem:[%s2 + $0x1f0] sm:$0xff]
    %v2333 = vld [vmem:[%s2 + $0x1f8] sm:$0xff]
    %v2334 = vmul.f32 %v1679, 0.0
    %v2335 = vmul.f32 %v1680, 0.0
    %v2336 = vld [vmem:[#allocation2] sm:$0xf]
    %v2337 = vld [vmem:[#allocation2 + $0x8] sm:$0xf]
    %v2338 = vld [vmem:[#allocation2 + $0x10] sm:$0xf]
    %v2339 = vld [vmem:[#allocation2 + $0x18] sm:$0xf]
    %v2340 = vpack.c.bf16 %v2334, %v2334
    %v2341 = vpack.c.bf16 %v2335, %v2335
    %v2406 = vunpack.c.l.b16 %v2270
    %v2407 = vunpack.c.h.b16 %v2270
    %v2408 = vunpack.c.l.b16 %v2271
    %v2409 = vunpack.c.h.b16 %v2271
    %v2410 = vunpack.c.l.b16 %v2272
    %v2411 = vunpack.c.h.b16 %v2272
    %v2412 = vunpack.c.l.b16 %v2273
    %v2413 = vunpack.c.h.b16 %v2273
    %v2414 = vunpack.c.l.b16 %v2274
    %v2415 = vunpack.c.h.b16 %v2274
    %v2416 = vunpack.c.l.b16 %v2275
    %v2417 = vunpack.c.h.b16 %v2275
    %v2418 = vunpack.c.l.b16 %v2276
    %v2419 = vunpack.c.h.b16 %v2276
    %v2420 = vunpack.c.l.b16 %v2277
    %v2421 = vunpack.c.h.b16 %v2277
    %v2422 = vunpack.c.l.b16 %v2278
    %v2423 = vunpack.c.h.b16 %v2278
    %v2424 = vunpack.c.l.b16 %v2279
    %v2425 = vunpack.c.h.b16 %v2279
    %v2426 = vunpack.c.l.b16 %v2280
    %v2427 = vunpack.c.h.b16 %v2280
    %v2428 = vunpack.c.l.b16 %v2281
    %v2429 = vunpack.c.h.b16 %v2281
    %v2430 = vunpack.c.l.b16 %v2282
    %v2431 = vunpack.c.h.b16 %v2282
    %v2432 = vunpack.c.l.b16 %v2283
    %v2433 = vunpack.c.h.b16 %v2283
    %v2434 = vunpack.c.l.b16 %v2284
    %v2435 = vunpack.c.h.b16 %v2284
    %v2436 = vunpack.c.l.b16 %v2285
    %v2437 = vunpack.c.h.b16 %v2285
    %v2438 = vunpack.c.l.b16 %v2286
    %v2439 = vunpack.c.h.b16 %v2286
    %v2440 = vunpack.c.l.b16 %v2287
    %v2441 = vunpack.c.h.b16 %v2287
    %v2442 = vunpack.c.l.b16 %v2288
    %v2443 = vunpack.c.h.b16 %v2288
    %v2444 = vunpack.c.l.b16 %v2289
    %v2445 = vunpack.c.h.b16 %v2289
    %v2446 = vunpack.c.l.b16 %v2290
    %v2447 = vunpack.c.h.b16 %v2290
    %v2448 = vunpack.c.l.b16 %v2291
    %v2449 = vunpack.c.h.b16 %v2291
    %v2450 = vunpack.c.l.b16 %v2292
    %v2451 = vunpack.c.h.b16 %v2292
    %v2452 = vunpack.c.l.b16 %v2293
    %v2453 = vunpack.c.h.b16 %v2293
    %v2454 = vunpack.c.l.b16 %v2294
    %v2455 = vunpack.c.h.b16 %v2294
    %v2456 = vunpack.c.l.b16 %v2295
    %v2457 = vunpack.c.h.b16 %v2295
    %v2458 = vunpack.c.l.b16 %v2296
    %v2459 = vunpack.c.h.b16 %v2296
    %v2460 = vunpack.c.l.b16 %v2297
    %v2461 = vunpack.c.h.b16 %v2297
    %v2462 = vunpack.c.l.b16 %v2298
    %v2463 = vunpack.c.h.b16 %v2298
    %v2464 = vunpack.c.l.b16 %v2299
    %v2465 = vunpack.c.h.b16 %v2299
    %v2466 = vunpack.c.l.b16 %v2300
    %v2467 = vunpack.c.h.b16 %v2300
    %v2468 = vunpack.c.l.b16 %v2301
    %v2469 = vunpack.c.h.b16 %v2301
    %v2470 = vunpack.c.l.b16 %v2302
    %v2471 = vunpack.c.h.b16 %v2302
    %v2472 = vunpack.c.l.b16 %v2303
    %v2473 = vunpack.c.h.b16 %v2303
    %v2474 = vunpack.c.l.b16 %v2304
    %v2475 = vunpack.c.h.b16 %v2304
    %v2476 = vunpack.c.l.b16 %v2305
    %v2477 = vunpack.c.h.b16 %v2305
    %v2478 = vunpack.c.l.b16 %v2306
    %v2479 = vunpack.c.h.b16 %v2306
    %v2480 = vunpack.c.l.b16 %v2307
    %v2481 = vunpack.c.h.b16 %v2307
    %v2482 = vunpack.c.l.b16 %v2308
    %v2483 = vunpack.c.h.b16 %v2308
    %v2484 = vunpack.c.l.b16 %v2309
    %v2485 = vunpack.c.h.b16 %v2309
    %v2486 = vunpack.c.l.b16 %v2310
    %v2487 = vunpack.c.h.b16 %v2310
    %v2488 = vunpack.c.l.b16 %v2311
    %v2489 = vunpack.c.h.b16 %v2311
    %v2490 = vunpack.c.l.b16 %v2312
    %v2491 = vunpack.c.h.b16 %v2312
    %v2492 = vunpack.c.l.b16 %v2313
    %v2493 = vunpack.c.h.b16 %v2313
    %v2494 = vunpack.c.l.b16 %v2314
    %v2495 = vunpack.c.h.b16 %v2314
    %v2496 = vunpack.c.l.b16 %v2315
    %v2497 = vunpack.c.h.b16 %v2315
    %v2498 = vunpack.c.l.b16 %v2316
    %v2499 = vunpack.c.h.b16 %v2316
    %v2500 = vunpack.c.l.b16 %v2317
    %v2501 = vunpack.c.h.b16 %v2317
    %v2502 = vunpack.c.l.b16 %v2318
    %v2503 = vunpack.c.h.b16 %v2318
    %v2504 = vunpack.c.l.b16 %v2319
    %v2505 = vunpack.c.h.b16 %v2319
    %v2506 = vunpack.c.l.b16 %v2320
    %v2507 = vunpack.c.h.b16 %v2320
    %v2508 = vunpack.c.l.b16 %v2321
    %v2509 = vunpack.c.h.b16 %v2321
    %v2510 = vunpack.c.l.b16 %v2322
    %v2511 = vunpack.c.h.b16 %v2322
    %v2512 = vunpack.c.l.b16 %v2323
    %v2513 = vunpack.c.h.b16 %v2323
    %v2514 = vunpack.c.l.b16 %v2324
    %v2515 = vunpack.c.h.b16 %v2324
    %v2516 = vunpack.c.l.b16 %v2325
    %v2517 = vunpack.c.h.b16 %v2325
    %v2518 = vunpack.c.l.b16 %v2326
    %v2519 = vunpack.c.h.b16 %v2326
    %v2520 = vunpack.c.l.b16 %v2327
    %v2521 = vunpack.c.h.b16 %v2327
    %v2522 = vunpack.c.l.b16 %v2328
    %v2523 = vunpack.c.h.b16 %v2328
    %v2524 = vunpack.c.l.b16 %v2329
    %v2525 = vunpack.c.h.b16 %v2329
    %v2526 = vunpack.c.l.b16 %v2330
    %v2527 = vunpack.c.h.b16 %v2330
    %v2528 = vunpack.c.l.b16 %v2331
    %v2529 = vunpack.c.h.b16 %v2331
    %v2530 = vunpack.c.l.b16 %v2332
    %v2531 = vunpack.c.h.b16 %v2332
    %v2532 = vunpack.c.l.b16 %v2333
    %v2533 = vunpack.c.h.b16 %v2333
    %v2534 = vpack.c.b16 %v2410, %v2406
    %v2535 = vpack.c.b16 %v2411, %v2407
    %v2536 = vpack.c.b16 %v2412, %v2408
    %v2537 = vpack.c.b16 %v2413, %v2409
    %v2538 = vpack.c.b16 %v2418, %v2414
    %v2539 = vpack.c.b16 %v2419, %v2415
    %v2540 = vpack.c.b16 %v2420, %v2416
    %v2541 = vpack.c.b16 %v2421, %v2417
    %v2542 = vpack.c.b16 %v2426, %v2422
    %v2543 = vpack.c.b16 %v2427, %v2423
    %v2544 = vpack.c.b16 %v2428, %v2424
    %v2545 = vpack.c.b16 %v2429, %v2425
    %v2546 = vpack.c.b16 %v2434, %v2430
    %v2547 = vpack.c.b16 %v2435, %v2431
    %v2548 = vpack.c.b16 %v2436, %v2432
    %v2549 = vpack.c.b16 %v2437, %v2433
    %v2550 = vpack.c.b16 %v2442, %v2438
    %v2551 = vpack.c.b16 %v2443, %v2439
    %v2552 = vpack.c.b16 %v2444, %v2440
    %v2553 = vpack.c.b16 %v2445, %v2441
    %v2554 = vpack.c.b16 %v2450, %v2446
    %v2555 = vpack.c.b16 %v2451, %v2447
    %v2556 = vpack.c.b16 %v2452, %v2448
    %v2557 = vpack.c.b16 %v2453, %v2449
    %v2558 = vpack.c.b16 %v2458, %v2454
    %v2559 = vpack.c.b16 %v2459, %v2455
    %v2560 = vpack.c.b16 %v2460, %v2456
    %v2561 = vpack.c.b16 %v2461, %v2457
    %v2562 = vpack.c.b16 %v2466, %v2462
    %v2563 = vpack.c.b16 %v2467, %v2463
    %v2564 = vpack.c.b16 %v2468, %v2464
    %v2565 = vpack.c.b16 %v2469, %v2465
    %v2566 = vpack.c.b16 %v2474, %v2470
    %v2567 = vpack.c.b16 %v2475, %v2471
    %v2568 = vpack.c.b16 %v2476, %v2472
    %v2569 = vpack.c.b16 %v2477, %v2473
    %v2570 = vpack.c.b16 %v2482, %v2478
    %v2571 = vpack.c.b16 %v2483, %v2479
    %v2572 = vpack.c.b16 %v2484, %v2480
    %v2573 = vpack.c.b16 %v2485, %v2481
    %v2574 = vpack.c.b16 %v2490, %v2486
    %v2575 = vpack.c.b16 %v2491, %v2487
    %v2576 = vpack.c.b16 %v2492, %v2488
    %v2577 = vpack.c.b16 %v2493, %v2489
    %v2578 = vpack.c.b16 %v2498, %v2494
    %v2579 = vpack.c.b16 %v2499, %v2495
    %v2580 = vpack.c.b16 %v2500, %v2496
    %v2581 = vpack.c.b16 %v2501, %v2497
    %v2582 = vpack.c.b16 %v2506, %v2502
    %v2583 = vpack.c.b16 %v2507, %v2503
    %v2584 = vpack.c.b16 %v2508, %v2504
    %v2585 = vpack.c.b16 %v2509, %v2505
    %v2586 = vpack.c.b16 %v2514, %v2510
    %v2587 = vpack.c.b16 %v2515, %v2511
    %v2588 = vpack.c.b16 %v2516, %v2512
    %v2589 = vpack.c.b16 %v2517, %v2513
    %v2590 = vpack.c.b16 %v2522, %v2518
    %v2591 = vpack.c.b16 %v2523, %v2519
    %v2592 = vpack.c.b16 %v2524, %v2520
    %v2593 = vpack.c.b16 %v2525, %v2521
    %v2594 = vpack.c.b16 %v2530, %v2526
    %v2595 = vpack.c.b16 %v2531, %v2527
    %v2596 = vpack.c.b16 %v2532, %v2528
    %v2597 = vpack.c.b16 %v2533, %v2529
    %2662 = vmatprep.subr.bf16.mxu0 %v2535
    %2663 = vmatpush1.bf16.msra.mxu0 %v2534
    %2664 = vmatprep.subr.bf16.mxu0 %v2539
    %2665 = vmatpush1.bf16.msra.mxu0 %v2538
    %2666 = vmatprep.subr.bf16.mxu0 %v2543
    %2667 = vmatpush1.bf16.msra.mxu0 %v2542
    %2668 = vmatprep.subr.bf16.mxu0 %v2547
    %2669 = vmatpush1.bf16.msra.mxu0 %v2546
    %2670 = vmatprep.subr.bf16.mxu0 %v2551
    %2671 = vmatpush1.bf16.msra.mxu0 %v2550
    %2672 = vmatprep.subr.bf16.mxu0 %v2555
    %2673 = vmatpush1.bf16.msra.mxu0 %v2554
    %2674 = vmatprep.subr.bf16.mxu0 %v2559
    %2675 = vmatpush1.bf16.msra.mxu0 %v2558
    %2676 = vmatprep.subr.bf16.mxu0 %v2563
    %2677 = vmatpush1.bf16.msra.mxu0 %v2562
    %2678 = vmatprep.subr.bf16.mxu0 %v2567
    %2679 = vmatpush1.bf16.msra.mxu0 %v2566
    %2680 = vmatprep.subr.bf16.mxu0 %v2571
    %2681 = vmatpush1.bf16.msra.mxu0 %v2570
    %2682 = vmatprep.subr.bf16.mxu0 %v2575
    %2683 = vmatpush1.bf16.msra.mxu0 %v2574
    %2684 = vmatprep.subr.bf16.mxu0 %v2579
    %2685 = vmatpush1.bf16.msra.mxu0 %v2578
    %2686 = vmatprep.subr.bf16.mxu0 %v2583
    %2687 = vmatpush1.bf16.msra.mxu0 %v2582
    %2688 = vmatprep.subr.bf16.mxu0 %v2587
    %2689 = vmatpush1.bf16.msra.mxu0 %v2586
    %2690 = vmatprep.subr.bf16.mxu0 %v2591
    %2691 = vmatpush1.bf16.msra.mxu0 %v2590
    %2692 = vmatprep.subr.bf16.mxu0 %v2595
    %2693 = vmatpush1.bf16.msra.mxu0 %v2594
    %2694 = vmatprep.mubr.bf16.mxu0 %v2341
    %2695 = vmatmul.mubr.bf16.gmra.mrb[0].mxu0 %v2340
    %v2696 = vpop.f32.mrb[0].mxu0
    %v2697 = vadd.f32 0.0, %v2696
    %v2698 = vpop.f32.mrb[0].mxu0
    %v2699 = vadd.f32 0.0, %v2698
    %v2700 = vpop.f32.mrb[0].mxu0
    %v2701 = vpop.f32.mrb[0].mxu0
    %2702 = vdwg.mxu0
    %2703 = vmatprep.subr.bf16.mxu0 %v2537
    %2704 = vmatpush1.bf16.msra.mxu0 %v2536
    %2705 = vmatprep.subr.bf16.mxu0 %v2541
    %2706 = vmatpush1.bf16.msra.mxu0 %v2540
    %2707 = vmatprep.subr.bf16.mxu0 %v2545
    %2708 = vmatpush1.bf16.msra.mxu0 %v2544
    %2709 = vmatprep.subr.bf16.mxu0 %v2549
    %2710 = vmatpush1.bf16.msra.mxu0 %v2548
    %2711 = vmatprep.subr.bf16.mxu0 %v2553
    %2712 = vmatpush1.bf16.msra.mxu0 %v2552
    %2713 = vmatprep.subr.bf16.mxu0 %v2557
    %2714 = vmatpush1.bf16.msra.mxu0 %v2556
    %2715 = vmatprep.subr.bf16.mxu0 %v2561
    %2716 = vmatpush1.bf16.msra.mxu0 %v2560
    %2717 = vmatprep.subr.bf16.mxu0 %v2565
    %2718 = vmatpush1.bf16.msra.mxu0 %v2564
    %2719 = vmatprep.subr.bf16.mxu0 %v2569
    %2720 = vmatpush1.bf16.msra.mxu0 %v2568
    %2721 = vmatprep.subr.bf16.mxu0 %v2573
    %2722 = vmatpush1.bf16.msra.mxu0 %v2572
    %2723 = vmatprep.subr.bf16.mxu0 %v2577
    %2724 = vmatpush1.bf16.msra.mxu0 %v2576
    %2725 = vmatprep.subr.bf16.mxu0 %v2581
    %2726 = vmatpush1.bf16.msra.mxu0 %v2580
    %2727 = vmatprep.subr.bf16.mxu0 %v2585
    %2728 = vmatpush1.bf16.msra.mxu0 %v2584
    %2729 = vmatprep.subr.bf16.mxu0 %v2589
    %2730 = vmatpush1.bf16.msra.mxu0 %v2588
    %2731 = vmatprep.subr.bf16.mxu0 %v2593
    %2732 = vmatpush1.bf16.msra.mxu0 %v2592
    %2733 = vmatprep.subr.bf16.mxu0 %v2597
    %2734 = vmatpush1.bf16.msra.mxu0 %v2596
    %2735 = vmatprep.mubr.bf16.mxu0 %v2341
    %2736 = vmatmul.mubr.bf16.gmra.mrb[0].mxu0 %v2340
    %v2737 = vpop.f32.mrb[0].mxu0
    %v2738 = vadd.f32 0.0, %v2737
    %v2739 = vpop.f32.mrb[0].mxu0
    %v2740 = vadd.f32 0.0, %v2739
    %v2741 = vpop.f32.mrb[0].mxu0
    %v2742 = vpop.f32.mrb[0].mxu0
    %2743 = vdwg.mxu0
    %v2744 = vadd.f32 %v2336, %v2697
    %v2745 = vadd.f32 %v2337, %v2699
    %v2746 = vadd.f32 %v2338, %v2738
    %v2747 = vadd.f32 %v2339, %v2740
    %v2748 = vmul.f32 %v2744, 0.5
    %v2749 = vtanh.pop %v2748
    %v2750 = vmul.f32 %v2749, 0.5
    %v2751 = vadd.f32 %v2750, 0.5
    %v2752 = vmul.f32 %v2745, 0.5
    %v2753 = vtanh.pop %v2752
    %v2754 = vmul.f32 %v2753, 0.5
    %v2755 = vadd.f32 %v2754, 0.5
    %v2756 = vtanh.pop %v2746
    %v2757 = vmul.f32 %v2747, 0.5
    %v2758 = vtanh.pop %v2757
    %v2759 = vmul.f32 %v2758, 0.5
    %v2760 = vadd.f32 %v2759, 0.5
    %v2761 = vmul.f32 %v2755, 0.0
    %v2762 = vmul.f32 %v2751, %v2756
    %v2763 = vadd.f32 %v2761, %v2762
    %v2764 = vtanh.pop %v2763
    %v2765 = vmul.f32 %v2760, %v2764
    %2766 = vst [vmem:[#allocation3] sm:$0x3] %v2765
    %v2768 = vrot.slane %v2765, 4
    %2770 = vst [vmem:[#allocation3 + $0x18] sm:$0xc0] %v2768
    %v2771 = vmul.f32 %v2765, %v1679
    %v2772 = vmul.f32 %v2765, %v1680
    %v2773 = vld [vmem:[#allocation2] sm:$0xf0]
    %v2774 = vld [vmem:[#allocation2 + $0x8] sm:$0xf0]
    %v2775 = vld [vmem:[#allocation2 + $0x10] sm:$0xf0]
    %v2776 = vld [vmem:[#allocation2 + $0x18] sm:$0xf0]
    %v2777 = vpack.c.bf16 %v2771, %v2771
    %v2778 = vpack.c.bf16 %v2772, %v2772
    %2779 = vmatprep.subr.bf16.mxu0 %v2535
    %2780 = vmatpush1.bf16.msra.mxu0 %v2534
    %2781 = vmatprep.subr.bf16.mxu0 %v2539
    %2782 = vmatpush1.bf16.msra.mxu0 %v2538
    %2783 = vmatprep.subr.bf16.mxu0 %v2543
    %2784 = vmatpush1.bf16.msra.mxu0 %v2542
    %2785 = vmatprep.subr.bf16.mxu0 %v2547
    %2786 = vmatpush1.bf16.msra.mxu0 %v2546
    %2787 = vmatprep.subr.bf16.mxu0 %v2551
    %2788 = vmatpush1.bf16.msra.mxu0 %v2550
    %2789 = vmatprep.subr.bf16.mxu0 %v2555
    %2790 = vmatpush1.bf16.msra.mxu0 %v2554
    %2791 = vmatprep.subr.bf16.mxu0 %v2559
    %2792 = vmatpush1.bf16.msra.mxu0 %v2558
    %2793 = vmatprep.subr.bf16.mxu0 %v2563
    %2794 = vmatpush1.bf16.msra.mxu0 %v2562
    %2795 = vmatprep.subr.bf16.mxu0 %v2567
    %2796 = vmatpush1.bf16.msra.mxu0 %v2566
    %2797 = vmatprep.subr.bf16.mxu0 %v2571
    %2798 = vmatpush1.bf16.msra.mxu0 %v2570
    %2799 = vmatprep.subr.bf16.mxu0 %v2575
    %2800 = vmatpush1.bf16.msra.mxu0 %v2574
    %2801 = vmatprep.subr.bf16.mxu0 %v2579
    %2802 = vmatpush1.bf16.msra.mxu0 %v2578
    %2803 = vmatprep.subr.bf16.mxu0 %v2583
    %2804 = vmatpush1.bf16.msra.mxu0 %v2582
    %2805 = vmatprep.subr.bf16.mxu0 %v2587
    %2806 = vmatpush1.bf16.msra.mxu0 %v2586
    %2807 = vmatprep.subr.bf16.mxu0 %v2591
    %2808 = vmatpush1.bf16.msra.mxu0 %v2590
    %2809 = vmatprep.subr.bf16.mxu0 %v2595
    %2810 = vmatpush1.bf16.msra.mxu0 %v2594
    %2811 = vmatprep.mubr.bf16.mxu0 %v2778
    %2812 = vmatmul.mubr.bf16.gmra.mrb[0].mxu0 %v2777
    %v2813 = vpop.f32.mrb[0].mxu0
    %v2814 = vadd.f32 0.0, %v2813
    %v2815 = vpop.f32.mrb[0].mxu0
    %v2816 = vadd.f32 0.0, %v2815
    %v2817 = vpop.f32.mrb[0].mxu0
    %v2818 = vpop.f32.mrb[0].mxu0
    %2819 = vdwg.mxu0
    %2820 = vmatprep.subr.bf16.mxu0 %v2537
    %2821 = vmatpush1.bf16.msra.mxu0 %v2536
    %2822 = vmatprep.subr.bf16.mxu0 %v2541
    %2823 = vmatpush1.bf16.msra.mxu0 %v2540
    %2824 = vmatprep.subr.bf16.mxu0 %v2545
    %2825 = vmatpush1.bf16.msra.mxu0 %v2544
    %2826 = vmatprep.subr.bf16.mxu0 %v2549
    %2827 = vmatpush1.bf16.msra.mxu0 %v2548
    %2828 = vmatprep.subr.bf16.mxu0 %v2553
    %2829 = vmatpush1.bf16.msra.mxu0 %v2552
    %2830 = vmatprep.subr.bf16.mxu0 %v2557
    %2831 = vmatpush1.bf16.msra.mxu0 %v2556
    %2832 = vmatprep.subr.bf16.mxu0 %v2561
    %2833 = vmatpush1.bf16.msra.mxu0 %v2560
    %2834 = vmatprep.subr.bf16.mxu0 %v2565
    %2835 = vmatpush1.bf16.msra.mxu0 %v2564
    %2836 = vmatprep.subr.bf16.mxu0 %v2569
    %2837 = vmatpush1.bf16.msra.mxu0 %v2568
    %2838 = vmatprep.subr.bf16.mxu0 %v2573
    %2839 = vmatpush1.bf16.msra.mxu0 %v2572
    %2840 = vmatprep.subr.bf16.mxu0 %v2577
    %2841 = vmatpush1.bf16.msra.mxu0 %v2576
    %2842 = vmatprep.subr.bf16.mxu0 %v2581
    %2843 = vmatpush1.bf16.msra.mxu0 %v2580
    %2844 = vmatprep.subr.bf16.mxu0 %v2585
    %2845 = vmatpush1.bf16.msra.mxu0 %v2584
    %2846 = vmatprep.subr.bf16.mxu0 %v2589
    %2847 = vmatpush1.bf16.msra.mxu0 %v2588
    %2848 = vmatprep.subr.bf16.mxu0 %v2593
    %2849 = vmatpush1.bf16.msra.mxu0 %v2592
    %2850 = vmatprep.subr.bf16.mxu0 %v2597
    %2851 = vmatpush1.bf16.msra.mxu0 %v2596
    %2852 = vmatprep.mubr.bf16.mxu0 %v2778
    %2853 = vmatmul.mubr.bf16.gmra.mrb[0].mxu0 %v2777
    %v2854 = vpop.f32.mrb[0].mxu0
    %v2855 = vadd.f32 0.0, %v2854
    %v2856 = vpop.f32.mrb[0].mxu0
    %v2857 = vadd.f32 0.0, %v2856
    %v2858 = vpop.f32.mrb[0].mxu0
    %v2859 = vpop.f32.mrb[0].mxu0
    %2860 = vdwg.mxu0
    %v2865 = vrot.slane %v2814, 4
    %v2866 = vrot.slane %v2816, 4
    %v2867 = vrot.slane %v2855, 4
    %v2868 = vrot.slane %v2857, 4
    %v2873 = vadd.f32 %v2773, %v2865
    %v2874 = vadd.f32 %v2774, %v2866
    %v2875 = vadd.f32 %v2775, %v2867
    %v2876 = vadd.f32 %v2776, %v2868
    %v2877 = vmul.f32 %v2873, 0.5
    %v2878 = vtanh.pop %v2877
    %v2879 = vmul.f32 %v2878, 0.5
    %v2880 = vadd.f32 %v2879, 0.5
    %v2881 = vmul.f32 %v2874, 0.5
    %v2882 = vtanh.pop %v2881
    %v2883 = vmul.f32 %v2882, 0.5
    %v2884 = vadd.f32 %v2883, 0.5
    %v2885 = vtanh.pop %v2875
    %v2886 = vmul.f32 %v2876, 0.5
    %v2887 = vtanh.pop %v2886
    %v2888 = vmul.f32 %v2887, 0.5
    %v2889 = vadd.f32 %v2888, 0.5
    %v2891 = vrot.slane %v2763, 4
    %v2893 = vmul.f32 %v2884, %v2891
    %v2894 = vmul.f32 %v2880, %v2885
    %v2895 = vadd.f32 %v2893, %v2894
    %v2896 = vtanh.pop %v2895
    %v2897 = vmul.f32 %v2889, %v2896
    %v2899 = vrot.slane %v2897, 2
    %2901 = vst [vmem:[#allocation3] sm:$0xc] %v2899
    %2902 = vst [vmem:[#allocation3 + $0x18] sm:$0x30] %v2899
    %v2904 = vrot.slane %v1679, 4
    %v2906 = vmul.f32 %v2897, %v2904
    %v2908 = vrot.slane %v1680, 4
    %v2910 = vmul.f32 %v2897, %v2908
    %v2911 = vld [vmem:[#allocation2 + $0x20] sm:$0xf]
    %v2912 = vld [vmem:[#allocation2 + $0x28] sm:$0xf]
    %v2913 = vld [vmem:[#allocation2 + $0x30] sm:$0xf]
    %v2914 = vld [vmem:[#allocation2 + $0x38] sm:$0xf]
    %v2915 = vpack.c.bf16 %v2906, %v2906
    %v2916 = vpack.c.bf16 %v2910, %v2910
    %v2919 = vrot.slane %v2915, 2
    %v2920 = vrot.slane %v2916, 2
    %2923 = vmatprep.subr.bf16.mxu0 %v2535
    %2924 = vmatpush1.bf16.msra.mxu0 %v2534
    %2925 = vmatprep.subr.bf16.mxu0 %v2539
    %2926 = vmatpush1.bf16.msra.mxu0 %v2538
    %2927 = vmatprep.subr.bf16.mxu0 %v2543
    %2928 = vmatpush1.bf16.msra.mxu0 %v2542
    %2929 = vmatprep.subr.bf16.mxu0 %v2547
    %2930 = vmatpush1.bf16.msra.mxu0 %v2546
    %2931 = vmatprep.subr.bf16.mxu0 %v2551
    %2932 = vmatpush1.bf16.msra.mxu0 %v2550
    %2933 = vmatprep.subr.bf16.mxu0 %v2555
    %2934 = vmatpush1.bf16.msra.mxu0 %v2554
    %2935 = vmatprep.subr.bf16.mxu0 %v2559
    %2936 = vmatpush1.bf16.msra.mxu0 %v2558
    %2937 = vmatprep.subr.bf16.mxu0 %v2563
    %2938 = vmatpush1.bf16.msra.mxu0 %v2562
    %2939 = vmatprep.subr.bf16.mxu0 %v2567
    %2940 = vmatpush1.bf16.msra.mxu0 %v2566
    %2941 = vmatprep.subr.bf16.mxu0 %v2571
    %2942 = vmatpush1.bf16.msra.mxu0 %v2570
    %2943 = vmatprep.subr.bf16.mxu0 %v2575
    %2944 = vmatpush1.bf16.msra.mxu0 %v2574
    %2945 = vmatprep.subr.bf16.mxu0 %v2579
    %2946 = vmatpush1.bf16.msra.mxu0 %v2578
    %2947 = vmatprep.subr.bf16.mxu0 %v2583
    %2948 = vmatpush1.bf16.msra.mxu0 %v2582
    %2949 = vmatprep.subr.bf16.mxu0 %v2587
    %2950 = vmatpush1.bf16.msra.mxu0 %v2586
    %2951 = vmatprep.subr.bf16.mxu0 %v2591
    %2952 = vmatpush1.bf16.msra.mxu0 %v2590
    %2953 = vmatprep.subr.bf16.mxu0 %v2595
    %2954 = vmatpush1.bf16.msra.mxu0 %v2594
    %2955 = vmatprep.mubr.bf16.mxu0 %v2920
    %2956 = vmatmul.mubr.bf16.gmra.mrb[0].mxu0 %v2919
    %v2957 = vpop.f32.mrb[0].mxu0
    %v2958 = vadd.f32 0.0, %v2957
    %v2959 = vpop.f32.mrb[0].mxu0
    %v2960 = vadd.f32 0.0, %v2959
    %v2961 = vpop.f32.mrb[0].mxu0
    %v2962 = vpop.f32.mrb[0].mxu0
    %2963 = vdwg.mxu0
    %2964 = vmatprep.subr.bf16.mxu0 %v2537
    %2965 = vmatpush1.bf16.msra.mxu0 %v2536
    %2966 = vmatprep.subr.bf16.mxu0 %v2541
    %2967 = vmatpush1.bf16.msra.mxu0 %v2540
    %2968 = vmatprep.subr.bf16.mxu0 %v2545
    %2969 = vmatpush1.bf16.msra.mxu0 %v2544
    %2970 = vmatprep.subr.bf16.mxu0 %v2549
    %2971 = vmatpush1.bf16.msra.mxu0 %v2548
    %2972 = vmatprep.subr.bf16.mxu0 %v2553
    %2973 = vmatpush1.bf16.msra.mxu0 %v2552
    %2974 = vmatprep.subr.bf16.mxu0 %v2557
    %2975 = vmatpush1.bf16.msra.mxu0 %v2556
    %2976 = vmatprep.subr.bf16.mxu0 %v2561
    %2977 = vmatpush1.bf16.msra.mxu0 %v2560
    %2978 = vmatprep.subr.bf16.mxu0 %v2565
    %2979 = vmatpush1.bf16.msra.mxu0 %v2564
    %2980 = vmatprep.subr.bf16.mxu0 %v2569
    %2981 = vmatpush1.bf16.msra.mxu0 %v2568
    %2982 = vmatprep.subr.bf16.mxu0 %v2573
    %2983 = vmatpush1.bf16.msra.mxu0 %v2572
    %2984 = vmatprep.subr.bf16.mxu0 %v2577
    %2985 = vmatpush1.bf16.msra.mxu0 %v2576
    %2986 = vmatprep.subr.bf16.mxu0 %v2581
    %2987 = vmatpush1.bf16.msra.mxu0 %v2580
    %2988 = vmatprep.subr.bf16.mxu0 %v2585
    %2989 = vmatpush1.bf16.msra.mxu0 %v2584
    %2990 = vmatprep.subr.bf16.mxu0 %v2589
    %2991 = vmatpush1.bf16.msra.mxu0 %v2588
    %2992 = vmatprep.subr.bf16.mxu0 %v2593
    %2993 = vmatpush1.bf16.msra.mxu0 %v2592
    %2994 = vmatprep.subr.bf16.mxu0 %v2597
    %2995 = vmatpush1.bf16.msra.mxu0 %v2596
    %2996 = vmatprep.mubr.bf16.mxu0 %v2920
    %2997 = vmatmul.mubr.bf16.gmra.mrb[0].mxu0 %v2919
    %v2998 = vpop.f32.mrb[0].mxu0
    %v2999 = vadd.f32 0.0, %v2998
    %v3000 = vpop.f32.mrb[0].mxu0
    %v3001 = vadd.f32 0.0, %v3000
    %v3002 = vpop.f32.mrb[0].mxu0
    %v3003 = vpop.f32.mrb[0].mxu0
    %3004 = vdwg.mxu0
    %v3005 = vadd.f32 %v2911, %v2958
    %v3006 = vadd.f32 %v2912, %v2960
    %v3007 = vadd.f32 %v2913, %v2999
    %v3008 = vadd.f32 %v2914, %v3001
    %v3009 = vmul.f32 %v3005, 0.5
    %v3010 = vtanh.pop %v3009
    %v3011 = vmul.f32 %v3010, 0.5
    %v3012 = vadd.f32 %v3011, 0.5
    %v3013 = vmul.f32 %v3006, 0.5
    %v3014 = vtanh.pop %v3013
    %v3015 = vmul.f32 %v3014, 0.5
    %v3016 = vadd.f32 %v3015, 0.5
    %v3017 = vtanh.pop %v3007
    %v3018 = vmul.f32 %v3008, 0.5
    %v3019 = vtanh.pop %v3018
    %v3020 = vmul.f32 %v3019, 0.5
    %v3021 = vadd.f32 %v3020, 0.5
    %v3023 = vrot.slane %v2895, 4
    %v3025 = vmul.f32 %v3016, %v3023
    %v3026 = vmul.f32 %v3012, %v3017
    %v3027 = vadd.f32 %v3025, %v3026
    %v3028 = vtanh.pop %v3027
    %v3029 = vmul.f32 %v3021, %v3028
    %v3031 = vrot.slane %v3029, 4
    %3033 = vst [vmem:[#allocation3] sm:$0x30] %v3031
    %3034 = vst [vmem:[#allocation3 + $0x18] sm:$0xc] %v3029
    %v3035 = vmul.f32 %v3029, %v1679
    %v3036 = vmul.f32 %v3029, %v1680
    %v3037 = vld [vmem:[#allocation2 + $0x20] sm:$0xf0]
    %v3038 = vld [vmem:[#allocation2 + $0x28] sm:$0xf0]
    %v3039 = vld [vmem:[#allocation2 + $0x30] sm:$0xf0]
    %v3040 = vld [vmem:[#allocation2 + $0x38] sm:$0xf0]
    %v3041 = vpack.c.bf16 %v3035, %v3035
    %v3042 = vpack.c.bf16 %v3036, %v3036
    %3043 = vmatprep.subr.bf16.mxu0 %v2535
    %3044 = vmatpush1.bf16.msra.mxu0 %v2534
    %3045 = vmatprep.subr.bf16.mxu0 %v2539
    %3046 = vmatpush1.bf16.msra.mxu0 %v2538
    %3047 = vmatprep.subr.bf16.mxu0 %v2543
    %3048 = vmatpush1.bf16.msra.mxu0 %v2542
    %3049 = vmatprep.subr.bf16.mxu0 %v2547
    %3050 = vmatpush1.bf16.msra.mxu0 %v2546
    %3051 = vmatprep.subr.bf16.mxu0 %v2551
    %3052 = vmatpush1.bf16.msra.mxu0 %v2550
    %3053 = vmatprep.subr.bf16.mxu0 %v2555
    %3054 = vmatpush1.bf16.msra.mxu0 %v2554
    %3055 = vmatprep.subr.bf16.mxu0 %v2559
    %3056 = vmatpush1.bf16.msra.mxu0 %v2558
    %3057 = vmatprep.subr.bf16.mxu0 %v2563
    %3058 = vmatpush1.bf16.msra.mxu0 %v2562
    %3059 = vmatprep.subr.bf16.mxu0 %v2567
    %3060 = vmatpush1.bf16.msra.mxu0 %v2566
    %3061 = vmatprep.subr.bf16.mxu0 %v2571
    %3062 = vmatpush1.bf16.msra.mxu0 %v2570
    %3063 = vmatprep.subr.bf16.mxu0 %v2575
    %3064 = vmatpush1.bf16.msra.mxu0 %v2574
    %3065 = vmatprep.subr.bf16.mxu0 %v2579
    %3066 = vmatpush1.bf16.msra.mxu0 %v2578
    %3067 = vmatprep.subr.bf16.mxu0 %v2583
    %3068 = vmatpush1.bf16.msra.mxu0 %v2582
    %3069 = vmatprep.subr.bf16.mxu0 %v2587
    %3070 = vmatpush1.bf16.msra.mxu0 %v2586
    %3071 = vmatprep.subr.bf16.mxu0 %v2591
    %3072 = vmatpush1.bf16.msra.mxu0 %v2590
    %3073 = vmatprep.subr.bf16.mxu0 %v2595
    %3074 = vmatpush1.bf16.msra.mxu0 %v2594
    %3075 = vmatprep.mubr.bf16.mxu0 %v3042
    %3076 = vmatmul.mubr.bf16.gmra.mrb[0].mxu0 %v3041
    %v3077 = vpop.f32.mrb[0].mxu0
    %v3078 = vadd.f32 0.0, %v3077
    %v3079 = vpop.f32.mrb[0].mxu0
    %v3080 = vadd.f32 0.0, %v3079
    %v3081 = vpop.f32.mrb[0].mxu0
    %v3082 = vpop.f32.mrb[0].mxu0
    %3083 = vdwg.mxu0
    %3084 = vmatprep.subr.bf16.mxu0 %v2537
    %3085 = vmatpush1.bf16.msra.mxu0 %v2536
    %3086 = vmatprep.subr.bf16.mxu0 %v2541
    %3087 = vmatpush1.bf16.msra.mxu0 %v2540
    %3088 = vmatprep.subr.bf16.mxu0 %v2545
    %3089 = vmatpush1.bf16.msra.mxu0 %v2544
    %3090 = vmatprep.subr.bf16.mxu0 %v2549
    %3091 = vmatpush1.bf16.msra.mxu0 %v2548
    %3092 = vmatprep.subr.bf16.mxu0 %v2553
    %3093 = vmatpush1.bf16.msra.mxu0 %v2552
    %3094 = vmatprep.subr.bf16.mxu0 %v2557
    %3095 = vmatpush1.bf16.msra.mxu0 %v2556
    %3096 = vmatprep.subr.bf16.mxu0 %v2561
    %3097 = vmatpush1.bf16.msra.mxu0 %v2560
    %3098 = vmatprep.subr.bf16.mxu0 %v2565
    %3099 = vmatpush1.bf16.msra.mxu0 %v2564
    %3100 = vmatprep.subr.bf16.mxu0 %v2569
    %3101 = vmatpush1.bf16.msra.mxu0 %v2568
    %3102 = vmatprep.subr.bf16.mxu0 %v2573
    %3103 = vmatpush1.bf16.msra.mxu0 %v2572
    %3104 = vmatprep.subr.bf16.mxu0 %v2577
    %3105 = vmatpush1.bf16.msra.mxu0 %v2576
    %3106 = vmatprep.subr.bf16.mxu0 %v2581
    %3107 = vmatpush1.bf16.msra.mxu0 %v2580
    %3108 = vmatprep.subr.bf16.mxu0 %v2585
    %3109 = vmatpush1.bf16.msra.mxu0 %v2584
    %3110 = vmatprep.subr.bf16.mxu0 %v2589
    %3111 = vmatpush1.bf16.msra.mxu0 %v2588
    %3112 = vmatprep.subr.bf16.mxu0 %v2593
    %3113 = vmatpush1.bf16.msra.mxu0 %v2592
    %3114 = vmatprep.subr.bf16.mxu0 %v2597
    %3115 = vmatpush1.bf16.msra.mxu0 %v2596
    %3116 = vmatprep.mubr.bf16.mxu0 %v3042
    %3117 = vmatmul.mubr.bf16.gmra.mrb[0].mxu0 %v3041
    %v3118 = vpop.f32.mrb[0].mxu0
    %v3119 = vadd.f32 0.0, %v3118
    %v3120 = vpop.f32.mrb[0].mxu0
    %v3121 = vadd.f32 0.0, %v3120
    %v3122 = vpop.f32.mrb[0].mxu0
    %v3123 = vpop.f32.mrb[0].mxu0
    %3124 = vdwg.mxu0
    %v3129 = vrot.slane %v3078, 4
    %v3130 = vrot.slane %v3080, 4
    %v3131 = vrot.slane %v3119, 4
    %v3132 = vrot.slane %v3121, 4
    %v3137 = vadd.f32 %v3037, %v3129
    %v3138 = vadd.f32 %v3038, %v3130
    %v3139 = vadd.f32 %v3039, %v3131
    %v3140 = vadd.f32 %v3040, %v3132
    %v3141 = vmul.f32 %v3137, 0.5
    %v3142 = vtanh.pop %v3141
    %v3143 = vmul.f32 %v3142, 0.5
    %v3144 = vadd.f32 %v3143, 0.5
    %v3145 = vmul.f32 %v3138, 0.5
    %v3146 = vtanh.pop %v3145
    %v3147 = vmul.f32 %v3146, 0.5
    %v3148 = vadd.f32 %v3147, 0.5
    %v3149 = vtanh.pop %v3139
    %v3150 = vmul.f32 %v3140, 0.5
    %v3151 = vtanh.pop %v3150
    %v3152 = vmul.f32 %v3151, 0.5
    %v3153 = vadd.f32 %v3152, 0.5
    %v3155 = vrot.slane %v3027, 4
    %v3157 = vmul.f32 %v3148, %v3155
    %v3158 = vmul.f32 %v3144, %v3149
    %v3159 = vadd.f32 %v3157, %v3158
    %v3160 = vtanh.pop %v3159
    %v3161 = vmul.f32 %v3153, %v3160
    %v3163 = vrot.slane %v3161, 6
    %3165 = vst [vmem:[#allocation3] sm:$0xc0] %v3163
    %3166 = vst [vmem:[#allocation3 + $0x18] sm:$0x3] %v3163
    %v3167 = vmul.f32 %v3161, %v2904
    %v3168 = vmul.f32 %v3161, %v2908
    %v3169 = vld [vmem:[#allocation2 + $0x40] sm:$0xf]
    %v3170 = vld [vmem:[#allocation2 + $0x48] sm:$0xf]
    %v3171 = vld [vmem:[#allocation2 + $0x50] sm:$0xf]
    %v3172 = vld [vmem:[#allocation2 + $0x58] sm:$0xf]
    %v3173 = vpack.c.bf16 %v3167, %v3167
    %v3174 = vpack.c.bf16 %v3168, %v3168
    %v3177 = vrot.slane %v3173, 2
    %v3178 = vrot.slane %v3174, 2
    %3181 = vmatprep.subr.bf16.mxu0 %v2535
    %3182 = vmatpush1.bf16.msra.mxu0 %v2534
    %3183 = vmatprep.subr.bf16.mxu0 %v2539
    %3184 = vmatpush1.bf16.msra.mxu0 %v2538
    %3185 = vmatprep.subr.bf16.mxu0 %v2543
    %3186 = vmatpush1.bf16.msra.mxu0 %v2542
    %3187 = vmatprep.subr.bf16.mxu0 %v2547
    %3188 = vmatpush1.bf16.msra.mxu0 %v2546
    %3189 = vmatprep.subr.bf16.mxu0 %v2551
    %3190 = vmatpush1.bf16.msra.mxu0 %v2550
    %3191 = vmatprep.subr.bf16.mxu0 %v2555
    %3192 = vmatpush1.bf16.msra.mxu0 %v2554
    %3193 = vmatprep.subr.bf16.mxu0 %v2559
    %3194 = vmatpush1.bf16.msra.mxu0 %v2558
    %3195 = vmatprep.subr.bf16.mxu0 %v2563
    %3196 = vmatpush1.bf16.msra.mxu0 %v2562
    %3197 = vmatprep.subr.bf16.mxu0 %v2567
    %3198 = vmatpush1.bf16.msra.mxu0 %v2566
    %3199 = vmatprep.subr.bf16.mxu0 %v2571
    %3200 = vmatpush1.bf16.msra.mxu0 %v2570
    %3201 = vmatprep.subr.bf16.mxu0 %v2575
    %3202 = vmatpush1.bf16.msra.mxu0 %v2574
    %3203 = vmatprep.subr.bf16.mxu0 %v2579
    %3204 = vmatpush1.bf16.msra.mxu0 %v2578
    %3205 = vmatprep.subr.bf16.mxu0 %v2583
    %3206 = vmatpush1.bf16.msra.mxu0 %v2582
    %3207 = vmatprep.subr.bf16.mxu0 %v2587
    %3208 = vmatpush1.bf16.msra.mxu0 %v2586
    %3209 = vmatprep.subr.bf16.mxu0 %v2591
    %3210 = vmatpush1.bf16.msra.mxu0 %v2590
    %3211 = vmatprep.subr.bf16.mxu0 %v2595
    %3212 = vmatpush1.bf16.msra.mxu0 %v2594
    %3213 = vmatprep.mubr.bf16.mxu0 %v3178
    %3214 = vmatmul.mubr.bf16.gmra.mrb[0].mxu0 %v3177
    %v3215 = vpop.f32.mrb[0].mxu0
    %v3216 = vadd.f32 0.0, %v3215
    %v3217 = vpop.f32.mrb[0].mxu0
    %v3218 = vadd.f32 0.0, %v3217
    %v3219 = vpop.f32.mrb[0].mxu0
    %v3220 = vpop.f32.mrb[0].mxu0
    %3221 = vdwg.mxu0
    %3222 = vmatprep.subr.bf16.mxu0 %v2537
    %3223 = vmatpush1.bf16.msra.mxu0 %v2536
    %3224 = vmatprep.subr.bf16.mxu0 %v2541
    %3225 = vmatpush1.bf16.msra.mxu0 %v2540
    %3226 = vmatprep.subr.bf16.mxu0 %v2545
    %3227 = vmatpush1.bf16.msra.mxu0 %v2544
    %3228 = vmatprep.subr.bf16.mxu0 %v2549
    %3229 = vmatpush1.bf16.msra.mxu0 %v2548
    %3230 = vmatprep.subr.bf16.mxu0 %v2553
    %3231 = vmatpush1.bf16.msra.mxu0 %v2552
    %3232 = vmatprep.subr.bf16.mxu0 %v2557
    %3233 = vmatpush1.bf16.msra.mxu0 %v2556
    %3234 = vmatprep.subr.bf16.mxu0 %v2561
    %3235 = vmatpush1.bf16.msra.mxu0 %v2560
    %3236 = vmatprep.subr.bf16.mxu0 %v2565
    %3237 = vmatpush1.bf16.msra.mxu0 %v2564
    %3238 = vmatprep.subr.bf16.mxu0 %v2569
    %3239 = vmatpush1.bf16.msra.mxu0 %v2568
    %3240 = vmatprep.subr.bf16.mxu0 %v2573
    %3241 = vmatpush1.bf16.msra.mxu0 %v2572
    %3242 = vmatprep.subr.bf16.mxu0 %v2577
    %3243 = vmatpush1.bf16.msra.mxu0 %v2576
    %3244 = vmatprep.subr.bf16.mxu0 %v2581
    %3245 = vmatpush1.bf16.msra.mxu0 %v2580
    %3246 = vmatprep.subr.bf16.mxu0 %v2585
    %3247 = vmatpush1.bf16.msra.mxu0 %v2584
    %3248 = vmatprep.subr.bf16.mxu0 %v2589
    %3249 = vmatpush1.bf16.msra.mxu0 %v2588
    %3250 = vmatprep.subr.bf16.mxu0 %v2593
    %3251 = vmatpush1.bf16.msra.mxu0 %v2592
    %3252 = vmatprep.subr.bf16.mxu0 %v2597
    %3253 = vmatpush1.bf16.msra.mxu0 %v2596
    %3254 = vmatprep.mubr.bf16.mxu0 %v3178
    %3255 = vmatmul.mubr.bf16.gmra.mrb[0].mxu0 %v3177
    %v3256 = vpop.f32.mrb[0].mxu0
    %v3257 = vadd.f32 0.0, %v3256
    %v3258 = vpop.f32.mrb[0].mxu0
    %v3259 = vadd.f32 0.0, %v3258
    %v3260 = vpop.f32.mrb[0].mxu0
    %v3261 = vpop.f32.mrb[0].mxu0
    %3262 = vdwg.mxu0
    %v3263 = vadd.f32 %v3169, %v3216
    %v3264 = vadd.f32 %v3170, %v3218
    %v3265 = vadd.f32 %v3171, %v3257
    %v3266 = vadd.f32 %v3172, %v3259
    %v3267 = vmul.f32 %v3263, 0.5
    %v3268 = vtanh.pop %v3267
    %v3269 = vmul.f32 %v3268, 0.5
    %v3270 = vadd.f32 %v3269, 0.5
    %v3271 = vmul.f32 %v3264, 0.5
    %v3272 = vtanh.pop %v3271
    %v3273 = vmul.f32 %v3272, 0.5
    %v3274 = vadd.f32 %v3273, 0.5
    %v3275 = vtanh.pop %v3265
    %v3276 = vmul.f32 %v3266, 0.5
    %v3277 = vtanh.pop %v3276
    %v3278 = vmul.f32 %v3277, 0.5
    %v3279 = vadd.f32 %v3278, 0.5
    %v3281 = vrot.slane %v3159, 4
    %v3283 = vmul.f32 %v3274, %v3281
    %v3284 = vmul.f32 %v3270, %v3275
    %v3285 = vadd.f32 %v3283, %v3284
    %v3286 = vtanh.pop %v3285
    %v3287 = vmul.f32 %v3279, %v3286
    %3288 = vst [vmem:[#allocation3 + $0x10] sm:$0x3] %v3287
    %v3290 = vrot.slane %v3287, 4
    %3292 = vst [vmem:[#allocation3 + $0x8] sm:$0xc0] %v3290
    %v3293 = vmul.f32 %v3287, %v1679
    %v3294 = vmul.f32 %v3287, %v1680
    %v3295 = vld [vmem:[#allocation2 + $0x40] sm:$0xf0]
    %v3296 = vld [vmem:[#allocation2 + $0x48] sm:$0xf0]
    %v3297 = vld [vmem:[#allocation2 + $0x50] sm:$0xf0]
    %v3298 = vld [vmem:[#allocation2 + $0x58] sm:$0xf0]
    %v3299 = vpack.c.bf16 %v3293, %v3293
    %v3300 = vpack.c.bf16 %v3294, %v3294
    %3301 = vmatprep.subr.bf16.mxu0 %v2535
    %3302 = vmatpush1.bf16.msra.mxu0 %v2534
    %3303 = vmatprep.subr.bf16.mxu0 %v2539
    %3304 = vmatpush1.bf16.msra.mxu0 %v2538
    %3305 = vmatprep.subr.bf16.mxu0 %v2543
    %3306 = vmatpush1.bf16.msra.mxu0 %v2542
    %3307 = vmatprep.subr.bf16.mxu0 %v2547
    %3308 = vmatpush1.bf16.msra.mxu0 %v2546
    %3309 = vmatprep.subr.bf16.mxu0 %v2551
    %3310 = vmatpush1.bf16.msra.mxu0 %v2550
    %3311 = vmatprep.subr.bf16.mxu0 %v2555
    %3312 = vmatpush1.bf16.msra.mxu0 %v2554
    %3313 = vmatprep.subr.bf16.mxu0 %v2559
    %3314 = vmatpush1.bf16.msra.mxu0 %v2558
    %3315 = vmatprep.subr.bf16.mxu0 %v2563
    %3316 = vmatpush1.bf16.msra.mxu0 %v2562
    %3317 = vmatprep.subr.bf16.mxu0 %v2567
    %3318 = vmatpush1.bf16.msra.mxu0 %v2566
    %3319 = vmatprep.subr.bf16.mxu0 %v2571
    %3320 = vmatpush1.bf16.msra.mxu0 %v2570
    %3321 = vmatprep.subr.bf16.mxu0 %v2575
    %3322 = vmatpush1.bf16.msra.mxu0 %v2574
    %3323 = vmatprep.subr.bf16.mxu0 %v2579
    %3324 = vmatpush1.bf16.msra.mxu0 %v2578
    %3325 = vmatprep.subr.bf16.mxu0 %v2583
    %3326 = vmatpush1.bf16.msra.mxu0 %v2582
    %3327 = vmatprep.subr.bf16.mxu0 %v2587
    %3328 = vmatpush1.bf16.msra.mxu0 %v2586
    %3329 = vmatprep.subr.bf16.mxu0 %v2591
    %3330 = vmatpush1.bf16.msra.mxu0 %v2590
    %3331 = vmatprep.subr.bf16.mxu0 %v2595
    %3332 = vmatpush1.bf16.msra.mxu0 %v2594
    %3333 = vmatprep.mubr.bf16.mxu0 %v3300
    %3334 = vmatmul.mubr.bf16.gmra.mrb[0].mxu0 %v3299
    %v3335 = vpop.f32.mrb[0].mxu0
    %v3336 = vadd.f32 0.0, %v3335
    %v3337 = vpop.f32.mrb[0].mxu0
    %v3338 = vadd.f32 0.0, %v3337
    %v3339 = vpop.f32.mrb[0].mxu0
    %v3340 = vpop.f32.mrb[0].mxu0
    %3341 = vdwg.mxu0
    %3342 = vmatprep.subr.bf16.mxu0 %v2537
    %3343 = vmatpush1.bf16.msra.mxu0 %v2536
    %3344 = vmatprep.subr.bf16.mxu0 %v2541
    %3345 = vmatpush1.bf16.msra.mxu0 %v2540
    %3346 = vmatprep.subr.bf16.mxu0 %v2545
    %3347 = vmatpush1.bf16.msra.mxu0 %v2544
    %3348 = vmatprep.subr.bf16.mxu0 %v2549
    %3349 = vmatpush1.bf16.msra.mxu0 %v2548
    %3350 = vmatprep.subr.bf16.mxu0 %v2553
    %3351 = vmatpush1.bf16.msra.mxu0 %v2552
    %3352 = vmatprep.subr.bf16.mxu0 %v2557
    %3353 = vmatpush1.bf16.msra.mxu0 %v2556
    %3354 = vmatprep.subr.bf16.mxu0 %v2561
    %3355 = vmatpush1.bf16.msra.mxu0 %v2560
    %3356 = vmatprep.subr.bf16.mxu0 %v2565
    %3357 = vmatpush1.bf16.msra.mxu0 %v2564
    %3358 = vmatprep.subr.bf16.mxu0 %v2569
    %3359 = vmatpush1.bf16.msra.mxu0 %v2568
    %3360 = vmatprep.subr.bf16.mxu0 %v2573
    %3361 = vmatpush1.bf16.msra.mxu0 %v2572
    %3362 = vmatprep.subr.bf16.mxu0 %v2577
    %3363 = vmatpush1.bf16.msra.mxu0 %v2576
    %3364 = vmatprep.subr.bf16.mxu0 %v2581
    %3365 = vmatpush1.bf16.msra.mxu0 %v2580
    %3366 = vmatprep.subr.bf16.mxu0 %v2585
    %3367 = vmatpush1.bf16.msra.mxu0 %v2584
    %3368 = vmatprep.subr.bf16.mxu0 %v2589
    %3369 = vmatpush1.bf16.msra.mxu0 %v2588
    %3370 = vmatprep.subr.bf16.mxu0 %v2593
    %3371 = vmatpush1.bf16.msra.mxu0 %v2592
    %3372 = vmatprep.subr.bf16.mxu0 %v2597
    %3373 = vmatpush1.bf16.msra.mxu0 %v2596
    %3374 = vmatprep.mubr.bf16.mxu0 %v3300
    %3375 = vmatmul.mubr.bf16.gmra.mrb[0].mxu0 %v3299
    %v3376 = vpop.f32.mrb[0].mxu0
    %v3377 = vadd.f32 0.0, %v3376
    %v3378 = vpop.f32.mrb[0].mxu0
    %v3379 = vadd.f32 0.0, %v3378
    %v3380 = vpop.f32.mrb[0].mxu0
    %v3381 = vpop.f32.mrb[0].mxu0
    %3382 = vdwg.mxu0
    %v3387 = vrot.slane %v3336, 4
    %v3388 = vrot.slane %v3338, 4
    %v3389 = vrot.slane %v3377, 4
    %v3390 = vrot.slane %v3379, 4
    %v3395 = vadd.f32 %v3295, %v3387
    %v3396 = vadd.f32 %v3296, %v3388
    %v3397 = vadd.f32 %v3297, %v3389
    %v3398 = vadd.f32 %v3298, %v3390
    %v3399 = vmul.f32 %v3395, 0.5
    %v3400 = vtanh.pop %v3399
    %v3401 = vmul.f32 %v3400, 0.5
    %v3402 = vadd.f32 %v3401, 0.5
    %v3403 = vmul.f32 %v3396, 0.5
    %v3404 = vtanh.pop %v3403
    %v3405 = vmul.f32 %v3404, 0.5
    %v3406 = vadd.f32 %v3405, 0.5
    %v3407 = vtanh.pop %v3397
    %v3408 = vmul.f32 %v3398, 0.5
    %v3409 = vtanh.pop %v3408
    %v3410 = vmul.f32 %v3409, 0.5
    %v3411 = vadd.f32 %v3410, 0.5
    %v3413 = vrot.slane %v3285, 4
    %v3415 = vmul.f32 %v3406, %v3413
    %v3416 = vmul.f32 %v3402, %v3407
    %v3417 = vadd.f32 %v3415, %v3416
    %v3418 = vtanh.pop %v3417
    %v3419 = vmul.f32 %v3411, %v3418
    %v3421 = vrot.slane %v3419, 2
    %3423 = vst [vmem:[#allocation3 + $0x10] sm:$0xc] %v3421
    %3424 = vst [vmem:[#allocation3 + $0x8] sm:$0x30] %v3421
    %v3425 = vmul.f32 %v3419, %v2904
    %v3426 = vmul.f32 %v3419, %v2908
    %v3427 = vld [vmem:[#allocation2 + $0x60] sm:$0xf]
    %v3428 = vld [vmem:[#allocation2 + $0x68] sm:$0xf]
    %v3429 = vld [vmem:[#allocation2 + $0x70] sm:$0xf]
    %v3430 = vld [vmem:[#allocation2 + $0x78] sm:$0xf]
    %v3431 = vpack.c.bf16 %v3425, %v3425
    %v3432 = vpack.c.bf16 %v3426, %v3426
    %v3435 = vrot.slane %v3431, 2
    %v3436 = vrot.slane %v3432, 2
    %3439 = vmatprep.subr.bf16.mxu0 %v2535
    %3440 = vmatpush1.bf16.msra.mxu0 %v2534
    %3441 = vmatprep.subr.bf16.mxu0 %v2539
    %3442 = vmatpush1.bf16.msra.mxu0 %v2538
    %3443 = vmatprep.subr.bf16.mxu0 %v2543
    %3444 = vmatpush1.bf16.msra.mxu0 %v2542
    %3445 = vmatprep.subr.bf16.mxu0 %v2547
    %3446 = vmatpush1.bf16.msra.mxu0 %v2546
    %3447 = vmatprep.subr.bf16.mxu0 %v2551
    %3448 = vmatpush1.bf16.msra.mxu0 %v2550
    %3449 = vmatprep.subr.bf16.mxu0 %v2555
    %3450 = vmatpush1.bf16.msra.mxu0 %v2554
    %3451 = vmatprep.subr.bf16.mxu0 %v2559
    %3452 = vmatpush1.bf16.msra.mxu0 %v2558
    %3453 = vmatprep.subr.bf16.mxu0 %v2563
    %3454 = vmatpush1.bf16.msra.mxu0 %v2562
    %3455 = vmatprep.subr.bf16.mxu0 %v2567
    %3456 = vmatpush1.bf16.msra.mxu0 %v2566
    %3457 = vmatprep.subr.bf16.mxu0 %v2571
    %3458 = vmatpush1.bf16.msra.mxu0 %v2570
    %3459 = vmatprep.subr.bf16.mxu0 %v2575
    %3460 = vmatpush1.bf16.msra.mxu0 %v2574
    %3461 = vmatprep.subr.bf16.mxu0 %v2579
    %3462 = vmatpush1.bf16.msra.mxu0 %v2578
    %3463 = vmatprep.subr.bf16.mxu0 %v2583
    %3464 = vmatpush1.bf16.msra.mxu0 %v2582
    %3465 = vmatprep.subr.bf16.mxu0 %v2587
    %3466 = vmatpush1.bf16.msra.mxu0 %v2586
    %3467 = vmatprep.subr.bf16.mxu0 %v2591
    %3468 = vmatpush1.bf16.msra.mxu0 %v2590
    %3469 = vmatprep.subr.bf16.mxu0 %v2595
    %3470 = vmatpush1.bf16.msra.mxu0 %v2594
    %3471 = vmatprep.mubr.bf16.mxu0 %v3436
    %3472 = vmatmul.mubr.bf16.gmra.mrb[0].mxu0 %v3435
    %v3473 = vpop.f32.mrb[0].mxu0
    %v3474 = vadd.f32 0.0, %v3473
    %v3475 = vpop.f32.mrb[0].mxu0
    %v3476 = vadd.f32 0.0, %v3475
    %v3477 = vpop.f32.mrb[0].mxu0
    %v3478 = vpop.f32.mrb[0].mxu0
    %3479 = vdwg.mxu0
    %3480 = vmatprep.subr.bf16.mxu0 %v2537
    %3481 = vmatpush1.bf16.msra.mxu0 %v2536
    %3482 = vmatprep.subr.bf16.mxu0 %v2541
    %3483 = vmatpush1.bf16.msra.mxu0 %v2540
    %3484 = vmatprep.subr.bf16.mxu0 %v2545
    %3485 = vmatpush1.bf16.msra.mxu0 %v2544
    %3486 = vmatprep.subr.bf16.mxu0 %v2549
    %3487 = vmatpush1.bf16.msra.mxu0 %v2548
    %3488 = vmatprep.subr.bf16.mxu0 %v2553
    %3489 = vmatpush1.bf16.msra.mxu0 %v2552
    %3490 = vmatprep.subr.bf16.mxu0 %v2557
    %3491 = vmatpush1.bf16.msra.mxu0 %v2556
    %3492 = vmatprep.subr.bf16.mxu0 %v2561
    %3493 = vmatpush1.bf16.msra.mxu0 %v2560
    %3494 = vmatprep.subr.bf16.mxu0 %v2565
    %3495 = vmatpush1.bf16.msra.mxu0 %v2564
    %3496 = vmatprep.subr.bf16.mxu0 %v2569
    %3497 = vmatpush1.bf16.msra.mxu0 %v2568
    %3498 = vmatprep.subr.bf16.mxu0 %v2573
    %3499 = vmatpush1.bf16.msra.mxu0 %v2572
    %3500 = vmatprep.subr.bf16.mxu0 %v2577
    %3501 = vmatpush1.bf16.msra.mxu0 %v2576
    %3502 = vmatprep.subr.bf16.mxu0 %v2581
    %3503 = vmatpush1.bf16.msra.mxu0 %v2580
    %3504 = vmatprep.subr.bf16.mxu0 %v2585
    %3505 = vmatpush1.bf16.msra.mxu0 %v2584
    %3506 = vmatprep.subr.bf16.mxu0 %v2589
    %3507 = vmatpush1.bf16.msra.mxu0 %v2588
    %3508 = vmatprep.subr.bf16.mxu0 %v2593
    %3509 = vmatpush1.bf16.msra.mxu0 %v2592
    %3510 = vmatprep.subr.bf16.mxu0 %v2597
    %3511 = vmatpush1.bf16.msra.mxu0 %v2596
    %3512 = vmatprep.mubr.bf16.mxu0 %v3436
    %3513 = vmatmul.mubr.bf16.gmra.mrb[0].mxu0 %v3435
    %v3514 = vpop.f32.mrb[0].mxu0
    %v3515 = vadd.f32 0.0, %v3514
    %v3516 = vpop.f32.mrb[0].mxu0
    %v3517 = vadd.f32 0.0, %v3516
    %v3518 = vpop.f32.mrb[0].mxu0
    %v3519 = vpop.f32.mrb[0].mxu0
    %3520 = vdwg.mxu0
    %v3521 = vadd.f32 %v3427, %v3474
    %v3522 = vadd.f32 %v3428, %v3476
    %v3523 = vadd.f32 %v3429, %v3515
    %v3524 = vadd.f32 %v3430, %v3517
    %v3525 = vmul.f32 %v3521, 0.5
    %v3526 = vtanh.pop %v3525
    %v3527 = vmul.f32 %v3526, 0.5
    %v3528 = vadd.f32 %v3527, 0.5
    %v3529 = vmul.f32 %v3522, 0.5
    %v3530 = vtanh.pop %v3529
    %v3531 = vmul.f32 %v3530, 0.5
    %v3532 = vadd.f32 %v3531, 0.5
    %v3533 = vtanh.pop %v3523
    %v3534 = vmul.f32 %v3524, 0.5
    %v3535 = vtanh.pop %v3534
    %v3536 = vmul.f32 %v3535, 0.5
    %v3537 = vadd.f32 %v3536, 0.5
    %v3539 = vrot.slane %v3417, 4
    %v3541 = vmul.f32 %v3532, %v3539
    %v3542 = vmul.f32 %v3528, %v3533
    %v3543 = vadd.f32 %v3541, %v3542
    %v3544 = vtanh.pop %v3543
    %v3545 = vmul.f32 %v3537, %v3544
    %v3547 = vrot.slane %v3545, 4
    %3549 = vst [vmem:[#allocation3 + $0x10] sm:$0x30] %v3547
    %3550 = vst [vmem:[#allocation3 + $0x8] sm:$0xc] %v3545
    %v3551 = vmul.f32 %v3545, %v1679
    %v3552 = vmul.f32 %v3545, %v1680
    %v3553 = vld [vmem:[#allocation2 + $0x60] sm:$0xf0]
    %v3554 = vld [vmem:[#allocation2 + $0x68] sm:$0xf0]
    %v3555 = vld [vmem:[#allocation2 + $0x70] sm:$0xf0]
    %v3556 = vld [vmem:[#allocation2 + $0x78] sm:$0xf0]
    %v3557 = vpack.c.bf16 %v3551, %v3551
    %v3558 = vpack.c.bf16 %v3552, %v3552
    %3559 = vmatprep.subr.bf16.mxu0 %v2535
    %3560 = vmatpush1.bf16.msra.mxu0 %v2534
    %3561 = vmatprep.subr.bf16.mxu0 %v2539
    %3562 = vmatpush1.bf16.msra.mxu0 %v2538
    %3563 = vmatprep.subr.bf16.mxu0 %v2543
    %3564 = vmatpush1.bf16.msra.mxu0 %v2542
    %3565 = vmatprep.subr.bf16.mxu0 %v2547
    %3566 = vmatpush1.bf16.msra.mxu0 %v2546
    %3567 = vmatprep.subr.bf16.mxu0 %v2551
    %3568 = vmatpush1.bf16.msra.mxu0 %v2550
    %3569 = vmatprep.subr.bf16.mxu0 %v2555
    %3570 = vmatpush1.bf16.msra.mxu0 %v2554
    %3571 = vmatprep.subr.bf16.mxu0 %v2559
    %3572 = vmatpush1.bf16.msra.mxu0 %v2558
    %3573 = vmatprep.subr.bf16.mxu0 %v2563
    %3574 = vmatpush1.bf16.msra.mxu0 %v2562
    %3575 = vmatprep.subr.bf16.mxu0 %v2567
    %3576 = vmatpush1.bf16.msra.mxu0 %v2566
    %3577 = vmatprep.subr.bf16.mxu0 %v2571
    %3578 = vmatpush1.bf16.msra.mxu0 %v2570
    %3579 = vmatprep.subr.bf16.mxu0 %v2575
    %3580 = vmatpush1.bf16.msra.mxu0 %v2574
    %3581 = vmatprep.subr.bf16.mxu0 %v2579
    %3582 = vmatpush1.bf16.msra.mxu0 %v2578
    %3583 = vmatprep.subr.bf16.mxu0 %v2583
    %3584 = vmatpush1.bf16.msra.mxu0 %v2582
    %3585 = vmatprep.subr.bf16.mxu0 %v2587
    %3586 = vmatpush1.bf16.msra.mxu0 %v2586
    %3587 = vmatprep.subr.bf16.mxu0 %v2591
    %3588 = vmatpush1.bf16.msra.mxu0 %v2590
    %3589 = vmatprep.subr.bf16.mxu0 %v2595
    %3590 = vmatpush1.bf16.msra.mxu0 %v2594
    %3591 = vmatprep.mubr.bf16.mxu0 %v3558
    %3592 = vmatmul.mubr.bf16.gmra.mrb[0].mxu0 %v3557
    %v3593 = vpop.f32.mrb[0].mxu0
    %v3594 = vadd.f32 0.0, %v3593
    %v3595 = vpop.f32.mrb[0].mxu0
    %v3596 = vadd.f32 0.0, %v3595
    %v3597 = vpop.f32.mrb[0].mxu0
    %v3598 = vpop.f32.mrb[0].mxu0
    %3599 = vdwg.mxu0
    %3600 = vmatprep.subr.bf16.mxu0 %v2537
    %3601 = vmatpush1.bf16.msra.mxu0 %v2536
    %3602 = vmatprep.subr.bf16.mxu0 %v2541
    %3603 = vmatpush1.bf16.msra.mxu0 %v2540
    %3604 = vmatprep.subr.bf16.mxu0 %v2545
    %3605 = vmatpush1.bf16.msra.mxu0 %v2544
    %3606 = vmatprep.subr.bf16.mxu0 %v2549
    %3607 = vmatpush1.bf16.msra.mxu0 %v2548
    %3608 = vmatprep.subr.bf16.mxu0 %v2553
    %3609 = vmatpush1.bf16.msra.mxu0 %v2552
    %3610 = vmatprep.subr.bf16.mxu0 %v2557
    %3611 = vmatpush1.bf16.msra.mxu0 %v2556
    %3612 = vmatprep.subr.bf16.mxu0 %v2561
    %3613 = vmatpush1.bf16.msra.mxu0 %v2560
    %3614 = vmatprep.subr.bf16.mxu0 %v2565
    %3615 = vmatpush1.bf16.msra.mxu0 %v2564
    %3616 = vmatprep.subr.bf16.mxu0 %v2569
    %3617 = vmatpush1.bf16.msra.mxu0 %v2568
    %3618 = vmatprep.subr.bf16.mxu0 %v2573
    %3619 = vmatpush1.bf16.msra.mxu0 %v2572
    %3620 = vmatprep.subr.bf16.mxu0 %v2577
    %3621 = vmatpush1.bf16.msra.mxu0 %v2576
    %3622 = vmatprep.subr.bf16.mxu0 %v2581
    %3623 = vmatpush1.bf16.msra.mxu0 %v2580
    %3624 = vmatprep.subr.bf16.mxu0 %v2585
    %3625 = vmatpush1.bf16.msra.mxu0 %v2584
    %3626 = vmatprep.subr.bf16.mxu0 %v2589
    %3627 = vmatpush1.bf16.msra.mxu0 %v2588
    %3628 = vmatprep.subr.bf16.mxu0 %v2593
    %3629 = vmatpush1.bf16.msra.mxu0 %v2592
    %3630 = vmatprep.subr.bf16.mxu0 %v2597
    %3631 = vmatpush1.bf16.msra.mxu0 %v2596
    %3632 = vmatprep.mubr.bf16.mxu0 %v3558
    %3633 = vmatmul.mubr.bf16.gmra.mrb[0].mxu0 %v3557
    %v3634 = vpop.f32.mrb[0].mxu0
    %v3635 = vadd.f32 0.0, %v3634
    %v3636 = vpop.f32.mrb[0].mxu0
    %v3637 = vadd.f32 0.0, %v3636
    %v3638 = vpop.f32.mrb[0].mxu0
    %v3639 = vpop.f32.mrb[0].mxu0
    %3640 = vdwg.mxu0
    %v3645 = vrot.slane %v3594, 4
    %v3646 = vrot.slane %v3596, 4
    %v3647 = vrot.slane %v3635, 4
    %v3648 = vrot.slane %v3637, 4
    %v3653 = vadd.f32 %v3553, %v3645
    %v3654 = vadd.f32 %v3554, %v3646
    %v3655 = vadd.f32 %v3555, %v3647
    %v3656 = vadd.f32 %v3556, %v3648
    %v3657 = vmul.f32 %v3653, 0.5
    %v3658 = vtanh.pop %v3657
    %v3659 = vmul.f32 %v3658, 0.5
    %v3660 = vadd.f32 %v3659, 0.5
    %v3661 = vmul.f32 %v3654, 0.5
    %v3662 = vtanh.pop %v3661
    %v3663 = vmul.f32 %v3662, 0.5
    %v3664 = vadd.f32 %v3663, 0.5
    %v3665 = vtanh.pop %v3655
    %v3666 = vmul.f32 %v3656, 0.5
    %v3667 = vtanh.pop %v3666
    %v3668 = vmul.f32 %v3667, 0.5
    %v3669 = vadd.f32 %v3668, 0.5
    %v3671 = vrot.slane %v3543, 4
    %v3673 = vmul.f32 %v3664, %v3671
    %v3674 = vmul.f32 %v3660, %v3665
    %v3675 = vadd.f32 %v3673, %v3674
    %v3676 = vtanh.pop %v3675
    %v3677 = vmul.f32 %v3669, %v3676
    %v3679 = vrot.slane %v3677, 6
    %3681 = vst [vmem:[#allocation3 + $0x10] sm:$0xc0] %v3679
    %3682 = vst [vmem:[#allocation3 + $0x8] sm:$0x3] %v3679
    %s3683 = smul.u32 4, 32
    %s3684 = smul.u32 %s3683, 8
    %s3685 = sshll.u32 %s3684, 4
    %3686 = dma.done [#allocation6], %s3685
    %s3687 = smul.u32 %s3683, 4
    %s3688 = sshll.u32 %s3687, 4
    %3689 = dma.done %s1114, %s3688
    %v3690 = vld [vmem:[#allocation3] sm:$0xff]
    %v3691 = vld [vmem:[#allocation3 + $0x8] sm:$0xff]
    %v3692 = vld [vmem:[#allocation3 + $0x10] sm:$0xff]
    %v3693 = vld [vmem:[#allocation3 + $0x18] sm:$0xff]
    %v3694 = vld [vmem:[#allocation4] sm:$0xff]
    %v3695 = vld [vmem:[#allocation4 + $0x8] sm:$0xff]
    %v3696 = vld [vmem:[#allocation4 + $0x10] sm:$0xff]
    %v3697 = vld [vmem:[#allocation4 + $0x18] sm:$0xff]
    %v3698 = vld [vmem:[#allocation4 + $0x20] sm:$0xff]
    %v3699 = vld [vmem:[#allocation4 + $0x28] sm:$0xff]
    %v3700 = vld [vmem:[#allocation4 + $0x30] sm:$0xff]
    %v3701 = vld [vmem:[#allocation4 + $0x38] sm:$0xff]
    %v3702 = vld [vmem:[#allocation4 + $0x40] sm:$0xff]
    %v3703 = vld [vmem:[#allocation4 + $0x48] sm:$0xff]
    %v3704 = vld [vmem:[#allocation4 + $0x50] sm:$0xff]
    %v3705 = vld [vmem:[#allocation4 + $0x58] sm:$0xff]
    %v3706 = vld [vmem:[#allocation4 + $0x60] sm:$0xff]
    %v3707 = vld [vmem:[#allocation4 + $0x68] sm:$0xff]
    %v3708 = vld [vmem:[#allocation4 + $0x70] sm:$0xff]
    %v3709 = vld [vmem:[#allocation4 + $0x78] sm:$0xff]
    %v3710 = vld [vmem:[#allocation4 + $0x80] sm:$0xff]
    %v3711 = vld [vmem:[#allocation4 + $0x88] sm:$0xff]
    %v3712 = vld [vmem:[#allocation4 + $0x90] sm:$0xff]
    %v3713 = vld [vmem:[#allocation4 + $0x98] sm:$0xff]
    %v3714 = vld [vmem:[#allocation4 + $0xa0] sm:$0xff]
    %v3715 = vld [vmem:[#allocation4 + $0xa8] sm:$0xff]
    %v3716 = vld [vmem:[#allocation4 + $0xb0] sm:$0xff]
    %v3717 = vld [vmem:[#allocation4 + $0xb8] sm:$0xff]
    %v3718 = vld [vmem:[#allocation4 + $0xc0] sm:$0xff]
    %v3719 = vld [vmem:[#allocation4 + $0xc8] sm:$0xff]
    %v3720 = vld [vmem:[#allocation4 + $0xd0] sm:$0xff]
    %v3721 = vld [vmem:[#allocation4 + $0xd8] sm:$0xff]
    %v3722 = vld [vmem:[#allocation4 + $0xe0] sm:$0xff]
    %v3723 = vld [vmem:[#allocation4 + $0xe8] sm:$0xff]
    %v3724 = vld [vmem:[#allocation4 + $0xf0] sm:$0xff]
    %v3725 = vld [vmem:[#allocation4 + $0xf8] sm:$0xff]
    %v3726 = vld [vmem:[#allocation4 + $0x100] sm:$0xff]
    %v3727 = vld [vmem:[#allocation4 + $0x108] sm:$0xff]
    %v3728 = vld [vmem:[#allocation4 + $0x110] sm:$0xff]
    %v3729 = vld [vmem:[#allocation4 + $0x118] sm:$0xff]
    %v3730 = vld [vmem:[#allocation4 + $0x120] sm:$0xff]
    %v3731 = vld [vmem:[#allocation4 + $0x128] sm:$0xff]
    %v3732 = vld [vmem:[#allocation4 + $0x130] sm:$0xff]
    %v3733 = vld [vmem:[#allocation4 + $0x138] sm:$0xff]
    %v3734 = vld [vmem:[#allocation4 + $0x140] sm:$0xff]
    %v3735 = vld [vmem:[#allocation4 + $0x148] sm:$0xff]
    %v3736 = vld [vmem:[#allocation4 + $0x150] sm:$0xff]
    %v3737 = vld [vmem:[#allocation4 + $0x158] sm:$0xff]
    %v3738 = vld [vmem:[#allocation4 + $0x160] sm:$0xff]
    %v3739 = vld [vmem:[#allocation4 + $0x168] sm:$0xff]
    %v3740 = vld [vmem:[#allocation4 + $0x170] sm:$0xff]
    %v3741 = vld [vmem:[#allocation4 + $0x178] sm:$0xff]
    %v3742 = vld [vmem:[#allocation4 + $0x180] sm:$0xff]
    %v3743 = vld [vmem:[#allocation4 + $0x188] sm:$0xff]
    %v3744 = vld [vmem:[#allocation4 + $0x190] sm:$0xff]
    %v3745 = vld [vmem:[#allocation4 + $0x198] sm:$0xff]
    %v3746 = vld [vmem:[#allocation4 + $0x1a0] sm:$0xff]
    %v3747 = vld [vmem:[#allocation4 + $0x1a8] sm:$0xff]
    %v3748 = vld [vmem:[#allocation4 + $0x1b0] sm:$0xff]
    %v3749 = vld [vmem:[#allocation4 + $0x1b8] sm:$0xff]
    %v3750 = vld [vmem:[#allocation4 + $0x1c0] sm:$0xff]
    %v3751 = vld [vmem:[#allocation4 + $0x1c8] sm:$0xff]
    %v3752 = vld [vmem:[#allocation4 + $0x1d0] sm:$0xff]
    %v3753 = vld [vmem:[#allocation4 + $0x1d8] sm:$0xff]
    %v3754 = vld [vmem:[#allocation4 + $0x1e0] sm:$0xff]
    %v3755 = vld [vmem:[#allocation4 + $0x1e8] sm:$0xff]
    %v3756 = vld [vmem:[#allocation4 + $0x1f0] sm:$0xff]
    %v3757 = vld [vmem:[#allocation4 + $0x1f8] sm:$0xff]
    %v3758 = vld [vmem:[#allocation4 + $0x200] sm:$0xff]
    %v3759 = vld [vmem:[#allocation4 + $0x208] sm:$0xff]
    %v3760 = vld [vmem:[#allocation4 + $0x210] sm:$0xff]
    %v3761 = vld [vmem:[#allocation4 + $0x218] sm:$0xff]
    %v3762 = vld [vmem:[#allocation4 + $0x220] sm:$0xff]
    %v3763 = vld [vmem:[#allocation4 + $0x228] sm:$0xff]
    %v3764 = vld [vmem:[#allocation4 + $0x230] sm:$0xff]
    %v3765 = vld [vmem:[#allocation4 + $0x238] sm:$0xff]
    %v3766 = vld [vmem:[#allocation4 + $0x240] sm:$0xff]
    %v3767 = vld [vmem:[#allocation4 + $0x248] sm:$0xff]
    %v3768 = vld [vmem:[#allocation4 + $0x250] sm:$0xff]
    %v3769 = vld [vmem:[#allocation4 + $0x258] sm:$0xff]
    %v3770 = vld [vmem:[#allocation4 + $0x260] sm:$0xff]
    %v3771 = vld [vmem:[#allocation4 + $0x268] sm:$0xff]
    %v3772 = vld [vmem:[#allocation4 + $0x270] sm:$0xff]
    %v3773 = vld [vmem:[#allocation4 + $0x278] sm:$0xff]
    %v3774 = vld [vmem:[#allocation4 + $0x280] sm:$0xff]
    %v3775 = vld [vmem:[#allocation4 + $0x288] sm:$0xff]
    %v3776 = vld [vmem:[#allocation4 + $0x290] sm:$0xff]
    %v3777 = vld [vmem:[#allocation4 + $0x298] sm:$0xff]
    %v3778 = vld [vmem:[#allocation4 + $0x2a0] sm:$0xff]
    %v3779 = vld [vmem:[#allocation4 + $0x2a8] sm:$0xff]
    %v3780 = vld [vmem:[#allocation4 + $0x2b0] sm:$0xff]
    %v3781 = vld [vmem:[#allocation4 + $0x2b8] sm:$0xff]
    %v3782 = vld [vmem:[#allocation4 + $0x2c0] sm:$0xff]
    %v3783 = vld [vmem:[#allocation4 + $0x2c8] sm:$0xff]
    %v3784 = vld [vmem:[#allocation4 + $0x2d0] sm:$0xff]
    %v3785 = vld [vmem:[#allocation4 + $0x2d8] sm:$0xff]
    %v3786 = vld [vmem:[#allocation4 + $0x2e0] sm:$0xff]
    %v3787 = vld [vmem:[#allocation4 + $0x2e8] sm:$0xff]
    %v3788 = vld [vmem:[#allocation4 + $0x2f0] sm:$0xff]
    %v3789 = vld [vmem:[#allocation4 + $0x2f8] sm:$0xff]
    %v3790 = vld [vmem:[#allocation4 + $0x300] sm:$0xff]
    %v3791 = vld [vmem:[#allocation4 + $0x308] sm:$0xff]
    %v3792 = vld [vmem:[#allocation4 + $0x310] sm:$0xff]
    %v3793 = vld [vmem:[#allocation4 + $0x318] sm:$0xff]
    %v3794 = vld [vmem:[#allocation4 + $0x320] sm:$0xff]
    %v3795 = vld [vmem:[#allocation4 + $0x328] sm:$0xff]
    %v3796 = vld [vmem:[#allocation4 + $0x330] sm:$0xff]
    %v3797 = vld [vmem:[#allocation4 + $0x338] sm:$0xff]
    %v3798 = vld [vmem:[#allocation4 + $0x340] sm:$0xff]
    %v3799 = vld [vmem:[#allocation4 + $0x348] sm:$0xff]
    %v3800 = vld [vmem:[#allocation4 + $0x350] sm:$0xff]
    %v3801 = vld [vmem:[#allocation4 + $0x358] sm:$0xff]
    %v3802 = vld [vmem:[#allocation4 + $0x360] sm:$0xff]
    %v3803 = vld [vmem:[#allocation4 + $0x368] sm:$0xff]
    %v3804 = vld [vmem:[#allocation4 + $0x370] sm:$0xff]
    %v3805 = vld [vmem:[#allocation4 + $0x378] sm:$0xff]
    %v3806 = vld [vmem:[#allocation4 + $0x380] sm:$0xff]
    %v3807 = vld [vmem:[#allocation4 + $0x388] sm:$0xff]
    %v3808 = vld [vmem:[#allocation4 + $0x390] sm:$0xff]
    %v3809 = vld [vmem:[#allocation4 + $0x398] sm:$0xff]
    %v3810 = vld [vmem:[#allocation4 + $0x3a0] sm:$0xff]
    %v3811 = vld [vmem:[#allocation4 + $0x3a8] sm:$0xff]
    %v3812 = vld [vmem:[#allocation4 + $0x3b0] sm:$0xff]
    %v3813 = vld [vmem:[#allocation4 + $0x3b8] sm:$0xff]
    %v3814 = vld [vmem:[#allocation4 + $0x3c0] sm:$0xff]
    %v3815 = vld [vmem:[#allocation4 + $0x3c8] sm:$0xff]
    %v3816 = vld [vmem:[#allocation4 + $0x3d0] sm:$0xff]
    %v3817 = vld [vmem:[#allocation4 + $0x3d8] sm:$0xff]
    %v3818 = vld [vmem:[#allocation4 + $0x3e0] sm:$0xff]
    %v3819 = vld [vmem:[#allocation4 + $0x3e8] sm:$0xff]
    %v3820 = vld [vmem:[#allocation4 + $0x3f0] sm:$0xff]
    %v3821 = vld [vmem:[#allocation4 + $0x3f8] sm:$0xff]
    %v3822 = vpack.c.bf16 %v3692, %v3690
    %v3823 = vpack.c.bf16 %v3693, %v3691
    %v3824 = vld [vmem:[%s6] sm:$0xff]
    %v3826 = vlaneseq
    %v3827 = vshrl.u32 %v3826, 7
    %v3828 = vsub.s32 0, %v3827
    %v3829 = vrot.slane %v3824, %v3828
    %v3830 = vlaneseq
    %v3831 = vshrl.u32 %v3830, 7
    %v3832 = vsub.s32 1, %v3831
    %v3833 = vrot.slane %v3824, %v3832
    %v3834 = vlaneseq
    %v3835 = vshrl.u32 %v3834, 7
    %v3836 = vsub.s32 2, %v3835
    %v3837 = vrot.slane %v3824, %v3836
    %v3838 = vlaneseq
    %v3839 = vshrl.u32 %v3838, 7
    %v3840 = vsub.s32 3, %v3839
    %v3841 = vrot.slane %v3824, %v3840
    %v3842 = vlaneseq
    %v3843 = vshrl.u32 %v3842, 7
    %v3844 = vsub.s32 4, %v3843
    %v3845 = vrot.slane %v3824, %v3844
    %v3846 = vlaneseq
    %v3847 = vshrl.u32 %v3846, 7
    %v3848 = vsub.s32 5, %v3847
    %v3849 = vrot.slane %v3824, %v3848
    %v3850 = vlaneseq
    %v3851 = vshrl.u32 %v3850, 7
    %v3852 = vsub.s32 6, %v3851
    %v3853 = vrot.slane %v3824, %v3852
    %v3854 = vlaneseq
    %v3855 = vshrl.u32 %v3854, 7
    %v3856 = vsub.s32 7, %v3855
    %v3857 = vrot.slane %v3824, %v3856
    %3866 = vmatprep.subr.bf16.mxu0 %v3695
    %3867 = vmatpush1.bf16.msra.mxu0 %v3694
    %3868 = vmatprep.subr.bf16.mxu0 %v3703
    %3869 = vmatpush1.bf16.msra.mxu0 %v3702
    %3870 = vmatprep.subr.bf16.mxu0 %v3711
    %3871 = vmatpush1.bf16.msra.mxu0 %v3710
    %3872 = vmatprep.subr.bf16.mxu0 %v3719
    %3873 = vmatpush1.bf16.msra.mxu0 %v3718
    %3874 = vmatprep.subr.bf16.mxu0 %v3727
    %3875 = vmatpush1.bf16.msra.mxu0 %v3726
    %3876 = vmatprep.subr.bf16.mxu0 %v3735
    %3877 = vmatpush1.bf16.msra.mxu0 %v3734
    %3878 = vmatprep.subr.bf16.mxu0 %v3743
    %3879 = vmatpush1.bf16.msra.mxu0 %v3742
    %3880 = vmatprep.subr.bf16.mxu0 %v3751
    %3881 = vmatpush1.bf16.msra.mxu0 %v3750
    %3882 = vmatprep.subr.bf16.mxu0 %v3759
    %3883 = vmatpush1.bf16.msra.mxu0 %v3758
    %3884 = vmatprep.subr.bf16.mxu0 %v3767
    %3885 = vmatpush1.bf16.msra.mxu0 %v3766
    %3886 = vmatprep.subr.bf16.mxu0 %v3775
    %3887 = vmatpush1.bf16.msra.mxu0 %v3774
    %3888 = vmatprep.subr.bf16.mxu0 %v3783
    %3889 = vmatpush1.bf16.msra.mxu0 %v3782
    %3890 = vmatprep.subr.bf16.mxu0 %v3791
    %3891 = vmatpush1.bf16.msra.mxu0 %v3790
    %3892 = vmatprep.subr.bf16.mxu0 %v3799
    %3893 = vmatpush1.bf16.msra.mxu0 %v3798
    %3894 = vmatprep.subr.bf16.mxu0 %v3807
    %3895 = vmatpush1.bf16.msra.mxu0 %v3806
    %3896 = vmatprep.subr.bf16.mxu0 %v3815
    %3897 = vmatpush1.bf16.msra.mxu0 %v3814
    %3898 = vmatprep.mubr.bf16.mxu0 %v3823
    %3899 = vmatmul.mubr.bf16.gmra.mrb[0].mxu0 %v3822
    %v3900 = vpop.f32.mrb[0].mxu0
    %v3901 = vadd.f32 %v3829, %v3900
    %v3902 = vpop.f32.mrb[0].mxu0
    %v3903 = vadd.f32 %v3833, %v3902
    %v3904 = vpop.f32.mrb[0].mxu0
    %v3905 = vadd.f32 %v3829, %v3904
    %v3906 = vpop.f32.mrb[0].mxu0
    %v3907 = vadd.f32 %v3833, %v3906
    %3908 = vdwg.mxu0
    %3909 = vmatprep.subr.bf16.mxu0 %v3697
    %3910 = vmatpush1.bf16.msra.mxu0 %v3696
    %3911 = vmatprep.subr.bf16.mxu0 %v3705
    %3912 = vmatpush1.bf16.msra.mxu0 %v3704
    %3913 = vmatprep.subr.bf16.mxu0 %v3713
    %3914 = vmatpush1.bf16.msra.mxu0 %v3712
    %3915 = vmatprep.subr.bf16.mxu0 %v3721
    %3916 = vmatpush1.bf16.msra.mxu0 %v3720
    %3917 = vmatprep.subr.bf16.mxu0 %v3729
    %3918 = vmatpush1.bf16.msra.mxu0 %v3728
    %3919 = vmatprep.subr.bf16.mxu0 %v3737
    %3920 = vmatpush1.bf16.msra.mxu0 %v3736
    %3921 = vmatprep.subr.bf16.mxu0 %v3745
    %3922 = vmatpush1.bf16.msra.mxu0 %v3744
    %3923 = vmatprep.subr.bf16.mxu0 %v3753
    %3924 = vmatpush1.bf16.msra.mxu0 %v3752
    %3925 = vmatprep.subr.bf16.mxu0 %v3761
    %3926 = vmatpush1.bf16.msra.mxu0 %v3760
    %3927 = vmatprep.subr.bf16.mxu0 %v3769
    %3928 = vmatpush1.bf16.msra.mxu0 %v3768
    %3929 = vmatprep.subr.bf16.mxu0 %v3777
    %3930 = vmatpush1.bf16.msra.mxu0 %v3776
    %3931 = vmatprep.subr.bf16.mxu0 %v3785
    %3932 = vmatpush1.bf16.msra.mxu0 %v3784
    %3933 = vmatprep.subr.bf16.mxu0 %v3793
    %3934 = vmatpush1.bf16.msra.mxu0 %v3792
    %3935 = vmatprep.subr.bf16.mxu0 %v3801
    %3936 = vmatpush1.bf16.msra.mxu0 %v3800
    %3937 = vmatprep.subr.bf16.mxu0 %v3809
    %3938 = vmatpush1.bf16.msra.mxu0 %v3808
    %3939 = vmatprep.subr.bf16.mxu0 %v3817
    %3940 = vmatpush1.bf16.msra.mxu0 %v3816
    %3941 = vmatprep.mubr.bf16.mxu0 %v3823
    %3942 = vmatmul.mubr.bf16.gmra.mrb[0].mxu0 %v3822
    %v3943 = vpop.f32.mrb[0].mxu0
    %v3944 = vadd.f32 %v3837, %v3943
    %v3945 = vpop.f32.mrb[0].mxu0
    %v3946 = vadd.f32 %v3841, %v3945
    %v3947 = vpop.f32.mrb[0].mxu0
    %v3948 = vadd.f32 %v3837, %v3947
    %v3949 = vpop.f32.mrb[0].mxu0
    %v3950 = vadd.f32 %v3841, %v3949
    %3951 = vdwg.mxu0
    %3952 = vmatprep.subr.bf16.mxu0 %v3699
    %3953 = vmatpush1.bf16.msra.mxu0 %v3698
    %3954 = vmatprep.subr.bf16.mxu0 %v3707
    %3955 = vmatpush1.bf16.msra.mxu0 %v3706
    %3956 = vmatprep.subr.bf16.mxu0 %v3715
    %3957 = vmatpush1.bf16.msra.mxu0 %v3714
    %3958 = vmatprep.subr.bf16.mxu0 %v3723
    %3959 = vmatpush1.bf16.msra.mxu0 %v3722
    %3960 = vmatprep.subr.bf16.mxu0 %v3731
    %3961 = vmatpush1.bf16.msra.mxu0 %v3730
    %3962 = vmatprep.subr.bf16.mxu0 %v3739
    %3963 = vmatpush1.bf16.msra.mxu0 %v3738
    %3964 = vmatprep.subr.bf16.mxu0 %v3747
    %3965 = vmatpush1.bf16.msra.mxu0 %v3746
    %3966 = vmatprep.subr.bf16.mxu0 %v3755
    %3967 = vmatpush1.bf16.msra.mxu0 %v3754
    %3968 = vmatprep.subr.bf16.mxu0 %v3763
    %3969 = vmatpush1.bf16.msra.mxu0 %v3762
    %3970 = vmatprep.subr.bf16.mxu0 %v3771
    %3971 = vmatpush1.bf16.msra.mxu0 %v3770
    %3972 = vmatprep.subr.bf16.mxu0 %v3779
    %3973 = vmatpush1.bf16.msra.mxu0 %v3778
    %3974 = vmatprep.subr.bf16.mxu0 %v3787
    %3975 = vmatpush1.bf16.msra.mxu0 %v3786
    %3976 = vmatprep.subr.bf16.mxu0 %v3795
    %3977 = vmatpush1.bf16.msra.mxu0 %v3794
    %3978 = vmatprep.subr.bf16.mxu0 %v3803
    %3979 = vmatpush1.bf16.msra.mxu0 %v3802
    %3980 = vmatprep.subr.bf16.mxu0 %v3811
    %3981 = vmatpush1.bf16.msra.mxu0 %v3810
    %3982 = vmatprep.subr.bf16.mxu0 %v3819
    %3983 = vmatpush1.bf16.msra.mxu0 %v3818
    %3984 = vmatprep.mubr.bf16.mxu0 %v3823
    %3985 = vmatmul.mubr.bf16.gmra.mrb[0].mxu0 %v3822
    %v3986 = vpop.f32.mrb[0].mxu0
    %v3987 = vadd.f32 %v3845, %v3986
    %v3988 = vpop.f32.mrb[0].mxu0
    %v3989 = vadd.f32 %v3849, %v3988
    %v3990 = vpop.f32.mrb[0].mxu0
    %v3991 = vadd.f32 %v3845, %v3990
    %v3992 = vpop.f32.mrb[0].mxu0
    %v3993 = vadd.f32 %v3849, %v3992
    %3994 = vdwg.mxu0
    %3995 = vmatprep.subr.bf16.mxu0 %v3701
    %3996 = vmatpush1.bf16.msra.mxu0 %v3700
    %3997 = vmatprep.subr.bf16.mxu0 %v3709
    %3998 = vmatpush1.bf16.msra.mxu0 %v3708
    %3999 = vmatprep.subr.bf16.mxu0 %v3717
    %4000 = vmatpush1.bf16.msra.mxu0 %v3716
    %4001 = vmatprep.subr.bf16.mxu0 %v3725
    %4002 = vmatpush1.bf16.msra.mxu0 %v3724
    %4003 = vmatprep.subr.bf16.mxu0 %v3733
    %4004 = vmatpush1.bf16.msra.mxu0 %v3732
    %4005 = vmatprep.subr.bf16.mxu0 %v3741
    %4006 = vmatpush1.bf16.msra.mxu0 %v3740
    %4007 = vmatprep.subr.bf16.mxu0 %v3749
    %4008 = vmatpush1.bf16.msra.mxu0 %v3748
    %4009 = vmatprep.subr.bf16.mxu0 %v3757
    %4010 = vmatpush1.bf16.msra.mxu0 %v3756
    %4011 = vmatprep.subr.bf16.mxu0 %v3765
    %4012 = vmatpush1.bf16.msra.mxu0 %v3764
    %4013 = vmatprep.subr.bf16.mxu0 %v3773
    %4014 = vmatpush1.bf16.msra.mxu0 %v3772
    %4015 = vmatprep.subr.bf16.mxu0 %v3781
    %4016 = vmatpush1.bf16.msra.mxu0 %v3780
    %4017 = vmatprep.subr.bf16.mxu0 %v3789
    %4018 = vmatpush1.bf16.msra.mxu0 %v3788
    %4019 = vmatprep.subr.bf16.mxu0 %v3797
    %4020 = vmatpush1.bf16.msra.mxu0 %v3796
    %4021 = vmatprep.subr.bf16.mxu0 %v3805
    %4022 = vmatpush1.bf16.msra.mxu0 %v3804
    %4023 = vmatprep.subr.bf16.mxu0 %v3813
    %4024 = vmatpush1.bf16.msra.mxu0 %v3812
    %4025 = vmatprep.subr.bf16.mxu0 %v3821
    %4026 = vmatpush1.bf16.msra.mxu0 %v3820
    %4027 = vmatprep.mubr.bf16.mxu0 %v3823
    %4028 = vmatmul.mubr.bf16.gmra.mrb[0].mxu0 %v3822
    %v4029 = vpop.f32.mrb[0].mxu0
    %v4030 = vadd.f32 %v3853, %v4029
    %v4031 = vpop.f32.mrb[0].mxu0
    %v4032 = vadd.f32 %v3857, %v4031
    %v4033 = vpop.f32.mrb[0].mxu0
    %v4034 = vadd.f32 %v3853, %v4033
    %v4035 = vpop.f32.mrb[0].mxu0
    %v4036 = vadd.f32 %v3857, %v4035
    %4037 = vdwg.mxu0
    %4038 = vst [vmem:[#allocation2] sm:$0x3] %v3901
    %4039 = vst [vmem:[#allocation2 + $0x8] sm:$0x3] %v3903
    %4040 = vst [vmem:[#allocation2 + $0x10] sm:$0x3] %v3944
    %4041 = vst [vmem:[#allocation2 + $0x18] sm:$0x3] %v3946
    %v4046 = vrot.slane %v3991, 4
    %v4047 = vrot.slane %v3993, 4
    %v4048 = vrot.slane %v4034, 4
    %v4049 = vrot.slane %v4036, 4
    %4054 = vst [vmem:[#allocation2] sm:$0xc] %v4046
    %4055 = vst [vmem:[#allocation2 + $0x8] sm:$0xc] %v4047
    %4056 = vst [vmem:[#allocation2 + $0x10] sm:$0xc] %v4048
    %4057 = vst [vmem:[#allocation2 + $0x18] sm:$0xc] %v4049
    %v4062 = vrot.slane %v3901, 6
    %v4063 = vrot.slane %v3903, 6
    %v4064 = vrot.slane %v3944, 6
    %v4065 = vrot.slane %v3946, 6
    %4070 = vst [vmem:[#allocation2] sm:$0x30] %v4062
    %4071 = vst [vmem:[#allocation2 + $0x8] sm:$0x30] %v4063
    %4072 = vst [vmem:[#allocation2 + $0x10] sm:$0x30] %v4064
    %4073 = vst [vmem:[#allocation2 + $0x18] sm:$0x30] %v4065
    %v4074 = vrot.slane %v3991, 6
    %v4075 = vrot.slane %v3993, 6
    %v4076 = vrot.slane %v4034, 6
    %v4077 = vrot.slane %v4036, 6
    %4082 = vst [vmem:[#allocation2] sm:$0xc0] %v4074
    %4083 = vst [vmem:[#allocation2 + $0x8] sm:$0xc0] %v4075
    %4084 = vst [vmem:[#allocation2 + $0x10] sm:$0xc0] %v4076
    %4085 = vst [vmem:[#allocation2 + $0x18] sm:$0xc0] %v4077
    %v4086 = vrot.slane %v3901, 4
    %v4087 = vrot.slane %v3903, 4
    %v4088 = vrot.slane %v3944, 4
    %v4089 = vrot.slane %v3946, 4
    %4094 = vst [vmem:[#allocation2 + $0x20] sm:$0x3] %v4086
    %4095 = vst [vmem:[#allocation2 + $0x28] sm:$0x3] %v4087
    %4096 = vst [vmem:[#allocation2 + $0x30] sm:$0x3] %v4088
    %4097 = vst [vmem:[#allocation2 + $0x38] sm:$0x3] %v4089
    %4098 = vst [vmem:[#allocation2 + $0x20] sm:$0xc] %v3991
    %4099 = vst [vmem:[#allocation2 + $0x28] sm:$0xc] %v3993
    %4100 = vst [vmem:[#allocation2 + $0x30] sm:$0xc] %v4034
    %4101 = vst [vmem:[#allocation2 + $0x38] sm:$0xc] %v4036
    %v4102 = vrot.slane %v3901, 2
    %v4103 = vrot.slane %v3903, 2
    %v4104 = vrot.slane %v3944, 2
    %v4105 = vrot.slane %v3946, 2
    %4110 = vst [vmem:[#allocation2 + $0x20] sm:$0x30] %v4102
    %4111 = vst [vmem:[#allocation2 + $0x28] sm:$0x30] %v4103
    %4112 = vst [vmem:[#allocation2 + $0x30] sm:$0x30] %v4104
    %4113 = vst [vmem:[#allocation2 + $0x38] sm:$0x30] %v4105
    %v4114 = vrot.slane %v3991, 2
    %v4115 = vrot.slane %v3993, 2
    %v4116 = vrot.slane %v4034, 2
    %v4117 = vrot.slane %v4036, 2
    %4122 = vst [vmem:[#allocation2 + $0x20] sm:$0xc0] %v4114
    %4123 = vst [vmem:[#allocation2 + $0x28] sm:$0xc0] %v4115
    %4124 = vst [vmem:[#allocation2 + $0x30] sm:$0xc0] %v4116
    %4125 = vst [vmem:[#allocation2 + $0x38] sm:$0xc0] %v4117
    %4126 = vst [vmem:[#allocation2 + $0x40] sm:$0x3] %v3905
    %4127 = vst [vmem:[#allocation2 + $0x48] sm:$0x3] %v3907
    %4128 = vst [vmem:[#allocation2 + $0x50] sm:$0x3] %v3948
    %4129 = vst [vmem:[#allocation2 + $0x58] sm:$0x3] %v3950
    %v4134 = vrot.slane %v3987, 4
    %v4135 = vrot.slane %v3989, 4
    %v4136 = vrot.slane %v4030, 4
    %v4137 = vrot.slane %v4032, 4
    %4142 = vst [vmem:[#allocation2 + $0x40] sm:$0xc] %v4134
    %4143 = vst [vmem:[#allocation2 + $0x48] sm:$0xc] %v4135
    %4144 = vst [vmem:[#allocation2 + $0x50] sm:$0xc] %v4136
    %4145 = vst [vmem:[#allocation2 + $0x58] sm:$0xc] %v4137
    %v4150 = vrot.slane %v3905, 6
    %v4151 = vrot.slane %v3907, 6
    %v4152 = vrot.slane %v3948, 6
    %v4153 = vrot.slane %v3950, 6
    %4158 = vst [vmem:[#allocation2 + $0x40] sm:$0x30] %v4150
    %4159 = vst [vmem:[#allocation2 + $0x48] sm:$0x30] %v4151
    %4160 = vst [vmem:[#allocation2 + $0x50] sm:$0x30] %v4152
    %4161 = vst [vmem:[#allocation2 + $0x58] sm:$0x30] %v4153
    %v4162 = vrot.slane %v3987, 6
    %v4163 = vrot.slane %v3989, 6
    %v4164 = vrot.slane %v4030, 6
    %v4165 = vrot.slane %v4032, 6
    %4170 = vst [vmem:[#allocation2 + $0x40] sm:$0xc0] %v4162
    %4171 = vst [vmem:[#allocation2 + $0x48] sm:$0xc0] %v4163
    %4172 = vst [vmem:[#allocation2 + $0x50] sm:$0xc0] %v4164
    %4173 = vst [vmem:[#allocation2 + $0x58] sm:$0xc0] %v4165
    %v4174 = vrot.slane %v3905, 4
    %v4175 = vrot.slane %v3907, 4
    %v4176 = vrot.slane %v3948, 4
    %v4177 = vrot.slane %v3950, 4
    %4182 = vst [vmem:[#allocation2 + $0x60] sm:$0x3] %v4174
    %4183 = vst [vmem:[#allocation2 + $0x68] sm:$0x3] %v4175
    %4184 = vst [vmem:[#allocation2 + $0x70] sm:$0x3] %v4176
    %4185 = vst [vmem:[#allocation2 + $0x78] sm:$0x3] %v4177
    %4186 = vst [vmem:[#allocation2 + $0x60] sm:$0xc] %v3987
    %4187 = vst [vmem:[#allocation2 + $0x68] sm:$0xc] %v3989
    %4188 = vst [vmem:[#allocation2 + $0x70] sm:$0xc] %v4030
    %4189 = vst [vmem:[#allocation2 + $0x78] sm:$0xc] %v4032
    %v4190 = vrot.slane %v3905, 2
    %v4191 = vrot.slane %v3907, 2
    %v4192 = vrot.slane %v3948, 2
    %v4193 = vrot.slane %v3950, 2
    %4198 = vst [vmem:[#allocation2 + $0x60] sm:$0x30] %v4190
    %4199 = vst [vmem:[#allocation2 + $0x68] sm:$0x30] %v4191
    %4200 = vst [vmem:[#allocation2 + $0x70] sm:$0x30] %v4192
    %4201 = vst [vmem:[#allocation2 + $0x78] sm:$0x30] %v4193
    %v4202 = vrot.slane %v3987, 2
    %v4203 = vrot.slane %v3989, 2
    %v4204 = vrot.slane %v4030, 2
    %v4205 = vrot.slane %v4032, 2
    %4210 = vst [vmem:[#allocation2 + $0x60] sm:$0xc0] %v4202
    %4211 = vst [vmem:[#allocation2 + $0x68] sm:$0xc0] %v4203
    %4212 = vst [vmem:[#allocation2 + $0x70] sm:$0xc0] %v4204
    %4213 = vst [vmem:[#allocation2 + $0x78] sm:$0xc0] %v4205
    %v4214 = vld [vmem:[#allocation5] sm:$0xff]
    %v4215 = vld [vmem:[#allocation5 + $0x8] sm:$0xff]
    %v4216 = vld [vmem:[#allocation5 + $0x10] sm:$0xff]
    %v4217 = vld [vmem:[#allocation5 + $0x18] sm:$0xff]
    %v4218 = vld [vmem:[#allocation5 + $0x20] sm:$0xff]
    %v4219 = vld [vmem:[#allocation5 + $0x28] sm:$0xff]
    %v4220 = vld [vmem:[#allocation5 + $0x30] sm:$0xff]
    %v4221 = vld [vmem:[#allocation5 + $0x38] sm:$0xff]
    %v4222 = vld [vmem:[#allocation5 + $0x40] sm:$0xff]
    %v4223 = vld [vmem:[#allocation5 + $0x48] sm:$0xff]
    %v4224 = vld [vmem:[#allocation5 + $0x50] sm:$0xff]
    %v4225 = vld [vmem:[#allocation5 + $0x58] sm:$0xff]
    %v4226 = vld [vmem:[#allocation5 + $0x60] sm:$0xff]
    %v4227 = vld [vmem:[#allocation5 + $0x68] sm:$0xff]
    %v4228 = vld [vmem:[#allocation5 + $0x70] sm:$0xff]
    %v4229 = vld [vmem:[#allocation5 + $0x78] sm:$0xff]
    %v4230 = vld [vmem:[#allocation5 + $0x80] sm:$0xff]
    %v4231 = vld [vmem:[#allocation5 + $0x88] sm:$0xff]
    %v4232 = vld [vmem:[#allocation5 + $0x90] sm:$0xff]
    %v4233 = vld [vmem:[#allocation5 + $0x98] sm:$0xff]
    %v4234 = vld [vmem:[#allocation5 + $0xa0] sm:$0xff]
    %v4235 = vld [vmem:[#allocation5 + $0xa8] sm:$0xff]
    %v4236 = vld [vmem:[#allocation5 + $0xb0] sm:$0xff]
    %v4237 = vld [vmem:[#allocation5 + $0xb8] sm:$0xff]
    %v4238 = vld [vmem:[#allocation5 + $0xc0] sm:$0xff]
    %v4239 = vld [vmem:[#allocation5 + $0xc8] sm:$0xff]
    %v4240 = vld [vmem:[#allocation5 + $0xd0] sm:$0xff]
    %v4241 = vld [vmem:[#allocation5 + $0xd8] sm:$0xff]
    %v4242 = vld [vmem:[#allocation5 + $0xe0] sm:$0xff]
    %v4243 = vld [vmem:[#allocation5 + $0xe8] sm:$0xff]
    %v4244 = vld [vmem:[#allocation5 + $0xf0] sm:$0xff]
    %v4245 = vld [vmem:[#allocation5 + $0xf8] sm:$0xff]
    %v4246 = vld [vmem:[#allocation5 + $0x100] sm:$0xff]
    %v4247 = vld [vmem:[#allocation5 + $0x108] sm:$0xff]
    %v4248 = vld [vmem:[#allocation5 + $0x110] sm:$0xff]
    %v4249 = vld [vmem:[#allocation5 + $0x118] sm:$0xff]
    %v4250 = vld [vmem:[#allocation5 + $0x120] sm:$0xff]
    %v4251 = vld [vmem:[#allocation5 + $0x128] sm:$0xff]
    %v4252 = vld [vmem:[#allocation5 + $0x130] sm:$0xff]
    %v4253 = vld [vmem:[#allocation5 + $0x138] sm:$0xff]
    %v4254 = vld [vmem:[#allocation5 + $0x140] sm:$0xff]
    %v4255 = vld [vmem:[#allocation5 + $0x148] sm:$0xff]
    %v4256 = vld [vmem:[#allocation5 + $0x150] sm:$0xff]
    %v4257 = vld [vmem:[#allocation5 + $0x158] sm:$0xff]
    %v4258 = vld [vmem:[#allocation5 + $0x160] sm:$0xff]
    %v4259 = vld [vmem:[#allocation5 + $0x168] sm:$0xff]
    %v4260 = vld [vmem:[#allocation5 + $0x170] sm:$0xff]
    %v4261 = vld [vmem:[#allocation5 + $0x178] sm:$0xff]
    %v4262 = vld [vmem:[#allocation5 + $0x180] sm:$0xff]
    %v4263 = vld [vmem:[#allocation5 + $0x188] sm:$0xff]
    %v4264 = vld [vmem:[#allocation5 + $0x190] sm:$0xff]
    %v4265 = vld [vmem:[#allocation5 + $0x198] sm:$0xff]
    %v4266 = vld [vmem:[#allocation5 + $0x1a0] sm:$0xff]
    %v4267 = vld [vmem:[#allocation5 + $0x1a8] sm:$0xff]
    %v4268 = vld [vmem:[#allocation5 + $0x1b0] sm:$0xff]
    %v4269 = vld [vmem:[#allocation5 + $0x1b8] sm:$0xff]
    %v4270 = vld [vmem:[#allocation5 + $0x1c0] sm:$0xff]
    %v4271 = vld [vmem:[#allocation5 + $0x1c8] sm:$0xff]
    %v4272 = vld [vmem:[#allocation5 + $0x1d0] sm:$0xff]
    %v4273 = vld [vmem:[#allocation5 + $0x1d8] sm:$0xff]
    %v4274 = vld [vmem:[#allocation5 + $0x1e0] sm:$0xff]
    %v4275 = vld [vmem:[#allocation5 + $0x1e8] sm:$0xff]
    %v4276 = vld [vmem:[#allocation5 + $0x1f0] sm:$0xff]
    %v4277 = vld [vmem:[#allocation5 + $0x1f8] sm:$0xff]
    %v4278 = vld [vmem:[#allocation2] sm:$0xf]
    %v4279 = vld [vmem:[#allocation2 + $0x8] sm:$0xf]
    %v4280 = vld [vmem:[#allocation2 + $0x10] sm:$0xf]
    %v4281 = vld [vmem:[#allocation2 + $0x18] sm:$0xf]
    %4282 = vmatprep.subr.bf16.mxu0 %v4215
    %4283 = vmatpush1.bf16.msra.mxu0 %v4214
    %4284 = vmatprep.subr.bf16.mxu0 %v4219
    %4285 = vmatpush1.bf16.msra.mxu0 %v4218
    %4286 = vmatprep.subr.bf16.mxu0 %v4223
    %4287 = vmatpush1.bf16.msra.mxu0 %v4222
    %4288 = vmatprep.subr.bf16.mxu0 %v4227
    %4289 = vmatpush1.bf16.msra.mxu0 %v4226
    %4290 = vmatprep.subr.bf16.mxu0 %v4231
    %4291 = vmatpush1.bf16.msra.mxu0 %v4230
    %4292 = vmatprep.subr.bf16.mxu0 %v4235
    %4293 = vmatpush1.bf16.msra.mxu0 %v4234
    %4294 = vmatprep.subr.bf16.mxu0 %v4239
    %4295 = vmatpush1.bf16.msra.mxu0 %v4238
    %4296 = vmatprep.subr.bf16.mxu0 %v4243
    %4297 = vmatpush1.bf16.msra.mxu0 %v4242
    %4298 = vmatprep.subr.bf16.mxu0 %v4247
    %4299 = vmatpush1.bf16.msra.mxu0 %v4246
    %4300 = vmatprep.subr.bf16.mxu0 %v4251
    %4301 = vmatpush1.bf16.msra.mxu0 %v4250
    %4302 = vmatprep.subr.bf16.mxu0 %v4255
    %4303 = vmatpush1.bf16.msra.mxu0 %v4254
    %4304 = vmatprep.subr.bf16.mxu0 %v4259
    %4305 = vmatpush1.bf16.msra.mxu0 %v4258
    %4306 = vmatprep.subr.bf16.mxu0 %v4263
    %4307 = vmatpush1.bf16.msra.mxu0 %v4262
    %4308 = vmatprep.subr.bf16.mxu0 %v4267
    %4309 = vmatpush1.bf16.msra.mxu0 %v4266
    %4310 = vmatprep.subr.bf16.mxu0 %v4271
    %4311 = vmatpush1.bf16.msra.mxu0 %v4270
    %4312 = vmatprep.subr.bf16.mxu0 %v4275
    %4313 = vmatpush1.bf16.msra.mxu0 %v4274
    %4314 = vmatprep.mubr.bf16.mxu0 %v2341
    %4315 = vmatmul.mubr.bf16.gmra.mrb[0].mxu0 %v2340
    %v4316 = vpop.f32.mrb[0].mxu0
    %v4317 = vadd.f32 0.0, %v4316
    %v4318 = vpop.f32.mrb[0].mxu0
    %v4319 = vadd.f32 0.0, %v4318
    %v4320 = vpop.f32.mrb[0].mxu0
    %v4321 = vpop.f32.mrb[0].mxu0
    %4322 = vdwg.mxu0
    %4323 = vmatprep.subr.bf16.mxu0 %v4217
    %4324 = vmatpush1.bf16.msra.mxu0 %v4216
    %4325 = vmatprep.subr.bf16.mxu0 %v4221
    %4326 = vmatpush1.bf16.msra.mxu0 %v4220
    %4327 = vmatprep.subr.bf16.mxu0 %v4225
    %4328 = vmatpush1.bf16.msra.mxu0 %v4224
    %4329 = vmatprep.subr.bf16.mxu0 %v4229
    %4330 = vmatpush1.bf16.msra.mxu0 %v4228
    %4331 = vmatprep.subr.bf16.mxu0 %v4233
    %4332 = vmatpush1.bf16.msra.mxu0 %v4232
    %4333 = vmatprep.subr.bf16.mxu0 %v4237
    %4334 = vmatpush1.bf16.msra.mxu0 %v4236
    %4335 = vmatprep.subr.bf16.mxu0 %v4241
    %4336 = vmatpush1.bf16.msra.mxu0 %v4240
    %4337 = vmatprep.subr.bf16.mxu0 %v4245
    %4338 = vmatpush1.bf16.msra.mxu0 %v4244
    %4339 = vmatprep.subr.bf16.mxu0 %v4249
    %4340 = vmatpush1.bf16.msra.mxu0 %v4248
    %4341 = vmatprep.subr.bf16.mxu0 %v4253
    %4342 = vmatpush1.bf16.msra.mxu0 %v4252
    %4343 = vmatprep.subr.bf16.mxu0 %v4257
    %4344 = vmatpush1.bf16.msra.mxu0 %v4256
    %4345 = vmatprep.subr.bf16.mxu0 %v4261
    %4346 = vmatpush1.bf16.msra.mxu0 %v4260
    %4347 = vmatprep.subr.bf16.mxu0 %v4265
    %4348 = vmatpush1.bf16.msra.mxu0 %v4264
    %4349 = vmatprep.subr.bf16.mxu0 %v4269
    %4350 = vmatpush1.bf16.msra.mxu0 %v4268
    %4351 = vmatprep.subr.bf16.mxu0 %v4273
    %4352 = vmatpush1.bf16.msra.mxu0 %v4272
    %4353 = vmatprep.subr.bf16.mxu0 %v4277
    %4354 = vmatpush1.bf16.msra.mxu0 %v4276
    %4355 = vmatprep.mubr.bf16.mxu0 %v2341
    %4356 = vmatmul.mubr.bf16.gmra.mrb[0].mxu0 %v2340
    %v4357 = vpop.f32.mrb[0].mxu0
    %v4358 = vadd.f32 0.0, %v4357
    %v4359 = vpop.f32.mrb[0].mxu0
    %v4360 = vadd.f32 0.0, %v4359
    %v4361 = vpop.f32.mrb[0].mxu0
    %v4362 = vpop.f32.mrb[0].mxu0
    %4363 = vdwg.mxu0
    %v4364 = vadd.f32 %v4278, %v4317
    %v4365 = vadd.f32 %v4279, %v4319
    %v4366 = vadd.f32 %v4280, %v4358
    %v4367 = vadd.f32 %v4281, %v4360
    %v4368 = vmul.f32 %v4364, 0.5
    %v4369 = vtanh.pop %v4368
    %v4370 = vmul.f32 %v4369, 0.5
    %v4371 = vadd.f32 %v4370, 0.5
    %v4372 = vmul.f32 %v4365, 0.5
    %v4373 = vtanh.pop %v4372
    %v4374 = vmul.f32 %v4373, 0.5
    %v4375 = vadd.f32 %v4374, 0.5
    %v4376 = vtanh.pop %v4366
    %v4377 = vmul.f32 %v4367, 0.5
    %v4378 = vtanh.pop %v4377
    %v4379 = vmul.f32 %v4378, 0.5
    %v4380 = vadd.f32 %v4379, 0.5
    %v4381 = vmul.f32 %v4375, 0.0
    %v4382 = vmul.f32 %v4371, %v4376
    %v4383 = vadd.f32 %v4381, %v4382
    %v4384 = vtanh.pop %v4383
    %v4385 = vmul.f32 %v4380, %v4384
    %4386 = vst [vmem:[#allocation3] sm:$0x3] %v4385
    %v4388 = vrot.slane %v4385, 4
    %4390 = vst [vmem:[#allocation3 + $0x18] sm:$0xc0] %v4388
    %v4391 = vmul.f32 %v4385, %v1679
    %v4392 = vmul.f32 %v4385, %v1680
    %v4393 = vld [vmem:[#allocation2] sm:$0xf0]
    %v4394 = vld [vmem:[#allocation2 + $0x8] sm:$0xf0]
    %v4395 = vld [vmem:[#allocation2 + $0x10] sm:$0xf0]
    %v4396 = vld [vmem:[#allocation2 + $0x18] sm:$0xf0]
    %v4397 = vpack.c.bf16 %v4391, %v4391
    %v4398 = vpack.c.bf16 %v4392, %v4392
    %4399 = vmatprep.subr.bf16.mxu0 %v4215
    %4400 = vmatpush1.bf16.msra.mxu0 %v4214
    %4401 = vmatprep.subr.bf16.mxu0 %v4219
    %4402 = vmatpush1.bf16.msra.mxu0 %v4218
    %4403 = vmatprep.subr.bf16.mxu0 %v4223
    %4404 = vmatpush1.bf16.msra.mxu0 %v4222
    %4405 = vmatprep.subr.bf16.mxu0 %v4227
    %4406 = vmatpush1.bf16.msra.mxu0 %v4226
    %4407 = vmatprep.subr.bf16.mxu0 %v4231
    %4408 = vmatpush1.bf16.msra.mxu0 %v4230
    %4409 = vmatprep.subr.bf16.mxu0 %v4235
    %4410 = vmatpush1.bf16.msra.mxu0 %v4234
    %4411 = vmatprep.subr.bf16.mxu0 %v4239
    %4412 = vmatpush1.bf16.msra.mxu0 %v4238
    %4413 = vmatprep.subr.bf16.mxu0 %v4243
    %4414 = vmatpush1.bf16.msra.mxu0 %v4242
    %4415 = vmatprep.subr.bf16.mxu0 %v4247
    %4416 = vmatpush1.bf16.msra.mxu0 %v4246
    %4417 = vmatprep.subr.bf16.mxu0 %v4251
    %4418 = vmatpush1.bf16.msra.mxu0 %v4250
    %4419 = vmatprep.subr.bf16.mxu0 %v4255
    %4420 = vmatpush1.bf16.msra.mxu0 %v4254
    %4421 = vmatprep.subr.bf16.mxu0 %v4259
    %4422 = vmatpush1.bf16.msra.mxu0 %v4258
    %4423 = vmatprep.subr.bf16.mxu0 %v4263
    %4424 = vmatpush1.bf16.msra.mxu0 %v4262
    %4425 = vmatprep.subr.bf16.mxu0 %v4267
    %4426 = vmatpush1.bf16.msra.mxu0 %v4266
    %4427 = vmatprep.subr.bf16.mxu0 %v4271
    %4428 = vmatpush1.bf16.msra.mxu0 %v4270
    %4429 = vmatprep.subr.bf16.mxu0 %v4275
    %4430 = vmatpush1.bf16.msra.mxu0 %v4274
    %4431 = vmatprep.mubr.bf16.mxu0 %v4398
    %4432 = vmatmul.mubr.bf16.gmra.mrb[0].mxu0 %v4397
    %v4433 = vpop.f32.mrb[0].mxu0
    %v4434 = vadd.f32 0.0, %v4433
    %v4435 = vpop.f32.mrb[0].mxu0
    %v4436 = vadd.f32 0.0, %v4435
    %v4437 = vpop.f32.mrb[0].mxu0
    %v4438 = vpop.f32.mrb[0].mxu0
    %4439 = vdwg.mxu0
    %4440 = vmatprep.subr.bf16.mxu0 %v4217
    %4441 = vmatpush1.bf16.msra.mxu0 %v4216
    %4442 = vmatprep.subr.bf16.mxu0 %v4221
    %4443 = vmatpush1.bf16.msra.mxu0 %v4220
    %4444 = vmatprep.subr.bf16.mxu0 %v4225
    %4445 = vmatpush1.bf16.msra.mxu0 %v4224
    %4446 = vmatprep.subr.bf16.mxu0 %v4229
    %4447 = vmatpush1.bf16.msra.mxu0 %v4228
    %4448 = vmatprep.subr.bf16.mxu0 %v4233
    %4449 = vmatpush1.bf16.msra.mxu0 %v4232
    %4450 = vmatprep.subr.bf16.mxu0 %v4237
    %4451 = vmatpush1.bf16.msra.mxu0 %v4236
    %4452 = vmatprep.subr.bf16.mxu0 %v4241
    %4453 = vmatpush1.bf16.msra.mxu0 %v4240
    %4454 = vmatprep.subr.bf16.mxu0 %v4245
    %4455 = vmatpush1.bf16.msra.mxu0 %v4244
    %4456 = vmatprep.subr.bf16.mxu0 %v4249
    %4457 = vmatpush1.bf16.msra.mxu0 %v4248
    %4458 = vmatprep.subr.bf16.mxu0 %v4253
    %4459 = vmatpush1.bf16.msra.mxu0 %v4252
    %4460 = vmatprep.subr.bf16.mxu0 %v4257
    %4461 = vmatpush1.bf16.msra.mxu0 %v4256
    %4462 = vmatprep.subr.bf16.mxu0 %v4261
    %4463 = vmatpush1.bf16.msra.mxu0 %v4260
    %4464 = vmatprep.subr.bf16.mxu0 %v4265
    %4465 = vmatpush1.bf16.msra.mxu0 %v4264
    %4466 = vmatprep.subr.bf16.mxu0 %v4269
    %4467 = vmatpush1.bf16.msra.mxu0 %v4268
    %4468 = vmatprep.subr.bf16.mxu0 %v4273
    %4469 = vmatpush1.bf16.msra.mxu0 %v4272
    %4470 = vmatprep.subr.bf16.mxu0 %v4277
    %4471 = vmatpush1.bf16.msra.mxu0 %v4276
    %4472 = vmatprep.mubr.bf16.mxu0 %v4398
    %4473 = vmatmul.mubr.bf16.gmra.mrb[0].mxu0 %v4397
    %v4474 = vpop.f32.mrb[0].mxu0
    %v4475 = vadd.f32 0.0, %v4474
    %v4476 = vpop.f32.mrb[0].mxu0
    %v4477 = vadd.f32 0.0, %v4476
    %v4478 = vpop.f32.mrb[0].mxu0
    %v4479 = vpop.f32.mrb[0].mxu0
    %4480 = vdwg.mxu0
    %v4485 = vrot.slane %v4434, 4
    %v4486 = vrot.slane %v4436, 4
    %v4487 = vrot.slane %v4475, 4
    %v4488 = vrot.slane %v4477, 4
    %v4493 = vadd.f32 %v4393, %v4485
    %v4494 = vadd.f32 %v4394, %v4486
    %v4495 = vadd.f32 %v4395, %v4487
    %v4496 = vadd.f32 %v4396, %v4488
    %v4497 = vmul.f32 %v4493, 0.5
    %v4498 = vtanh.pop %v4497
    %v4499 = vmul.f32 %v4498, 0.5
    %v4500 = vadd.f32 %v4499, 0.5
    %v4501 = vmul.f32 %v4494, 0.5
    %v4502 = vtanh.pop %v4501
    %v4503 = vmul.f32 %v4502, 0.5
    %v4504 = vadd.f32 %v4503, 0.5
    %v4505 = vtanh.pop %v4495
    %v4506 = vmul.f32 %v4496, 0.5
    %v4507 = vtanh.pop %v4506
    %v4508 = vmul.f32 %v4507, 0.5
    %v4509 = vadd.f32 %v4508, 0.5
    %v4511 = vrot.slane %v4383, 4
    %v4513 = vmul.f32 %v4504, %v4511
    %v4514 = vmul.f32 %v4500, %v4505
    %v4515 = vadd.f32 %v4513, %v4514
    %v4516 = vtanh.pop %v4515
    %v4517 = vmul.f32 %v4509, %v4516
    %v4519 = vrot.slane %v4517, 2
    %4521 = vst [vmem:[#allocation3] sm:$0xc] %v4519
    %4522 = vst [vmem:[#allocation3 + $0x18] sm:$0x30] %v4519
    %v4523 = vmul.f32 %v4517, %v2904
    %v4524 = vmul.f32 %v4517, %v2908
    %v4525 = vld [vmem:[#allocation2 + $0x20] sm:$0xf]
    %v4526 = vld [vmem:[#allocation2 + $0x28] sm:$0xf]
    %v4527 = vld [vmem:[#allocation2 + $0x30] sm:$0xf]
    %v4528 = vld [vmem:[#allocation2 + $0x38] sm:$0xf]
    %v4529 = vpack.c.bf16 %v4523, %v4523
    %v4530 = vpack.c.bf16 %v4524, %v4524
    %v4533 = vrot.slane %v4529, 2
    %v4534 = vrot.slane %v4530, 2
    %4537 = vmatprep.subr.bf16.mxu0 %v4215
    %4538 = vmatpush1.bf16.msra.mxu0 %v4214
    %4539 = vmatprep.subr.bf16.mxu0 %v4219
    %4540 = vmatpush1.bf16.msra.mxu0 %v4218
    %4541 = vmatprep.subr.bf16.mxu0 %v4223
    %4542 = vmatpush1.bf16.msra.mxu0 %v4222
    %4543 = vmatprep.subr.bf16.mxu0 %v4227
    %4544 = vmatpush1.bf16.msra.mxu0 %v4226
    %4545 = vmatprep.subr.bf16.mxu0 %v4231
    %4546 = vmatpush1.bf16.msra.mxu0 %v4230
    %4547 = vmatprep.subr.bf16.mxu0 %v4235
    %4548 = vmatpush1.bf16.msra.mxu0 %v4234
    %4549 = vmatprep.subr.bf16.mxu0 %v4239
    %4550 = vmatpush1.bf16.msra.mxu0 %v4238
    %4551 = vmatprep.subr.bf16.mxu0 %v4243
    %4552 = vmatpush1.bf16.msra.mxu0 %v4242
    %4553 = vmatprep.subr.bf16.mxu0 %v4247
    %4554 = vmatpush1.bf16.msra.mxu0 %v4246
    %4555 = vmatprep.subr.bf16.mxu0 %v4251
    %4556 = vmatpush1.bf16.msra.mxu0 %v4250
    %4557 = vmatprep.subr.bf16.mxu0 %v4255
    %4558 = vmatpush1.bf16.msra.mxu0 %v4254
    %4559 = vmatprep.subr.bf16.mxu0 %v4259
    %4560 = vmatpush1.bf16.msra.mxu0 %v4258
    %4561 = vmatprep.subr.bf16.mxu0 %v4263
    %4562 = vmatpush1.bf16.msra.mxu0 %v4262
    %4563 = vmatprep.subr.bf16.mxu0 %v4267
    %4564 = vmatpush1.bf16.msra.mxu0 %v4266
    %4565 = vmatprep.subr.bf16.mxu0 %v4271
    %4566 = vmatpush1.bf16.msra.mxu0 %v4270
    %4567 = vmatprep.subr.bf16.mxu0 %v4275
    %4568 = vmatpush1.bf16.msra.mxu0 %v4274
    %4569 = vmatprep.mubr.bf16.mxu0 %v4534
    %4570 = vmatmul.mubr.bf16.gmra.mrb[0].mxu0 %v4533
    %v4571 = vpop.f32.mrb[0].mxu0
    %v4572 = vadd.f32 0.0, %v4571
    %v4573 = vpop.f32.mrb[0].mxu0
    %v4574 = vadd.f32 0.0, %v4573
    %v4575 = vpop.f32.mrb[0].mxu0
    %v4576 = vpop.f32.mrb[0].mxu0
    %4577 = vdwg.mxu0
    %4578 = vmatprep.subr.bf16.mxu0 %v4217
    %4579 = vmatpush1.bf16.msra.mxu0 %v4216
    %4580 = vmatprep.subr.bf16.mxu0 %v4221
    %4581 = vmatpush1.bf16.msra.mxu0 %v4220
    %4582 = vmatprep.subr.bf16.mxu0 %v4225
    %4583 = vmatpush1.bf16.msra.mxu0 %v4224
    %4584 = vmatprep.subr.bf16.mxu0 %v4229
    %4585 = vmatpush1.bf16.msra.mxu0 %v4228
    %4586 = vmatprep.subr.bf16.mxu0 %v4233
    %4587 = vmatpush1.bf16.msra.mxu0 %v4232
    %4588 = vmatprep.subr.bf16.mxu0 %v4237
    %4589 = vmatpush1.bf16.msra.mxu0 %v4236
    %4590 = vmatprep.subr.bf16.mxu0 %v4241
    %4591 = vmatpush1.bf16.msra.mxu0 %v4240
    %4592 = vmatprep.subr.bf16.mxu0 %v4245
    %4593 = vmatpush1.bf16.msra.mxu0 %v4244
    %4594 = vmatprep.subr.bf16.mxu0 %v4249
    %4595 = vmatpush1.bf16.msra.mxu0 %v4248
    %4596 = vmatprep.subr.bf16.mxu0 %v4253
    %4597 = vmatpush1.bf16.msra.mxu0 %v4252
    %4598 = vmatprep.subr.bf16.mxu0 %v4257
    %4599 = vmatpush1.bf16.msra.mxu0 %v4256
    %4600 = vmatprep.subr.bf16.mxu0 %v4261
    %4601 = vmatpush1.bf16.msra.mxu0 %v4260
    %4602 = vmatprep.subr.bf16.mxu0 %v4265
    %4603 = vmatpush1.bf16.msra.mxu0 %v4264
    %4604 = vmatprep.subr.bf16.mxu0 %v4269
    %4605 = vmatpush1.bf16.msra.mxu0 %v4268
    %4606 = vmatprep.subr.bf16.mxu0 %v4273
    %4607 = vmatpush1.bf16.msra.mxu0 %v4272
    %4608 = vmatprep.subr.bf16.mxu0 %v4277
    %4609 = vmatpush1.bf16.msra.mxu0 %v4276
    %4610 = vmatprep.mubr.bf16.mxu0 %v4534
    %4611 = vmatmul.mubr.bf16.gmra.mrb[0].mxu0 %v4533
    %v4612 = vpop.f32.mrb[0].mxu0
    %v4613 = vadd.f32 0.0, %v4612
    %v4614 = vpop.f32.mrb[0].mxu0
    %v4615 = vadd.f32 0.0, %v4614
    %v4616 = vpop.f32.mrb[0].mxu0
    %v4617 = vpop.f32.mrb[0].mxu0
    %4618 = vdwg.mxu0
    %v4619 = vadd.f32 %v4525, %v4572
    %v4620 = vadd.f32 %v4526, %v4574
    %v4621 = vadd.f32 %v4527, %v4613
    %v4622 = vadd.f32 %v4528, %v4615
    %v4623 = vmul.f32 %v4619, 0.5
    %v4624 = vtanh.pop %v4623
    %v4625 = vmul.f32 %v4624, 0.5
    %v4626 = vadd.f32 %v4625, 0.5
    %v4627 = vmul.f32 %v4620, 0.5
    %v4628 = vtanh.pop %v4627
    %v4629 = vmul.f32 %v4628, 0.5
    %v4630 = vadd.f32 %v4629, 0.5
    %v4631 = vtanh.pop %v4621
    %v4632 = vmul.f32 %v4622, 0.5
    %v4633 = vtanh.pop %v4632
    %v4634 = vmul.f32 %v4633, 0.5
    %v4635 = vadd.f32 %v4634, 0.5
    %v4637 = vrot.slane %v4515, 4
    %v4639 = vmul.f32 %v4630, %v4637
    %v4640 = vmul.f32 %v4626, %v4631
    %v4641 = vadd.f32 %v4639, %v4640
    %v4642 = vtanh.pop %v4641
    %v4643 = vmul.f32 %v4635, %v4642
    %v4645 = vrot.slane %v4643, 4
    %4647 = vst [vmem:[#allocation3] sm:$0x30] %v4645
    %4648 = vst [vmem:[#allocation3 + $0x18] sm:$0xc] %v4643
    %v4649 = vmul.f32 %v4643, %v1679
    %v4650 = vmul.f32 %v4643, %v1680
    %v4651 = vld [vmem:[#allocation2 + $0x20] sm:$0xf0]
    %v4652 = vld [vmem:[#allocation2 + $0x28] sm:$0xf0]
    %v4653 = vld [vmem:[#allocation2 + $0x30] sm:$0xf0]
    %v4654 = vld [vmem:[#allocation2 + $0x38] sm:$0xf0]
    %v4655 = vpack.c.bf16 %v4649, %v4649
    %v4656 = vpack.c.bf16 %v4650, %v4650
    %4657 = vmatprep.subr.bf16.mxu0 %v4215
    %4658 = vmatpush1.bf16.msra.mxu0 %v4214
    %4659 = vmatprep.subr.bf16.mxu0 %v4219
    %4660 = vmatpush1.bf16.msra.mxu0 %v4218
    %4661 = vmatprep.subr.bf16.mxu0 %v4223
    %4662 = vmatpush1.bf16.msra.mxu0 %v4222
    %4663 = vmatprep.subr.bf16.mxu0 %v4227
    %4664 = vmatpush1.bf16.msra.mxu0 %v4226
    %4665 = vmatprep.subr.bf16.mxu0 %v4231
    %4666 = vmatpush1.bf16.msra.mxu0 %v4230
    %4667 = vmatprep.subr.bf16.mxu0 %v4235
    %4668 = vmatpush1.bf16.msra.mxu0 %v4234
    %4669 = vmatprep.subr.bf16.mxu0 %v4239
    %4670 = vmatpush1.bf16.msra.mxu0 %v4238
    %4671 = vmatprep.subr.bf16.mxu0 %v4243
    %4672 = vmatpush1.bf16.msra.mxu0 %v4242
    %4673 = vmatprep.subr.bf16.mxu0 %v4247
    %4674 = vmatpush1.bf16.msra.mxu0 %v4246
    %4675 = vmatprep.subr.bf16.mxu0 %v4251
    %4676 = vmatpush1.bf16.msra.mxu0 %v4250
    %4677 = vmatprep.subr.bf16.mxu0 %v4255
    %4678 = vmatpush1.bf16.msra.mxu0 %v4254
    %4679 = vmatprep.subr.bf16.mxu0 %v4259
    %4680 = vmatpush1.bf16.msra.mxu0 %v4258
    %4681 = vmatprep.subr.bf16.mxu0 %v4263
    %4682 = vmatpush1.bf16.msra.mxu0 %v4262
    %4683 = vmatprep.subr.bf16.mxu0 %v4267
    %4684 = vmatpush1.bf16.msra.mxu0 %v4266
    %4685 = vmatprep.subr.bf16.mxu0 %v4271
    %4686 = vmatpush1.bf16.msra.mxu0 %v4270
    %4687 = vmatprep.subr.bf16.mxu0 %v4275
    %4688 = vmatpush1.bf16.msra.mxu0 %v4274
    %4689 = vmatprep.mubr.bf16.mxu0 %v4656
    %4690 = vmatmul.mubr.bf16.gmra.mrb[0].mxu0 %v4655
    %v4691 = vpop.f32.mrb[0].mxu0
    %v4692 = vadd.f32 0.0, %v4691
    %v4693 = vpop.f32.mrb[0].mxu0
    %v4694 = vadd.f32 0.0, %v4693
    %v4695 = vpop.f32.mrb[0].mxu0
    %v4696 = vpop.f32.mrb[0].mxu0
    %4697 = vdwg.mxu0
    %4698 = vmatprep.subr.bf16.mxu0 %v4217
    %4699 = vmatpush1.bf16.msra.mxu0 %v4216
    %4700 = vmatprep.subr.bf16.mxu0 %v4221
    %4701 = vmatpush1.bf16.msra.mxu0 %v4220
    %4702 = vmatprep.subr.bf16.mxu0 %v4225
    %4703 = vmatpush1.bf16.msra.mxu0 %v4224
    %4704 = vmatprep.subr.bf16.mxu0 %v4229
    %4705 = vmatpush1.bf16.msra.mxu0 %v4228
    %4706 = vmatprep.subr.bf16.mxu0 %v4233
    %4707 = vmatpush1.bf16.msra.mxu0 %v4232
    %4708 = vmatprep.subr.bf16.mxu0 %v4237
    %4709 = vmatpush1.bf16.msra.mxu0 %v4236
    %4710 = vmatprep.subr.bf16.mxu0 %v4241
    %4711 = vmatpush1.bf16.msra.mxu0 %v4240
    %4712 = vmatprep.subr.bf16.mxu0 %v4245
    %4713 = vmatpush1.bf16.msra.mxu0 %v4244
    %4714 = vmatprep.subr.bf16.mxu0 %v4249
    %4715 = vmatpush1.bf16.msra.mxu0 %v4248
    %4716 = vmatprep.subr.bf16.mxu0 %v4253
    %4717 = vmatpush1.bf16.msra.mxu0 %v4252
    %4718 = vmatprep.subr.bf16.mxu0 %v4257
    %4719 = vmatpush1.bf16.msra.mxu0 %v4256
    %4720 = vmatprep.subr.bf16.mxu0 %v4261
    %4721 = vmatpush1.bf16.msra.mxu0 %v4260
    %4722 = vmatprep.subr.bf16.mxu0 %v4265
    %4723 = vmatpush1.bf16.msra.mxu0 %v4264
    %4724 = vmatprep.subr.bf16.mxu0 %v4269
    %4725 = vmatpush1.bf16.msra.mxu0 %v4268
    %4726 = vmatprep.subr.bf16.mxu0 %v4273
    %4727 = vmatpush1.bf16.msra.mxu0 %v4272
    %4728 = vmatprep.subr.bf16.mxu0 %v4277
    %4729 = vmatpush1.bf16.msra.mxu0 %v4276
    %4730 = vmatprep.mubr.bf16.mxu0 %v4656
    %4731 = vmatmul.mubr.bf16.gmra.mrb[0].mxu0 %v4655
    %v4732 = vpop.f32.mrb[0].mxu0
    %v4733 = vadd.f32 0.0, %v4732
    %v4734 = vpop.f32.mrb[0].mxu0
    %v4735 = vadd.f32 0.0, %v4734
    %v4736 = vpop.f32.mrb[0].mxu0
    %v4737 = vpop.f32.mrb[0].mxu0
    %4738 = vdwg.mxu0
    %v4743 = vrot.slane %v4692, 4
    %v4744 = vrot.slane %v4694, 4
    %v4745 = vrot.slane %v4733, 4
    %v4746 = vrot.slane %v4735, 4
    %v4751 = vadd.f32 %v4651, %v4743
    %v4752 = vadd.f32 %v4652, %v4744
    %v4753 = vadd.f32 %v4653, %v4745
    %v4754 = vadd.f32 %v4654, %v4746
    %v4755 = vmul.f32 %v4751, 0.5
    %v4756 = vtanh.pop %v4755
    %v4757 = vmul.f32 %v4756, 0.5
    %v4758 = vadd.f32 %v4757, 0.5
    %v4759 = vmul.f32 %v4752, 0.5
    %v4760 = vtanh.pop %v4759
    %v4761 = vmul.f32 %v4760, 0.5
    %v4762 = vadd.f32 %v4761, 0.5
    %v4763 = vtanh.pop %v4753
    %v4764 = vmul.f32 %v4754, 0.5
    %v4765 = vtanh.pop %v4764
    %v4766 = vmul.f32 %v4765, 0.5
    %v4767 = vadd.f32 %v4766, 0.5
    %v4769 = vrot.slane %v4641, 4
    %v4771 = vmul.f32 %v4762, %v4769
    %v4772 = vmul.f32 %v4758, %v4763
    %v4773 = vadd.f32 %v4771, %v4772
    %v4774 = vtanh.pop %v4773
    %v4775 = vmul.f32 %v4767, %v4774
    %v4777 = vrot.slane %v4775, 6
    %4779 = vst [vmem:[#allocation3] sm:$0xc0] %v4777
    %4780 = vst [vmem:[#allocation3 + $0x18] sm:$0x3] %v4777
    %v4781 = vmul.f32 %v4775, %v2904
    %v4782 = vmul.f32 %v4775, %v2908
    %v4783 = vld [vmem:[#allocation2 + $0x40] sm:$0xf]
    %v4784 = vld [vmem:[#allocation2 + $0x48] sm:$0xf]
    %v4785 = vld [vmem:[#allocation2 + $0x50] sm:$0xf]
    %v4786 = vld [vmem:[#allocation2 + $0x58] sm:$0xf]
    %v4787 = vpack.c.bf16 %v4781, %v4781
    %v4788 = vpack.c.bf16 %v4782, %v4782
    %v4791 = vrot.slane %v4787, 2
    %v4792 = vrot.slane %v4788, 2
    %4795 = vmatprep.subr.bf16.mxu0 %v4215
    %4796 = vmatpush1.bf16.msra.mxu0 %v4214
    %4797 = vmatprep.subr.bf16.mxu0 %v4219
    %4798 = vmatpush1.bf16.msra.mxu0 %v4218
    %4799 = vmatprep.subr.bf16.mxu0 %v4223
    %4800 = vmatpush1.bf16.msra.mxu0 %v4222
    %4801 = vmatprep.subr.bf16.mxu0 %v4227
    %4802 = vmatpush1.bf16.msra.mxu0 %v4226
    %4803 = vmatprep.subr.bf16.mxu0 %v4231
    %4804 = vmatpush1.bf16.msra.mxu0 %v4230
    %4805 = vmatprep.subr.bf16.mxu0 %v4235
    %4806 = vmatpush1.bf16.msra.mxu0 %v4234
    %4807 = vmatprep.subr.bf16.mxu0 %v4239
    %4808 = vmatpush1.bf16.msra.mxu0 %v4238
    %4809 = vmatprep.subr.bf16.mxu0 %v4243
    %4810 = vmatpush1.bf16.msra.mxu0 %v4242
    %4811 = vmatprep.subr.bf16.mxu0 %v4247
    %4812 = vmatpush1.bf16.msra.mxu0 %v4246
    %4813 = vmatprep.subr.bf16.mxu0 %v4251
    %4814 = vmatpush1.bf16.msra.mxu0 %v4250
    %4815 = vmatprep.subr.bf16.mxu0 %v4255
    %4816 = vmatpush1.bf16.msra.mxu0 %v4254
    %4817 = vmatprep.subr.bf16.mxu0 %v4259
    %4818 = vmatpush1.bf16.msra.mxu0 %v4258
    %4819 = vmatprep.subr.bf16.mxu0 %v4263
    %4820 = vmatpush1.bf16.msra.mxu0 %v4262
    %4821 = vmatprep.subr.bf16.mxu0 %v4267
    %4822 = vmatpush1.bf16.msra.mxu0 %v4266
    %4823 = vmatprep.subr.bf16.mxu0 %v4271
    %4824 = vmatpush1.bf16.msra.mxu0 %v4270
    %4825 = vmatprep.subr.bf16.mxu0 %v4275
    %4826 = vmatpush1.bf16.msra.mxu0 %v4274
    %4827 = vmatprep.mubr.bf16.mxu0 %v4792
    %4828 = vmatmul.mubr.bf16.gmra.mrb[0].mxu0 %v4791
    %v4829 = vpop.f32.mrb[0].mxu0
    %v4830 = vadd.f32 0.0, %v4829
    %v4831 = vpop.f32.mrb[0].mxu0
    %v4832 = vadd.f32 0.0, %v4831
    %v4833 = vpop.f32.mrb[0].mxu0
    %v4834 = vpop.f32.mrb[0].mxu0
    %4835 = vdwg.mxu0
    %4836 = vmatprep.subr.bf16.mxu0 %v4217
    %4837 = vmatpush1.bf16.msra.mxu0 %v4216
    %4838 = vmatprep.subr.bf16.mxu0 %v4221
    %4839 = vmatpush1.bf16.msra.mxu0 %v4220
    %4840 = vmatprep.subr.bf16.mxu0 %v4225
    %4841 = vmatpush1.bf16.msra.mxu0 %v4224
    %4842 = vmatprep.subr.bf16.mxu0 %v4229
    %4843 = vmatpush1.bf16.msra.mxu0 %v4228
    %4844 = vmatprep.subr.bf16.mxu0 %v4233
    %4845 = vmatpush1.bf16.msra.mxu0 %v4232
    %4846 = vmatprep.subr.bf16.mxu0 %v4237
    %4847 = vmatpush1.bf16.msra.mxu0 %v4236
    %4848 = vmatprep.subr.bf16.mxu0 %v4241
    %4849 = vmatpush1.bf16.msra.mxu0 %v4240
    %4850 = vmatprep.subr.bf16.mxu0 %v4245
    %4851 = vmatpush1.bf16.msra.mxu0 %v4244
    %4852 = vmatprep.subr.bf16.mxu0 %v4249
    %4853 = vmatpush1.bf16.msra.mxu0 %v4248
    %4854 = vmatprep.subr.bf16.mxu0 %v4253
    %4855 = vmatpush1.bf16.msra.mxu0 %v4252
    %4856 = vmatprep.subr.bf16.mxu0 %v4257
    %4857 = vmatpush1.bf16.msra.mxu0 %v4256
    %4858 = vmatprep.subr.bf16.mxu0 %v4261
    %4859 = vmatpush1.bf16.msra.mxu0 %v4260
    %4860 = vmatprep.subr.bf16.mxu0 %v4265
    %4861 = vmatpush1.bf16.msra.mxu0 %v4264
    %4862 = vmatprep.subr.bf16.mxu0 %v4269
    %4863 = vmatpush1.bf16.msra.mxu0 %v4268
    %4864 = vmatprep.subr.bf16.mxu0 %v4273
    %4865 = vmatpush1.bf16.msra.mxu0 %v4272
    %4866 = vmatprep.subr.bf16.mxu0 %v4277
    %4867 = vmatpush1.bf16.msra.mxu0 %v4276
    %4868 = vmatprep.mubr.bf16.mxu0 %v4792
    %4869 = vmatmul.mubr.bf16.gmra.mrb[0].mxu0 %v4791
    %v4870 = vpop.f32.mrb[0].mxu0
    %v4871 = vadd.f32 0.0, %v4870
    %v4872 = vpop.f32.mrb[0].mxu0
    %v4873 = vadd.f32 0.0, %v4872
    %v4874 = vpop.f32.mrb[0].mxu0
    %v4875 = vpop.f32.mrb[0].mxu0
    %4876 = vdwg.mxu0
    %v4877 = vadd.f32 %v4783, %v4830
    %v4878 = vadd.f32 %v4784, %v4832
    %v4879 = vadd.f32 %v4785, %v4871
    %v4880 = vadd.f32 %v4786, %v4873
    %v4881 = vmul.f32 %v4877, 0.5
    %v4882 = vtanh.pop %v4881
    %v4883 = vmul.f32 %v4882, 0.5
    %v4884 = vadd.f32 %v4883, 0.5
    %v4885 = vmul.f32 %v4878, 0.5
    %v4886 = vtanh.pop %v4885
    %v4887 = vmul.f32 %v4886, 0.5
    %v4888 = vadd.f32 %v4887, 0.5
    %v4889 = vtanh.pop %v4879
    %v4890 = vmul.f32 %v4880, 0.5
    %v4891 = vtanh.pop %v4890
    %v4892 = vmul.f32 %v4891, 0.5
    %v4893 = vadd.f32 %v4892, 0.5
    %v4895 = vrot.slane %v4773, 4
    %v4897 = vmul.f32 %v4888, %v4895
    %v4898 = vmul.f32 %v4884, %v4889
    %v4899 = vadd.f32 %v4897, %v4898
    %v4900 = vtanh.pop %v4899
    %v4901 = vmul.f32 %v4893, %v4900
    %4902 = vst [vmem:[#allocation3 + $0x10] sm:$0x3] %v4901
    %v4904 = vrot.slane %v4901, 4
    %4906 = vst [vmem:[#allocation3 + $0x8] sm:$0xc0] %v4904
    %v4907 = vmul.f32 %v4901, %v1679
    %v4908 = vmul.f32 %v4901, %v1680
    %v4909 = vld [vmem:[#allocation2 + $0x40] sm:$0xf0]
    %v4910 = vld [vmem:[#allocation2 + $0x48] sm:$0xf0]
    %v4911 = vld [vmem:[#allocation2 + $0x50] sm:$0xf0]
    %v4912 = vld [vmem:[#allocation2 + $0x58] sm:$0xf0]
    %v4913 = vpack.c.bf16 %v4907, %v4907
    %v4914 = vpack.c.bf16 %v4908, %v4908
    %4915 = vmatprep.subr.bf16.mxu0 %v4215
    %4916 = vmatpush1.bf16.msra.mxu0 %v4214
    %4917 = vmatprep.subr.bf16.mxu0 %v4219
    %4918 = vmatpush1.bf16.msra.mxu0 %v4218
    %4919 = vmatprep.subr.bf16.mxu0 %v4223
    %4920 = vmatpush1.bf16.msra.mxu0 %v4222
    %4921 = vmatprep.subr.bf16.mxu0 %v4227
    %4922 = vmatpush1.bf16.msra.mxu0 %v4226
    %4923 = vmatprep.subr.bf16.mxu0 %v4231
    %4924 = vmatpush1.bf16.msra.mxu0 %v4230
    %4925 = vmatprep.subr.bf16.mxu0 %v4235
    %4926 = vmatpush1.bf16.msra.mxu0 %v4234
    %4927 = vmatprep.subr.bf16.mxu0 %v4239
    %4928 = vmatpush1.bf16.msra.mxu0 %v4238
    %4929 = vmatprep.subr.bf16.mxu0 %v4243
    %4930 = vmatpush1.bf16.msra.mxu0 %v4242
    %4931 = vmatprep.subr.bf16.mxu0 %v4247
    %4932 = vmatpush1.bf16.msra.mxu0 %v4246
    %4933 = vmatprep.subr.bf16.mxu0 %v4251
    %4934 = vmatpush1.bf16.msra.mxu0 %v4250
    %4935 = vmatprep.subr.bf16.mxu0 %v4255
    %4936 = vmatpush1.bf16.msra.mxu0 %v4254
    %4937 = vmatprep.subr.bf16.mxu0 %v4259
    %4938 = vmatpush1.bf16.msra.mxu0 %v4258
    %4939 = vmatprep.subr.bf16.mxu0 %v4263
    %4940 = vmatpush1.bf16.msra.mxu0 %v4262
    %4941 = vmatprep.subr.bf16.mxu0 %v4267
    %4942 = vmatpush1.bf16.msra.mxu0 %v4266
    %4943 = vmatprep.subr.bf16.mxu0 %v4271
    %4944 = vmatpush1.bf16.msra.mxu0 %v4270
    %4945 = vmatprep.subr.bf16.mxu0 %v4275
    %4946 = vmatpush1.bf16.msra.mxu0 %v4274
    %4947 = vmatprep.mubr.bf16.mxu0 %v4914
    %4948 = vmatmul.mubr.bf16.gmra.mrb[0].mxu0 %v4913
    %v4949 = vpop.f32.mrb[0].mxu0
    %v4950 = vadd.f32 0.0, %v4949
    %v4951 = vpop.f32.mrb[0].mxu0
    %v4952 = vadd.f32 0.0, %v4951
    %v4953 = vpop.f32.mrb[0].mxu0
    %v4954 = vpop.f32.mrb[0].mxu0
    %4955 = vdwg.mxu0
    %4956 = vmatprep.subr.bf16.mxu0 %v4217
    %4957 = vmatpush1.bf16.msra.mxu0 %v4216
    %4958 = vmatprep.subr.bf16.mxu0 %v4221
    %4959 = vmatpush1.bf16.msra.mxu0 %v4220
    %4960 = vmatprep.subr.bf16.mxu0 %v4225
    %4961 = vmatpush1.bf16.msra.mxu0 %v4224
    %4962 = vmatprep.subr.bf16.mxu0 %v4229
    %4963 = vmatpush1.bf16.msra.mxu0 %v4228
    %4964 = vmatprep.subr.bf16.mxu0 %v4233
    %4965 = vmatpush1.bf16.msra.mxu0 %v4232
    %4966 = vmatprep.subr.bf16.mxu0 %v4237
    %4967 = vmatpush1.bf16.msra.mxu0 %v4236
    %4968 = vmatprep.subr.bf16.mxu0 %v4241
    %4969 = vmatpush1.bf16.msra.mxu0 %v4240
    %4970 = vmatprep.subr.bf16.mxu0 %v4245
    %4971 = vmatpush1.bf16.msra.mxu0 %v4244
    %4972 = vmatprep.subr.bf16.mxu0 %v4249
    %4973 = vmatpush1.bf16.msra.mxu0 %v4248
    %4974 = vmatprep.subr.bf16.mxu0 %v4253
    %4975 = vmatpush1.bf16.msra.mxu0 %v4252
    %4976 = vmatprep.subr.bf16.mxu0 %v4257
    %4977 = vmatpush1.bf16.msra.mxu0 %v4256
    %4978 = vmatprep.subr.bf16.mxu0 %v4261
    %4979 = vmatpush1.bf16.msra.mxu0 %v4260
    %4980 = vmatprep.subr.bf16.mxu0 %v4265
    %4981 = vmatpush1.bf16.msra.mxu0 %v4264
    %4982 = vmatprep.subr.bf16.mxu0 %v4269
    %4983 = vmatpush1.bf16.msra.mxu0 %v4268
    %4984 = vmatprep.subr.bf16.mxu0 %v4273
    %4985 = vmatpush1.bf16.msra.mxu0 %v4272
    %4986 = vmatprep.subr.bf16.mxu0 %v4277
    %4987 = vmatpush1.bf16.msra.mxu0 %v4276
    %4988 = vmatprep.mubr.bf16.mxu0 %v4914
    %4989 = vmatmul.mubr.bf16.gmra.mrb[0].mxu0 %v4913
    %v4990 = vpop.f32.mrb[0].mxu0
    %v4991 = vadd.f32 0.0, %v4990
    %v4992 = vpop.f32.mrb[0].mxu0
    %v4993 = vadd.f32 0.0, %v4992
    %v4994 = vpop.f32.mrb[0].mxu0
    %v4995 = vpop.f32.mrb[0].mxu0
    %4996 = vdwg.mxu0
    %v5001 = vrot.slane %v4950, 4
    %v5002 = vrot.slane %v4952, 4
    %v5003 = vrot.slane %v4991, 4
    %v5004 = vrot.slane %v4993, 4
    %v5009 = vadd.f32 %v4909, %v5001
    %v5010 = vadd.f32 %v4910, %v5002
    %v5011 = vadd.f32 %v4911, %v5003
    %v5012 = vadd.f32 %v4912, %v5004
    %v5013 = vmul.f32 %v5009, 0.5
    %v5014 = vtanh.pop %v5013
    %v5015 = vmul.f32 %v5014, 0.5
    %v5016 = vadd.f32 %v5015, 0.5
    %v5017 = vmul.f32 %v5010, 0.5
    %v5018 = vtanh.pop %v5017
    %v5019 = vmul.f32 %v5018, 0.5
    %v5020 = vadd.f32 %v5019, 0.5
    %v5021 = vtanh.pop %v5011
    %v5022 = vmul.f32 %v5012, 0.5
    %v5023 = vtanh.pop %v5022
    %v5024 = vmul.f32 %v5023, 0.5
    %v5025 = vadd.f32 %v5024, 0.5
    %v5027 = vrot.slane %v4899, 4
    %v5029 = vmul.f32 %v5020, %v5027
    %v5030 = vmul.f32 %v5016, %v5021
    %v5031 = vadd.f32 %v5029, %v5030
    %v5032 = vtanh.pop %v5031
    %v5033 = vmul.f32 %v5025, %v5032
    %v5035 = vrot.slane %v5033, 2
    %5037 = vst [vmem:[#allocation3 + $0x10] sm:$0xc] %v5035
    %5038 = vst [vmem:[#allocation3 + $0x8] sm:$0x30] %v5035
    %v5039 = vmul.f32 %v5033, %v2904
    %v5040 = vmul.f32 %v5033, %v2908
    %v5041 = vld [vmem:[#allocation2 + $0x60] sm:$0xf]
    %v5042 = vld [vmem:[#allocation2 + $0x68] sm:$0xf]
    %v5043 = vld [vmem:[#allocation2 + $0x70] sm:$0xf]
    %v5044 = vld [vmem:[#allocation2 + $0x78] sm:$0xf]
    %v5045 = vpack.c.bf16 %v5039, %v5039
    %v5046 = vpack.c.bf16 %v5040, %v5040
    %v5049 = vrot.slane %v5045, 2
    %v5050 = vrot.slane %v5046, 2
    %5053 = vmatprep.subr.bf16.mxu0 %v4215
    %5054 = vmatpush1.bf16.msra.mxu0 %v4214
    %5055 = vmatprep.subr.bf16.mxu0 %v4219
    %5056 = vmatpush1.bf16.msra.mxu0 %v4218
    %5057 = vmatprep.subr.bf16.mxu0 %v4223
    %5058 = vmatpush1.bf16.msra.mxu0 %v4222
    %5059 = vmatprep.subr.bf16.mxu0 %v4227
    %5060 = vmatpush1.bf16.msra.mxu0 %v4226
    %5061 = vmatprep.subr.bf16.mxu0 %v4231
    %5062 = vmatpush1.bf16.msra.mxu0 %v4230
    %5063 = vmatprep.subr.bf16.mxu0 %v4235
    %5064 = vmatpush1.bf16.msra.mxu0 %v4234
    %5065 = vmatprep.subr.bf16.mxu0 %v4239
    %5066 = vmatpush1.bf16.msra.mxu0 %v4238
    %5067 = vmatprep.subr.bf16.mxu0 %v4243
    %5068 = vmatpush1.bf16.msra.mxu0 %v4242
    %5069 = vmatprep.subr.bf16.mxu0 %v4247
    %5070 = vmatpush1.bf16.msra.mxu0 %v4246
    %5071 = vmatprep.subr.bf16.mxu0 %v4251
    %5072 = vmatpush1.bf16.msra.mxu0 %v4250
    %5073 = vmatprep.subr.bf16.mxu0 %v4255
    %5074 = vmatpush1.bf16.msra.mxu0 %v4254
    %5075 = vmatprep.subr.bf16.mxu0 %v4259
    %5076 = vmatpush1.bf16.msra.mxu0 %v4258
    %5077 = vmatprep.subr.bf16.mxu0 %v4263
    %5078 = vmatpush1.bf16.msra.mxu0 %v4262
    %5079 = vmatprep.subr.bf16.mxu0 %v4267
    %5080 = vmatpush1.bf16.msra.mxu0 %v4266
    %5081 = vmatprep.subr.bf16.mxu0 %v4271
    %5082 = vmatpush1.bf16.msra.mxu0 %v4270
    %5083 = vmatprep.subr.bf16.mxu0 %v4275
    %5084 = vmatpush1.bf16.msra.mxu0 %v4274
    %5085 = vmatprep.mubr.bf16.mxu0 %v5050
    %5086 = vmatmul.mubr.bf16.gmra.mrb[0].mxu0 %v5049
    %v5087 = vpop.f32.mrb[0].mxu0
    %v5088 = vadd.f32 0.0, %v5087
    %v5089 = vpop.f32.mrb[0].mxu0
    %v5090 = vadd.f32 0.0, %v5089
    %v5091 = vpop.f32.mrb[0].mxu0
    %v5092 = vpop.f32.mrb[0].mxu0
    %5093 = vdwg.mxu0
    %5094 = vmatprep.subr.bf16.mxu0 %v4217
    %5095 = vmatpush1.bf16.msra.mxu0 %v4216
    %5096 = vmatprep.subr.bf16.mxu0 %v4221
    %5097 = vmatpush1.bf16.msra.mxu0 %v4220
    %5098 = vmatprep.subr.bf16.mxu0 %v4225
    %5099 = vmatpush1.bf16.msra.mxu0 %v4224
    %5100 = vmatprep.subr.bf16.mxu0 %v4229
    %5101 = vmatpush1.bf16.msra.mxu0 %v4228
    %5102 = vmatprep.subr.bf16.mxu0 %v4233
    %5103 = vmatpush1.bf16.msra.mxu0 %v4232
    %5104 = vmatprep.subr.bf16.mxu0 %v4237
    %5105 = vmatpush1.bf16.msra.mxu0 %v4236
    %5106 = vmatprep.subr.bf16.mxu0 %v4241
    %5107 = vmatpush1.bf16.msra.mxu0 %v4240
    %5108 = vmatprep.subr.bf16.mxu0 %v4245
    %5109 = vmatpush1.bf16.msra.mxu0 %v4244
    %5110 = vmatprep.subr.bf16.mxu0 %v4249
    %5111 = vmatpush1.bf16.msra.mxu0 %v4248
    %5112 = vmatprep.subr.bf16.mxu0 %v4253
    %5113 = vmatpush1.bf16.msra.mxu0 %v4252
    %5114 = vmatprep.subr.bf16.mxu0 %v4257
    %5115 = vmatpush1.bf16.msra.mxu0 %v4256
    %5116 = vmatprep.subr.bf16.mxu0 %v4261
    %5117 = vmatpush1.bf16.msra.mxu0 %v4260
    %5118 = vmatprep.subr.bf16.mxu0 %v4265
    %5119 = vmatpush1.bf16.msra.mxu0 %v4264
    %5120 = vmatprep.subr.bf16.mxu0 %v4269
    %5121 = vmatpush1.bf16.msra.mxu0 %v4268
    %5122 = vmatprep.subr.bf16.mxu0 %v4273
    %5123 = vmatpush1.bf16.msra.mxu0 %v4272
    %5124 = vmatprep.subr.bf16.mxu0 %v4277
    %5125 = vmatpush1.bf16.msra.mxu0 %v4276
    %5126 = vmatprep.mubr.bf16.mxu0 %v5050
    %5127 = vmatmul.mubr.bf16.gmra.mrb[0].mxu0 %v5049
    %v5128 = vpop.f32.mrb[0].mxu0
    %v5129 = vadd.f32 0.0, %v5128
    %v5130 = vpop.f32.mrb[0].mxu0
    %v5131 = vadd.f32 0.0, %v5130
    %v5132 = vpop.f32.mrb[0].mxu0
    %v5133 = vpop.f32.mrb[0].mxu0
    %5134 = vdwg.mxu0
    %v5135 = vadd.f32 %v5041, %v5088
    %v5136 = vadd.f32 %v5042, %v5090
    %v5137 = vadd.f32 %v5043, %v5129
    %v5138 = vadd.f32 %v5044, %v5131
    %v5139 = vmul.f32 %v5135, 0.5
    %v5140 = vtanh.pop %v5139
    %v5141 = vmul.f32 %v5140, 0.5
    %v5142 = vadd.f32 %v5141, 0.5
    %v5143 = vmul.f32 %v5136, 0.5
    %v5144 = vtanh.pop %v5143
    %v5145 = vmul.f32 %v5144, 0.5
    %v5146 = vadd.f32 %v5145, 0.5
    %v5147 = vtanh.pop %v5137
    %v5148 = vmul.f32 %v5138, 0.5
    %v5149 = vtanh.pop %v5148
    %v5150 = vmul.f32 %v5149, 0.5
    %v5151 = vadd.f32 %v5150, 0.5
    %v5153 = vrot.slane %v5031, 4
    %v5155 = vmul.f32 %v5146, %v5153
    %v5156 = vmul.f32 %v5142, %v5147
    %v5157 = vadd.f32 %v5155, %v5156
    %v5158 = vtanh.pop %v5157
    %v5159 = vmul.f32 %v5151, %v5158
    %v5161 = vrot.slane %v5159, 4
    %5163 = vst [vmem:[#allocation3 + $0x10] sm:$0x30] %v5161
    %5164 = vst [vmem:[#allocation3 + $0x8] sm:$0xc] %v5159
    %v5165 = vmul.f32 %v5159, %v1679
    %v5166 = vmul.f32 %v5159, %v1680
    %v5167 = vld [vmem:[#allocation2 + $0x60] sm:$0xf0]
    %v5168 = vld [vmem:[#allocation2 + $0x68] sm:$0xf0]
    %v5169 = vld [vmem:[#allocation2 + $0x70] sm:$0xf0]
    %v5170 = vld [vmem:[#allocation2 + $0x78] sm:$0xf0]
    %v5171 = vpack.c.bf16 %v5165, %v5165
    %v5172 = vpack.c.bf16 %v5166, %v5166
    %5173 = vmatprep.subr.bf16.mxu0 %v4215
    %5174 = vmatpush1.bf16.msra.mxu0 %v4214
    %5175 = vmatprep.subr.bf16.mxu0 %v4219
    %5176 = vmatpush1.bf16.msra.mxu0 %v4218
    %5177 = vmatprep.subr.bf16.mxu0 %v4223
    %5178 = vmatpush1.bf16.msra.mxu0 %v4222
    %5179 = vmatprep.subr.bf16.mxu0 %v4227
    %5180 = vmatpush1.bf16.msra.mxu0 %v4226
    %5181 = vmatprep.subr.bf16.mxu0 %v4231
    %5182 = vmatpush1.bf16.msra.mxu0 %v4230
    %5183 = vmatprep.subr.bf16.mxu0 %v4235
    %5184 = vmatpush1.bf16.msra.mxu0 %v4234
    %5185 = vmatprep.subr.bf16.mxu0 %v4239
    %5186 = vmatpush1.bf16.msra.mxu0 %v4238
    %5187 = vmatprep.subr.bf16.mxu0 %v4243
    %5188 = vmatpush1.bf16.msra.mxu0 %v4242
    %5189 = vmatprep.subr.bf16.mxu0 %v4247
    %5190 = vmatpush1.bf16.msra.mxu0 %v4246
    %5191 = vmatprep.subr.bf16.mxu0 %v4251
    %5192 = vmatpush1.bf16.msra.mxu0 %v4250
    %5193 = vmatprep.subr.bf16.mxu0 %v4255
    %5194 = vmatpush1.bf16.msra.mxu0 %v4254
    %5195 = vmatprep.subr.bf16.mxu0 %v4259
    %5196 = vmatpush1.bf16.msra.mxu0 %v4258
    %5197 = vmatprep.subr.bf16.mxu0 %v4263
    %5198 = vmatpush1.bf16.msra.mxu0 %v4262
    %5199 = vmatprep.subr.bf16.mxu0 %v4267
    %5200 = vmatpush1.bf16.msra.mxu0 %v4266
    %5201 = vmatprep.subr.bf16.mxu0 %v4271
    %5202 = vmatpush1.bf16.msra.mxu0 %v4270
    %5203 = vmatprep.subr.bf16.mxu0 %v4275
    %5204 = vmatpush1.bf16.msra.mxu0 %v4274
    %5205 = vmatprep.mubr.bf16.mxu0 %v5172
    %5206 = vmatmul.mubr.bf16.gmra.mrb[0].mxu0 %v5171
    %v5207 = vpop.f32.mrb[0].mxu0
    %v5208 = vadd.f32 0.0, %v5207
    %v5209 = vpop.f32.mrb[0].mxu0
    %v5210 = vadd.f32 0.0, %v5209
    %v5211 = vpop.f32.mrb[0].mxu0
    %v5212 = vpop.f32.mrb[0].mxu0
    %5213 = vdwg.mxu0
    %5214 = vmatprep.subr.bf16.mxu0 %v4217
    %5215 = vmatpush1.bf16.msra.mxu0 %v4216
    %5216 = vmatprep.subr.bf16.mxu0 %v4221
    %5217 = vmatpush1.bf16.msra.mxu0 %v4220
    %5218 = vmatprep.subr.bf16.mxu0 %v4225
    %5219 = vmatpush1.bf16.msra.mxu0 %v4224
    %5220 = vmatprep.subr.bf16.mxu0 %v4229
    %5221 = vmatpush1.bf16.msra.mxu0 %v4228
    %5222 = vmatprep.subr.bf16.mxu0 %v4233
    %5223 = vmatpush1.bf16.msra.mxu0 %v4232
    %5224 = vmatprep.subr.bf16.mxu0 %v4237
    %5225 = vmatpush1.bf16.msra.mxu0 %v4236
    %5226 = vmatprep.subr.bf16.mxu0 %v4241
    %5227 = vmatpush1.bf16.msra.mxu0 %v4240
    %5228 = vmatprep.subr.bf16.mxu0 %v4245
    %5229 = vmatpush1.bf16.msra.mxu0 %v4244
    %5230 = vmatprep.subr.bf16.mxu0 %v4249
    %5231 = vmatpush1.bf16.msra.mxu0 %v4248
    %5232 = vmatprep.subr.bf16.mxu0 %v4253
    %5233 = vmatpush1.bf16.msra.mxu0 %v4252
    %5234 = vmatprep.subr.bf16.mxu0 %v4257
    %5235 = vmatpush1.bf16.msra.mxu0 %v4256
    %5236 = vmatprep.subr.bf16.mxu0 %v4261
    %5237 = vmatpush1.bf16.msra.mxu0 %v4260
    %5238 = vmatprep.subr.bf16.mxu0 %v4265
    %5239 = vmatpush1.bf16.msra.mxu0 %v4264
    %5240 = vmatprep.subr.bf16.mxu0 %v4269
    %5241 = vmatpush1.bf16.msra.mxu0 %v4268
    %5242 = vmatprep.subr.bf16.mxu0 %v4273
    %5243 = vmatpush1.bf16.msra.mxu0 %v4272
    %5244 = vmatprep.subr.bf16.mxu0 %v4277
    %5245 = vmatpush1.bf16.msra.mxu0 %v4276
    %5246 = vmatprep.mubr.bf16.mxu0 %v5172
    %5247 = vmatmul.mubr.bf16.gmra.mrb[0].mxu0 %v5171
    %v5248 = vpop.f32.mrb[0].mxu0
    %v5249 = vadd.f32 0.0, %v5248
    %v5250 = vpop.f32.mrb[0].mxu0
    %v5251 = vadd.f32 0.0, %v5250
    %v5252 = vpop.f32.mrb[0].mxu0
    %v5253 = vpop.f32.mrb[0].mxu0
    %5254 = vdwg.mxu0
    %v5259 = vrot.slane %v5208, 4
    %v5260 = vrot.slane %v5210, 4
    %v5261 = vrot.slane %v5249, 4
    %v5262 = vrot.slane %v5251, 4
    %v5267 = vadd.f32 %v5167, %v5259
    %v5268 = vadd.f32 %v5168, %v5260
    %v5269 = vadd.f32 %v5169, %v5261
    %v5270 = vadd.f32 %v5170, %v5262
    %v5271 = vmul.f32 %v5267, 0.5
    %v5272 = vtanh.pop %v5271
    %v5273 = vmul.f32 %v5272, 0.5
    %v5274 = vadd.f32 %v5273, 0.5
    %v5275 = vmul.f32 %v5268, 0.5
    %v5276 = vtanh.pop %v5275
    %v5277 = vmul.f32 %v5276, 0.5
    %v5278 = vadd.f32 %v5277, 0.5
    %v5279 = vtanh.pop %v5269
    %v5280 = vmul.f32 %v5270, 0.5
    %v5281 = vtanh.pop %v5280
    %v5282 = vmul.f32 %v5281, 0.5
    %v5283 = vadd.f32 %v5282, 0.5
    %v5285 = vrot.slane %v5157, 4
    %v5287 = vmul.f32 %v5278, %v5285
    %v5288 = vmul.f32 %v5274, %v5279
    %v5289 = vadd.f32 %v5287, %v5288
    %v5290 = vtanh.pop %v5289
    %v5291 = vmul.f32 %v5283, %v5290
    %v5293 = vrot.slane %v5291, 6
    %5295 = vst [vmem:[#allocation3 + $0x10] sm:$0xc0] %v5293
    %5296 = vst [vmem:[#allocation3 + $0x8] sm:$0x3] %v5293
    %v5297 = vld [vmem:[#allocation3] sm:$0xff]
    %v5298 = vld [vmem:[#allocation3 + $0x8] sm:$0xff]
    %v5299 = vld [vmem:[#allocation3 + $0x10] sm:$0xff]
    %v5300 = vld [vmem:[#allocation3 + $0x18] sm:$0xff]
    %v5301 = vld [vmem:[%s7] sm:$0x3]
    %v5303 = vlaneseq
    %v5304 = vshrl.u32 %v5303, 7
    %v5305 = vsub.s32 0, %v5304
    %v5306 = vrot.slane %v5301, %v5305
    %v5307 = vlaneseq
    %v5308 = vshrl.u32 %v5307, 7
    %v5309 = vsub.s32 1, %v5308
    %v5310 = vrot.slane %v5301, %v5309
    %v5313 = vmul.f32 %v5297, %v5306
    %v5314 = vmul.f32 %v5298, %v5310
    %v5315 = vmul.f32 %v5299, %v5306
    %v5316 = vmul.f32 %v5300, %v5310
    %v5317 = vadd.f32 %v5313, %v5314
    %5318 = vadd.xlane.f32.xlu0 %v5317
    %v5319 = vpop.xlane.xlu0 %5318
    %v5320 = vadd.f32 %v5315, %v5316
    %5321 = vadd.xlane.f32.xlu0 %v5320
    %v5322 = vpop.xlane.xlu0 %5321
    %v5323 = vmax.f32 %v5319, %v5322
    %v5324 = vrot.slane %v5323, 4
    %v5325 = vmax.f32 %v5323, %v5324
    %v5326 = vrot.slane %v5325, 2
    %v5327 = vmax.f32 %v5325, %v5326
    %v5328 = vrot.slane %v5327, 1
    %v5329 = vmax.f32 %v5327, %v5328
    %v5330 = vsub.f32 %v5319, %v5329
    %v5331 = vsub.f32 %v5322, %v5329
    %v5332 = vmul.f32 %v5330, 1.442695
    %v5333 = vpow.pop %v5332
    %v5334 = vmul.f32 %v5331, 1.442695
    %v5335 = vpow.pop %v5334
    %v5336 = vld [vmem:[%s8] sm:$0x3]
    %vm5337 = vcmask 130048
    %v5339 = vsel %vm5337, %v5336, 0
    %5341 = vmatprep.subr.mxu0 0.0
    %5342 = vmatpush1.msra.mxu0 %v5333
    %5343 = vmatprep.subr.mxu0 0.0
    %5344 = vmatpush1.msra.mxu0 %v5335
    %5345 = vmatprep.subr.mxu0 0.0
    %5346 = vmatpush1.msra.mxu0 0.0
    %5347 = vmatprep.subr.mxu0 0.0
    %5348 = vmatpush1.msra.mxu0 0.0
    %5349 = vmatprep.subr.mxu0 0.0
    %5350 = vmatpush1.msra.mxu0 0.0
    %5351 = vmatprep.subr.mxu0 0.0
    %5352 = vmatpush1.msra.mxu0 0.0
    %5353 = vmatprep.subr.mxu0 0.0
    %5354 = vmatpush1.msra.mxu0 0.0
    %5355 = vmatprep.subr.mxu0 0.0
    %5356 = vmatpush1.msra.mxu0 0.0
    %5357 = vmatprep.subr.mxu0 0.0
    %5358 = vmatpush1.msra.mxu0 0.0
    %5359 = vmatprep.subr.mxu0 0.0
    %5360 = vmatpush1.msra.mxu0 0.0
    %5361 = vmatprep.subr.mxu0 0.0
    %5362 = vmatpush1.msra.mxu0 0.0
    %5363 = vmatprep.subr.mxu0 0.0
    %5364 = vmatpush1.msra.mxu0 0.0
    %5365 = vmatprep.subr.mxu0 0.0
    %5366 = vmatpush1.msra.mxu0 0.0
    %5367 = vmatprep.subr.mxu0 0.0
    %5368 = vmatpush1.msra.mxu0 0.0
    %5369 = vmatprep.subr.mxu0 0.0
    %5370 = vmatpush1.msra.mxu0 0.0
    %5371 = vmatprep.subr.mxu0 0.0
    %5372 = vmatpush1.msra.mxu0 0.0
    %5373 = vmatprep.subr.mxu0 0.0
    %5374 = vmatpush1.msra.mxu0 0.0
    %5375 = vmatprep.subr.mxu0 0.0
    %5376 = vmatpush1.msra.mxu0 0.0
    %5377 = vmatprep.subr.mxu0 0.0
    %5378 = vmatpush1.msra.mxu0 0.0
    %5379 = vmatprep.subr.mxu0 0.0
    %5380 = vmatpush1.msra.mxu0 0.0
    %5381 = vmatprep.subr.mxu0 0.0
    %5382 = vmatpush1.msra.mxu0 0.0
    %5383 = vmatprep.subr.mxu0 0.0
    %5384 = vmatpush1.msra.mxu0 0.0
    %5385 = vmatprep.subr.mxu0 0.0
    %5386 = vmatpush1.msra.mxu0 0.0
    %5387 = vmatprep.subr.mxu0 0.0
    %5388 = vmatpush1.msra.mxu0 0.0
    %5389 = vmatprep.subr.mxu0 0.0
    %5390 = vmatpush1.msra.mxu0 0.0
    %5391 = vmatprep.subr.mxu0 0.0
    %5392 = vmatpush1.msra.mxu0 0.0
    %5393 = vmatprep.subr.mxu0 0.0
    %5394 = vmatpush1.msra.mxu0 0.0
    %5395 = vmatprep.subr.mxu0 0.0
    %5396 = vmatpush1.msra.mxu0 0.0
    %5397 = vmatprep.subr.mxu0 0.0
    %5398 = vmatpush1.msra.mxu0 0.0
    %5399 = vmatprep.subr.mxu0 0.0
    %5400 = vmatpush1.msra.mxu0 0.0
    %5401 = vmatprep.subr.mxu0 0.0
    %5402 = vmatpush1.msra.mxu0 0.0
    %5403 = vmatprep.subr.mxu0 0.0
    %5404 = vmatpush1.msra.mxu0 0.0
    %5405 = vmatprep.mubr.f32.mxu0 0.0
    %5406 = vmatmul.mubr.f32.gmra.mrb[0].mxu0 %v5339
    %v5407 = vpop.f32.mrb[0].mxu0
    %v5408 = vadd.f32 0.0, %v5407
    %v5409 = vpop.f32.mrb[0].mxu0
    %5410 = vdwg.mxu0
    %v5411 = vmul.f32 %v5297, %v5333
    %v5412 = vmul.f32 %v5298, %v5333
    %v5413 = vmul.f32 %v5299, %v5335
    %v5414 = vmul.f32 %v5300, %v5335
    %5415 = vmatprep.subr.mxu0 %v5412
    %5416 = vmatpush1.msra.mxu0 %v5411
    %5417 = vmatprep.subr.mxu0 %v5414
    %5418 = vmatpush1.msra.mxu0 %v5413
    %5419 = vmatprep.subr.mxu0 0.0
    %5420 = vmatpush1.msra.mxu0 0.0
    %5421 = vmatprep.subr.mxu0 0.0
    %5422 = vmatpush1.msra.mxu0 0.0
    %5423 = vmatprep.subr.mxu0 0.0
    %5424 = vmatpush1.msra.mxu0 0.0
    %5425 = vmatprep.subr.mxu0 0.0
    %5426 = vmatpush1.msra.mxu0 0.0
    %5427 = vmatprep.subr.mxu0 0.0
    %5428 = vmatpush1.msra.mxu0 0.0
    %5429 = vmatprep.subr.mxu0 0.0
    %5430 = vmatpush1.msra.mxu0 0.0
    %5431 = vmatprep.subr.mxu0 0.0
    %5432 = vmatpush1.msra.mxu0 0.0
    %5433 = vmatprep.subr.mxu0 0.0
    %5434 = vmatpush1.msra.mxu0 0.0
    %5435 = vmatprep.subr.mxu0 0.0
    %5436 = vmatpush1.msra.mxu0 0.0
    %5437 = vmatprep.subr.mxu0 0.0
    %5438 = vmatpush1.msra.mxu0 0.0
    %5439 = vmatprep.subr.mxu0 0.0
    %5440 = vmatpush1.msra.mxu0 0.0
    %5441 = vmatprep.subr.mxu0 0.0
    %5442 = vmatpush1.msra.mxu0 0.0
    %5443 = vmatprep.subr.mxu0 0.0
    %5444 = vmatpush1.msra.mxu0 0.0
    %5445 = vmatprep.subr.mxu0 0.0
    %5446 = vmatpush1.msra.mxu0 0.0
    %5447 = vmatprep.subr.mxu0 0.0
    %5448 = vmatpush1.msra.mxu0 0.0
    %5449 = vmatprep.subr.mxu0 0.0
    %5450 = vmatpush1.msra.mxu0 0.0
    %5451 = vmatprep.subr.mxu0 0.0
    %5452 = vmatpush1.msra.mxu0 0.0
    %5453 = vmatprep.subr.mxu0 0.0
    %5454 = vmatpush1.msra.mxu0 0.0
    %5455 = vmatprep.subr.mxu0 0.0
    %5456 = vmatpush1.msra.mxu0 0.0
    %5457 = vmatprep.subr.mxu0 0.0
    %5458 = vmatpush1.msra.mxu0 0.0
    %5459 = vmatprep.subr.mxu0 0.0
    %5460 = vmatpush1.msra.mxu0 0.0
    %5461 = vmatprep.subr.mxu0 0.0
    %5462 = vmatpush1.msra.mxu0 0.0
    %5463 = vmatprep.subr.mxu0 0.0
    %5464 = vmatpush1.msra.mxu0 0.0
    %5465 = vmatprep.subr.mxu0 0.0
    %5466 = vmatpush1.msra.mxu0 0.0
    %5467 = vmatprep.subr.mxu0 0.0
    %5468 = vmatpush1.msra.mxu0 0.0
    %5469 = vmatprep.subr.mxu0 0.0
    %5470 = vmatpush1.msra.mxu0 0.0
    %5471 = vmatprep.subr.mxu0 0.0
    %5472 = vmatpush1.msra.mxu0 0.0
    %5473 = vmatprep.subr.mxu0 0.0
    %5474 = vmatpush1.msra.mxu0 0.0
    %5475 = vmatprep.subr.mxu0 0.0
    %5476 = vmatpush1.msra.mxu0 0.0
    %5477 = vmatprep.subr.mxu0 0.0
    %5478 = vmatpush1.msra.mxu0 0.0
    %5479 = vmatprep.mubr.f32.mxu0 0.0
    %5480 = vmatmul.mubr.f32.gmra.mrb[0].mxu0 %v5339
    %v5481 = vpop.f32.mrb[0].mxu0
    %v5482 = vadd.f32 0.0, %v5481
    %v5483 = vpop.f32.mrb[0].mxu0
    %v5484 = vadd.f32 0.0, %v5483
    %5485 = vdwg.mxu0
    %v5486 = vrcp.pop %v5408
    %5488 = vset.pattern.permute.xlu0 0
    %5489 = vperm.xlu0 %5488, %v5486
    %v5490 = vpop.permute.xlu0 %5489
    %v5492 = vmul.f32 %v5482, %v5490
    %v5493 = vmul.f32 %v5484, %v5490
    %v5494 = vmax.f32 %v5492, 0.0
    %v5495 = vmax.f32 %v5493, 0.0
    %v5496 = vld [vmem:[%s9] sm:$0xf]
    %v5497 = vld [vmem:[%s9 + $0x4] sm:$0xf]
    %v5498 = vld [vmem:[%s9 + $0x8] sm:$0xf]
    %v5499 = vld [vmem:[%s9 + $0xc] sm:$0xf]
    %v5500 = vld [vmem:[%s9 + $0x10] sm:$0xf]
    %v5501 = vld [vmem:[%s9 + $0x14] sm:$0xf]
    %v5502 = vld [vmem:[%s9 + $0x18] sm:$0xf]
    %v5503 = vld [vmem:[%s9 + $0x1c] sm:$0xf]
    %v5504 = vld [vmem:[%s9 + $0x20] sm:$0xf]
    %v5505 = vld [vmem:[%s9 + $0x24] sm:$0xf]
    %v5506 = vld [vmem:[%s9 + $0x28] sm:$0xf]
    %v5507 = vld [vmem:[%s9 + $0x2c] sm:$0xf]
    %v5508 = vld [vmem:[%s9 + $0x30] sm:$0xf]
    %v5509 = vld [vmem:[%s9 + $0x34] sm:$0xf]
    %v5510 = vld [vmem:[%s9 + $0x38] sm:$0xf]
    %v5511 = vld [vmem:[%s9 + $0x3c] sm:$0xf]
    %v5512 = vld [vmem:[%s9 + $0x40] sm:$0xf]
    %v5513 = vld [vmem:[%s9 + $0x44] sm:$0xf]
    %v5514 = vld [vmem:[%s9 + $0x48] sm:$0xf]
    %v5515 = vld [vmem:[%s9 + $0x4c] sm:$0xf]
    %v5516 = vld [vmem:[%s9 + $0x50] sm:$0xf]
    %v5517 = vld [vmem:[%s9 + $0x54] sm:$0xf]
    %v5518 = vld [vmem:[%s9 + $0x58] sm:$0xf]
    %v5519 = vld [vmem:[%s9 + $0x5c] sm:$0xf]
    %v5520 = vld [vmem:[%s9 + $0x60] sm:$0xf]
    %v5521 = vld [vmem:[%s9 + $0x64] sm:$0xf]
    %v5522 = vld [vmem:[%s9 + $0x68] sm:$0xf]
    %v5523 = vld [vmem:[%s9 + $0x6c] sm:$0xf]
    %v5524 = vld [vmem:[%s9 + $0x70] sm:$0xf]
    %v5525 = vld [vmem:[%s9 + $0x74] sm:$0xf]
    %v5526 = vld [vmem:[%s9 + $0x78] sm:$0xf]
    %v5527 = vld [vmem:[%s9 + $0x7c] sm:$0xf]
    %v5528 = vpack.c.bf16 %v5494, %v5494
    %v5529 = vpack.c.bf16 %v5495, %v5495
    %v5530 = vld [vmem:[%s10] sm:$0x1]
    %v5532 = vlaneseq
    %v5533 = vshrl.u32 %v5532, 7
    %v5534 = vsub.s32 0, %v5533
    %v5535 = vrot.slane %v5530, %v5534
    %v5569 = vunpack.c.l.b16 %v5496
    %v5570 = vunpack.c.l.b16 %v5497
    %v5571 = vunpack.c.l.b16 %v5498
    %v5572 = vunpack.c.l.b16 %v5499
    %v5573 = vunpack.c.l.b16 %v5500
    %v5574 = vunpack.c.l.b16 %v5501
    %v5575 = vunpack.c.l.b16 %v5502
    %v5576 = vunpack.c.l.b16 %v5503
    %v5577 = vunpack.c.l.b16 %v5504
    %v5578 = vunpack.c.l.b16 %v5505
    %v5579 = vunpack.c.l.b16 %v5506
    %v5580 = vunpack.c.l.b16 %v5507
    %v5581 = vunpack.c.l.b16 %v5508
    %v5582 = vunpack.c.l.b16 %v5509
    %v5583 = vunpack.c.l.b16 %v5510
    %v5584 = vunpack.c.l.b16 %v5511
    %v5585 = vunpack.c.l.b16 %v5512
    %v5586 = vunpack.c.l.b16 %v5513
    %v5587 = vunpack.c.l.b16 %v5514
    %v5588 = vunpack.c.l.b16 %v5515
    %v5589 = vunpack.c.l.b16 %v5516
    %v5590 = vunpack.c.l.b16 %v5517
    %v5591 = vunpack.c.l.b16 %v5518
    %v5592 = vunpack.c.l.b16 %v5519
    %v5593 = vunpack.c.l.b16 %v5520
    %v5594 = vunpack.c.l.b16 %v5521
    %v5595 = vunpack.c.l.b16 %v5522
    %v5596 = vunpack.c.l.b16 %v5523
    %v5597 = vunpack.c.l.b16 %v5524
    %v5598 = vunpack.c.l.b16 %v5525
    %v5599 = vunpack.c.l.b16 %v5526
    %v5600 = vunpack.c.l.b16 %v5527
    %v5601 = vpack.c.b16 %v5570, %v5569
    %v5602 = vpack.c.b16 %v5572, %v5571
    %v5603 = vpack.c.b16 %v5574, %v5573
    %v5604 = vpack.c.b16 %v5576, %v5575
    %v5605 = vpack.c.b16 %v5578, %v5577
    %v5606 = vpack.c.b16 %v5580, %v5579
    %v5607 = vpack.c.b16 %v5582, %v5581
    %v5608 = vpack.c.b16 %v5584, %v5583
    %v5609 = vpack.c.b16 %v5586, %v5585
    %v5610 = vpack.c.b16 %v5588, %v5587
    %v5611 = vpack.c.b16 %v5590, %v5589
    %v5612 = vpack.c.b16 %v5592, %v5591
    %v5613 = vpack.c.b16 %v5594, %v5593
    %v5614 = vpack.c.b16 %v5596, %v5595
    %v5615 = vpack.c.b16 %v5598, %v5597
    %v5616 = vpack.c.b16 %v5600, %v5599
    %5633 = vmatprep.subr.bf16.mxu0 0
    %5634 = vmatpush1.bf16.msra.mxu0 %v5601
    %5635 = vmatprep.subr.bf16.mxu0 0
    %5636 = vmatpush1.bf16.msra.mxu0 %v5602
    %5637 = vmatprep.subr.bf16.mxu0 0
    %5638 = vmatpush1.bf16.msra.mxu0 %v5603
    %5639 = vmatprep.subr.bf16.mxu0 0
    %5640 = vmatpush1.bf16.msra.mxu0 %v5604
    %5641 = vmatprep.subr.bf16.mxu0 0
    %5642 = vmatpush1.bf16.msra.mxu0 %v5605
    %5643 = vmatprep.subr.bf16.mxu0 0
    %5644 = vmatpush1.bf16.msra.mxu0 %v5606
    %5645 = vmatprep.subr.bf16.mxu0 0
    %5646 = vmatpush1.bf16.msra.mxu0 %v5607
    %5647 = vmatprep.subr.bf16.mxu0 0
    %5648 = vmatpush1.bf16.msra.mxu0 %v5608
    %5649 = vmatprep.subr.bf16.mxu0 0
    %5650 = vmatpush1.bf16.msra.mxu0 %v5609
    %5651 = vmatprep.subr.bf16.mxu0 0
    %5652 = vmatpush1.bf16.msra.mxu0 %v5610
    %5653 = vmatprep.subr.bf16.mxu0 0
    %5654 = vmatpush1.bf16.msra.mxu0 %v5611
    %5655 = vmatprep.subr.bf16.mxu0 0
    %5656 = vmatpush1.bf16.msra.mxu0 %v5612
    %5657 = vmatprep.subr.bf16.mxu0 0
    %5658 = vmatpush1.bf16.msra.mxu0 %v5613
    %5659 = vmatprep.subr.bf16.mxu0 0
    %5660 = vmatpush1.bf16.msra.mxu0 %v5614
    %5661 = vmatprep.subr.bf16.mxu0 0
    %5662 = vmatpush1.bf16.msra.mxu0 %v5615
    %5663 = vmatprep.subr.bf16.mxu0 0
    %5664 = vmatpush1.bf16.msra.mxu0 %v5616
    %5665 = vmatprep.mubr.bf16.mxu0 %v5529
    %5666 = vmatmul.mubr.bf16.gmra.mrb[0].mxu0 %v5528
    %v5667 = vpop.f32.mrb[0].mxu0
    %v5668 = vadd.f32 %v5535, %v5667
    %v5669 = vpop.f32.mrb[0].mxu0
    %v5670 = vpop.f32.mrb[0].mxu0
    %v5671 = vpop.f32.mrb[0].mxu0
    %5672 = vdwg.mxu0
    %v5673 = vld [vmem:[%s11] sm:$0xf]
    %v5674 = vld [vmem:[%s11 + $0x4] sm:$0xf]
    %v5675 = vld [vmem:[%s11 + $0x8] sm:$0xf]
    %v5676 = vld [vmem:[%s11 + $0xc] sm:$0xf]
    %v5677 = vld [vmem:[%s11 + $0x10] sm:$0xf]
    %v5678 = vld [vmem:[%s11 + $0x14] sm:$0xf]
    %v5679 = vld [vmem:[%s11 + $0x18] sm:$0xf]
    %v5680 = vld [vmem:[%s11 + $0x1c] sm:$0xf]
    %v5681 = vld [vmem:[%s11 + $0x20] sm:$0xf]
    %v5682 = vld [vmem:[%s11 + $0x24] sm:$0xf]
    %v5683 = vld [vmem:[%s11 + $0x28] sm:$0xf]
    %v5684 = vld [vmem:[%s11 + $0x2c] sm:$0xf]
    %v5685 = vld [vmem:[%s11 + $0x30] sm:$0xf]
    %v5686 = vld [vmem:[%s11 + $0x34] sm:$0xf]
    %v5687 = vld [vmem:[%s11 + $0x38] sm:$0xf]
    %v5688 = vld [vmem:[%s11 + $0x3c] sm:$0xf]
    %v5689 = vpack.c.bf16 %v5668, %v5668
    %v5690 = vld [vmem:[%s12] sm:$0x1]
    %v5692 = vlaneseq
    %v5693 = vshrl.u32 %v5692, 7
    %v5694 = vsub.s32 0, %v5693
    %v5695 = vrot.slane %v5690, %v5694
    %v5713 = vunpack.c.l.b16 %v5673
    %v5714 = vunpack.c.l.b16 %v5674
    %v5715 = vunpack.c.l.b16 %v5675
    %v5716 = vunpack.c.l.b16 %v5676
    %v5717 = vunpack.c.l.b16 %v5677
    %v5718 = vunpack.c.l.b16 %v5678
    %v5719 = vunpack.c.l.b16 %v5679
    %v5720 = vunpack.c.l.b16 %v5680
    %v5721 = vunpack.c.l.b16 %v5681
    %v5722 = vunpack.c.l.b16 %v5682
    %v5723 = vunpack.c.l.b16 %v5683
    %v5724 = vunpack.c.l.b16 %v5684
    %v5725 = vunpack.c.l.b16 %v5685
    %v5726 = vunpack.c.l.b16 %v5686
    %v5727 = vunpack.c.l.b16 %v5687
    %v5728 = vunpack.c.l.b16 %v5688
    %v5729 = vpack.c.b16 %v5714, %v5713
    %v5730 = vpack.c.b16 %v5716, %v5715
    %v5731 = vpack.c.b16 %v5718, %v5717
    %v5732 = vpack.c.b16 %v5720, %v5719
    %v5733 = vpack.c.b16 %v5722, %v5721
    %v5734 = vpack.c.b16 %v5724, %v5723
    %v5735 = vpack.c.b16 %v5726, %v5725
    %v5736 = vpack.c.b16 %v5728, %v5727
    %5745 = vmatprep.subr.bf16.mxu0 0
    %5746 = vmatpush1.bf16.msra.mxu0 %v5729
    %5747 = vmatprep.subr.bf16.mxu0 0
    %5748 = vmatpush1.bf16.msra.mxu0 %v5730
    %5749 = vmatprep.subr.bf16.mxu0 0
    %5750 = vmatpush1.bf16.msra.mxu0 %v5731
    %5751 = vmatprep.subr.bf16.mxu0 0
    %5752 = vmatpush1.bf16.msra.mxu0 %v5732
    %5753 = vmatprep.subr.bf16.mxu0 0
    %5754 = vmatpush1.bf16.msra.mxu0 %v5733
    %5755 = vmatprep.subr.bf16.mxu0 0
    %5756 = vmatpush1.bf16.msra.mxu0 %v5734
    %5757 = vmatprep.subr.bf16.mxu0 0
    %5758 = vmatpush1.bf16.msra.mxu0 %v5735
    %5759 = vmatprep.subr.bf16.mxu0 0
    %5760 = vmatpush1.bf16.msra.mxu0 %v5736
    %5761 = vmatprep.subr.bf16.mxu0 0
    %5762 = vmatpush1.bf16.msra.mxu0 0
    %5763 = vmatprep.subr.bf16.mxu0 0
    %5764 = vmatpush1.bf16.msra.mxu0 0
    %5765 = vmatprep.subr.bf16.mxu0 0
    %5766 = vmatpush1.bf16.msra.mxu0 0
    %5767 = vmatprep.subr.bf16.mxu0 0
    %5768 = vmatpush1.bf16.msra.mxu0 0
    %5769 = vmatprep.subr.bf16.mxu0 0
    %5770 = vmatpush1.bf16.msra.mxu0 0
    %5771 = vmatprep.subr.bf16.mxu0 0
    %5772 = vmatpush1.bf16.msra.mxu0 0
    %5773 = vmatprep.subr.bf16.mxu0 0
    %5774 = vmatpush1.bf16.msra.mxu0 0
    %5775 = vmatprep.subr.bf16.mxu0 0
    %5776 = vmatpush1.bf16.msra.mxu0 0
    %5777 = vmatprep.mubr.bf16.mxu0 0
    %5778 = vmatmul.mubr.bf16.gmra.mrb[0].mxu0 %v5689
    %v5779 = vpop.f32.mrb[0].mxu0
    %v5780 = vadd.f32 %v5695, %v5779
    %v5781 = vpop.f32.mrb[0].mxu0
    %v5782 = vpop.f32.mrb[0].mxu0
    %v5783 = vpop.f32.mrb[0].mxu0
    %5784 = vdwg.mxu0
    %5785 = vst [vmem:[#allocation7] sm:$0x3] %v5780
    // Predicated region
    $region120: #{_lambda_.1} parent=1 // pred_check
      _
    $region121: #{_lambda_.1} parent=1 // pred_check_branch
      %5787 = sbr.rel (0) target = $region123
    $region122: #{_lambda_.1} parent=1 // pred_region
      %s5789 = ssub.s32 32, 32
      %5790 = vsyncadd [#allocation8], %s5789
      %s5792 = sshll.u32 [#allocation7], 4
      %s5793 = int_to_ptr.vmem [resolvable:$true] %s5792
      %5795 = dma.vmem_to_hbm [thread:$0]  %s5793, 32, %s13, [#allocation8]
    $region123: #{_lambda_.1} parent=1 // pred_fallthru
      _
    // Predicated region
    $region124: #{_lambda_.1} parent=1 // pred_check
      _
    $region125: #{_lambda_.1} parent=1 // pred_check_branch
      %5797 = sbr.rel (0) target = $region127
    $region126: #{_lambda_.1} parent=1 // pred_region
      %5798 = dma.done [#allocation8], 32
    $region127: #{_lambda_.1} parent=1 // pred_fallthru
      _
    %5799 = vsyncpa [#allocation8], 1
  %5800 = vsyncmov [#allocation6]
  %s5801 = vpop.sfrf %5800
  %p5802 = scmp.eq.s32.totalorder %s5801, 0
  %p5803 = pneg %p5802
  %5805 = shalt.err (%p5803)
  %s5806 = scalar_lea.sflag [#allocation6], 1
  %5807 = vsyncmov %s5806
  %s5808 = vpop.sfrf %5807
  %p5809 = scmp.eq.s32.totalorder %s5808, 0
  %p5810 = pneg %p5809
  %5812 = shalt.err (%p5810)

</llo_original>
